<compile_context>
chip_gen: v5e
topology: v5e:2x2
jax: 0.10.0
libtpu: 0.0.40
codegen_flags: <defaults>
</compile_context>

<pallas_src>
import functools

import jax
import jax.numpy as jnp
from jax.experimental import pallas as pl
from jax.experimental.pallas import tpu as pltpu


# Fixed LeNet geometry (fc1 = 16*5*5 implies a 32x32 single-channel input).
H = W = 32
# Slack columns so shifted-window reads never run past the buffer.
# Max tap offset read: conv2 taps on pool1 = 2*(4*W+4) = 264 <= PAD.
PAD = 384


# ----------------------------------------------------------------------------
# The fused kernel
# ----------------------------------------------------------------------------
def _lenet_kernel(x_ref, w1_ref, b1_ref, w2_ref, b2_ref,
                  wf1_ref, bf1_ref, wf2_ref, bf2_ref, wf3_ref, bf3_ref,
                  out_ref,
                  xp_ref, s1_ref, a1_ref, p1_ref, s2_ref, a2_ref, p2_ref,
                  feat_ref,
                  *, batch, nflat, pad):
    f32 = jnp.float32
    hw = H * W

    # Zero the tails that shifted reads may touch (keeps out-of-image garbage
    # finite; valid outputs never depend on it).
    xp_ref[:, pl.ds(nflat, pad)] = jnp.zeros((1, pad), f32)
    a1_ref[:, pl.ds(nflat, pad)] = jnp.zeros((6, pad), f32)
    p1_ref[:, pl.ds(nflat, pad)] = jnp.zeros((6, pad), f32)
    a2_ref[:, pl.ds(nflat, pad)] = jnp.zeros((16, pad), f32)

    # Padded input lives in VMEM (no jnp.pad in the wrapper).
    xp_ref[:, pl.ds(0, nflat)] = x_ref[...]

    # -------- conv1 (1 -> 6, 5x5, valid) as ONE matmul ----------------------
    # Stacked-shift RHS: row t = x shifted by (i*W + j).
    for i in range(5):
        for j in range(5):
            t = i * 5 + j
            s1_ref[pl.ds(t, 1), :] = xp_ref[:, pl.ds(i * W + j, nflat)]
    a1 = jnp.dot(w1_ref[...], s1_ref[...], preferred_element_type=f32)
    a1_ref[:, pl.ds(0, nflat)] = jnp.maximum(a1 + b1_ref[...], 0.0)

    # -------- max-pool 2x2 (grid stays 32x32; dilation becomes 2) -----------
    p1_ref[:, pl.ds(0, nflat)] = jnp.maximum(
        jnp.maximum(a1_ref[:, pl.ds(0, nflat)], a1_ref[:, pl.ds(1, nflat)]),
        jnp.maximum(a1_ref[:, pl.ds(W, nflat)], a1_ref[:, pl.ds(W + 1, nflat)]))

    # -------- conv2 (6 -> 16, 5x5, dilated taps) as ONE matmul --------------
    # Stacked-tap RHS: rows [6t, 6t+6) = pool1 shifted by 2*(i*W + j).
    for i in range(5):
        for j in range(5):
            t = i * 5 + j
            s2_ref[pl.ds(6 * t, 6), :] = p1_ref[:, pl.ds(2 * (i * W + j), nflat)]
    a2 = jnp.dot(w2_ref[...], s2_ref[...], preferred_element_type=f32)
    a2_ref[:, pl.ds(0, nflat)] = jnp.maximum(a2 + b2_ref[...], 0.0)

    # -------- max-pool 2x2 (dilation 2 -> 4) --------------------------------
    p2_ref[...] = jnp.maximum(
        jnp.maximum(a2_ref[:, pl.ds(0, nflat)], a2_ref[:, pl.ds(2, nflat)]),
        jnp.maximum(a2_ref[:, pl.ds(2 * W, nflat)],
                    a2_ref[:, pl.ds(2 * W + 2, nflat)]))

    # -------- gather flattened features for ALL batch elements --------------
    # feat[(qh*5+qw)*16 + c, b] = p2[c, b*hw + 4*qh*W + 4*qw]
    # (fc1 weights are packed to exactly this row order).
    for qh in range(5):
        for qw in range(5):
            tap = qh * 5 + qw
            off = 4 * qh * W + 4 * qw
            for b in range(batch):
                feat_ref[pl.ds(16 * tap, 16), pl.ds(b, 1)] = \
                    p2_ref[:, pl.ds(b * hw + off, 1)]

    # -------- fully-connected stack: three batched matmuls ------------------
    h1 = jnp.maximum(
        jnp.dot(wf1_ref[...], feat_ref[...], preferred_element_type=f32)
        + bf1_ref[...], 0.0)                                    # (120, B)
    h2 = jnp.maximum(
        jnp.dot(wf2_ref[...], h1, preferred_element_type=f32)
        + bf2_ref[...], 0.0)                                    # (84, B)
    out_ref[...] = (jnp.dot(wf3_ref[...], h2, preferred_element_type=f32)
                    + bf3_ref[...])                             # (10, B)


def _full_spec(shape):
    n = len(shape)
    return pl.BlockSpec(shape, lambda i, _n=n: (0,) * _n)


# ----------------------------------------------------------------------------
# One-time parameter repack (PyTorch layout -> kernel layout); no per-step
# weight transposes inside the jitted forward.
# ----------------------------------------------------------------------------
def pack_params(params):
    f32 = jnp.float32
    return {
        # conv1: [out, i*5+j]
        "w1": params["conv1_w"].reshape(6, 25).astype(f32),
        "b1": params["conv1_b"].reshape(6, 1).astype(f32),
        # conv2: [out, (i*5+j)*6 + cin]  (matches stack2 row layout)
        "w2": params["conv2_w"].transpose(0, 2, 3, 1).reshape(16, 150).astype(f32),
        "b2": params["conv2_b"].reshape(16, 1).astype(f32),
        # fc1: [out, (qh*5+qw)*16 + cin]  (matches feat row layout)
        "wf1": params["fc1_w"].reshape(120, 16, 5, 5)
                              .transpose(0, 2, 3, 1).reshape(120, 400).astype(f32),
        "bf1": params["fc1_b"].reshape(120, 1).astype(f32),
        "wf2": params["fc2_w"].astype(f32),
        "bf2": params["fc2_b"].reshape(84, 1).astype(f32),
        "wf3": params["fc3_w"].astype(f32),
        "bf3": params["fc3_b"].reshape(10, 1).astype(f32),
    }


# ----------------------------------------------------------------------------
# Fused forward
# ----------------------------------------------------------------------------
@jax.jit
def lenet_forward(packed, x):
    # x: (B, 1, 32, 32) NCHW float32
    B = x.shape[0]
    assert x.shape[1:] == (1, H, W), x.shape
    nflat = B * H * W
    npad = nflat + PAD

    xflat = x.reshape(1, nflat).astype(jnp.float32)   # pure reshape (C == 1)

    args = (xflat, packed["w1"], packed["b1"], packed["w2"], packed["b2"],
            packed["wf1"], packed["bf1"], packed["wf2"], packed["bf2"],
            packed["wf3"], packed["bf3"])

    kernel = functools.partial(_lenet_kernel, batch=B, nflat=nflat, pad=PAD)
    out = pl.pallas_call(
        kernel,
        out_shape=jax.ShapeDtypeStruct((10, B), jnp.float32),
        grid=(1,),
        in_specs=[_full_spec(a.shape) for a in args],
        out_specs=_full_spec((10, B)),
        scratch_shapes=[
            pltpu.VMEM((1, npad), jnp.float32),      # zero-tail-padded input
            pltpu.VMEM((25, nflat), jnp.float32),    # conv1 stacked-shift RHS
            pltpu.VMEM((6, npad), jnp.float32),      # conv1 + ReLU
            pltpu.VMEM((6, npad), jnp.float32),      # pool1
            pltpu.VMEM((150, nflat), jnp.float32),   # conv2 stacked-tap RHS
            pltpu.VMEM((16, npad), jnp.float32),     # conv2 + ReLU
            pltpu.VMEM((16, nflat), jnp.float32),    # pool2
            pltpu.VMEM((400, B), jnp.float32),       # flattened features
        ],
        compiler_params=pltpu.CompilerParams(
            dimension_semantics=("arbitrary",)),
    )(*args)
    # Kernel keeps batch on the lane axis (no in-kernel transpose); the final
    # (10, B) -> (B, 10) flip is an 80-byte op.
    return out.T


# ----------------------------------------------------------------------------
# Plain-JAX reference (for correctness verification) + deterministic init
# ----------------------------------------------------------------------------
def lenet_reference(params, x):
    y = jax.lax.conv_general_dilated(
        x, params["conv1_w"], (1, 1), "VALID",
        dimension_numbers=("NCHW", "OIHW", "NCHW"))
    y = jnp.maximum(y + params["conv1_b"].reshape(1, -1, 1, 1), 0.0)
    y = jax.lax.reduce_window(y, -jnp.inf, jax.lax.max,
                              (1, 1, 2, 2), (1, 1, 2, 2), "VALID")
    y = jax.lax.conv_general_dilated(
        y, params["conv2_w"], (1, 1), "VALID",
        dimension_numbers=("NCHW", "OIHW", "NCHW"))
    y = jnp.maximum(y + params["conv2_b"].reshape(1, -1, 1, 1), 0.0)
    y = jax.lax.reduce_window(y, -jnp.inf, jax.lax.max,
                              (1, 1, 2, 2), (1, 1, 2, 2), "VALID")
    y = y.reshape(y.shape[0], -1)
    y = jnp.maximum(y @ params["fc1_w"].T + params["fc1_b"], 0.0)
    y = jnp.maximum(y @ params["fc2_w"].T + params["fc2_b"], 0.0)
    return y @ params["fc3_w"].T + params["fc3_b"]


def _uniform(key, shape, fan_in):
    bound = 1.0 / float(fan_in) ** 0.5
    return jax.random.uniform(key, shape, jnp.float32, -bound, bound)


def init_lenet_params(key):
    ks = jax.random.split(key, 10)
    return {
        "conv1_w": _uniform(ks[0], (6, 1, 5, 5), 25),
        "conv1_b": _uniform(ks[1], (6,), 25),
        "conv2_w": _uniform(ks[2], (16, 6, 5, 5), 150),
        "conv2_b": _uniform(ks[3], (16,), 150),
        "fc1_w": _uniform(ks[4], (120, 400), 400),
        "fc1_b": _uniform(ks[5], (120,), 400),
        "fc2_w": _uniform(ks[6], (84, 120), 120),
        "fc2_b": _uniform(ks[7], (84,), 120),
        "fc3_w": _uniform(ks[8], (10, 84), 84),
        "fc3_b": _uniform(ks[9], (10,), 84),
    }


if __name__ == "__main__":
    key = jax.random.PRNGKey(0)
    k_param, k_x = jax.random.split(key)
    params = init_lenet_params(k_param)
    packed = pack_params(params)

    # LeNet's fc1 (16*5*5) implies 32x32 single-channel input; batch = 2.
    x = jax.random.normal(k_x, (2, 1, 32, 32), dtype=jnp.float32)

    out = jax.block_until_ready(lenet_forward(packed, x))
    assert out.shape == (2, 10), out.shape

    ref = lenet_reference(params, x)
    assert jnp.allclose(out, ref, atol=1e-3, rtol=1e-3), \
        float(jnp.max(jnp.abs(out - ref)))
    print("KERNEL_OK")
</pallas_src>

<mosaic_0001>
module attributes {stable_mosaic.version = 11 : i64} {
  func.func @_lenet_kernel(%arg0: i32, %arg1: memref<1x2048xf32, #tpu.memory_space<vmem>>, %arg2: memref<6x25xf32, #tpu.memory_space<vmem>>, %arg3: memref<6x1xf32, #tpu.memory_space<vmem>>, %arg4: memref<16x150xf32, #tpu.memory_space<vmem>>, %arg5: memref<16x1xf32, #tpu.memory_space<vmem>>, %arg6: memref<120x400xf32, #tpu.memory_space<vmem>>, %arg7: memref<120x1xf32, #tpu.memory_space<vmem>>, %arg8: memref<84x120xf32, #tpu.memory_space<vmem>>, %arg9: memref<84x1xf32, #tpu.memory_space<vmem>>, %arg10: memref<10x84xf32, #tpu.memory_space<vmem>>, %arg11: memref<10x1xf32, #tpu.memory_space<vmem>>, %arg12: memref<10x2xf32, #tpu.memory_space<vmem>>, %arg13: memref<1x2432xf32, #tpu.memory_space<vmem>>, %arg14: memref<25x2048xf32, #tpu.memory_space<vmem>>, %arg15: memref<6x2432xf32, #tpu.memory_space<vmem>>, %arg16: memref<6x2432xf32, #tpu.memory_space<vmem>>, %arg17: memref<150x2048xf32, #tpu.memory_space<vmem>>, %arg18: memref<16x2432xf32, #tpu.memory_space<vmem>>, %arg19: memref<16x2048xf32, #tpu.memory_space<vmem>>, %arg20: memref<400x2xf32, #tpu.memory_space<vmem>>) attributes {dimension_semantics = [#tpu.dimension_semantics<arbitrary>], iteration_bounds = array<i64: 1>, scalar_prefetch = 0 : i64, scratch_operands = 8 : i64, tpu.core_type = #tpu.core_type<tc>, window_params = [{pipeline_mode = #tpu.pipeline_mode<synchronous>, transform_indices = @transform_0, window_bounds = array<i64: 1, 2048>}, {pipeline_mode = #tpu.pipeline_mode<synchronous>, transform_indices = @transform_1, window_bounds = array<i64: 6, 25>}, {pipeline_mode = #tpu.pipeline_mode<synchronous>, transform_indices = @transform_2, window_bounds = array<i64: 6, 1>}, {pipeline_mode = #tpu.pipeline_mode<synchronous>, transform_indices = @transform_3, window_bounds = array<i64: 16, 150>}, {pipeline_mode = #tpu.pipeline_mode<synchronous>, transform_indices = @transform_4, window_bounds = array<i64: 16, 1>}, {pipeline_mode = #tpu.pipeline_mode<synchronous>, transform_indices = @transform_5, window_bounds = array<i64: 120, 400>}, {pipeline_mode = #tpu.pipeline_mode<synchronous>, transform_indices = @transform_6, window_bounds = array<i64: 120, 1>}, {pipeline_mode = #tpu.pipeline_mode<synchronous>, transform_indices = @transform_7, window_bounds = array<i64: 84, 120>}, {pipeline_mode = #tpu.pipeline_mode<synchronous>, transform_indices = @transform_8, window_bounds = array<i64: 84, 1>}, {pipeline_mode = #tpu.pipeline_mode<synchronous>, transform_indices = @transform_9, window_bounds = array<i64: 10, 84>}, {pipeline_mode = #tpu.pipeline_mode<synchronous>, transform_indices = @transform_10, window_bounds = array<i64: 10, 1>}, {pipeline_mode = #tpu.pipeline_mode<synchronous>, transform_indices = @transform_11, window_bounds = array<i64: 10, 2>}]} {
    %cst = arith.constant 0.000000e+00 : f32
    %0 = vector.broadcast %cst : f32 to vector<1x384xf32>
    %c0 = arith.constant 0 : index
    %c2048 = arith.constant 2048 : index
    %1 = vector.load %arg13[%c0, %c2048] : memref<1x2432xf32, #tpu.memory_space<vmem>>, vector<1x384xf32>
    tpu.vector_store %arg13[%c0, %c2048], %0 {strides = array<i32>} : memref<1x2432xf32, #tpu.memory_space<vmem>>, vector<1x384xf32>,
    %cst_0 = arith.constant 0.000000e+00 : f32
    %2 = vector.broadcast %cst_0 : f32 to vector<6x384xf32>
    %c0_1 = arith.constant 0 : index
    %c2048_2 = arith.constant 2048 : index
    %3 = vector.load %arg15[%c0_1, %c2048_2] : memref<6x2432xf32, #tpu.memory_space<vmem>>, vector<6x384xf32>
    tpu.vector_store %arg15[%c0_1, %c2048_2], %2 {strides = array<i32>} : memref<6x2432xf32, #tpu.memory_space<vmem>>, vector<6x384xf32>,
    %cst_3 = arith.constant 0.000000e+00 : f32
    %4 = vector.broadcast %cst_3 : f32 to vector<6x384xf32>
    %c0_4 = arith.constant 0 : index
    %c2048_5 = arith.constant 2048 : index
    %5 = vector.load %arg16[%c0_4, %c2048_5] : memref<6x2432xf32, #tpu.memory_space<vmem>>, vector<6x384xf32>
    tpu.vector_store %arg16[%c0_4, %c2048_5], %4 {strides = array<i32>} : memref<6x2432xf32, #tpu.memory_space<vmem>>, vector<6x384xf32>,
    %cst_6 = arith.constant 0.000000e+00 : f32
    %6 = vector.broadcast %cst_6 : f32 to vector<16x384xf32>
    %c0_7 = arith.constant 0 : index
    %c2048_8 = arith.constant 2048 : index
    %7 = vector.load %arg18[%c0_7, %c2048_8] : memref<16x2432xf32, #tpu.memory_space<vmem>>, vector<16x384xf32>
    tpu.vector_store %arg18[%c0_7, %c2048_8], %6 {strides = array<i32>} : memref<16x2432xf32, #tpu.memory_space<vmem>>, vector<16x384xf32>,
    %c0_9 = arith.constant 0 : index
    %c0_10 = arith.constant 0 : index
    %8 = vector.load %arg1[%c0_9, %c0_10] : memref<1x2048xf32, #tpu.memory_space<vmem>>, vector<1x2048xf32>
    %c0_11 = arith.constant 0 : index
    %c0_12 = arith.constant 0 : index
    %9 = vector.load %arg13[%c0_11, %c0_12] : memref<1x2432xf32, #tpu.memory_space<vmem>>, vector<1x2048xf32>
    tpu.vector_store %arg13[%c0_11, %c0_12], %8 {strides = array<i32>} : memref<1x2432xf32, #tpu.memory_space<vmem>>, vector<1x2048xf32>,
    %c0_13 = arith.constant 0 : index
    %c0_14 = arith.constant 0 : index
    %10 = vector.load %arg13[%c0_13, %c0_14] : memref<1x2432xf32, #tpu.memory_space<vmem>>, vector<1x2048xf32>
    %c0_15 = arith.constant 0 : index
    %c0_16 = arith.constant 0 : index
    %11 = vector.load %arg14[%c0_15, %c0_16] : memref<25x2048xf32, #tpu.memory_space<vmem>>, vector<1x2048xf32>
    tpu.vector_store %arg14[%c0_15, %c0_16], %10 {strides = array<i32>} : memref<25x2048xf32, #tpu.memory_space<vmem>>, vector<1x2048xf32>,
    %c0_17 = arith.constant 0 : index
    %c1 = arith.constant 1 : index
    %12 = vector.load %arg13[%c0_17, %c1] : memref<1x2432xf32, #tpu.memory_space<vmem>>, vector<1x2048xf32>
    %c1_18 = arith.constant 1 : index
    %c0_19 = arith.constant 0 : index
    %13 = vector.load %arg14[%c1_18, %c0_19] : memref<25x2048xf32, #tpu.memory_space<vmem>>, vector<1x2048xf32>
    tpu.vector_store %arg14[%c1_18, %c0_19], %12 {strides = array<i32>} : memref<25x2048xf32, #tpu.memory_space<vmem>>, vector<1x2048xf32>,
    %c0_20 = arith.constant 0 : index
    %c2 = arith.constant 2 : index
    %14 = vector.load %arg13[%c0_20, %c2] : memref<1x2432xf32, #tpu.memory_space<vmem>>, vector<1x2048xf32>
    %c2_21 = arith.constant 2 : index
    %c0_22 = arith.constant 0 : index
    %15 = vector.load %arg14[%c2_21, %c0_22] : memref<25x2048xf32, #tpu.memory_space<vmem>>, vector<1x2048xf32>
    tpu.vector_store %arg14[%c2_21, %c0_22], %14 {strides = array<i32>} : memref<25x2048xf32, #tpu.memory_space<vmem>>, vector<1x2048xf32>,
    %c0_23 = arith.constant 0 : index
    %c3 = arith.constant 3 : index
    %16 = vector.load %arg13[%c0_23, %c3] : memref<1x2432xf32, #tpu.memory_space<vmem>>, vector<1x2048xf32>
    %c3_24 = arith.constant 3 : index
    %c0_25 = arith.constant 0 : index
    %17 = vector.load %arg14[%c3_24, %c0_25] : memref<25x2048xf32, #tpu.memory_space<vmem>>, vector<1x2048xf32>
    tpu.vector_store %arg14[%c3_24, %c0_25], %16 {strides = array<i32>} : memref<25x2048xf32, #tpu.memory_space<vmem>>, vector<1x2048xf32>,
    %c0_26 = arith.constant 0 : index
    %c4 = arith.constant 4 : index
    %18 = vector.load %arg13[%c0_26, %c4] : memref<1x2432xf32, #tpu.memory_space<vmem>>, vector<1x2048xf32>
    %c4_27 = arith.constant 4 : index
    %c0_28 = arith.constant 0 : index
    %19 = vector.load %arg14[%c4_27, %c0_28] : memref<25x2048xf32, #tpu.memory_space<vmem>>, vector<1x2048xf32>
    tpu.vector_store %arg14[%c4_27, %c0_28], %18 {strides = array<i32>} : memref<25x2048xf32, #tpu.memory_space<vmem>>, vector<1x2048xf32>,
    %c0_29 = arith.constant 0 : index
    %c32 = arith.constant 32 : index
    %20 = vector.load %arg13[%c0_29, %c32] : memref<1x2432xf32, #tpu.memory_space<vmem>>, vector<1x2048xf32>
    %c5 = arith.constant 5 : index
    %c0_30 = arith.constant 0 : index
    %21 = vector.load %arg14[%c5, %c0_30] : memref<25x2048xf32, #tpu.memory_space<vmem>>, vector<1x2048xf32>
    tpu.vector_store %arg14[%c5, %c0_30], %20 {strides = array<i32>} : memref<25x2048xf32, #tpu.memory_space<vmem>>, vector<1x2048xf32>,
    %c0_31 = arith.constant 0 : index
    %c33 = arith.constant 33 : index
    %22 = vector.load %arg13[%c0_31, %c33] : memref<1x2432xf32, #tpu.memory_space<vmem>>, vector<1x2048xf32>
    %c6 = arith.constant 6 : index
    %c0_32 = arith.constant 0 : index
    %23 = vector.load %arg14[%c6, %c0_32] : memref<25x2048xf32, #tpu.memory_space<vmem>>, vector<1x2048xf32>
    tpu.vector_store %arg14[%c6, %c0_32], %22 {strides = array<i32>} : memref<25x2048xf32, #tpu.memory_space<vmem>>, vector<1x2048xf32>,
    %c0_33 = arith.constant 0 : index
    %c34 = arith.constant 34 : index
    %24 = vector.load %arg13[%c0_33, %c34] : memref<1x2432xf32, #tpu.memory_space<vmem>>, vector<1x2048xf32>
    %c7 = arith.constant 7 : index
    %c0_34 = arith.constant 0 : index
    %25 = vector.load %arg14[%c7, %c0_34] : memref<25x2048xf32, #tpu.memory_space<vmem>>, vector<1x2048xf32>
    tpu.vector_store %arg14[%c7, %c0_34], %24 {strides = array<i32>} : memref<25x2048xf32, #tpu.memory_space<vmem>>, vector<1x2048xf32>,
    %c0_35 = arith.constant 0 : index
    %c35 = arith.constant 35 : index
    %26 = vector.load %arg13[%c0_35, %c35] : memref<1x2432xf32, #tpu.memory_space<vmem>>, vector<1x2048xf32>
    %c8 = arith.constant 8 : index
    %c0_36 = arith.constant 0 : index
    %27 = vector.load %arg14[%c8, %c0_36] : memref<25x2048xf32, #tpu.memory_space<vmem>>, vector<1x2048xf32>
    tpu.vector_store %arg14[%c8, %c0_36], %26 {strides = array<i32>} : memref<25x2048xf32, #tpu.memory_space<vmem>>, vector<1x2048xf32>,
    %c0_37 = arith.constant 0 : index
    %c36 = arith.constant 36 : index
    %28 = vector.load %arg13[%c0_37, %c36] : memref<1x2432xf32, #tpu.memory_space<vmem>>, vector<1x2048xf32>
    %c9 = arith.constant 9 : index
    %c0_38 = arith.constant 0 : index
    %29 = vector.load %arg14[%c9, %c0_38] : memref<25x2048xf32, #tpu.memory_space<vmem>>, vector<1x2048xf32>
    tpu.vector_store %arg14[%c9, %c0_38], %28 {strides = array<i32>} : memref<25x2048xf32, #tpu.memory_space<vmem>>, vector<1x2048xf32>,
    %c0_39 = arith.constant 0 : index
    %c64 = arith.constant 64 : index
    %30 = vector.load %arg13[%c0_39, %c64] : memref<1x2432xf32, #tpu.memory_space<vmem>>, vector<1x2048xf32>
    %c10 = arith.constant 10 : index
    %c0_40 = arith.constant 0 : index
    %31 = vector.load %arg14[%c10, %c0_40] : memref<25x2048xf32, #tpu.memory_space<vmem>>, vector<1x2048xf32>
    tpu.vector_store %arg14[%c10, %c0_40], %30 {strides = array<i32>} : memref<25x2048xf32, #tpu.memory_space<vmem>>, vector<1x2048xf32>,
    %c0_41 = arith.constant 0 : index
    %c65 = arith.constant 65 : index
    %32 = vector.load %arg13[%c0_41, %c65] : memref<1x2432xf32, #tpu.memory_space<vmem>>, vector<1x2048xf32>
    %c11 = arith.constant 11 : index
    %c0_42 = arith.constant 0 : index
    %33 = vector.load %arg14[%c11, %c0_42] : memref<25x2048xf32, #tpu.memory_space<vmem>>, vector<1x2048xf32>
    tpu.vector_store %arg14[%c11, %c0_42], %32 {strides = array<i32>} : memref<25x2048xf32, #tpu.memory_space<vmem>>, vector<1x2048xf32>,
    %c0_43 = arith.constant 0 : index
    %c66 = arith.constant 66 : index
    %34 = vector.load %arg13[%c0_43, %c66] : memref<1x2432xf32, #tpu.memory_space<vmem>>, vector<1x2048xf32>
    %c12 = arith.constant 12 : index
    %c0_44 = arith.constant 0 : index
    %35 = vector.load %arg14[%c12, %c0_44] : memref<25x2048xf32, #tpu.memory_space<vmem>>, vector<1x2048xf32>
    tpu.vector_store %arg14[%c12, %c0_44], %34 {strides = array<i32>} : memref<25x2048xf32, #tpu.memory_space<vmem>>, vector<1x2048xf32>,
    %c0_45 = arith.constant 0 : index
    %c67 = arith.constant 67 : index
    %36 = vector.load %arg13[%c0_45, %c67] : memref<1x2432xf32, #tpu.memory_space<vmem>>, vector<1x2048xf32>
    %c13 = arith.constant 13 : index
    %c0_46 = arith.constant 0 : index
    %37 = vector.load %arg14[%c13, %c0_46] : memref<25x2048xf32, #tpu.memory_space<vmem>>, vector<1x2048xf32>
    tpu.vector_store %arg14[%c13, %c0_46], %36 {strides = array<i32>} : memref<25x2048xf32, #tpu.memory_space<vmem>>, vector<1x2048xf32>,
    %c0_47 = arith.constant 0 : index
    %c68 = arith.constant 68 : index
    %38 = vector.load %arg13[%c0_47, %c68] : memref<1x2432xf32, #tpu.memory_space<vmem>>, vector<1x2048xf32>
    %c14 = arith.constant 14 : index
    %c0_48 = arith.constant 0 : index
    %39 = vector.load %arg14[%c14, %c0_48] : memref<25x2048xf32, #tpu.memory_space<vmem>>, vector<1x2048xf32>
    tpu.vector_store %arg14[%c14, %c0_48], %38 {strides = array<i32>} : memref<25x2048xf32, #tpu.memory_space<vmem>>, vector<1x2048xf32>,
    %c0_49 = arith.constant 0 : index
    %c96 = arith.constant 96 : index
    %40 = vector.load %arg13[%c0_49, %c96] : memref<1x2432xf32, #tpu.memory_space<vmem>>, vector<1x2048xf32>
    %c15 = arith.constant 15 : index
    %c0_50 = arith.constant 0 : index
    %41 = vector.load %arg14[%c15, %c0_50] : memref<25x2048xf32, #tpu.memory_space<vmem>>, vector<1x2048xf32>
    tpu.vector_store %arg14[%c15, %c0_50], %40 {strides = array<i32>} : memref<25x2048xf32, #tpu.memory_space<vmem>>, vector<1x2048xf32>,
    %c0_51 = arith.constant 0 : index
    %c97 = arith.constant 97 : index
    %42 = vector.load %arg13[%c0_51, %c97] : memref<1x2432xf32, #tpu.memory_space<vmem>>, vector<1x2048xf32>
    %c16 = arith.constant 16 : index
    %c0_52 = arith.constant 0 : index
    %43 = vector.load %arg14[%c16, %c0_52] : memref<25x2048xf32, #tpu.memory_space<vmem>>, vector<1x2048xf32>
    tpu.vector_store %arg14[%c16, %c0_52], %42 {strides = array<i32>} : memref<25x2048xf32, #tpu.memory_space<vmem>>, vector<1x2048xf32>,
    %c0_53 = arith.constant 0 : index
    %c98 = arith.constant 98 : index
    %44 = vector.load %arg13[%c0_53, %c98] : memref<1x2432xf32, #tpu.memory_space<vmem>>, vector<1x2048xf32>
    %c17 = arith.constant 17 : index
    %c0_54 = arith.constant 0 : index
    %45 = vector.load %arg14[%c17, %c0_54] : memref<25x2048xf32, #tpu.memory_space<vmem>>, vector<1x2048xf32>
    tpu.vector_store %arg14[%c17, %c0_54], %44 {strides = array<i32>} : memref<25x2048xf32, #tpu.memory_space<vmem>>, vector<1x2048xf32>,
    %c0_55 = arith.constant 0 : index
    %c99 = arith.constant 99 : index
    %46 = vector.load %arg13[%c0_55, %c99] : memref<1x2432xf32, #tpu.memory_space<vmem>>, vector<1x2048xf32>
    %c18 = arith.constant 18 : index
    %c0_56 = arith.constant 0 : index
    %47 = vector.load %arg14[%c18, %c0_56] : memref<25x2048xf32, #tpu.memory_space<vmem>>, vector<1x2048xf32>
    tpu.vector_store %arg14[%c18, %c0_56], %46 {strides = array<i32>} : memref<25x2048xf32, #tpu.memory_space<vmem>>, vector<1x2048xf32>,
    %c0_57 = arith.constant 0 : index
    %c100 = arith.constant 100 : index
    %48 = vector.load %arg13[%c0_57, %c100] : memref<1x2432xf32, #tpu.memory_space<vmem>>, vector<1x2048xf32>
    %c19 = arith.constant 19 : index
    %c0_58 = arith.constant 0 : index
    %49 = vector.load %arg14[%c19, %c0_58] : memref<25x2048xf32, #tpu.memory_space<vmem>>, vector<1x2048xf32>
    tpu.vector_store %arg14[%c19, %c0_58], %48 {strides = array<i32>} : memref<25x2048xf32, #tpu.memory_space<vmem>>, vector<1x2048xf32>,
    %c0_59 = arith.constant 0 : index
    %c128 = arith.constant 128 : index
    %50 = vector.load %arg13[%c0_59, %c128] : memref<1x2432xf32, #tpu.memory_space<vmem>>, vector<1x2048xf32>
    %c20 = arith.constant 20 : index
    %c0_60 = arith.constant 0 : index
    %51 = vector.load %arg14[%c20, %c0_60] : memref<25x2048xf32, #tpu.memory_space<vmem>>, vector<1x2048xf32>
    tpu.vector_store %arg14[%c20, %c0_60], %50 {strides = array<i32>} : memref<25x2048xf32, #tpu.memory_space<vmem>>, vector<1x2048xf32>,
    %c0_61 = arith.constant 0 : index
    %c129 = arith.constant 129 : index
    %52 = vector.load %arg13[%c0_61, %c129] : memref<1x2432xf32, #tpu.memory_space<vmem>>, vector<1x2048xf32>
    %c21 = arith.constant 21 : index
    %c0_62 = arith.constant 0 : index
    %53 = vector.load %arg14[%c21, %c0_62] : memref<25x2048xf32, #tpu.memory_space<vmem>>, vector<1x2048xf32>
    tpu.vector_store %arg14[%c21, %c0_62], %52 {strides = array<i32>} : memref<25x2048xf32, #tpu.memory_space<vmem>>, vector<1x2048xf32>,
    %c0_63 = arith.constant 0 : index
    %c130 = arith.constant 130 : index
    %54 = vector.load %arg13[%c0_63, %c130] : memref<1x2432xf32, #tpu.memory_space<vmem>>, vector<1x2048xf32>
    %c22 = arith.constant 22 : index
    %c0_64 = arith.constant 0 : index
    %55 = vector.load %arg14[%c22, %c0_64] : memref<25x2048xf32, #tpu.memory_space<vmem>>, vector<1x2048xf32>
    tpu.vector_store %arg14[%c22, %c0_64], %54 {strides = array<i32>} : memref<25x2048xf32, #tpu.memory_space<vmem>>, vector<1x2048xf32>,
    %c0_65 = arith.constant 0 : index
    %c131 = arith.constant 131 : index
    %56 = vector.load %arg13[%c0_65, %c131] : memref<1x2432xf32, #tpu.memory_space<vmem>>, vector<1x2048xf32>
    %c23 = arith.constant 23 : index
    %c0_66 = arith.constant 0 : index
    %57 = vector.load %arg14[%c23, %c0_66] : memref<25x2048xf32, #tpu.memory_space<vmem>>, vector<1x2048xf32>
    tpu.vector_store %arg14[%c23, %c0_66], %56 {strides = array<i32>} : memref<25x2048xf32, #tpu.memory_space<vmem>>, vector<1x2048xf32>,
    %c0_67 = arith.constant 0 : index
    %c132 = arith.constant 132 : index
    %58 = vector.load %arg13[%c0_67, %c132] : memref<1x2432xf32, #tpu.memory_space<vmem>>, vector<1x2048xf32>
    %c24 = arith.constant 24 : index
    %c0_68 = arith.constant 0 : index
    %59 = vector.load %arg14[%c24, %c0_68] : memref<25x2048xf32, #tpu.memory_space<vmem>>, vector<1x2048xf32>
    tpu.vector_store %arg14[%c24, %c0_68], %58 {strides = array<i32>} : memref<25x2048xf32, #tpu.memory_space<vmem>>, vector<1x2048xf32>,
    %c0_69 = arith.constant 0 : index
    %c0_70 = arith.constant 0 : index
    %60 = vector.load %arg2[%c0_69, %c0_70] : memref<6x25xf32, #tpu.memory_space<vmem>>, vector<6x25xf32>
    %c0_71 = arith.constant 0 : index
    %c0_72 = arith.constant 0 : index
    %61 = vector.load %arg14[%c0_71, %c0_72] : memref<25x2048xf32, #tpu.memory_space<vmem>>, vector<25x2048xf32>
    %cst_73 = arith.constant dense<0.000000e+00> : vector<6x2048xf32>
    %62 = tpu.matmul %60, %61, %cst_73 {dimension_numbers = #tpu.dot_dimension_numbers<[1], [0], [0], [1], [0, 0, 1, 1], [], []>} : vector<6x25xf32>, vector<25x2048xf32>, vector<6x2048xf32> -> vector<6x2048xf32>
    %c0_74 = arith.constant 0 : index
    %c0_75 = arith.constant 0 : index
    %63 = vector.load %arg3[%c0_74, %c0_75] : memref<6x1xf32, #tpu.memory_space<vmem>>, vector<6x1xf32>
    %64 = vector.broadcast %63 : vector<6x1xf32> to vector<6x2048xf32>
    %65 = arith.addf %62, %64 : vector<6x2048xf32>
    %cst_76 = arith.constant 0.000000e+00 : f32
    %66 = vector.broadcast %cst_76 : f32 to vector<6x2048xf32>
    %67 = arith.maximumf %65, %66 : vector<6x2048xf32>
    %c0_77 = arith.constant 0 : index
    %c0_78 = arith.constant 0 : index
    %68 = vector.load %arg15[%c0_77, %c0_78] : memref<6x2432xf32, #tpu.memory_space<vmem>>, vector<6x2048xf32>
    tpu.vector_store %arg15[%c0_77, %c0_78], %67 {strides = array<i32>} : memref<6x2432xf32, #tpu.memory_space<vmem>>, vector<6x2048xf32>,
    %c0_79 = arith.constant 0 : index
    %c0_80 = arith.constant 0 : index
    %69 = vector.load %arg15[%c0_79, %c0_80] : memref<6x2432xf32, #tpu.memory_space<vmem>>, vector<6x2048xf32>
    %c0_81 = arith.constant 0 : index
    %c1_82 = arith.constant 1 : index
    %70 = vector.load %arg15[%c0_81, %c1_82] : memref<6x2432xf32, #tpu.memory_space<vmem>>, vector<6x2048xf32>
    %71 = arith.maximumf %69, %70 : vector<6x2048xf32>
    %c0_83 = arith.constant 0 : index
    %c32_84 = arith.constant 32 : index
    %72 = vector.load %arg15[%c0_83, %c32_84] : memref<6x2432xf32, #tpu.memory_space<vmem>>, vector<6x2048xf32>
    %c0_85 = arith.constant 0 : index
    %c33_86 = arith.constant 33 : index
    %73 = vector.load %arg15[%c0_85, %c33_86] : memref<6x2432xf32, #tpu.memory_space<vmem>>, vector<6x2048xf32>
    %74 = arith.maximumf %72, %73 : vector<6x2048xf32>
    %75 = arith.maximumf %71, %74 : vector<6x2048xf32>
    %c0_87 = arith.constant 0 : index
    %c0_88 = arith.constant 0 : index
    %76 = vector.load %arg16[%c0_87, %c0_88] : memref<6x2432xf32, #tpu.memory_space<vmem>>, vector<6x2048xf32>
    tpu.vector_store %arg16[%c0_87, %c0_88], %75 {strides = array<i32>} : memref<6x2432xf32, #tpu.memory_space<vmem>>, vector<6x2048xf32>,
    %c0_89 = arith.constant 0 : index
    %c0_90 = arith.constant 0 : index
    %77 = vector.load %arg16[%c0_89, %c0_90] : memref<6x2432xf32, #tpu.memory_space<vmem>>, vector<6x2048xf32>
    %c0_91 = arith.constant 0 : index
    %c0_92 = arith.constant 0 : index
    %78 = vector.load %arg17[%c0_91, %c0_92] : memref<150x2048xf32, #tpu.memory_space<vmem>>, vector<6x2048xf32>
    tpu.vector_store %arg17[%c0_91, %c0_92], %77 {strides = array<i32>} : memref<150x2048xf32, #tpu.memory_space<vmem>>, vector<6x2048xf32>,
    %c0_93 = arith.constant 0 : index
    %c2_94 = arith.constant 2 : index
    %79 = vector.load %arg16[%c0_93, %c2_94] : memref<6x2432xf32, #tpu.memory_space<vmem>>, vector<6x2048xf32>
    %c6_95 = arith.constant 6 : index
    %c0_96 = arith.constant 0 : index
    %80 = vector.load %arg17[%c6_95, %c0_96] : memref<150x2048xf32, #tpu.memory_space<vmem>>, vector<6x2048xf32>
    tpu.vector_store %arg17[%c6_95, %c0_96], %79 {strides = array<i32>} : memref<150x2048xf32, #tpu.memory_space<vmem>>, vector<6x2048xf32>,
    %c0_97 = arith.constant 0 : index
    %c4_98 = arith.constant 4 : index
    %81 = vector.load %arg16[%c0_97, %c4_98] : memref<6x2432xf32, #tpu.memory_space<vmem>>, vector<6x2048xf32>
    %c12_99 = arith.constant 12 : index
    %c0_100 = arith.constant 0 : index
    %82 = vector.load %arg17[%c12_99, %c0_100] : memref<150x2048xf32, #tpu.memory_space<vmem>>, vector<6x2048xf32>
    tpu.vector_store %arg17[%c12_99, %c0_100], %81 {strides = array<i32>} : memref<150x2048xf32, #tpu.memory_space<vmem>>, vector<6x2048xf32>,
    %c0_101 = arith.constant 0 : index
    %c6_102 = arith.constant 6 : index
    %83 = vector.load %arg16[%c0_101, %c6_102] : memref<6x2432xf32, #tpu.memory_space<vmem>>, vector<6x2048xf32>
    %c18_103 = arith.constant 18 : index
    %c0_104 = arith.constant 0 : index
    %84 = vector.load %arg17[%c18_103, %c0_104] : memref<150x2048xf32, #tpu.memory_space<vmem>>, vector<6x2048xf32>
    tpu.vector_store %arg17[%c18_103, %c0_104], %83 {strides = array<i32>} : memref<150x2048xf32, #tpu.memory_space<vmem>>, vector<6x2048xf32>,
    %c0_105 = arith.constant 0 : index
    %c8_106 = arith.constant 8 : index
    %85 = vector.load %arg16[%c0_105, %c8_106] : memref<6x2432xf32, #tpu.memory_space<vmem>>, vector<6x2048xf32>
    %c24_107 = arith.constant 24 : index
    %c0_108 = arith.constant 0 : index
    %86 = vector.load %arg17[%c24_107, %c0_108] : memref<150x2048xf32, #tpu.memory_space<vmem>>, vector<6x2048xf32>
    tpu.vector_store %arg17[%c24_107, %c0_108], %85 {strides = array<i32>} : memref<150x2048xf32, #tpu.memory_space<vmem>>, vector<6x2048xf32>,
    %c0_109 = arith.constant 0 : index
    %c64_110 = arith.constant 64 : index
    %87 = vector.load %arg16[%c0_109, %c64_110] : memref<6x2432xf32, #tpu.memory_space<vmem>>, vector<6x2048xf32>
    %c30 = arith.constant 30 : index
    %c0_111 = arith.constant 0 : index
    %88 = vector.load %arg17[%c30, %c0_111] : memref<150x2048xf32, #tpu.memory_space<vmem>>, vector<6x2048xf32>
    tpu.vector_store %arg17[%c30, %c0_111], %87 {strides = array<i32>} : memref<150x2048xf32, #tpu.memory_space<vmem>>, vector<6x2048xf32>,
    %c0_112 = arith.constant 0 : index
    %c66_113 = arith.constant 66 : index
    %89 = vector.load %arg16[%c0_112, %c66_113] : memref<6x2432xf32, #tpu.memory_space<vmem>>, vector<6x2048xf32>
    %c36_114 = arith.constant 36 : index
    %c0_115 = arith.constant 0 : index
    %90 = vector.load %arg17[%c36_114, %c0_115] : memref<150x2048xf32, #tpu.memory_space<vmem>>, vector<6x2048xf32>
    tpu.vector_store %arg17[%c36_114, %c0_115], %89 {strides = array<i32>} : memref<150x2048xf32, #tpu.memory_space<vmem>>, vector<6x2048xf32>,
    %c0_116 = arith.constant 0 : index
    %c68_117 = arith.constant 68 : index
    %91 = vector.load %arg16[%c0_116, %c68_117] : memref<6x2432xf32, #tpu.memory_space<vmem>>, vector<6x2048xf32>
    %c42 = arith.constant 42 : index
    %c0_118 = arith.constant 0 : index
    %92 = vector.load %arg17[%c42, %c0_118] : memref<150x2048xf32, #tpu.memory_space<vmem>>, vector<6x2048xf32>
    tpu.vector_store %arg17[%c42, %c0_118], %91 {strides = array<i32>} : memref<150x2048xf32, #tpu.memory_space<vmem>>, vector<6x2048xf32>,
    %c0_119 = arith.constant 0 : index
    %c70 = arith.constant 70 : index
    %93 = vector.load %arg16[%c0_119, %c70] : memref<6x2432xf32, #tpu.memory_space<vmem>>, vector<6x2048xf32>
    %c48 = arith.constant 48 : index
    %c0_120 = arith.constant 0 : index
    %94 = vector.load %arg17[%c48, %c0_120] : memref<150x2048xf32, #tpu.memory_space<vmem>>, vector<6x2048xf32>
    tpu.vector_store %arg17[%c48, %c0_120], %93 {strides = array<i32>} : memref<150x2048xf32, #tpu.memory_space<vmem>>, vector<6x2048xf32>,
    %c0_121 = arith.constant 0 : index
    %c72 = arith.constant 72 : index
    %95 = vector.load %arg16[%c0_121, %c72] : memref<6x2432xf32, #tpu.memory_space<vmem>>, vector<6x2048xf32>
    %c54 = arith.constant 54 : index
    %c0_122 = arith.constant 0 : index
    %96 = vector.load %arg17[%c54, %c0_122] : memref<150x2048xf32, #tpu.memory_space<vmem>>, vector<6x2048xf32>
    tpu.vector_store %arg17[%c54, %c0_122], %95 {strides = array<i32>} : memref<150x2048xf32, #tpu.memory_space<vmem>>, vector<6x2048xf32>,
    %c0_123 = arith.constant 0 : index
    %c128_124 = arith.constant 128 : index
    %97 = vector.load %arg16[%c0_123, %c128_124] : memref<6x2432xf32, #tpu.memory_space<vmem>>, vector<6x2048xf32>
    %c60 = arith.constant 60 : index
    %c0_125 = arith.constant 0 : index
    %98 = vector.load %arg17[%c60, %c0_125] : memref<150x2048xf32, #tpu.memory_space<vmem>>, vector<6x2048xf32>
    tpu.vector_store %arg17[%c60, %c0_125], %97 {strides = array<i32>} : memref<150x2048xf32, #tpu.memory_space<vmem>>, vector<6x2048xf32>,
    %c0_126 = arith.constant 0 : index
    %c130_127 = arith.constant 130 : index
    %99 = vector.load %arg16[%c0_126, %c130_127] : memref<6x2432xf32, #tpu.memory_space<vmem>>, vector<6x2048xf32>
    %c66_128 = arith.constant 66 : index
    %c0_129 = arith.constant 0 : index
    %100 = vector.load %arg17[%c66_128, %c0_129] : memref<150x2048xf32, #tpu.memory_space<vmem>>, vector<6x2048xf32>
    tpu.vector_store %arg17[%c66_128, %c0_129], %99 {strides = array<i32>} : memref<150x2048xf32, #tpu.memory_space<vmem>>, vector<6x2048xf32>,
    %c0_130 = arith.constant 0 : index
    %c132_131 = arith.constant 132 : index
    %101 = vector.load %arg16[%c0_130, %c132_131] : memref<6x2432xf32, #tpu.memory_space<vmem>>, vector<6x2048xf32>
    %c72_132 = arith.constant 72 : index
    %c0_133 = arith.constant 0 : index
    %102 = vector.load %arg17[%c72_132, %c0_133] : memref<150x2048xf32, #tpu.memory_space<vmem>>, vector<6x2048xf32>
    tpu.vector_store %arg17[%c72_132, %c0_133], %101 {strides = array<i32>} : memref<150x2048xf32, #tpu.memory_space<vmem>>, vector<6x2048xf32>,
    %c0_134 = arith.constant 0 : index
    %c134 = arith.constant 134 : index
    %103 = vector.load %arg16[%c0_134, %c134] : memref<6x2432xf32, #tpu.memory_space<vmem>>, vector<6x2048xf32>
    %c78 = arith.constant 78 : index
    %c0_135 = arith.constant 0 : index
    %104 = vector.load %arg17[%c78, %c0_135] : memref<150x2048xf32, #tpu.memory_space<vmem>>, vector<6x2048xf32>
    tpu.vector_store %arg17[%c78, %c0_135], %103 {strides = array<i32>} : memref<150x2048xf32, #tpu.memory_space<vmem>>, vector<6x2048xf32>,
    %c0_136 = arith.constant 0 : index
    %c136 = arith.constant 136 : index
    %105 = vector.load %arg16[%c0_136, %c136] : memref<6x2432xf32, #tpu.memory_space<vmem>>, vector<6x2048xf32>
    %c84 = arith.constant 84 : index
    %c0_137 = arith.constant 0 : index
    %106 = vector.load %arg17[%c84, %c0_137] : memref<150x2048xf32, #tpu.memory_space<vmem>>, vector<6x2048xf32>
    tpu.vector_store %arg17[%c84, %c0_137], %105 {strides = array<i32>} : memref<150x2048xf32, #tpu.memory_space<vmem>>, vector<6x2048xf32>,
    %c0_138 = arith.constant 0 : index
    %c192 = arith.constant 192 : index
    %107 = vector.load %arg16[%c0_138, %c192] : memref<6x2432xf32, #tpu.memory_space<vmem>>, vector<6x2048xf32>
    %c90 = arith.constant 90 : index
    %c0_139 = arith.constant 0 : index
    %108 = vector.load %arg17[%c90, %c0_139] : memref<150x2048xf32, #tpu.memory_space<vmem>>, vector<6x2048xf32>
    tpu.vector_store %arg17[%c90, %c0_139], %107 {strides = array<i32>} : memref<150x2048xf32, #tpu.memory_space<vmem>>, vector<6x2048xf32>,
    %c0_140 = arith.constant 0 : index
    %c194 = arith.constant 194 : index
    %109 = vector.load %arg16[%c0_140, %c194] : memref<6x2432xf32, #tpu.memory_space<vmem>>, vector<6x2048xf32>
    %c96_141 = arith.constant 96 : index
    %c0_142 = arith.constant 0 : index
    %110 = vector.load %arg17[%c96_141, %c0_142] : memref<150x2048xf32, #tpu.memory_space<vmem>>, vector<6x2048xf32>
    tpu.vector_store %arg17[%c96_141, %c0_142], %109 {strides = array<i32>} : memref<150x2048xf32, #tpu.memory_space<vmem>>, vector<6x2048xf32>,
    %c0_143 = arith.constant 0 : index
    %c196 = arith.constant 196 : index
    %111 = vector.load %arg16[%c0_143, %c196] : memref<6x2432xf32, #tpu.memory_space<vmem>>, vector<6x2048xf32>
    %c102 = arith.constant 102 : index
    %c0_144 = arith.constant 0 : index
    %112 = vector.load %arg17[%c102, %c0_144] : memref<150x2048xf32, #tpu.memory_space<vmem>>, vector<6x2048xf32>
    tpu.vector_store %arg17[%c102, %c0_144], %111 {strides = array<i32>} : memref<150x2048xf32, #tpu.memory_space<vmem>>, vector<6x2048xf32>,
    %c0_145 = arith.constant 0 : index
    %c198 = arith.constant 198 : index
    %113 = vector.load %arg16[%c0_145, %c198] : memref<6x2432xf32, #tpu.memory_space<vmem>>, vector<6x2048xf32>
    %c108 = arith.constant 108 : index
    %c0_146 = arith.constant 0 : index
    %114 = vector.load %arg17[%c108, %c0_146] : memref<150x2048xf32, #tpu.memory_space<vmem>>, vector<6x2048xf32>
    tpu.vector_store %arg17[%c108, %c0_146], %113 {strides = array<i32>} : memref<150x2048xf32, #tpu.memory_space<vmem>>, vector<6x2048xf32>,
    %c0_147 = arith.constant 0 : index
    %c200 = arith.constant 200 : index
    %115 = vector.load %arg16[%c0_147, %c200] : memref<6x2432xf32, #tpu.memory_space<vmem>>, vector<6x2048xf32>
    %c114 = arith.constant 114 : index
    %c0_148 = arith.constant 0 : index
    %116 = vector.load %arg17[%c114, %c0_148] : memref<150x2048xf32, #tpu.memory_space<vmem>>, vector<6x2048xf32>
    tpu.vector_store %arg17[%c114, %c0_148], %115 {strides = array<i32>} : memref<150x2048xf32, #tpu.memory_space<vmem>>, vector<6x2048xf32>,
    %c0_149 = arith.constant 0 : index
    %c256 = arith.constant 256 : index
    %117 = vector.load %arg16[%c0_149, %c256] : memref<6x2432xf32, #tpu.memory_space<vmem>>, vector<6x2048xf32>
    %c120 = arith.constant 120 : index
    %c0_150 = arith.constant 0 : index
    %118 = vector.load %arg17[%c120, %c0_150] : memref<150x2048xf32, #tpu.memory_space<vmem>>, vector<6x2048xf32>
    tpu.vector_store %arg17[%c120, %c0_150], %117 {strides = array<i32>} : memref<150x2048xf32, #tpu.memory_space<vmem>>, vector<6x2048xf32>,
    %c0_151 = arith.constant 0 : index
    %c258 = arith.constant 258 : index
    %119 = vector.load %arg16[%c0_151, %c258] : memref<6x2432xf32, #tpu.memory_space<vmem>>, vector<6x2048xf32>
    %c126 = arith.constant 126 : index
    %c0_152 = arith.constant 0 : index
    %120 = vector.load %arg17[%c126, %c0_152] : memref<150x2048xf32, #tpu.memory_space<vmem>>, vector<6x2048xf32>
    tpu.vector_store %arg17[%c126, %c0_152], %119 {strides = array<i32>} : memref<150x2048xf32, #tpu.memory_space<vmem>>, vector<6x2048xf32>,
    %c0_153 = arith.constant 0 : index
    %c260 = arith.constant 260 : index
    %121 = vector.load %arg16[%c0_153, %c260] : memref<6x2432xf32, #tpu.memory_space<vmem>>, vector<6x2048xf32>
    %c132_154 = arith.constant 132 : index
    %c0_155 = arith.constant 0 : index
    %122 = vector.load %arg17[%c132_154, %c0_155] : memref<150x2048xf32, #tpu.memory_space<vmem>>, vector<6x2048xf32>
    tpu.vector_store %arg17[%c132_154, %c0_155], %121 {strides = array<i32>} : memref<150x2048xf32, #tpu.memory_space<vmem>>, vector<6x2048xf32>,
    %c0_156 = arith.constant 0 : index
    %c262 = arith.constant 262 : index
    %123 = vector.load %arg16[%c0_156, %c262] : memref<6x2432xf32, #tpu.memory_space<vmem>>, vector<6x2048xf32>
    %c138 = arith.constant 138 : index
    %c0_157 = arith.constant 0 : index
    %124 = vector.load %arg17[%c138, %c0_157] : memref<150x2048xf32, #tpu.memory_space<vmem>>, vector<6x2048xf32>
    tpu.vector_store %arg17[%c138, %c0_157], %123 {strides = array<i32>} : memref<150x2048xf32, #tpu.memory_space<vmem>>, vector<6x2048xf32>,
    %c0_158 = arith.constant 0 : index
    %c264 = arith.constant 264 : index
    %125 = vector.load %arg16[%c0_158, %c264] : memref<6x2432xf32, #tpu.memory_space<vmem>>, vector<6x2048xf32>
    %c144 = arith.constant 144 : index
    %c0_159 = arith.constant 0 : index
    %126 = vector.load %arg17[%c144, %c0_159] : memref<150x2048xf32, #tpu.memory_space<vmem>>, vector<6x2048xf32>
    tpu.vector_store %arg17[%c144, %c0_159], %125 {strides = array<i32>} : memref<150x2048xf32, #tpu.memory_space<vmem>>, vector<6x2048xf32>,
    %c0_160 = arith.constant 0 : index
    %c0_161 = arith.constant 0 : index
    %127 = vector.load %arg4[%c0_160, %c0_161] : memref<16x150xf32, #tpu.memory_space<vmem>>, vector<16x150xf32>
    %c0_162 = arith.constant 0 : index
    %c0_163 = arith.constant 0 : index
    %128 = vector.load %arg17[%c0_162, %c0_163] : memref<150x2048xf32, #tpu.memory_space<vmem>>, vector<150x2048xf32>
    %cst_164 = arith.constant dense<0.000000e+00> : vector<16x2048xf32>
    %129 = tpu.matmul %127, %128, %cst_164 {dimension_numbers = #tpu.dot_dimension_numbers<[1], [0], [0], [1], [0, 0, 1, 1], [], []>} : vector<16x150xf32>, vector<150x2048xf32>, vector<16x2048xf32> -> vector<16x2048xf32>
    %c0_165 = arith.constant 0 : index
    %c0_166 = arith.constant 0 : index
    %130 = vector.load %arg5[%c0_165, %c0_166] : memref<16x1xf32, #tpu.memory_space<vmem>>, vector<16x1xf32>
    %131 = vector.broadcast %130 : vector<16x1xf32> to vector<16x2048xf32>
    %132 = arith.addf %129, %131 : vector<16x2048xf32>
    %cst_167 = arith.constant 0.000000e+00 : f32
    %133 = vector.broadcast %cst_167 : f32 to vector<16x2048xf32>
    %134 = arith.maximumf %132, %133 : vector<16x2048xf32>
    %c0_168 = arith.constant 0 : index
    %c0_169 = arith.constant 0 : index
    %135 = vector.load %arg18[%c0_168, %c0_169] : memref<16x2432xf32, #tpu.memory_space<vmem>>, vector<16x2048xf32>
    tpu.vector_store %arg18[%c0_168, %c0_169], %134 {strides = array<i32>} : memref<16x2432xf32, #tpu.memory_space<vmem>>, vector<16x2048xf32>,
    %c0_170 = arith.constant 0 : index
    %c0_171 = arith.constant 0 : index
    %136 = vector.load %arg18[%c0_170, %c0_171] : memref<16x2432xf32, #tpu.memory_space<vmem>>, vector<16x2048xf32>
    %c0_172 = arith.constant 0 : index
    %c2_173 = arith.constant 2 : index
    %137 = vector.load %arg18[%c0_172, %c2_173] : memref<16x2432xf32, #tpu.memory_space<vmem>>, vector<16x2048xf32>
    %138 = arith.maximumf %136, %137 : vector<16x2048xf32>
    %c0_174 = arith.constant 0 : index
    %c64_175 = arith.constant 64 : index
    %139 = vector.load %arg18[%c0_174, %c64_175] : memref<16x2432xf32, #tpu.memory_space<vmem>>, vector<16x2048xf32>
    %c0_176 = arith.constant 0 : index
    %c66_177 = arith.constant 66 : index
    %140 = vector.load %arg18[%c0_176, %c66_177] : memref<16x2432xf32, #tpu.memory_space<vmem>>, vector<16x2048xf32>
    %141 = arith.maximumf %139, %140 : vector<16x2048xf32>
    %142 = arith.maximumf %138, %141 : vector<16x2048xf32>
    %c0_178 = arith.constant 0 : index
    %c0_179 = arith.constant 0 : index
    %143 = vector.load %arg19[%c0_178, %c0_179] : memref<16x2048xf32, #tpu.memory_space<vmem>>, vector<16x2048xf32>
    tpu.vector_store %arg19[%c0_178, %c0_179], %142 {strides = array<i32>} : memref<16x2048xf32, #tpu.memory_space<vmem>>, vector<16x2048xf32>,
    %c0_180 = arith.constant 0 : index
    %c0_181 = arith.constant 0 : index
    %144 = vector.load %arg19[%c0_180, %c0_181] : memref<16x2048xf32, #tpu.memory_space<vmem>>, vector<16x1xf32>
    %c0_182 = arith.constant 0 : index
    %c0_183 = arith.constant 0 : index
    %145 = vector.load %arg20[%c0_182, %c0_183] : memref<400x2xf32, #tpu.memory_space<vmem>>, vector<16x1xf32>
    tpu.vector_store %arg20[%c0_182, %c0_183], %144 {strides = array<i32>} : memref<400x2xf32, #tpu.memory_space<vmem>>, vector<16x1xf32>,
    %c0_184 = arith.constant 0 : index
    %c1024 = arith.constant 1024 : index
    %146 = vector.load %arg19[%c0_184, %c1024] : memref<16x2048xf32, #tpu.memory_space<vmem>>, vector<16x1xf32>
    %c0_185 = arith.constant 0 : index
    %c1_186 = arith.constant 1 : index
    %147 = vector.load %arg20[%c0_185, %c1_186] : memref<400x2xf32, #tpu.memory_space<vmem>>, vector<16x1xf32>
    tpu.vector_store %arg20[%c0_185, %c1_186], %146 {strides = array<i32>} : memref<400x2xf32, #tpu.memory_space<vmem>>, vector<16x1xf32>,
    %c0_187 = arith.constant 0 : index
    %c4_188 = arith.constant 4 : index
    %148 = vector.load %arg19[%c0_187, %c4_188] : memref<16x2048xf32, #tpu.memory_space<vmem>>, vector<16x1xf32>
    %c16_189 = arith.constant 16 : index
    %c0_190 = arith.constant 0 : index
    %149 = vector.load %arg20[%c16_189, %c0_190] : memref<400x2xf32, #tpu.memory_space<vmem>>, vector<16x1xf32>
    tpu.vector_store %arg20[%c16_189, %c0_190], %148 {strides = array<i32>} : memref<400x2xf32, #tpu.memory_space<vmem>>, vector<16x1xf32>,
    %c0_191 = arith.constant 0 : index
    %c1028 = arith.constant 1028 : index
    %150 = vector.load %arg19[%c0_191, %c1028] : memref<16x2048xf32, #tpu.memory_space<vmem>>, vector<16x1xf32>
    %c16_192 = arith.constant 16 : index
    %c1_193 = arith.constant 1 : index
    %151 = vector.load %arg20[%c16_192, %c1_193] : memref<400x2xf32, #tpu.memory_space<vmem>>, vector<16x1xf32>
    tpu.vector_store %arg20[%c16_192, %c1_193], %150 {strides = array<i32>} : memref<400x2xf32, #tpu.memory_space<vmem>>, vector<16x1xf32>,
    %c0_194 = arith.constant 0 : index
    %c8_195 = arith.constant 8 : index
    %152 = vector.load %arg19[%c0_194, %c8_195] : memref<16x2048xf32, #tpu.memory_space<vmem>>, vector<16x1xf32>
    %c32_196 = arith.constant 32 : index
    %c0_197 = arith.constant 0 : index
    %153 = vector.load %arg20[%c32_196, %c0_197] : memref<400x2xf32, #tpu.memory_space<vmem>>, vector<16x1xf32>
    tpu.vector_store %arg20[%c32_196, %c0_197], %152 {strides = array<i32>} : memref<400x2xf32, #tpu.memory_space<vmem>>, vector<16x1xf32>,
    %c0_198 = arith.constant 0 : index
    %c1032 = arith.constant 1032 : index
    %154 = vector.load %arg19[%c0_198, %c1032] : memref<16x2048xf32, #tpu.memory_space<vmem>>, vector<16x1xf32>
    %c32_199 = arith.constant 32 : index
    %c1_200 = arith.constant 1 : index
    %155 = vector.load %arg20[%c32_199, %c1_200] : memref<400x2xf32, #tpu.memory_space<vmem>>, vector<16x1xf32>
    tpu.vector_store %arg20[%c32_199, %c1_200], %154 {strides = array<i32>} : memref<400x2xf32, #tpu.memory_space<vmem>>, vector<16x1xf32>,
    %c0_201 = arith.constant 0 : index
    %c12_202 = arith.constant 12 : index
    %156 = vector.load %arg19[%c0_201, %c12_202] : memref<16x2048xf32, #tpu.memory_space<vmem>>, vector<16x1xf32>
    %c48_203 = arith.constant 48 : index
    %c0_204 = arith.constant 0 : index
    %157 = vector.load %arg20[%c48_203, %c0_204] : memref<400x2xf32, #tpu.memory_space<vmem>>, vector<16x1xf32>
    tpu.vector_store %arg20[%c48_203, %c0_204], %156 {strides = array<i32>} : memref<400x2xf32, #tpu.memory_space<vmem>>, vector<16x1xf32>,
    %c0_205 = arith.constant 0 : index
    %c1036 = arith.constant 1036 : index
    %158 = vector.load %arg19[%c0_205, %c1036] : memref<16x2048xf32, #tpu.memory_space<vmem>>, vector<16x1xf32>
    %c48_206 = arith.constant 48 : index
    %c1_207 = arith.constant 1 : index
    %159 = vector.load %arg20[%c48_206, %c1_207] : memref<400x2xf32, #tpu.memory_space<vmem>>, vector<16x1xf32>
    tpu.vector_store %arg20[%c48_206, %c1_207], %158 {strides = array<i32>} : memref<400x2xf32, #tpu.memory_space<vmem>>, vector<16x1xf32>,
    %c0_208 = arith.constant 0 : index
    %c16_209 = arith.constant 16 : index
    %160 = vector.load %arg19[%c0_208, %c16_209] : memref<16x2048xf32, #tpu.memory_space<vmem>>, vector<16x1xf32>
    %c64_210 = arith.constant 64 : index
    %c0_211 = arith.constant 0 : index
    %161 = vector.load %arg20[%c64_210, %c0_211] : memref<400x2xf32, #tpu.memory_space<vmem>>, vector<16x1xf32>
    tpu.vector_store %arg20[%c64_210, %c0_211], %160 {strides = array<i32>} : memref<400x2xf32, #tpu.memory_space<vmem>>, vector<16x1xf32>,
    %c0_212 = arith.constant 0 : index
    %c1040 = arith.constant 1040 : index
    %162 = vector.load %arg19[%c0_212, %c1040] : memref<16x2048xf32, #tpu.memory_space<vmem>>, vector<16x1xf32>
    %c64_213 = arith.constant 64 : index
    %c1_214 = arith.constant 1 : index
    %163 = vector.load %arg20[%c64_213, %c1_214] : memref<400x2xf32, #tpu.memory_space<vmem>>, vector<16x1xf32>
    tpu.vector_store %arg20[%c64_213, %c1_214], %162 {strides = array<i32>} : memref<400x2xf32, #tpu.memory_space<vmem>>, vector<16x1xf32>,
    %c0_215 = arith.constant 0 : index
    %c128_216 = arith.constant 128 : index
    %164 = vector.load %arg19[%c0_215, %c128_216] : memref<16x2048xf32, #tpu.memory_space<vmem>>, vector<16x1xf32>
    %c80 = arith.constant 80 : index
    %c0_217 = arith.constant 0 : index
    %165 = vector.load %arg20[%c80, %c0_217] : memref<400x2xf32, #tpu.memory_space<vmem>>, vector<16x1xf32>
    tpu.vector_store %arg20[%c80, %c0_217], %164 {strides = array<i32>} : memref<400x2xf32, #tpu.memory_space<vmem>>, vector<16x1xf32>,
    %c0_218 = arith.constant 0 : index
    %c1152 = arith.constant 1152 : index
    %166 = vector.load %arg19[%c0_218, %c1152] : memref<16x2048xf32, #tpu.memory_space<vmem>>, vector<16x1xf32>
    %c80_219 = arith.constant 80 : index
    %c1_220 = arith.constant 1 : index
    %167 = vector.load %arg20[%c80_219, %c1_220] : memref<400x2xf32, #tpu.memory_space<vmem>>, vector<16x1xf32>
    tpu.vector_store %arg20[%c80_219, %c1_220], %166 {strides = array<i32>} : memref<400x2xf32, #tpu.memory_space<vmem>>, vector<16x1xf32>,
    %c0_221 = arith.constant 0 : index
    %c132_222 = arith.constant 132 : index
    %168 = vector.load %arg19[%c0_221, %c132_222] : memref<16x2048xf32, #tpu.memory_space<vmem>>, vector<16x1xf32>
    %c96_223 = arith.constant 96 : index
    %c0_224 = arith.constant 0 : index
    %169 = vector.load %arg20[%c96_223, %c0_224] : memref<400x2xf32, #tpu.memory_space<vmem>>, vector<16x1xf32>
    tpu.vector_store %arg20[%c96_223, %c0_224], %168 {strides = array<i32>} : memref<400x2xf32, #tpu.memory_space<vmem>>, vector<16x1xf32>,
    %c0_225 = arith.constant 0 : index
    %c1156 = arith.constant 1156 : index
    %170 = vector.load %arg19[%c0_225, %c1156] : memref<16x2048xf32, #tpu.memory_space<vmem>>, vector<16x1xf32>
    %c96_226 = arith.constant 96 : index
    %c1_227 = arith.constant 1 : index
    %171 = vector.load %arg20[%c96_226, %c1_227] : memref<400x2xf32, #tpu.memory_space<vmem>>, vector<16x1xf32>
    tpu.vector_store %arg20[%c96_226, %c1_227], %170 {strides = array<i32>} : memref<400x2xf32, #tpu.memory_space<vmem>>, vector<16x1xf32>,
    %c0_228 = arith.constant 0 : index
    %c136_229 = arith.constant 136 : index
    %172 = vector.load %arg19[%c0_228, %c136_229] : memref<16x2048xf32, #tpu.memory_space<vmem>>, vector<16x1xf32>
    %c112 = arith.constant 112 : index
    %c0_230 = arith.constant 0 : index
    %173 = vector.load %arg20[%c112, %c0_230] : memref<400x2xf32, #tpu.memory_space<vmem>>, vector<16x1xf32>
    tpu.vector_store %arg20[%c112, %c0_230], %172 {strides = array<i32>} : memref<400x2xf32, #tpu.memory_space<vmem>>, vector<16x1xf32>,
    %c0_231 = arith.constant 0 : index
    %c1160 = arith.constant 1160 : index
    %174 = vector.load %arg19[%c0_231, %c1160] : memref<16x2048xf32, #tpu.memory_space<vmem>>, vector<16x1xf32>
    %c112_232 = arith.constant 112 : index
    %c1_233 = arith.constant 1 : index
    %175 = vector.load %arg20[%c112_232, %c1_233] : memref<400x2xf32, #tpu.memory_space<vmem>>, vector<16x1xf32>
    tpu.vector_store %arg20[%c112_232, %c1_233], %174 {strides = array<i32>} : memref<400x2xf32, #tpu.memory_space<vmem>>, vector<16x1xf32>,
    %c0_234 = arith.constant 0 : index
    %c140 = arith.constant 140 : index
    %176 = vector.load %arg19[%c0_234, %c140] : memref<16x2048xf32, #tpu.memory_space<vmem>>, vector<16x1xf32>
    %c128_235 = arith.constant 128 : index
    %c0_236 = arith.constant 0 : index
    %177 = vector.load %arg20[%c128_235, %c0_236] : memref<400x2xf32, #tpu.memory_space<vmem>>, vector<16x1xf32>
    tpu.vector_store %arg20[%c128_235, %c0_236], %176 {strides = array<i32>} : memref<400x2xf32, #tpu.memory_space<vmem>>, vector<16x1xf32>,
    %c0_237 = arith.constant 0 : index
    %c1164 = arith.constant 1164 : index
    %178 = vector.load %arg19[%c0_237, %c1164] : memref<16x2048xf32, #tpu.memory_space<vmem>>, vector<16x1xf32>
    %c128_238 = arith.constant 128 : index
    %c1_239 = arith.constant 1 : index
    %179 = vector.load %arg20[%c128_238, %c1_239] : memref<400x2xf32, #tpu.memory_space<vmem>>, vector<16x1xf32>
    tpu.vector_store %arg20[%c128_238, %c1_239], %178 {strides = array<i32>} : memref<400x2xf32, #tpu.memory_space<vmem>>, vector<16x1xf32>,
    %c0_240 = arith.constant 0 : index
    %c144_241 = arith.constant 144 : index
    %180 = vector.load %arg19[%c0_240, %c144_241] : memref<16x2048xf32, #tpu.memory_space<vmem>>, vector<16x1xf32>
    %c144_242 = arith.constant 144 : index
    %c0_243 = arith.constant 0 : index
    %181 = vector.load %arg20[%c144_242, %c0_243] : memref<400x2xf32, #tpu.memory_space<vmem>>, vector<16x1xf32>
    tpu.vector_store %arg20[%c144_242, %c0_243], %180 {strides = array<i32>} : memref<400x2xf32, #tpu.memory_space<vmem>>, vector<16x1xf32>,
    %c0_244 = arith.constant 0 : index
    %c1168 = arith.constant 1168 : index
    %182 = vector.load %arg19[%c0_244, %c1168] : memref<16x2048xf32, #tpu.memory_space<vmem>>, vector<16x1xf32>
    %c144_245 = arith.constant 144 : index
    %c1_246 = arith.constant 1 : index
    %183 = vector.load %arg20[%c144_245, %c1_246] : memref<400x2xf32, #tpu.memory_space<vmem>>, vector<16x1xf32>
    tpu.vector_store %arg20[%c144_245, %c1_246], %182 {strides = array<i32>} : memref<400x2xf32, #tpu.memory_space<vmem>>, vector<16x1xf32>,
    %c0_247 = arith.constant 0 : index
    %c256_248 = arith.constant 256 : index
    %184 = vector.load %arg19[%c0_247, %c256_248] : memref<16x2048xf32, #tpu.memory_space<vmem>>, vector<16x1xf32>
    %c160 = arith.constant 160 : index
    %c0_249 = arith.constant 0 : index
    %185 = vector.load %arg20[%c160, %c0_249] : memref<400x2xf32, #tpu.memory_space<vmem>>, vector<16x1xf32>
    tpu.vector_store %arg20[%c160, %c0_249], %184 {strides = array<i32>} : memref<400x2xf32, #tpu.memory_space<vmem>>, vector<16x1xf32>,
    %c0_250 = arith.constant 0 : index
    %c1280 = arith.constant 1280 : index
    %186 = vector.load %arg19[%c0_250, %c1280] : memref<16x2048xf32, #tpu.memory_space<vmem>>, vector<16x1xf32>
    %c160_251 = arith.constant 160 : index
    %c1_252 = arith.constant 1 : index
    %187 = vector.load %arg20[%c160_251, %c1_252] : memref<400x2xf32, #tpu.memory_space<vmem>>, vector<16x1xf32>
    tpu.vector_store %arg20[%c160_251, %c1_252], %186 {strides = array<i32>} : memref<400x2xf32, #tpu.memory_space<vmem>>, vector<16x1xf32>,
    %c0_253 = arith.constant 0 : index
    %c260_254 = arith.constant 260 : index
    %188 = vector.load %arg19[%c0_253, %c260_254] : memref<16x2048xf32, #tpu.memory_space<vmem>>, vector<16x1xf32>
    %c176 = arith.constant 176 : index
    %c0_255 = arith.constant 0 : index
    %189 = vector.load %arg20[%c176, %c0_255] : memref<400x2xf32, #tpu.memory_space<vmem>>, vector<16x1xf32>
    tpu.vector_store %arg20[%c176, %c0_255], %188 {strides = array<i32>} : memref<400x2xf32, #tpu.memory_space<vmem>>, vector<16x1xf32>,
    %c0_256 = arith.constant 0 : index
    %c1284 = arith.constant 1284 : index
    %190 = vector.load %arg19[%c0_256, %c1284] : memref<16x2048xf32, #tpu.memory_space<vmem>>, vector<16x1xf32>
    %c176_257 = arith.constant 176 : index
    %c1_258 = arith.constant 1 : index
    %191 = vector.load %arg20[%c176_257, %c1_258] : memref<400x2xf32, #tpu.memory_space<vmem>>, vector<16x1xf32>
    tpu.vector_store %arg20[%c176_257, %c1_258], %190 {strides = array<i32>} : memref<400x2xf32, #tpu.memory_space<vmem>>, vector<16x1xf32>,
    %c0_259 = arith.constant 0 : index
    %c264_260 = arith.constant 264 : index
    %192 = vector.load %arg19[%c0_259, %c264_260] : memref<16x2048xf32, #tpu.memory_space<vmem>>, vector<16x1xf32>
    %c192_261 = arith.constant 192 : index
    %c0_262 = arith.constant 0 : index
    %193 = vector.load %arg20[%c192_261, %c0_262] : memref<400x2xf32, #tpu.memory_space<vmem>>, vector<16x1xf32>
    tpu.vector_store %arg20[%c192_261, %c0_262], %192 {strides = array<i32>} : memref<400x2xf32, #tpu.memory_space<vmem>>, vector<16x1xf32>,
    %c0_263 = arith.constant 0 : index
    %c1288 = arith.constant 1288 : index
    %194 = vector.load %arg19[%c0_263, %c1288] : memref<16x2048xf32, #tpu.memory_space<vmem>>, vector<16x1xf32>
    %c192_264 = arith.constant 192 : index
    %c1_265 = arith.constant 1 : index
    %195 = vector.load %arg20[%c192_264, %c1_265] : memref<400x2xf32, #tpu.memory_space<vmem>>, vector<16x1xf32>
    tpu.vector_store %arg20[%c192_264, %c1_265], %194 {strides = array<i32>} : memref<400x2xf32, #tpu.memory_space<vmem>>, vector<16x1xf32>,
    %c0_266 = arith.constant 0 : index
    %c268 = arith.constant 268 : index
    %196 = vector.load %arg19[%c0_266, %c268] : memref<16x2048xf32, #tpu.memory_space<vmem>>, vector<16x1xf32>
    %c208 = arith.constant 208 : index
    %c0_267 = arith.constant 0 : index
    %197 = vector.load %arg20[%c208, %c0_267] : memref<400x2xf32, #tpu.memory_space<vmem>>, vector<16x1xf32>
    tpu.vector_store %arg20[%c208, %c0_267], %196 {strides = array<i32>} : memref<400x2xf32, #tpu.memory_space<vmem>>, vector<16x1xf32>,
    %c0_268 = arith.constant 0 : index
    %c1292 = arith.constant 1292 : index
    %198 = vector.load %arg19[%c0_268, %c1292] : memref<16x2048xf32, #tpu.memory_space<vmem>>, vector<16x1xf32>
    %c208_269 = arith.constant 208 : index
    %c1_270 = arith.constant 1 : index
    %199 = vector.load %arg20[%c208_269, %c1_270] : memref<400x2xf32, #tpu.memory_space<vmem>>, vector<16x1xf32>
    tpu.vector_store %arg20[%c208_269, %c1_270], %198 {strides = array<i32>} : memref<400x2xf32, #tpu.memory_space<vmem>>, vector<16x1xf32>,
    %c0_271 = arith.constant 0 : index
    %c272 = arith.constant 272 : index
    %200 = vector.load %arg19[%c0_271, %c272] : memref<16x2048xf32, #tpu.memory_space<vmem>>, vector<16x1xf32>
    %c224 = arith.constant 224 : index
    %c0_272 = arith.constant 0 : index
    %201 = vector.load %arg20[%c224, %c0_272] : memref<400x2xf32, #tpu.memory_space<vmem>>, vector<16x1xf32>
    tpu.vector_store %arg20[%c224, %c0_272], %200 {strides = array<i32>} : memref<400x2xf32, #tpu.memory_space<vmem>>, vector<16x1xf32>,
    %c0_273 = arith.constant 0 : index
    %c1296 = arith.constant 1296 : index
    %202 = vector.load %arg19[%c0_273, %c1296] : memref<16x2048xf32, #tpu.memory_space<vmem>>, vector<16x1xf32>
    %c224_274 = arith.constant 224 : index
    %c1_275 = arith.constant 1 : index
    %203 = vector.load %arg20[%c224_274, %c1_275] : memref<400x2xf32, #tpu.memory_space<vmem>>, vector<16x1xf32>
    tpu.vector_store %arg20[%c224_274, %c1_275], %202 {strides = array<i32>} : memref<400x2xf32, #tpu.memory_space<vmem>>, vector<16x1xf32>,
    %c0_276 = arith.constant 0 : index
    %c384 = arith.constant 384 : index
    %204 = vector.load %arg19[%c0_276, %c384] : memref<16x2048xf32, #tpu.memory_space<vmem>>, vector<16x1xf32>
    %c240 = arith.constant 240 : index
    %c0_277 = arith.constant 0 : index
    %205 = vector.load %arg20[%c240, %c0_277] : memref<400x2xf32, #tpu.memory_space<vmem>>, vector<16x1xf32>
    tpu.vector_store %arg20[%c240, %c0_277], %204 {strides = array<i32>} : memref<400x2xf32, #tpu.memory_space<vmem>>, vector<16x1xf32>,
    %c0_278 = arith.constant 0 : index
    %c1408 = arith.constant 1408 : index
    %206 = vector.load %arg19[%c0_278, %c1408] : memref<16x2048xf32, #tpu.memory_space<vmem>>, vector<16x1xf32>
    %c240_279 = arith.constant 240 : index
    %c1_280 = arith.constant 1 : index
    %207 = vector.load %arg20[%c240_279, %c1_280] : memref<400x2xf32, #tpu.memory_space<vmem>>, vector<16x1xf32>
    tpu.vector_store %arg20[%c240_279, %c1_280], %206 {strides = array<i32>} : memref<400x2xf32, #tpu.memory_space<vmem>>, vector<16x1xf32>,
    %c0_281 = arith.constant 0 : index
    %c388 = arith.constant 388 : index
    %208 = vector.load %arg19[%c0_281, %c388] : memref<16x2048xf32, #tpu.memory_space<vmem>>, vector<16x1xf32>
    %c256_282 = arith.constant 256 : index
    %c0_283 = arith.constant 0 : index
    %209 = vector.load %arg20[%c256_282, %c0_283] : memref<400x2xf32, #tpu.memory_space<vmem>>, vector<16x1xf32>
    tpu.vector_store %arg20[%c256_282, %c0_283], %208 {strides = array<i32>} : memref<400x2xf32, #tpu.memory_space<vmem>>, vector<16x1xf32>,
    %c0_284 = arith.constant 0 : index
    %c1412 = arith.constant 1412 : index
    %210 = vector.load %arg19[%c0_284, %c1412] : memref<16x2048xf32, #tpu.memory_space<vmem>>, vector<16x1xf32>
    %c256_285 = arith.constant 256 : index
    %c1_286 = arith.constant 1 : index
    %211 = vector.load %arg20[%c256_285, %c1_286] : memref<400x2xf32, #tpu.memory_space<vmem>>, vector<16x1xf32>
    tpu.vector_store %arg20[%c256_285, %c1_286], %210 {strides = array<i32>} : memref<400x2xf32, #tpu.memory_space<vmem>>, vector<16x1xf32>,
    %c0_287 = arith.constant 0 : index
    %c392 = arith.constant 392 : index
    %212 = vector.load %arg19[%c0_287, %c392] : memref<16x2048xf32, #tpu.memory_space<vmem>>, vector<16x1xf32>
    %c272_288 = arith.constant 272 : index
    %c0_289 = arith.constant 0 : index
    %213 = vector.load %arg20[%c272_288, %c0_289] : memref<400x2xf32, #tpu.memory_space<vmem>>, vector<16x1xf32>
    tpu.vector_store %arg20[%c272_288, %c0_289], %212 {strides = array<i32>} : memref<400x2xf32, #tpu.memory_space<vmem>>, vector<16x1xf32>,
    %c0_290 = arith.constant 0 : index
    %c1416 = arith.constant 1416 : index
    %214 = vector.load %arg19[%c0_290, %c1416] : memref<16x2048xf32, #tpu.memory_space<vmem>>, vector<16x1xf32>
    %c272_291 = arith.constant 272 : index
    %c1_292 = arith.constant 1 : index
    %215 = vector.load %arg20[%c272_291, %c1_292] : memref<400x2xf32, #tpu.memory_space<vmem>>, vector<16x1xf32>
    tpu.vector_store %arg20[%c272_291, %c1_292], %214 {strides = array<i32>} : memref<400x2xf32, #tpu.memory_space<vmem>>, vector<16x1xf32>,
    %c0_293 = arith.constant 0 : index
    %c396 = arith.constant 396 : index
    %216 = vector.load %arg19[%c0_293, %c396] : memref<16x2048xf32, #tpu.memory_space<vmem>>, vector<16x1xf32>
    %c288 = arith.constant 288 : index
    %c0_294 = arith.constant 0 : index
    %217 = vector.load %arg20[%c288, %c0_294] : memref<400x2xf32, #tpu.memory_space<vmem>>, vector<16x1xf32>
    tpu.vector_store %arg20[%c288, %c0_294], %216 {strides = array<i32>} : memref<400x2xf32, #tpu.memory_space<vmem>>, vector<16x1xf32>,
    %c0_295 = arith.constant 0 : index
    %c1420 = arith.constant 1420 : index
    %218 = vector.load %arg19[%c0_295, %c1420] : memref<16x2048xf32, #tpu.memory_space<vmem>>, vector<16x1xf32>
    %c288_296 = arith.constant 288 : index
    %c1_297 = arith.constant 1 : index
    %219 = vector.load %arg20[%c288_296, %c1_297] : memref<400x2xf32, #tpu.memory_space<vmem>>, vector<16x1xf32>
    tpu.vector_store %arg20[%c288_296, %c1_297], %218 {strides = array<i32>} : memref<400x2xf32, #tpu.memory_space<vmem>>, vector<16x1xf32>,
    %c0_298 = arith.constant 0 : index
    %c400 = arith.constant 400 : index
    %220 = vector.load %arg19[%c0_298, %c400] : memref<16x2048xf32, #tpu.memory_space<vmem>>, vector<16x1xf32>
    %c304 = arith.constant 304 : index
    %c0_299 = arith.constant 0 : index
    %221 = vector.load %arg20[%c304, %c0_299] : memref<400x2xf32, #tpu.memory_space<vmem>>, vector<16x1xf32>
    tpu.vector_store %arg20[%c304, %c0_299], %220 {strides = array<i32>} : memref<400x2xf32, #tpu.memory_space<vmem>>, vector<16x1xf32>,
    %c0_300 = arith.constant 0 : index
    %c1424 = arith.constant 1424 : index
    %222 = vector.load %arg19[%c0_300, %c1424] : memref<16x2048xf32, #tpu.memory_space<vmem>>, vector<16x1xf32>
    %c304_301 = arith.constant 304 : index
    %c1_302 = arith.constant 1 : index
    %223 = vector.load %arg20[%c304_301, %c1_302] : memref<400x2xf32, #tpu.memory_space<vmem>>, vector<16x1xf32>
    tpu.vector_store %arg20[%c304_301, %c1_302], %222 {strides = array<i32>} : memref<400x2xf32, #tpu.memory_space<vmem>>, vector<16x1xf32>,
    %c0_303 = arith.constant 0 : index
    %c512 = arith.constant 512 : index
    %224 = vector.load %arg19[%c0_303, %c512] : memref<16x2048xf32, #tpu.memory_space<vmem>>, vector<16x1xf32>
    %c320 = arith.constant 320 : index
    %c0_304 = arith.constant 0 : index
    %225 = vector.load %arg20[%c320, %c0_304] : memref<400x2xf32, #tpu.memory_space<vmem>>, vector<16x1xf32>
    tpu.vector_store %arg20[%c320, %c0_304], %224 {strides = array<i32>} : memref<400x2xf32, #tpu.memory_space<vmem>>, vector<16x1xf32>,
    %c0_305 = arith.constant 0 : index
    %c1536 = arith.constant 1536 : index
    %226 = vector.load %arg19[%c0_305, %c1536] : memref<16x2048xf32, #tpu.memory_space<vmem>>, vector<16x1xf32>
    %c320_306 = arith.constant 320 : index
    %c1_307 = arith.constant 1 : index
    %227 = vector.load %arg20[%c320_306, %c1_307] : memref<400x2xf32, #tpu.memory_space<vmem>>, vector<16x1xf32>
    tpu.vector_store %arg20[%c320_306, %c1_307], %226 {strides = array<i32>} : memref<400x2xf32, #tpu.memory_space<vmem>>, vector<16x1xf32>,
    %c0_308 = arith.constant 0 : index
    %c516 = arith.constant 516 : index
    %228 = vector.load %arg19[%c0_308, %c516] : memref<16x2048xf32, #tpu.memory_space<vmem>>, vector<16x1xf32>
    %c336 = arith.constant 336 : index
    %c0_309 = arith.constant 0 : index
    %229 = vector.load %arg20[%c336, %c0_309] : memref<400x2xf32, #tpu.memory_space<vmem>>, vector<16x1xf32>
    tpu.vector_store %arg20[%c336, %c0_309], %228 {strides = array<i32>} : memref<400x2xf32, #tpu.memory_space<vmem>>, vector<16x1xf32>,
    %c0_310 = arith.constant 0 : index
    %c1540 = arith.constant 1540 : index
    %230 = vector.load %arg19[%c0_310, %c1540] : memref<16x2048xf32, #tpu.memory_space<vmem>>, vector<16x1xf32>
    %c336_311 = arith.constant 336 : index
    %c1_312 = arith.constant 1 : index
    %231 = vector.load %arg20[%c336_311, %c1_312] : memref<400x2xf32, #tpu.memory_space<vmem>>, vector<16x1xf32>
    tpu.vector_store %arg20[%c336_311, %c1_312], %230 {strides = array<i32>} : memref<400x2xf32, #tpu.memory_space<vmem>>, vector<16x1xf32>,
    %c0_313 = arith.constant 0 : index
    %c520 = arith.constant 520 : index
    %232 = vector.load %arg19[%c0_313, %c520] : memref<16x2048xf32, #tpu.memory_space<vmem>>, vector<16x1xf32>
    %c352 = arith.constant 352 : index
    %c0_314 = arith.constant 0 : index
    %233 = vector.load %arg20[%c352, %c0_314] : memref<400x2xf32, #tpu.memory_space<vmem>>, vector<16x1xf32>
    tpu.vector_store %arg20[%c352, %c0_314], %232 {strides = array<i32>} : memref<400x2xf32, #tpu.memory_space<vmem>>, vector<16x1xf32>,
    %c0_315 = arith.constant 0 : index
    %c1544 = arith.constant 1544 : index
    %234 = vector.load %arg19[%c0_315, %c1544] : memref<16x2048xf32, #tpu.memory_space<vmem>>, vector<16x1xf32>
    %c352_316 = arith.constant 352 : index
    %c1_317 = arith.constant 1 : index
    %235 = vector.load %arg20[%c352_316, %c1_317] : memref<400x2xf32, #tpu.memory_space<vmem>>, vector<16x1xf32>
    tpu.vector_store %arg20[%c352_316, %c1_317], %234 {strides = array<i32>} : memref<400x2xf32, #tpu.memory_space<vmem>>, vector<16x1xf32>,
    %c0_318 = arith.constant 0 : index
    %c524 = arith.constant 524 : index
    %236 = vector.load %arg19[%c0_318, %c524] : memref<16x2048xf32, #tpu.memory_space<vmem>>, vector<16x1xf32>
    %c368 = arith.constant 368 : index
    %c0_319 = arith.constant 0 : index
    %237 = vector.load %arg20[%c368, %c0_319] : memref<400x2xf32, #tpu.memory_space<vmem>>, vector<16x1xf32>
    tpu.vector_store %arg20[%c368, %c0_319], %236 {strides = array<i32>} : memref<400x2xf32, #tpu.memory_space<vmem>>, vector<16x1xf32>,
    %c0_320 = arith.constant 0 : index
    %c1548 = arith.constant 1548 : index
    %238 = vector.load %arg19[%c0_320, %c1548] : memref<16x2048xf32, #tpu.memory_space<vmem>>, vector<16x1xf32>
    %c368_321 = arith.constant 368 : index
    %c1_322 = arith.constant 1 : index
    %239 = vector.load %arg20[%c368_321, %c1_322] : memref<400x2xf32, #tpu.memory_space<vmem>>, vector<16x1xf32>
    tpu.vector_store %arg20[%c368_321, %c1_322], %238 {strides = array<i32>} : memref<400x2xf32, #tpu.memory_space<vmem>>, vector<16x1xf32>,
    %c0_323 = arith.constant 0 : index
    %c528 = arith.constant 528 : index
    %240 = vector.load %arg19[%c0_323, %c528] : memref<16x2048xf32, #tpu.memory_space<vmem>>, vector<16x1xf32>
    %c384_324 = arith.constant 384 : index
    %c0_325 = arith.constant 0 : index
    %241 = vector.load %arg20[%c384_324, %c0_325] : memref<400x2xf32, #tpu.memory_space<vmem>>, vector<16x1xf32>
    tpu.vector_store %arg20[%c384_324, %c0_325], %240 {strides = array<i32>} : memref<400x2xf32, #tpu.memory_space<vmem>>, vector<16x1xf32>,
    %c0_326 = arith.constant 0 : index
    %c1552 = arith.constant 1552 : index
    %242 = vector.load %arg19[%c0_326, %c1552] : memref<16x2048xf32, #tpu.memory_space<vmem>>, vector<16x1xf32>
    %c384_327 = arith.constant 384 : index
    %c1_328 = arith.constant 1 : index
    %243 = vector.load %arg20[%c384_327, %c1_328] : memref<400x2xf32, #tpu.memory_space<vmem>>, vector<16x1xf32>
    tpu.vector_store %arg20[%c384_327, %c1_328], %242 {strides = array<i32>} : memref<400x2xf32, #tpu.memory_space<vmem>>, vector<16x1xf32>,
    %c0_329 = arith.constant 0 : index
    %c0_330 = arith.constant 0 : index
    %244 = vector.load %arg6[%c0_329, %c0_330] : memref<120x400xf32, #tpu.memory_space<vmem>>, vector<120x400xf32>
    %c0_331 = arith.constant 0 : index
    %c0_332 = arith.constant 0 : index
    %245 = vector.load %arg20[%c0_331, %c0_332] : memref<400x2xf32, #tpu.memory_space<vmem>>, vector<400x2xf32>
    %cst_333 = arith.constant dense<0.000000e+00> : vector<120x2xf32>
    %246 = tpu.matmul %244, %245, %cst_333 {dimension_numbers = #tpu.dot_dimension_numbers<[1], [0], [0], [1], [0, 0, 1, 1], [], []>} : vector<120x400xf32>, vector<400x2xf32>, vector<120x2xf32> -> vector<120x2xf32>
    %c0_334 = arith.constant 0 : index
    %c0_335 = arith.constant 0 : index
    %247 = vector.load %arg7[%c0_334, %c0_335] : memref<120x1xf32, #tpu.memory_space<vmem>>, vector<120x1xf32>
    %248 = vector.broadcast %247 : vector<120x1xf32> to vector<120x2xf32>
    %249 = arith.addf %246, %248 : vector<120x2xf32>
    %cst_336 = arith.constant 0.000000e+00 : f32
    %250 = vector.broadcast %cst_336 : f32 to vector<120x2xf32>
    %251 = arith.maximumf %249, %250 : vector<120x2xf32>
    %c0_337 = arith.constant 0 : index
    %c0_338 = arith.constant 0 : index
    %252 = vector.load %arg8[%c0_337, %c0_338] : memref<84x120xf32, #tpu.memory_space<vmem>>, vector<84x120xf32>
    %cst_339 = arith.constant dense<0.000000e+00> : vector<84x2xf32>
    %253 = tpu.matmul %252, %251, %cst_339 {dimension_numbers = #tpu.dot_dimension_numbers<[1], [0], [0], [1], [0, 0, 1, 1], [], []>} : vector<84x120xf32>, vector<120x2xf32>, vector<84x2xf32> -> vector<84x2xf32>
    %c0_340 = arith.constant 0 : index
    %c0_341 = arith.constant 0 : index
    %254 = vector.load %arg9[%c0_340, %c0_341] : memref<84x1xf32, #tpu.memory_space<vmem>>, vector<84x1xf32>
    %255 = vector.broadcast %254 : vector<84x1xf32> to vector<84x2xf32>
    %256 = arith.addf %253, %255 : vector<84x2xf32>
    %cst_342 = arith.constant 0.000000e+00 : f32
    %257 = vector.broadcast %cst_342 : f32 to vector<84x2xf32>
    %258 = arith.maximumf %256, %257 : vector<84x2xf32>
    %c0_343 = arith.constant 0 : index
    %c0_344 = arith.constant 0 : index
    %259 = vector.load %arg10[%c0_343, %c0_344] : memref<10x84xf32, #tpu.memory_space<vmem>>, vector<10x84xf32>
    %cst_345 = arith.constant dense<0.000000e+00> : vector<10x2xf32>
    %260 = tpu.matmul %259, %258, %cst_345 {dimension_numbers = #tpu.dot_dimension_numbers<[1], [0], [0], [1], [0, 0, 1, 1], [], []>} : vector<10x84xf32>, vector<84x2xf32>, vector<10x2xf32> -> vector<10x2xf32>
    %c0_346 = arith.constant 0 : index
    %c0_347 = arith.constant 0 : index
    %261 = vector.load %arg11[%c0_346, %c0_347] : memref<10x1xf32, #tpu.memory_space<vmem>>, vector<10x1xf32>
    %262 = vector.broadcast %261 : vector<10x1xf32> to vector<10x2xf32>
    %263 = arith.addf %260, %262 : vector<10x2xf32>
    %c0_348 = arith.constant 0 : index
    %c0_349 = arith.constant 0 : index
    %264 = vector.load %arg12[%c0_348, %c0_349] : memref<10x2xf32, #tpu.memory_space<vmem>>, vector<10x2xf32>
    tpu.vector_store %arg12[%c0_348, %c0_349], %263 {strides = array<i32>} : memref<10x2xf32, #tpu.memory_space<vmem>>, vector<10x2xf32>,
    return
  }
  func.func @transform_0(%arg0: i32) -> (i32, i32) {
    %c0_i32 = arith.constant 0 : i32
    %c0_i32_0 = arith.constant 0 : i32
    %c0_i32_1 = arith.constant 0 : i32
    return %c0_i32, %c0_i32_0 : i32, i32
  }
  func.func @transform_1(%arg0: i32) -> (i32, i32) {
    %c0_i32 = arith.constant 0 : i32
    %c0_i32_0 = arith.constant 0 : i32
    %c0_i32_1 = arith.constant 0 : i32
    return %c0_i32, %c0_i32_0 : i32, i32
  }
  func.func @transform_2(%arg0: i32) -> (i32, i32) {
    %c0_i32 = arith.constant 0 : i32
    %c0_i32_0 = arith.constant 0 : i32
    %c0_i32_1 = arith.constant 0 : i32
    return %c0_i32, %c0_i32_0 : i32, i32
  }
  func.func @transform_3(%arg0: i32) -> (i32, i32) {
    %c0_i32 = arith.constant 0 : i32
    %c0_i32_0 = arith.constant 0 : i32
    %c0_i32_1 = arith.constant 0 : i32
    return %c0_i32, %c0_i32_0 : i32, i32
  }
  func.func @transform_4(%arg0: i32) -> (i32, i32) {
    %c0_i32 = arith.constant 0 : i32
    %c0_i32_0 = arith.constant 0 : i32
    %c0_i32_1 = arith.constant 0 : i32
    return %c0_i32, %c0_i32_0 : i32, i32
  }
  func.func @transform_5(%arg0: i32) -> (i32, i32) {
    %c0_i32 = arith.constant 0 : i32
    %c0_i32_0 = arith.constant 0 : i32
    %c0_i32_1 = arith.constant 0 : i32
    return %c0_i32, %c0_i32_0 : i32, i32
  }
  func.func @transform_6(%arg0: i32) -> (i32, i32) {
    %c0_i32 = arith.constant 0 : i32
    %c0_i32_0 = arith.constant 0 : i32
    %c0_i32_1 = arith.constant 0 : i32
    return %c0_i32, %c0_i32_0 : i32, i32
  }
  func.func @transform_7(%arg0: i32) -> (i32, i32) {
    %c0_i32 = arith.constant 0 : i32
    %c0_i32_0 = arith.constant 0 : i32
    %c0_i32_1 = arith.constant 0 : i32
    return %c0_i32, %c0_i32_0 : i32, i32
  }
  func.func @transform_8(%arg0: i32) -> (i32, i32) {
    %c0_i32 = arith.constant 0 : i32
    %c0_i32_0 = arith.constant 0 : i32
    %c0_i32_1 = arith.constant 0 : i32
    return %c0_i32, %c0_i32_0 : i32, i32
  }
  func.func @transform_9(%arg0: i32) -> (i32, i32) {
    %c0_i32 = arith.constant 0 : i32
    %c0_i32_0 = arith.constant 0 : i32
    %c0_i32_1 = arith.constant 0 : i32
    return %c0_i32, %c0_i32_0 : i32, i32
  }
  func.func @transform_10(%arg0: i32) -> (i32, i32) {
    %c0_i32 = arith.constant 0 : i32
    %c0_i32_0 = arith.constant 0 : i32
    %c0_i32_1 = arith.constant 0 : i32
    return %c0_i32, %c0_i32_0 : i32, i32
  }
  func.func @transform_11(%arg0: i32) -> (i32, i32) {
    %c0_i32 = arith.constant 0 : i32
    %c0_i32_0 = arith.constant 0 : i32
    %c0_i32_1 = arith.constant 0 : i32
    return %c0_i32, %c0_i32_0 : i32, i32
  }
}

</mosaic_0001>

<llo_original>
// kernel: lenet_forward.1
$region0: #{lenet_forward.1}
  #allocation0 [shape = 'u32[]', space=smem, size = 0x4, offset = 0x4, fixed_abs, tag = 'smem constant byte address 0x4 - core index']
  #allocation1 [shape = 'u32[72,128]{1,0:T(1,128)}', space=vmem, size = 0x9000, scoped, tag = 'internal scratch']
  #allocation2 [shape = 'f32[1,2432]{1,0:T(1,128)}', space=vmem, size = 0x2600, scoped, tag = 'scratch operand']
  #allocation3 [shape = 'f32[25,2048]{1,0:T(8,128)}', space=vmem, size = 0x40000, scoped, tag = 'scratch operand']
  #allocation4 [shape = 'f32[6,2432]{1,0:T(8,128)}', space=vmem, size = 0x13000, scoped, tag = 'scratch operand']
  #allocation5 [shape = 'f32[6,2432]{1,0:T(8,128)}', space=vmem, size = 0x13000, scoped, tag = 'scratch operand']
  #allocation6 [shape = 'f32[150,2048]{1,0:T(8,128)}', space=vmem, size = 0x130000, scoped, tag = 'scratch operand']
  #allocation7 [shape = 'f32[16,2432]{1,0:T(8,128)}', space=vmem, size = 0x26000, scoped, tag = 'scratch operand']
  #allocation8 [shape = 'f32[16,2048]{1,0:T(8,128)}', space=vmem, size = 0x20000, scoped, tag = 'scratch operand']
  #allocation9 [shape = 'f32[400,2]{1,0:T(8,128)}', space=vmem, size = 0x32000, scoped, tag = 'scratch operand']
  %s0 = inlined_call_operand.vmem [shape: f32[1,2048], index: 0, kind: input, shape index: {}]
  %s1 = inlined_call_operand.vmem [shape: f32[6,25], index: 1, kind: input, shape index: {}]
  %s2 = inlined_call_operand.vmem [shape: f32[6,1], index: 2, kind: input, shape index: {}]
  %s3 = inlined_call_operand.vmem [shape: f32[16,150], index: 3, kind: input, shape index: {}]
  %s4 = inlined_call_operand.vmem [shape: f32[16,1], index: 4, kind: input, shape index: {}]
  %s5 = inlined_call_operand.vmem [shape: f32[120,400], index: 5, kind: input, shape index: {}]
  %s6 = inlined_call_operand.vmem [shape: f32[120,1], index: 6, kind: input, shape index: {}]
  %s7 = inlined_call_operand.vmem [shape: f32[84,120], index: 7, kind: input, shape index: {}]
  %s8 = inlined_call_operand.vmem [shape: f32[84,1], index: 8, kind: input, shape index: {}]
  %s9 = inlined_call_operand.vmem [shape: f32[10,84], index: 9, kind: input, shape index: {}]
  %s10 = inlined_call_operand.vmem [shape: f32[10,1], index: 10, kind: input, shape index: {}]
  %s11 = inlined_call_operand.vmem [shape: f32[10,2], index: 11, kind: output, shape index: {}]
  %s12 = sld [smem:[#allocation0]]
  $region54: #{lenet_forward.1} parent=0
    _
  %s14 = ssub.s32 1, %s12
  %s15 = scalar_select 0, %s14, %s12
  // Predicated region
  $region2: #{lenet_forward.1} parent=0 // pred_check
    _
  $region3: #{lenet_forward.1} parent=0 // pred_check_branch
    %17 = sbr.rel (0) target = $region5
  $region4: #{lenet_forward.1} parent=0 // pred_region
    _
  $region5: #{lenet_forward.1} parent=0 // pred_fallthru
    _
  // Predicated region
  $region6: #{lenet_forward.1} parent=0 // pred_check
    _
  $region7: #{lenet_forward.1} parent=0 // pred_check_branch
    %19 = sbr.rel (0) target = $region9
  $region8: #{lenet_forward.1} parent=0 // pred_region
    _
  $region9: #{lenet_forward.1} parent=0 // pred_fallthru
    _
  // Predicated region
  $region10: #{lenet_forward.1} parent=0 // pred_check
    _
  $region11: #{lenet_forward.1} parent=0 // pred_check_branch
    %21 = sbr.rel (0) target = $region13
  $region12: #{lenet_forward.1} parent=0 // pred_region
    _
  $region13: #{lenet_forward.1} parent=0 // pred_fallthru
    _
  // Predicated region
  $region14: #{lenet_forward.1} parent=0 // pred_check
    _
  $region15: #{lenet_forward.1} parent=0 // pred_check_branch
    %23 = sbr.rel (0) target = $region17
  $region16: #{lenet_forward.1} parent=0 // pred_region
    _
  $region17: #{lenet_forward.1} parent=0 // pred_fallthru
    _
  // Predicated region
  $region18: #{lenet_forward.1} parent=0 // pred_check
    _
  $region19: #{lenet_forward.1} parent=0 // pred_check_branch
    %25 = sbr.rel (0) target = $region21
  $region20: #{lenet_forward.1} parent=0 // pred_region
    _
  $region21: #{lenet_forward.1} parent=0 // pred_fallthru
    _
  // Predicated region
  $region22: #{lenet_forward.1} parent=0 // pred_check
    _
  $region23: #{lenet_forward.1} parent=0 // pred_check_branch
    %27 = sbr.rel (0) target = $region25
  $region24: #{lenet_forward.1} parent=0 // pred_region
    _
  $region25: #{lenet_forward.1} parent=0 // pred_fallthru
    _
  // Predicated region
  $region26: #{lenet_forward.1} parent=0 // pred_check
    _
  $region27: #{lenet_forward.1} parent=0 // pred_check_branch
    %29 = sbr.rel (0) target = $region29
  $region28: #{lenet_forward.1} parent=0 // pred_region
    _
  $region29: #{lenet_forward.1} parent=0 // pred_fallthru
    _
  // Predicated region
  $region30: #{lenet_forward.1} parent=0 // pred_check
    _
  $region31: #{lenet_forward.1} parent=0 // pred_check_branch
    %31 = sbr.rel (0) target = $region33
  $region32: #{lenet_forward.1} parent=0 // pred_region
    _
  $region33: #{lenet_forward.1} parent=0 // pred_fallthru
    _
  // Predicated region
  $region34: #{lenet_forward.1} parent=0 // pred_check
    _
  $region35: #{lenet_forward.1} parent=0 // pred_check_branch
    %33 = sbr.rel (0) target = $region37
  $region36: #{lenet_forward.1} parent=0 // pred_region
    _
  $region37: #{lenet_forward.1} parent=0 // pred_fallthru
    _
  // Predicated region
  $region38: #{lenet_forward.1} parent=0 // pred_check
    _
  $region39: #{lenet_forward.1} parent=0 // pred_check_branch
    %35 = sbr.rel (0) target = $region41
  $region40: #{lenet_forward.1} parent=0 // pred_region
    _
  $region41: #{lenet_forward.1} parent=0 // pred_fallthru
    _
  // Predicated region
  $region42: #{lenet_forward.1} parent=0 // pred_check
    _
  $region43: #{lenet_forward.1} parent=0 // pred_check_branch
    %37 = sbr.rel (0) target = $region45
  $region44: #{lenet_forward.1} parent=0 // pred_region
    _
  $region45: #{lenet_forward.1} parent=0 // pred_fallthru
    _
  %v38 = vlaneseq
  %vm39 = vcmp.ge.s32.totalorder %v38, 0
  %vm40 = vcmp.lt.s32.totalorder %v38, 384
  %vm41 = vmand %vm39, %vm40
  %42 = vst.msk [vmem:[#allocation2 + $0x10] sm:$0x7] %vm41, 0.0
  %43 = vst [vmem:[#allocation4 + $0x80] sm:$0x3f] 0.0
  %44 = vst [vmem:[#allocation4 + $0x88] sm:$0x3f] 0.0
  %45 = vst [vmem:[#allocation4 + $0x90] sm:$0x3f] 0.0
  %46 = vst [vmem:[#allocation5 + $0x80] sm:$0x3f] 0.0
  %47 = vst [vmem:[#allocation5 + $0x88] sm:$0x3f] 0.0
  %48 = vst [vmem:[#allocation5 + $0x90] sm:$0x3f] 0.0
  %49 = vst [vmem:[#allocation7 + $0x80] sm:$0xff] 0.0
  %50 = vst [vmem:[#allocation7 + $0x88] sm:$0xff] 0.0
  %51 = vst [vmem:[#allocation7 + $0x90] sm:$0xff] 0.0
  %52 = vst [vmem:[#allocation7 + $0x118] sm:$0xff] 0.0
  %53 = vst [vmem:[#allocation7 + $0x120] sm:$0xff] 0.0
  %54 = vst [vmem:[#allocation7 + $0x128] sm:$0xff] 0.0
  %v55 = vld [vmem:[%s0] sm:$0xff]
  %v56 = vld [vmem:[%s0 + $0x8] sm:$0xff]
  %57 = vst [vmem:[#allocation2] sm:$0xff] %v55
  %58 = vst [vmem:[#allocation2 + $0x8] sm:$0xff] %v56
  %v59 = vld [vmem:[#allocation2] sm:$0xff]
  %v60 = vld [vmem:[#allocation2 + $0x8] sm:$0xff]
  %61 = vst [vmem:[#allocation3] ss:$8 sm:$0xf] %v59
  %62 = vst [vmem:[#allocation3] ss:$8 sm:$0xf0] %v59
  %s63 = scalar_lea.vmem [#allocation3], 64
  %64 = vst [vmem:[%s63] ss:$8 sm:$0xf] %v60
  %65 = vst [vmem:[%s63] ss:$8 sm:$0xf0] %v60
  %v66 = vld [vmem:[#allocation2] sm:$0xff]
  %v67 = vld [vmem:[#allocation2 + $0x8] sm:$0xff]
  %v68 = vld [vmem:[#allocation2 + $0x10] sm:$0x1]
  %72 = vrot.lane.b32.xlu0 %v66, 127
  %v73 = vpop.permute.xlu0 %72
  %74 = vrot.lane.b32.xlu0 %v67, 127
  %v75 = vpop.permute.xlu0 %74
  %76 = vrot.lane.b32.xlu0 %v68, 127
  %v77 = vpop.permute.xlu0 %76
  %v78 = vrot.slane %v73, 1
  %v79 = vrot.slane %v75, 1
  %v80 = vrot.slane %v77, 1
  %vm81 = vcmask 1046528
  %v82 = vsel %vm81, %v78, %v79
  %vm83 = vcmask 1039360
  %v84 = vsel %vm83, %v73, %v82
  %v85 = vsel %vm81, %v79, %v80
  %v86 = vsel %vm83, %v75, %v85
  %s89 = scalar_lea.vmem [#allocation3], 1
  %90 = vst [vmem:[%s89] ss:$8 sm:$0xf] %v84
  %91 = vst [vmem:[%s89] ss:$8 sm:$0xf0] %v84
  %s92 = scalar_lea.vmem [#allocation3], 65
  %93 = vst [vmem:[%s92] ss:$8 sm:$0xf] %v86
  %94 = vst [vmem:[%s92] ss:$8 sm:$0xf0] %v86
  %v95 = vld [vmem:[#allocation2] sm:$0xff]
  %v96 = vld [vmem:[#allocation2 + $0x8] sm:$0xff]
  %v97 = vld [vmem:[#allocation2 + $0x10] sm:$0x1]
  %101 = vrot.lane.b32.xlu0 %v95, 126
  %v102 = vpop.permute.xlu0 %101
  %103 = vrot.lane.b32.xlu0 %v96, 126
  %v104 = vpop.permute.xlu0 %103
  %105 = vrot.lane.b32.xlu0 %v97, 126
  %v106 = vpop.permute.xlu0 %105
  %v107 = vrot.slane %v102, 1
  %v108 = vrot.slane %v104, 1
  %v109 = vrot.slane %v106, 1
  %v110 = vsel %vm81, %v107, %v108
  %vm111 = vcmask 1031168
  %v112 = vsel %vm111, %v102, %v110
  %v113 = vsel %vm81, %v108, %v109
  %v114 = vsel %vm111, %v104, %v113
  %s117 = scalar_lea.vmem [#allocation3], 2
  %118 = vst [vmem:[%s117] ss:$8 sm:$0xf] %v112
  %119 = vst [vmem:[%s117] ss:$8 sm:$0xf0] %v112
  %s120 = scalar_lea.vmem [#allocation3], 66
  %121 = vst [vmem:[%s120] ss:$8 sm:$0xf] %v114
  %122 = vst [vmem:[%s120] ss:$8 sm:$0xf0] %v114
  %v123 = vld [vmem:[#allocation2] sm:$0xff]
  %v124 = vld [vmem:[#allocation2 + $0x8] sm:$0xff]
  %v125 = vld [vmem:[#allocation2 + $0x10] sm:$0x1]
  %129 = vrot.lane.b32.xlu0 %v123, 125
  %v130 = vpop.permute.xlu0 %129
  %131 = vrot.lane.b32.xlu0 %v124, 125
  %v132 = vpop.permute.xlu0 %131
  %133 = vrot.lane.b32.xlu0 %v125, 125
  %v134 = vpop.permute.xlu0 %133
  %v135 = vrot.slane %v130, 1
  %v136 = vrot.slane %v132, 1
  %v137 = vrot.slane %v134, 1
  %v138 = vsel %vm81, %v135, %v136
  %vm139 = vcmask 1022976
  %v140 = vsel %vm139, %v130, %v138
  %v141 = vsel %vm81, %v136, %v137
  %v142 = vsel %vm139, %v132, %v141
  %s145 = scalar_lea.vmem [#allocation3], 3
  %146 = vst [vmem:[%s145] ss:$8 sm:$0xf] %v140
  %147 = vst [vmem:[%s145] ss:$8 sm:$0xf0] %v140
  %s148 = scalar_lea.vmem [#allocation3], 67
  %149 = vst [vmem:[%s148] ss:$8 sm:$0xf] %v142
  %150 = vst [vmem:[%s148] ss:$8 sm:$0xf0] %v142
  %v151 = vld [vmem:[#allocation2] sm:$0xff]
  %v152 = vld [vmem:[#allocation2 + $0x8] sm:$0xff]
  %v153 = vld [vmem:[#allocation2 + $0x10] sm:$0x1]
  %157 = vrot.lane.b32.xlu0 %v151, 124
  %v158 = vpop.permute.xlu0 %157
  %159 = vrot.lane.b32.xlu0 %v152, 124
  %v160 = vpop.permute.xlu0 %159
  %161 = vrot.lane.b32.xlu0 %v153, 124
  %v162 = vpop.permute.xlu0 %161
  %v163 = vrot.slane %v158, 1
  %v164 = vrot.slane %v160, 1
  %v165 = vrot.slane %v162, 1
  %v166 = vsel %vm81, %v163, %v164
  %vm167 = vcmask 1014784
  %v168 = vsel %vm167, %v158, %v166
  %v169 = vsel %vm81, %v164, %v165
  %v170 = vsel %vm167, %v160, %v169
  %s173 = scalar_lea.vmem [#allocation3], 4
  %174 = vst [vmem:[%s173] ss:$8 sm:$0xf] %v168
  %175 = vst [vmem:[%s173] ss:$8 sm:$0xf0] %v168
  %s176 = scalar_lea.vmem [#allocation3], 68
  %177 = vst [vmem:[%s176] ss:$8 sm:$0xf] %v170
  %178 = vst [vmem:[%s176] ss:$8 sm:$0xf0] %v170
  %v179 = vld [vmem:[#allocation2] sm:$0xff]
  %v180 = vld [vmem:[#allocation2 + $0x8] sm:$0xff]
  %v181 = vld [vmem:[#allocation2 + $0x10] sm:$0x1]
  %185 = vrot.lane.b32.xlu0 %v179, 96
  %v186 = vpop.permute.xlu0 %185
  %187 = vrot.lane.b32.xlu0 %v180, 96
  %v188 = vpop.permute.xlu0 %187
  %189 = vrot.lane.b32.xlu0 %v181, 96
  %v190 = vpop.permute.xlu0 %189
  %v191 = vrot.slane %v186, 1
  %v192 = vrot.slane %v188, 1
  %v193 = vrot.slane %v190, 1
  %v194 = vsel %vm81, %v191, %v192
  %vm195 = vcmask 785408
  %v196 = vsel %vm195, %v186, %v194
  %v197 = vsel %vm81, %v192, %v193
  %v198 = vsel %vm195, %v188, %v197
  %s201 = scalar_lea.vmem [#allocation3], 5
  %202 = vst [vmem:[%s201] ss:$8 sm:$0xf] %v196
  %203 = vst [vmem:[%s201] ss:$8 sm:$0xf0] %v196
  %s204 = scalar_lea.vmem [#allocation3], 69
  %205 = vst [vmem:[%s204] ss:$8 sm:$0xf] %v198
  %206 = vst [vmem:[%s204] ss:$8 sm:$0xf0] %v198
  %v207 = vld [vmem:[#allocation2] sm:$0xff]
  %v208 = vld [vmem:[#allocation2 + $0x8] sm:$0xff]
  %v209 = vld [vmem:[#allocation2 + $0x10] sm:$0x1]
  %213 = vrot.lane.b32.xlu0 %v207, 95
  %v214 = vpop.permute.xlu0 %213
  %215 = vrot.lane.b32.xlu0 %v208, 95
  %v216 = vpop.permute.xlu0 %215
  %217 = vrot.lane.b32.xlu0 %v209, 95
  %v218 = vpop.permute.xlu0 %217
  %v219 = vrot.slane %v214, 1
  %v220 = vrot.slane %v216, 1
  %v221 = vrot.slane %v218, 1
  %v222 = vsel %vm81, %v219, %v220
  %vm223 = vcmask 777216
  %v224 = vsel %vm223, %v214, %v222
  %v225 = vsel %vm81, %v220, %v221
  %v226 = vsel %vm223, %v216, %v225
  %s229 = scalar_lea.vmem [#allocation3], 6
  %230 = vst [vmem:[%s229] ss:$8 sm:$0xf] %v224
  %231 = vst [vmem:[%s229] ss:$8 sm:$0xf0] %v224
  %s232 = scalar_lea.vmem [#allocation3], 70
  %233 = vst [vmem:[%s232] ss:$8 sm:$0xf] %v226
  %234 = vst [vmem:[%s232] ss:$8 sm:$0xf0] %v226
  %v235 = vld [vmem:[#allocation2] sm:$0xff]
  %v236 = vld [vmem:[#allocation2 + $0x8] sm:$0xff]
  %v237 = vld [vmem:[#allocation2 + $0x10] sm:$0x1]
  %241 = vrot.lane.b32.xlu0 %v235, 94
  %v242 = vpop.permute.xlu0 %241
  %243 = vrot.lane.b32.xlu0 %v236, 94
  %v244 = vpop.permute.xlu0 %243
  %245 = vrot.lane.b32.xlu0 %v237, 94
  %v246 = vpop.permute.xlu0 %245
  %v247 = vrot.slane %v242, 1
  %v248 = vrot.slane %v244, 1
  %v249 = vrot.slane %v246, 1
  %v250 = vsel %vm81, %v247, %v248
  %vm251 = vcmask 769024
  %v252 = vsel %vm251, %v242, %v250
  %v253 = vsel %vm81, %v248, %v249
  %v254 = vsel %vm251, %v244, %v253
  %s257 = scalar_lea.vmem [#allocation3], 7
  %258 = vst [vmem:[%s257] ss:$8 sm:$0xf] %v252
  %259 = vst [vmem:[%s257] ss:$8 sm:$0xf0] %v252
  %s260 = scalar_lea.vmem [#allocation3], 71
  %261 = vst [vmem:[%s260] ss:$8 sm:$0xf] %v254
  %262 = vst [vmem:[%s260] ss:$8 sm:$0xf0] %v254
  %v263 = vld [vmem:[#allocation2] sm:$0xff]
  %v264 = vld [vmem:[#allocation2 + $0x8] sm:$0xff]
  %v265 = vld [vmem:[#allocation2 + $0x10] sm:$0x1]
  %269 = vrot.lane.b32.xlu0 %v263, 93
  %v270 = vpop.permute.xlu0 %269
  %271 = vrot.lane.b32.xlu0 %v264, 93
  %v272 = vpop.permute.xlu0 %271
  %273 = vrot.lane.b32.xlu0 %v265, 93
  %v274 = vpop.permute.xlu0 %273
  %v275 = vrot.slane %v270, 1
  %v276 = vrot.slane %v272, 1
  %v277 = vrot.slane %v274, 1
  %v278 = vsel %vm81, %v275, %v276
  %vm279 = vcmask 760832
  %v280 = vsel %vm279, %v270, %v278
  %v281 = vsel %vm81, %v276, %v277
  %v282 = vsel %vm279, %v272, %v281
  %s285 = scalar_lea.vmem [#allocation3], 128
  %286 = vst [vmem:[%s285] ss:$8 sm:$0xf] %v280
  %287 = vst [vmem:[%s285] ss:$8 sm:$0xf0] %v280
  %s288 = scalar_lea.vmem [#allocation3], 192
  %289 = vst [vmem:[%s288] ss:$8 sm:$0xf] %v282
  %290 = vst [vmem:[%s288] ss:$8 sm:$0xf0] %v282
  %v291 = vld [vmem:[#allocation2] sm:$0xff]
  %v292 = vld [vmem:[#allocation2 + $0x8] sm:$0xff]
  %v293 = vld [vmem:[#allocation2 + $0x10] sm:$0x1]
  %297 = vrot.lane.b32.xlu0 %v291, 92
  %v298 = vpop.permute.xlu0 %297
  %299 = vrot.lane.b32.xlu0 %v292, 92
  %v300 = vpop.permute.xlu0 %299
  %301 = vrot.lane.b32.xlu0 %v293, 92
  %v302 = vpop.permute.xlu0 %301
  %v303 = vrot.slane %v298, 1
  %v304 = vrot.slane %v300, 1
  %v305 = vrot.slane %v302, 1
  %v306 = vsel %vm81, %v303, %v304
  %vm307 = vcmask 752640
  %v308 = vsel %vm307, %v298, %v306
  %v309 = vsel %vm81, %v304, %v305
  %v310 = vsel %vm307, %v300, %v309
  %s313 = scalar_lea.vmem [#allocation3], 129
  %314 = vst [vmem:[%s313] ss:$8 sm:$0xf] %v308
  %315 = vst [vmem:[%s313] ss:$8 sm:$0xf0] %v308
  %s316 = scalar_lea.vmem [#allocation3], 193
  %317 = vst [vmem:[%s316] ss:$8 sm:$0xf] %v310
  %318 = vst [vmem:[%s316] ss:$8 sm:$0xf0] %v310
  %v319 = vld [vmem:[#allocation2] sm:$0xff]
  %v320 = vld [vmem:[#allocation2 + $0x8] sm:$0xff]
  %v321 = vld [vmem:[#allocation2 + $0x10] sm:$0x1]
  %325 = vrot.lane.b32.xlu0 %v319, 64
  %v326 = vpop.permute.xlu0 %325
  %327 = vrot.lane.b32.xlu0 %v320, 64
  %v328 = vpop.permute.xlu0 %327
  %329 = vrot.lane.b32.xlu0 %v321, 64
  %v330 = vpop.permute.xlu0 %329
  %v331 = vrot.slane %v326, 1
  %v332 = vrot.slane %v328, 1
  %v333 = vrot.slane %v330, 1
  %v334 = vsel %vm81, %v331, %v332
  %vm335 = vcmask 523264
  %v336 = vsel %vm335, %v326, %v334
  %v337 = vsel %vm81, %v332, %v333
  %v338 = vsel %vm335, %v328, %v337
  %s341 = scalar_lea.vmem [#allocation3], 130
  %342 = vst [vmem:[%s341] ss:$8 sm:$0xf] %v336
  %343 = vst [vmem:[%s341] ss:$8 sm:$0xf0] %v336
  %s344 = scalar_lea.vmem [#allocation3], 194
  %345 = vst [vmem:[%s344] ss:$8 sm:$0xf] %v338
  %346 = vst [vmem:[%s344] ss:$8 sm:$0xf0] %v338
  %v347 = vld [vmem:[#allocation2] sm:$0xff]
  %v348 = vld [vmem:[#allocation2 + $0x8] sm:$0xff]
  %v349 = vld [vmem:[#allocation2 + $0x10] sm:$0x1]
  %353 = vrot.lane.b32.xlu0 %v347, 63
  %v354 = vpop.permute.xlu0 %353
  %355 = vrot.lane.b32.xlu0 %v348, 63
  %v356 = vpop.permute.xlu0 %355
  %357 = vrot.lane.b32.xlu0 %v349, 63
  %v358 = vpop.permute.xlu0 %357
  %v359 = vrot.slane %v354, 1
  %v360 = vrot.slane %v356, 1
  %v361 = vrot.slane %v358, 1
  %v362 = vsel %vm81, %v359, %v360
  %vm363 = vcmask 515072
  %v364 = vsel %vm363, %v354, %v362
  %v365 = vsel %vm81, %v360, %v361
  %v366 = vsel %vm363, %v356, %v365
  %s369 = scalar_lea.vmem [#allocation3], 131
  %370 = vst [vmem:[%s369] ss:$8 sm:$0xf] %v364
  %371 = vst [vmem:[%s369] ss:$8 sm:$0xf0] %v364
  %s372 = scalar_lea.vmem [#allocation3], 195
  %373 = vst [vmem:[%s372] ss:$8 sm:$0xf] %v366
  %374 = vst [vmem:[%s372] ss:$8 sm:$0xf0] %v366
  %v375 = vld [vmem:[#allocation2] sm:$0xff]
  %v376 = vld [vmem:[#allocation2 + $0x8] sm:$0xff]
  %v377 = vld [vmem:[#allocation2 + $0x10] sm:$0x1]
  %381 = vrot.lane.b32.xlu0 %v375, 62
  %v382 = vpop.permute.xlu0 %381
  %383 = vrot.lane.b32.xlu0 %v376, 62
  %v384 = vpop.permute.xlu0 %383
  %385 = vrot.lane.b32.xlu0 %v377, 62
  %v386 = vpop.permute.xlu0 %385
  %v387 = vrot.slane %v382, 1
  %v388 = vrot.slane %v384, 1
  %v389 = vrot.slane %v386, 1
  %v390 = vsel %vm81, %v387, %v388
  %vm391 = vcmask 506880
  %v392 = vsel %vm391, %v382, %v390
  %v393 = vsel %vm81, %v388, %v389
  %v394 = vsel %vm391, %v384, %v393
  %s397 = scalar_lea.vmem [#allocation3], 132
  %398 = vst [vmem:[%s397] ss:$8 sm:$0xf] %v392
  %399 = vst [vmem:[%s397] ss:$8 sm:$0xf0] %v392
  %s400 = scalar_lea.vmem [#allocation3], 196
  %401 = vst [vmem:[%s400] ss:$8 sm:$0xf] %v394
  %402 = vst [vmem:[%s400] ss:$8 sm:$0xf0] %v394
  %v403 = vld [vmem:[#allocation2] sm:$0xff]
  %v404 = vld [vmem:[#allocation2 + $0x8] sm:$0xff]
  %v405 = vld [vmem:[#allocation2 + $0x10] sm:$0x1]
  %409 = vrot.lane.b32.xlu0 %v403, 61
  %v410 = vpop.permute.xlu0 %409
  %411 = vrot.lane.b32.xlu0 %v404, 61
  %v412 = vpop.permute.xlu0 %411
  %413 = vrot.lane.b32.xlu0 %v405, 61
  %v414 = vpop.permute.xlu0 %413
  %v415 = vrot.slane %v410, 1
  %v416 = vrot.slane %v412, 1
  %v417 = vrot.slane %v414, 1
  %v418 = vsel %vm81, %v415, %v416
  %vm419 = vcmask 498688
  %v420 = vsel %vm419, %v410, %v418
  %v421 = vsel %vm81, %v416, %v417
  %v422 = vsel %vm419, %v412, %v421
  %s425 = scalar_lea.vmem [#allocation3], 133
  %426 = vst [vmem:[%s425] ss:$8 sm:$0xf] %v420
  %427 = vst [vmem:[%s425] ss:$8 sm:$0xf0] %v420
  %s428 = scalar_lea.vmem [#allocation3], 197
  %429 = vst [vmem:[%s428] ss:$8 sm:$0xf] %v422
  %430 = vst [vmem:[%s428] ss:$8 sm:$0xf0] %v422
  %v431 = vld [vmem:[#allocation2] sm:$0xff]
  %v432 = vld [vmem:[#allocation2 + $0x8] sm:$0xff]
  %v433 = vld [vmem:[#allocation2 + $0x10] sm:$0x1]
  %437 = vrot.lane.b32.xlu0 %v431, 60
  %v438 = vpop.permute.xlu0 %437
  %439 = vrot.lane.b32.xlu0 %v432, 60
  %v440 = vpop.permute.xlu0 %439
  %441 = vrot.lane.b32.xlu0 %v433, 60
  %v442 = vpop.permute.xlu0 %441
  %v443 = vrot.slane %v438, 1
  %v444 = vrot.slane %v440, 1
  %v445 = vrot.slane %v442, 1
  %v446 = vsel %vm81, %v443, %v444
  %vm447 = vcmask 490496
  %v448 = vsel %vm447, %v438, %v446
  %v449 = vsel %vm81, %v444, %v445
  %v450 = vsel %vm447, %v440, %v449
  %s453 = scalar_lea.vmem [#allocation3], 134
  %454 = vst [vmem:[%s453] ss:$8 sm:$0xf] %v448
  %455 = vst [vmem:[%s453] ss:$8 sm:$0xf0] %v448
  %s456 = scalar_lea.vmem [#allocation3], 198
  %457 = vst [vmem:[%s456] ss:$8 sm:$0xf] %v450
  %458 = vst [vmem:[%s456] ss:$8 sm:$0xf0] %v450
  %v459 = vld [vmem:[#allocation2] sm:$0xff]
  %v460 = vld [vmem:[#allocation2 + $0x8] sm:$0xff]
  %v461 = vld [vmem:[#allocation2 + $0x10] sm:$0x1]
  %465 = vrot.lane.b32.xlu0 %v459, 32
  %v466 = vpop.permute.xlu0 %465
  %467 = vrot.lane.b32.xlu0 %v460, 32
  %v468 = vpop.permute.xlu0 %467
  %469 = vrot.lane.b32.xlu0 %v461, 32
  %v470 = vpop.permute.xlu0 %469
  %v471 = vrot.slane %v466, 1
  %v472 = vrot.slane %v468, 1
  %v473 = vrot.slane %v470, 1
  %v474 = vsel %vm81, %v471, %v472
  %vm475 = vcmask 261120
  %v476 = vsel %vm475, %v466, %v474
  %v477 = vsel %vm81, %v472, %v473
  %v478 = vsel %vm475, %v468, %v477
  %s481 = scalar_lea.vmem [#allocation3], 135
  %482 = vst [vmem:[%s481] ss:$8 sm:$0xf] %v476
  %483 = vst [vmem:[%s481] ss:$8 sm:$0xf0] %v476
  %s484 = scalar_lea.vmem [#allocation3], 199
  %485 = vst [vmem:[%s484] ss:$8 sm:$0xf] %v478
  %486 = vst [vmem:[%s484] ss:$8 sm:$0xf0] %v478
  %v487 = vld [vmem:[#allocation2] sm:$0xff]
  %v488 = vld [vmem:[#allocation2 + $0x8] sm:$0xff]
  %v489 = vld [vmem:[#allocation2 + $0x10] sm:$0x1]
  %493 = vrot.lane.b32.xlu0 %v487, 31
  %v494 = vpop.permute.xlu0 %493
  %495 = vrot.lane.b32.xlu0 %v488, 31
  %v496 = vpop.permute.xlu0 %495
  %497 = vrot.lane.b32.xlu0 %v489, 31
  %v498 = vpop.permute.xlu0 %497
  %v499 = vrot.slane %v494, 1
  %v500 = vrot.slane %v496, 1
  %v501 = vrot.slane %v498, 1
  %v502 = vsel %vm81, %v499, %v500
  %vm503 = vcmask 252928
  %v504 = vsel %vm503, %v494, %v502
  %v505 = vsel %vm81, %v500, %v501
  %v506 = vsel %vm503, %v496, %v505
  %s509 = scalar_lea.vmem [#allocation3], 256
  %510 = vst [vmem:[%s509] ss:$8 sm:$0xf] %v504
  %511 = vst [vmem:[%s509] ss:$8 sm:$0xf0] %v504
  %s512 = scalar_lea.vmem [#allocation3], 320
  %513 = vst [vmem:[%s512] ss:$8 sm:$0xf] %v506
  %514 = vst [vmem:[%s512] ss:$8 sm:$0xf0] %v506
  %v515 = vld [vmem:[#allocation2] sm:$0xff]
  %v516 = vld [vmem:[#allocation2 + $0x8] sm:$0xff]
  %v517 = vld [vmem:[#allocation2 + $0x10] sm:$0x1]
  %521 = vrot.lane.b32.xlu0 %v515, 30
  %v522 = vpop.permute.xlu0 %521
  %523 = vrot.lane.b32.xlu0 %v516, 30
  %v524 = vpop.permute.xlu0 %523
  %525 = vrot.lane.b32.xlu0 %v517, 30
  %v526 = vpop.permute.xlu0 %525
  %v527 = vrot.slane %v522, 1
  %v528 = vrot.slane %v524, 1
  %v529 = vrot.slane %v526, 1
  %v530 = vsel %vm81, %v527, %v528
  %vm531 = vcmask 244736
  %v532 = vsel %vm531, %v522, %v530
  %v533 = vsel %vm81, %v528, %v529
  %v534 = vsel %vm531, %v524, %v533
  %s537 = scalar_lea.vmem [#allocation3], 257
  %538 = vst [vmem:[%s537] ss:$8 sm:$0xf] %v532
  %539 = vst [vmem:[%s537] ss:$8 sm:$0xf0] %v532
  %s540 = scalar_lea.vmem [#allocation3], 321
  %541 = vst [vmem:[%s540] ss:$8 sm:$0xf] %v534
  %542 = vst [vmem:[%s540] ss:$8 sm:$0xf0] %v534
  %v543 = vld [vmem:[#allocation2] sm:$0xff]
  %v544 = vld [vmem:[#allocation2 + $0x8] sm:$0xff]
  %v545 = vld [vmem:[#allocation2 + $0x10] sm:$0x1]
  %549 = vrot.lane.b32.xlu0 %v543, 29
  %v550 = vpop.permute.xlu0 %549
  %551 = vrot.lane.b32.xlu0 %v544, 29
  %v552 = vpop.permute.xlu0 %551
  %553 = vrot.lane.b32.xlu0 %v545, 29
  %v554 = vpop.permute.xlu0 %553
  %v555 = vrot.slane %v550, 1
  %v556 = vrot.slane %v552, 1
  %v557 = vrot.slane %v554, 1
  %v558 = vsel %vm81, %v555, %v556
  %vm559 = vcmask 236544
  %v560 = vsel %vm559, %v550, %v558
  %v561 = vsel %vm81, %v556, %v557
  %v562 = vsel %vm559, %v552, %v561
  %s565 = scalar_lea.vmem [#allocation3], 258
  %566 = vst [vmem:[%s565] ss:$8 sm:$0xf] %v560
  %567 = vst [vmem:[%s565] ss:$8 sm:$0xf0] %v560
  %s568 = scalar_lea.vmem [#allocation3], 322
  %569 = vst [vmem:[%s568] ss:$8 sm:$0xf] %v562
  %570 = vst [vmem:[%s568] ss:$8 sm:$0xf0] %v562
  %v571 = vld [vmem:[#allocation2] sm:$0xff]
  %v572 = vld [vmem:[#allocation2 + $0x8] sm:$0xff]
  %v573 = vld [vmem:[#allocation2 + $0x10] sm:$0x1]
  %577 = vrot.lane.b32.xlu0 %v571, 28
  %v578 = vpop.permute.xlu0 %577
  %579 = vrot.lane.b32.xlu0 %v572, 28
  %v580 = vpop.permute.xlu0 %579
  %581 = vrot.lane.b32.xlu0 %v573, 28
  %v582 = vpop.permute.xlu0 %581
  %v583 = vrot.slane %v578, 1
  %v584 = vrot.slane %v580, 1
  %v585 = vrot.slane %v582, 1
  %v586 = vsel %vm81, %v583, %v584
  %vm587 = vcmask 228352
  %v588 = vsel %vm587, %v578, %v586
  %v589 = vsel %vm81, %v584, %v585
  %v590 = vsel %vm587, %v580, %v589
  %s593 = scalar_lea.vmem [#allocation3], 259
  %594 = vst [vmem:[%s593] ss:$8 sm:$0xf] %v588
  %595 = vst [vmem:[%s593] ss:$8 sm:$0xf0] %v588
  %s596 = scalar_lea.vmem [#allocation3], 323
  %597 = vst [vmem:[%s596] ss:$8 sm:$0xf] %v590
  %598 = vst [vmem:[%s596] ss:$8 sm:$0xf0] %v590
  %v599 = vld [vmem:[#allocation2 + $0x1] sm:$0xff]
  %v600 = vld [vmem:[#allocation2 + $0x9] sm:$0xff]
  %s601 = scalar_lea.vmem [#allocation3], 260
  %602 = vst [vmem:[%s601] ss:$8 sm:$0xf] %v599
  %603 = vst [vmem:[%s601] ss:$8 sm:$0xf0] %v599
  %s604 = scalar_lea.vmem [#allocation3], 324
  %605 = vst [vmem:[%s604] ss:$8 sm:$0xf] %v600
  %606 = vst [vmem:[%s604] ss:$8 sm:$0xf0] %v600
  %v607 = vld [vmem:[#allocation2 + $0x1] sm:$0xff]
  %v608 = vld [vmem:[#allocation2 + $0x9] sm:$0xff]
  %v609 = vld [vmem:[#allocation2 + $0x11] sm:$0x1]
  %613 = vrot.lane.b32.xlu0 %v607, 127
  %v614 = vpop.permute.xlu0 %613
  %615 = vrot.lane.b32.xlu0 %v608, 127
  %v616 = vpop.permute.xlu0 %615
  %617 = vrot.lane.b32.xlu0 %v609, 127
  %v618 = vpop.permute.xlu0 %617
  %v619 = vrot.slane %v614, 1
  %v620 = vrot.slane %v616, 1
  %v621 = vrot.slane %v618, 1
  %v622 = vsel %vm81, %v619, %v620
  %v623 = vsel %vm83, %v614, %v622
  %v624 = vsel %vm81, %v620, %v621
  %v625 = vsel %vm83, %v616, %v624
  %s628 = scalar_lea.vmem [#allocation3], 261
  %629 = vst [vmem:[%s628] ss:$8 sm:$0xf] %v623
  %630 = vst [vmem:[%s628] ss:$8 sm:$0xf0] %v623
  %s631 = scalar_lea.vmem [#allocation3], 325
  %632 = vst [vmem:[%s631] ss:$8 sm:$0xf] %v625
  %633 = vst [vmem:[%s631] ss:$8 sm:$0xf0] %v625
  %v634 = vld [vmem:[#allocation2 + $0x1] sm:$0xff]
  %v635 = vld [vmem:[#allocation2 + $0x9] sm:$0xff]
  %v636 = vld [vmem:[#allocation2 + $0x11] sm:$0x1]
  %640 = vrot.lane.b32.xlu0 %v634, 126
  %v641 = vpop.permute.xlu0 %640
  %642 = vrot.lane.b32.xlu0 %v635, 126
  %v643 = vpop.permute.xlu0 %642
  %644 = vrot.lane.b32.xlu0 %v636, 126
  %v645 = vpop.permute.xlu0 %644
  %v646 = vrot.slane %v641, 1
  %v647 = vrot.slane %v643, 1
  %v648 = vrot.slane %v645, 1
  %v649 = vsel %vm81, %v646, %v647
  %v650 = vsel %vm111, %v641, %v649
  %v651 = vsel %vm81, %v647, %v648
  %v652 = vsel %vm111, %v643, %v651
  %s655 = scalar_lea.vmem [#allocation3], 262
  %656 = vst [vmem:[%s655] ss:$8 sm:$0xf] %v650
  %657 = vst [vmem:[%s655] ss:$8 sm:$0xf0] %v650
  %s658 = scalar_lea.vmem [#allocation3], 326
  %659 = vst [vmem:[%s658] ss:$8 sm:$0xf] %v652
  %660 = vst [vmem:[%s658] ss:$8 sm:$0xf0] %v652
  %v661 = vld [vmem:[#allocation2 + $0x1] sm:$0xff]
  %v662 = vld [vmem:[#allocation2 + $0x9] sm:$0xff]
  %v663 = vld [vmem:[#allocation2 + $0x11] sm:$0x1]
  %667 = vrot.lane.b32.xlu0 %v661, 125
  %v668 = vpop.permute.xlu0 %667
  %669 = vrot.lane.b32.xlu0 %v662, 125
  %v670 = vpop.permute.xlu0 %669
  %671 = vrot.lane.b32.xlu0 %v663, 125
  %v672 = vpop.permute.xlu0 %671
  %v673 = vrot.slane %v668, 1
  %v674 = vrot.slane %v670, 1
  %v675 = vrot.slane %v672, 1
  %v676 = vsel %vm81, %v673, %v674
  %v677 = vsel %vm139, %v668, %v676
  %v678 = vsel %vm81, %v674, %v675
  %v679 = vsel %vm139, %v670, %v678
  %s682 = scalar_lea.vmem [#allocation3], 263
  %683 = vst [vmem:[%s682] ss:$8 sm:$0xf] %v677
  %684 = vst [vmem:[%s682] ss:$8 sm:$0xf0] %v677
  %s685 = scalar_lea.vmem [#allocation3], 327
  %686 = vst [vmem:[%s685] ss:$8 sm:$0xf] %v679
  %687 = vst [vmem:[%s685] ss:$8 sm:$0xf0] %v679
  %v688 = vld [vmem:[#allocation2 + $0x1] sm:$0xff]
  %v689 = vld [vmem:[#allocation2 + $0x9] sm:$0xff]
  %v690 = vld [vmem:[#allocation2 + $0x11] sm:$0x1]
  %694 = vrot.lane.b32.xlu0 %v688, 124
  %v695 = vpop.permute.xlu0 %694
  %696 = vrot.lane.b32.xlu0 %v689, 124
  %v697 = vpop.permute.xlu0 %696
  %698 = vrot.lane.b32.xlu0 %v690, 124
  %v699 = vpop.permute.xlu0 %698
  %v700 = vrot.slane %v695, 1
  %v701 = vrot.slane %v697, 1
  %v702 = vrot.slane %v699, 1
  %v703 = vsel %vm81, %v700, %v701
  %v704 = vsel %vm167, %v695, %v703
  %v705 = vsel %vm81, %v701, %v702
  %v706 = vsel %vm167, %v697, %v705
  %s709 = scalar_lea.vmem [#allocation3], 384
  %710 = vst [vmem:[%s709] ss:$8 sm:$0xf] %v704
  %711 = vst [vmem:[%s709] ss:$8 sm:$0xf0] %v704
  %s712 = scalar_lea.vmem [#allocation3], 448
  %713 = vst [vmem:[%s712] ss:$8 sm:$0xf] %v706
  %714 = vst [vmem:[%s712] ss:$8 sm:$0xf0] %v706
  %v715 = vld [vmem:[%s1] sm:$0x3f]
  %v716 = vld [vmem:[#allocation3] sm:$0xff]
  %v717 = vld [vmem:[#allocation3 + $0x8] sm:$0xff]
  %v718 = vld [vmem:[#allocation3 + $0x10] sm:$0xff]
  %v719 = vld [vmem:[#allocation3 + $0x18] sm:$0xff]
  %v720 = vld [vmem:[#allocation3 + $0x20] sm:$0xff]
  %v721 = vld [vmem:[#allocation3 + $0x28] sm:$0xff]
  %v722 = vld [vmem:[#allocation3 + $0x30] sm:$0xff]
  %v723 = vld [vmem:[#allocation3 + $0x38] sm:$0xff]
  %v724 = vld [vmem:[#allocation3 + $0x40] sm:$0xff]
  %v725 = vld [vmem:[#allocation3 + $0x48] sm:$0xff]
  %v726 = vld [vmem:[#allocation3 + $0x50] sm:$0xff]
  %v727 = vld [vmem:[#allocation3 + $0x58] sm:$0xff]
  %v728 = vld [vmem:[#allocation3 + $0x60] sm:$0xff]
  %v729 = vld [vmem:[#allocation3 + $0x68] sm:$0xff]
  %v730 = vld [vmem:[#allocation3 + $0x70] sm:$0xff]
  %v731 = vld [vmem:[#allocation3 + $0x78] sm:$0xff]
  %v732 = vld [vmem:[#allocation3 + $0x80] sm:$0xff]
  %v733 = vld [vmem:[#allocation3 + $0x88] sm:$0xff]
  %v734 = vld [vmem:[#allocation3 + $0x90] sm:$0xff]
  %v735 = vld [vmem:[#allocation3 + $0x98] sm:$0xff]
  %v736 = vld [vmem:[#allocation3 + $0xa0] sm:$0xff]
  %v737 = vld [vmem:[#allocation3 + $0xa8] sm:$0xff]
  %v738 = vld [vmem:[#allocation3 + $0xb0] sm:$0xff]
  %v739 = vld [vmem:[#allocation3 + $0xb8] sm:$0xff]
  %v740 = vld [vmem:[#allocation3 + $0xc0] sm:$0xff]
  %v741 = vld [vmem:[#allocation3 + $0xc8] sm:$0xff]
  %v742 = vld [vmem:[#allocation3 + $0xd0] sm:$0xff]
  %v743 = vld [vmem:[#allocation3 + $0xd8] sm:$0xff]
  %v744 = vld [vmem:[#allocation3 + $0xe0] sm:$0xff]
  %v745 = vld [vmem:[#allocation3 + $0xe8] sm:$0xff]
  %v746 = vld [vmem:[#allocation3 + $0xf0] sm:$0xff]
  %v747 = vld [vmem:[#allocation3 + $0xf8] sm:$0xff]
  %v748 = vld [vmem:[#allocation3 + $0x100] sm:$0xff]
  %v749 = vld [vmem:[#allocation3 + $0x108] sm:$0xff]
  %v750 = vld [vmem:[#allocation3 + $0x110] sm:$0xff]
  %v751 = vld [vmem:[#allocation3 + $0x118] sm:$0xff]
  %v752 = vld [vmem:[#allocation3 + $0x120] sm:$0xff]
  %v753 = vld [vmem:[#allocation3 + $0x128] sm:$0xff]
  %v754 = vld [vmem:[#allocation3 + $0x130] sm:$0xff]
  %v755 = vld [vmem:[#allocation3 + $0x138] sm:$0xff]
  %v756 = vld [vmem:[#allocation3 + $0x140] sm:$0xff]
  %v757 = vld [vmem:[#allocation3 + $0x148] sm:$0xff]
  %v758 = vld [vmem:[#allocation3 + $0x150] sm:$0xff]
  %v759 = vld [vmem:[#allocation3 + $0x158] sm:$0xff]
  %v760 = vld [vmem:[#allocation3 + $0x160] sm:$0xff]
  %v761 = vld [vmem:[#allocation3 + $0x168] sm:$0xff]
  %v762 = vld [vmem:[#allocation3 + $0x170] sm:$0xff]
  %v763 = vld [vmem:[#allocation3 + $0x178] sm:$0xff]
  %v764 = vld [vmem:[#allocation3 + $0x180] sm:$0x1]
  %v765 = vld [vmem:[#allocation3 + $0x188] sm:$0x1]
  %v766 = vld [vmem:[#allocation3 + $0x190] sm:$0x1]
  %v767 = vld [vmem:[#allocation3 + $0x198] sm:$0x1]
  %v768 = vld [vmem:[#allocation3 + $0x1a0] sm:$0x1]
  %v769 = vld [vmem:[#allocation3 + $0x1a8] sm:$0x1]
  %v770 = vld [vmem:[#allocation3 + $0x1b0] sm:$0x1]
  %v771 = vld [vmem:[#allocation3 + $0x1b8] sm:$0x1]
  %v772 = vld [vmem:[#allocation3 + $0x1c0] sm:$0x1]
  %v773 = vld [vmem:[#allocation3 + $0x1c8] sm:$0x1]
  %v774 = vld [vmem:[#allocation3 + $0x1d0] sm:$0x1]
  %v775 = vld [vmem:[#allocation3 + $0x1d8] sm:$0x1]
  %v776 = vld [vmem:[#allocation3 + $0x1e0] sm:$0x1]
  %v777 = vld [vmem:[#allocation3 + $0x1e8] sm:$0x1]
  %v778 = vld [vmem:[#allocation3 + $0x1f0] sm:$0x1]
  %v779 = vld [vmem:[#allocation3 + $0x1f8] sm:$0x1]
  %v780 = vld [vmem:[%s2] sm:$0x3f]
  %782 = vset.pattern.permute.xlu0 0
  %783 = vperm.xlu0 %782, %v780
  %v784 = vpop.permute.xlu0 %783
  %vm786 = vcmask 203776
  %v788 = vsel %vm786, %v715, 0
  %vm790 = vcmask 1040384
  %v792 = vsel %vm790, %v764, 0
  %v795 = vsel %vm790, %v765, 0
  %v798 = vsel %vm790, %v766, 0
  %v801 = vsel %vm790, %v767, 0
  %v804 = vsel %vm790, %v768, 0
  %v807 = vsel %vm790, %v769, 0
  %v810 = vsel %vm790, %v770, 0
  %v813 = vsel %vm790, %v771, 0
  %v816 = vsel %vm790, %v772, 0
  %v819 = vsel %vm790, %v773, 0
  %v822 = vsel %vm790, %v774, 0
  %v825 = vsel %vm790, %v775, 0
  %v828 = vsel %vm790, %v776, 0
  %v831 = vsel %vm790, %v777, 0
  %v834 = vsel %vm790, %v778, 0
  %v837 = vsel %vm790, %v779, 0
  %839 = vmatpush.msra.mxu0 0.0
  %840 = vmatpush.msra.mxu0 0.0
  %841 = vmatpush.msra.mxu0 0.0
  %842 = vmatpush.msra.mxu0 0.0
  %843 = vmatpush.msra.mxu0 0.0
  %844 = vmatpush.msra.mxu0 0.0
  %845 = vmatpush.msra.mxu0 0.0
  %846 = vmatpush.msra.mxu0 0.0
  %847 = vmatpush.msra.mxu0 0.0
  %848 = vmatpush.msra.mxu0 0.0
  %849 = vmatpush.msra.mxu0 0.0
  %850 = vmatpush.msra.mxu0 0.0
  %851 = vmatpush.msra.mxu0 %v792
  %852 = vmatpush.msra.mxu0 %v748
  %853 = vmatpush.msra.mxu0 %v732
  %854 = vmatpush.msra.mxu0 %v716
  %855 = vmatmul.f32.gmra.mxu0 %v788
  %v856 = vpop.f32.mrf.mxu0
  %v857 = vadd.f32 %v784, %v856
  %858 = vdwg.mxu0
  %859 = vmatpush.msra.mxu0 0.0
  %860 = vmatpush.msra.mxu0 0.0
  %861 = vmatpush.msra.mxu0 0.0
  %862 = vmatpush.msra.mxu0 0.0
  %863 = vmatpush.msra.mxu0 0.0
  %864 = vmatpush.msra.mxu0 0.0
  %865 = vmatpush.msra.mxu0 0.0
  %866 = vmatpush.msra.mxu0 0.0
  %867 = vmatpush.msra.mxu0 0.0
  %868 = vmatpush.msra.mxu0 0.0
  %869 = vmatpush.msra.mxu0 0.0
  %870 = vmatpush.msra.mxu0 0.0
  %871 = vmatpush.msra.mxu0 %v795
  %872 = vmatpush.msra.mxu0 %v749
  %873 = vmatpush.msra.mxu0 %v733
  %874 = vmatpush.msra.mxu0 %v717
  %875 = vmatmul.f32.gmra.mxu0 %v788
  %v876 = vpop.f32.mrf.mxu0
  %v877 = vadd.f32 %v784, %v876
  %878 = vdwg.mxu0
  %879 = vmatpush.msra.mxu0 0.0
  %880 = vmatpush.msra.mxu0 0.0
  %881 = vmatpush.msra.mxu0 0.0
  %882 = vmatpush.msra.mxu0 0.0
  %883 = vmatpush.msra.mxu0 0.0
  %884 = vmatpush.msra.mxu0 0.0
  %885 = vmatpush.msra.mxu0 0.0
  %886 = vmatpush.msra.mxu0 0.0
  %887 = vmatpush.msra.mxu0 0.0
  %888 = vmatpush.msra.mxu0 0.0
  %889 = vmatpush.msra.mxu0 0.0
  %890 = vmatpush.msra.mxu0 0.0
  %891 = vmatpush.msra.mxu0 %v798
  %892 = vmatpush.msra.mxu0 %v750
  %893 = vmatpush.msra.mxu0 %v734
  %894 = vmatpush.msra.mxu0 %v718
  %895 = vmatmul.f32.gmra.mxu0 %v788
  %v896 = vpop.f32.mrf.mxu0
  %v897 = vadd.f32 %v784, %v896
  %898 = vdwg.mxu0
  %899 = vmatpush.msra.mxu0 0.0
  %900 = vmatpush.msra.mxu0 0.0
  %901 = vmatpush.msra.mxu0 0.0
  %902 = vmatpush.msra.mxu0 0.0
  %903 = vmatpush.msra.mxu0 0.0
  %904 = vmatpush.msra.mxu0 0.0
  %905 = vmatpush.msra.mxu0 0.0
  %906 = vmatpush.msra.mxu0 0.0
  %907 = vmatpush.msra.mxu0 0.0
  %908 = vmatpush.msra.mxu0 0.0
  %909 = vmatpush.msra.mxu0 0.0
  %910 = vmatpush.msra.mxu0 0.0
  %911 = vmatpush.msra.mxu0 %v801
  %912 = vmatpush.msra.mxu0 %v751
  %913 = vmatpush.msra.mxu0 %v735
  %914 = vmatpush.msra.mxu0 %v719
  %915 = vmatmul.f32.gmra.mxu0 %v788
  %v916 = vpop.f32.mrf.mxu0
  %v917 = vadd.f32 %v784, %v916
  %918 = vdwg.mxu0
  %919 = vmatpush.msra.mxu0 0.0
  %920 = vmatpush.msra.mxu0 0.0
  %921 = vmatpush.msra.mxu0 0.0
  %922 = vmatpush.msra.mxu0 0.0
  %923 = vmatpush.msra.mxu0 0.0
  %924 = vmatpush.msra.mxu0 0.0
  %925 = vmatpush.msra.mxu0 0.0
  %926 = vmatpush.msra.mxu0 0.0
  %927 = vmatpush.msra.mxu0 0.0
  %928 = vmatpush.msra.mxu0 0.0
  %929 = vmatpush.msra.mxu0 0.0
  %930 = vmatpush.msra.mxu0 0.0
  %931 = vmatpush.msra.mxu0 %v804
  %932 = vmatpush.msra.mxu0 %v752
  %933 = vmatpush.msra.mxu0 %v736
  %934 = vmatpush.msra.mxu0 %v720
  %935 = vmatmul.f32.gmra.mxu0 %v788
  %v936 = vpop.f32.mrf.mxu0
  %v937 = vadd.f32 %v784, %v936
  %938 = vdwg.mxu0
  %939 = vmatpush.msra.mxu0 0.0
  %940 = vmatpush.msra.mxu0 0.0
  %941 = vmatpush.msra.mxu0 0.0
  %942 = vmatpush.msra.mxu0 0.0
  %943 = vmatpush.msra.mxu0 0.0
  %944 = vmatpush.msra.mxu0 0.0
  %945 = vmatpush.msra.mxu0 0.0
  %946 = vmatpush.msra.mxu0 0.0
  %947 = vmatpush.msra.mxu0 0.0
  %948 = vmatpush.msra.mxu0 0.0
  %949 = vmatpush.msra.mxu0 0.0
  %950 = vmatpush.msra.mxu0 0.0
  %951 = vmatpush.msra.mxu0 %v807
  %952 = vmatpush.msra.mxu0 %v753
  %953 = vmatpush.msra.mxu0 %v737
  %954 = vmatpush.msra.mxu0 %v721
  %955 = vmatmul.f32.gmra.mxu0 %v788
  %v956 = vpop.f32.mrf.mxu0
  %v957 = vadd.f32 %v784, %v956
  %958 = vdwg.mxu0
  %959 = vmatpush.msra.mxu0 0.0
  %960 = vmatpush.msra.mxu0 0.0
  %961 = vmatpush.msra.mxu0 0.0
  %962 = vmatpush.msra.mxu0 0.0
  %963 = vmatpush.msra.mxu0 0.0
  %964 = vmatpush.msra.mxu0 0.0
  %965 = vmatpush.msra.mxu0 0.0
  %966 = vmatpush.msra.mxu0 0.0
  %967 = vmatpush.msra.mxu0 0.0
  %968 = vmatpush.msra.mxu0 0.0
  %969 = vmatpush.msra.mxu0 0.0
  %970 = vmatpush.msra.mxu0 0.0
  %971 = vmatpush.msra.mxu0 %v810
  %972 = vmatpush.msra.mxu0 %v754
  %973 = vmatpush.msra.mxu0 %v738
  %974 = vmatpush.msra.mxu0 %v722
  %975 = vmatmul.f32.gmra.mxu0 %v788
  %v976 = vpop.f32.mrf.mxu0
  %v977 = vadd.f32 %v784, %v976
  %978 = vdwg.mxu0
  %979 = vmatpush.msra.mxu0 0.0
  %980 = vmatpush.msra.mxu0 0.0
  %981 = vmatpush.msra.mxu0 0.0
  %982 = vmatpush.msra.mxu0 0.0
  %983 = vmatpush.msra.mxu0 0.0
  %984 = vmatpush.msra.mxu0 0.0
  %985 = vmatpush.msra.mxu0 0.0
  %986 = vmatpush.msra.mxu0 0.0
  %987 = vmatpush.msra.mxu0 0.0
  %988 = vmatpush.msra.mxu0 0.0
  %989 = vmatpush.msra.mxu0 0.0
  %990 = vmatpush.msra.mxu0 0.0
  %991 = vmatpush.msra.mxu0 %v813
  %992 = vmatpush.msra.mxu0 %v755
  %993 = vmatpush.msra.mxu0 %v739
  %994 = vmatpush.msra.mxu0 %v723
  %995 = vmatmul.f32.gmra.mxu0 %v788
  %v996 = vpop.f32.mrf.mxu0
  %v997 = vadd.f32 %v784, %v996
  %998 = vdwg.mxu0
  %999 = vmatpush.msra.mxu0 0.0
  %1000 = vmatpush.msra.mxu0 0.0
  %1001 = vmatpush.msra.mxu0 0.0
  %1002 = vmatpush.msra.mxu0 0.0
  %1003 = vmatpush.msra.mxu0 0.0
  %1004 = vmatpush.msra.mxu0 0.0
  %1005 = vmatpush.msra.mxu0 0.0
  %1006 = vmatpush.msra.mxu0 0.0
  %1007 = vmatpush.msra.mxu0 0.0
  %1008 = vmatpush.msra.mxu0 0.0
  %1009 = vmatpush.msra.mxu0 0.0
  %1010 = vmatpush.msra.mxu0 0.0
  %1011 = vmatpush.msra.mxu0 %v816
  %1012 = vmatpush.msra.mxu0 %v756
  %1013 = vmatpush.msra.mxu0 %v740
  %1014 = vmatpush.msra.mxu0 %v724
  %1015 = vmatmul.f32.gmra.mxu0 %v788
  %v1016 = vpop.f32.mrf.mxu0
  %v1017 = vadd.f32 %v784, %v1016
  %1018 = vdwg.mxu0
  %1019 = vmatpush.msra.mxu0 0.0
  %1020 = vmatpush.msra.mxu0 0.0
  %1021 = vmatpush.msra.mxu0 0.0
  %1022 = vmatpush.msra.mxu0 0.0
  %1023 = vmatpush.msra.mxu0 0.0
  %1024 = vmatpush.msra.mxu0 0.0
  %1025 = vmatpush.msra.mxu0 0.0
  %1026 = vmatpush.msra.mxu0 0.0
  %1027 = vmatpush.msra.mxu0 0.0
  %1028 = vmatpush.msra.mxu0 0.0
  %1029 = vmatpush.msra.mxu0 0.0
  %1030 = vmatpush.msra.mxu0 0.0
  %1031 = vmatpush.msra.mxu0 %v819
  %1032 = vmatpush.msra.mxu0 %v757
  %1033 = vmatpush.msra.mxu0 %v741
  %1034 = vmatpush.msra.mxu0 %v725
  %1035 = vmatmul.f32.gmra.mxu0 %v788
  %v1036 = vpop.f32.mrf.mxu0
  %v1037 = vadd.f32 %v784, %v1036
  %1038 = vdwg.mxu0
  %1039 = vmatpush.msra.mxu0 0.0
  %1040 = vmatpush.msra.mxu0 0.0
  %1041 = vmatpush.msra.mxu0 0.0
  %1042 = vmatpush.msra.mxu0 0.0
  %1043 = vmatpush.msra.mxu0 0.0
  %1044 = vmatpush.msra.mxu0 0.0
  %1045 = vmatpush.msra.mxu0 0.0
  %1046 = vmatpush.msra.mxu0 0.0
  %1047 = vmatpush.msra.mxu0 0.0
  %1048 = vmatpush.msra.mxu0 0.0
  %1049 = vmatpush.msra.mxu0 0.0
  %1050 = vmatpush.msra.mxu0 0.0
  %1051 = vmatpush.msra.mxu0 %v822
  %1052 = vmatpush.msra.mxu0 %v758
  %1053 = vmatpush.msra.mxu0 %v742
  %1054 = vmatpush.msra.mxu0 %v726
  %1055 = vmatmul.f32.gmra.mxu0 %v788
  %v1056 = vpop.f32.mrf.mxu0
  %v1057 = vadd.f32 %v784, %v1056
  %1058 = vdwg.mxu0
  %1059 = vmatpush.msra.mxu0 0.0
  %1060 = vmatpush.msra.mxu0 0.0
  %1061 = vmatpush.msra.mxu0 0.0
  %1062 = vmatpush.msra.mxu0 0.0
  %1063 = vmatpush.msra.mxu0 0.0
  %1064 = vmatpush.msra.mxu0 0.0
  %1065 = vmatpush.msra.mxu0 0.0
  %1066 = vmatpush.msra.mxu0 0.0
  %1067 = vmatpush.msra.mxu0 0.0
  %1068 = vmatpush.msra.mxu0 0.0
  %1069 = vmatpush.msra.mxu0 0.0
  %1070 = vmatpush.msra.mxu0 0.0
  %1071 = vmatpush.msra.mxu0 %v825
  %1072 = vmatpush.msra.mxu0 %v759
  %1073 = vmatpush.msra.mxu0 %v743
  %1074 = vmatpush.msra.mxu0 %v727
  %1075 = vmatmul.f32.gmra.mxu0 %v788
  %v1076 = vpop.f32.mrf.mxu0
  %v1077 = vadd.f32 %v784, %v1076
  %1078 = vdwg.mxu0
  %1079 = vmatpush.msra.mxu0 0.0
  %1080 = vmatpush.msra.mxu0 0.0
  %1081 = vmatpush.msra.mxu0 0.0
  %1082 = vmatpush.msra.mxu0 0.0
  %1083 = vmatpush.msra.mxu0 0.0
  %1084 = vmatpush.msra.mxu0 0.0
  %1085 = vmatpush.msra.mxu0 0.0
  %1086 = vmatpush.msra.mxu0 0.0
  %1087 = vmatpush.msra.mxu0 0.0
  %1088 = vmatpush.msra.mxu0 0.0
  %1089 = vmatpush.msra.mxu0 0.0
  %1090 = vmatpush.msra.mxu0 0.0
  %1091 = vmatpush.msra.mxu0 %v828
  %1092 = vmatpush.msra.mxu0 %v760
  %1093 = vmatpush.msra.mxu0 %v744
  %1094 = vmatpush.msra.mxu0 %v728
  %1095 = vmatmul.f32.gmra.mxu0 %v788
  %v1096 = vpop.f32.mrf.mxu0
  %v1097 = vadd.f32 %v784, %v1096
  %1098 = vdwg.mxu0
  %1099 = vmatpush.msra.mxu0 0.0
  %1100 = vmatpush.msra.mxu0 0.0
  %1101 = vmatpush.msra.mxu0 0.0
  %1102 = vmatpush.msra.mxu0 0.0
  %1103 = vmatpush.msra.mxu0 0.0
  %1104 = vmatpush.msra.mxu0 0.0
  %1105 = vmatpush.msra.mxu0 0.0
  %1106 = vmatpush.msra.mxu0 0.0
  %1107 = vmatpush.msra.mxu0 0.0
  %1108 = vmatpush.msra.mxu0 0.0
  %1109 = vmatpush.msra.mxu0 0.0
  %1110 = vmatpush.msra.mxu0 0.0
  %1111 = vmatpush.msra.mxu0 %v831
  %1112 = vmatpush.msra.mxu0 %v761
  %1113 = vmatpush.msra.mxu0 %v745
  %1114 = vmatpush.msra.mxu0 %v729
  %1115 = vmatmul.f32.gmra.mxu0 %v788
  %v1116 = vpop.f32.mrf.mxu0
  %v1117 = vadd.f32 %v784, %v1116
  %1118 = vdwg.mxu0
  %1119 = vmatpush.msra.mxu0 0.0
  %1120 = vmatpush.msra.mxu0 0.0
  %1121 = vmatpush.msra.mxu0 0.0
  %1122 = vmatpush.msra.mxu0 0.0
  %1123 = vmatpush.msra.mxu0 0.0
  %1124 = vmatpush.msra.mxu0 0.0
  %1125 = vmatpush.msra.mxu0 0.0
  %1126 = vmatpush.msra.mxu0 0.0
  %1127 = vmatpush.msra.mxu0 0.0
  %1128 = vmatpush.msra.mxu0 0.0
  %1129 = vmatpush.msra.mxu0 0.0
  %1130 = vmatpush.msra.mxu0 0.0
  %1131 = vmatpush.msra.mxu0 %v834
  %1132 = vmatpush.msra.mxu0 %v762
  %1133 = vmatpush.msra.mxu0 %v746
  %1134 = vmatpush.msra.mxu0 %v730
  %1135 = vmatmul.f32.gmra.mxu0 %v788
  %v1136 = vpop.f32.mrf.mxu0
  %v1137 = vadd.f32 %v784, %v1136
  %1138 = vdwg.mxu0
  %1139 = vmatpush.msra.mxu0 0.0
  %1140 = vmatpush.msra.mxu0 0.0
  %1141 = vmatpush.msra.mxu0 0.0
  %1142 = vmatpush.msra.mxu0 0.0
  %1143 = vmatpush.msra.mxu0 0.0
  %1144 = vmatpush.msra.mxu0 0.0
  %1145 = vmatpush.msra.mxu0 0.0
  %1146 = vmatpush.msra.mxu0 0.0
  %1147 = vmatpush.msra.mxu0 0.0
  %1148 = vmatpush.msra.mxu0 0.0
  %1149 = vmatpush.msra.mxu0 0.0
  %1150 = vmatpush.msra.mxu0 0.0
  %1151 = vmatpush.msra.mxu0 %v837
  %1152 = vmatpush.msra.mxu0 %v763
  %1153 = vmatpush.msra.mxu0 %v747
  %1154 = vmatpush.msra.mxu0 %v731
  %1155 = vmatmul.f32.gmra.mxu0 %v788
  %v1156 = vpop.f32.mrf.mxu0
  %v1157 = vadd.f32 %v784, %v1156
  %1158 = vdwg.mxu0
  %v1159 = vmax.f32 %v857, 0.0
  %v1160 = vmax.f32 %v877, 0.0
  %v1161 = vmax.f32 %v897, 0.0
  %v1162 = vmax.f32 %v917, 0.0
  %v1163 = vmax.f32 %v937, 0.0
  %v1164 = vmax.f32 %v957, 0.0
  %v1165 = vmax.f32 %v977, 0.0
  %v1166 = vmax.f32 %v997, 0.0
  %v1167 = vmax.f32 %v1017, 0.0
  %v1168 = vmax.f32 %v1037, 0.0
  %v1169 = vmax.f32 %v1057, 0.0
  %v1170 = vmax.f32 %v1077, 0.0
  %v1171 = vmax.f32 %v1097, 0.0
  %v1172 = vmax.f32 %v1117, 0.0
  %v1173 = vmax.f32 %v1137, 0.0
  %v1174 = vmax.f32 %v1157, 0.0
  %1175 = vst [vmem:[#allocation4] sm:$0x3f] %v1159
  %1176 = vst [vmem:[#allocation4 + $0x8] sm:$0x3f] %v1160
  %1177 = vst [vmem:[#allocation4 + $0x10] sm:$0x3f] %v1161
  %1178 = vst [vmem:[#allocation4 + $0x18] sm:$0x3f] %v1162
  %1179 = vst [vmem:[#allocation4 + $0x20] sm:$0x3f] %v1163
  %1180 = vst [vmem:[#allocation4 + $0x28] sm:$0x3f] %v1164
  %1181 = vst [vmem:[#allocation4 + $0x30] sm:$0x3f] %v1165
  %1182 = vst [vmem:[#allocation4 + $0x38] sm:$0x3f] %v1166
  %1183 = vst [vmem:[#allocation4 + $0x40] sm:$0x3f] %v1167
  %1184 = vst [vmem:[#allocation4 + $0x48] sm:$0x3f] %v1168
  %1185 = vst [vmem:[#allocation4 + $0x50] sm:$0x3f] %v1169
  %1186 = vst [vmem:[#allocation4 + $0x58] sm:$0x3f] %v1170
  %1187 = vst [vmem:[#allocation4 + $0x60] sm:$0x3f] %v1171
  %1188 = vst [vmem:[#allocation4 + $0x68] sm:$0x3f] %v1172
  %1189 = vst [vmem:[#allocation4 + $0x70] sm:$0x3f] %v1173
  %1190 = vst [vmem:[#allocation4 + $0x78] sm:$0x3f] %v1174
  %v1191 = vld [vmem:[#allocation4] sm:$0x3f]
  %v1192 = vld [vmem:[#allocation4 + $0x8] sm:$0x3f]
  %v1193 = vld [vmem:[#allocation4 + $0x10] sm:$0x3f]
  %v1194 = vld [vmem:[#allocation4 + $0x18] sm:$0x3f]
  %v1195 = vld [vmem:[#allocation4 + $0x20] sm:$0x3f]
  %v1196 = vld [vmem:[#allocation4 + $0x28] sm:$0x3f]
  %v1197 = vld [vmem:[#allocation4 + $0x30] sm:$0x3f]
  %v1198 = vld [vmem:[#allocation4 + $0x38] sm:$0x3f]
  %v1199 = vld [vmem:[#allocation4 + $0x40] sm:$0x3f]
  %v1200 = vld [vmem:[#allocation4 + $0x48] sm:$0x3f]
  %v1201 = vld [vmem:[#allocation4 + $0x50] sm:$0x3f]
  %v1202 = vld [vmem:[#allocation4 + $0x58] sm:$0x3f]
  %v1203 = vld [vmem:[#allocation4 + $0x60] sm:$0x3f]
  %v1204 = vld [vmem:[#allocation4 + $0x68] sm:$0x3f]
  %v1205 = vld [vmem:[#allocation4 + $0x70] sm:$0x3f]
  %v1206 = vld [vmem:[#allocation4 + $0x78] sm:$0x3f]
  %v1207 = vld [vmem:[#allocation4 + $0x80] sm:$0x3f]
  %1225 = vrot.lane.b32.xlu0 %v1191, 127
  %v1226 = vpop.permute.xlu0 %1225
  %1227 = vrot.lane.b32.xlu0 %v1192, 127
  %v1228 = vpop.permute.xlu0 %1227
  %1229 = vrot.lane.b32.xlu0 %v1193, 127
  %v1230 = vpop.permute.xlu0 %1229
  %1231 = vrot.lane.b32.xlu0 %v1194, 127
  %v1232 = vpop.permute.xlu0 %1231
  %1233 = vrot.lane.b32.xlu0 %v1195, 127
  %v1234 = vpop.permute.xlu0 %1233
  %1235 = vrot.lane.b32.xlu0 %v1196, 127
  %v1236 = vpop.permute.xlu0 %1235
  %1237 = vrot.lane.b32.xlu0 %v1197, 127
  %v1238 = vpop.permute.xlu0 %1237
  %1239 = vrot.lane.b32.xlu0 %v1198, 127
  %v1240 = vpop.permute.xlu0 %1239
  %1241 = vrot.lane.b32.xlu0 %v1199, 127
  %v1242 = vpop.permute.xlu0 %1241
  %1243 = vrot.lane.b32.xlu0 %v1200, 127
  %v1244 = vpop.permute.xlu0 %1243
  %1245 = vrot.lane.b32.xlu0 %v1201, 127
  %v1246 = vpop.permute.xlu0 %1245
  %1247 = vrot.lane.b32.xlu0 %v1202, 127
  %v1248 = vpop.permute.xlu0 %1247
  %1249 = vrot.lane.b32.xlu0 %v1203, 127
  %v1250 = vpop.permute.xlu0 %1249
  %1251 = vrot.lane.b32.xlu0 %v1204, 127
  %v1252 = vpop.permute.xlu0 %1251
  %1253 = vrot.lane.b32.xlu0 %v1205, 127
  %v1254 = vpop.permute.xlu0 %1253
  %1255 = vrot.lane.b32.xlu0 %v1206, 127
  %v1256 = vpop.permute.xlu0 %1255
  %1257 = vrot.lane.b32.xlu0 %v1207, 127
  %v1258 = vpop.permute.xlu0 %1257
  %v1259 = vsel %vm83, %v1226, %v1228
  %v1260 = vsel %vm83, %v1228, %v1230
  %v1261 = vsel %vm83, %v1230, %v1232
  %v1262 = vsel %vm83, %v1232, %v1234
  %v1263 = vsel %vm83, %v1234, %v1236
  %v1264 = vsel %vm83, %v1236, %v1238
  %v1265 = vsel %vm83, %v1238, %v1240
  %v1266 = vsel %vm83, %v1240, %v1242
  %v1267 = vsel %vm83, %v1242, %v1244
  %v1268 = vsel %vm83, %v1244, %v1246
  %v1269 = vsel %vm83, %v1246, %v1248
  %v1270 = vsel %vm83, %v1248, %v1250
  %v1271 = vsel %vm83, %v1250, %v1252
  %v1272 = vsel %vm83, %v1252, %v1254
  %v1273 = vsel %vm83, %v1254, %v1256
  %v1274 = vsel %vm83, %v1256, %v1258
  %v1291 = vmax.f32 %v1191, %v1259
  %v1292 = vmax.f32 %v1192, %v1260
  %v1293 = vmax.f32 %v1193, %v1261
  %v1294 = vmax.f32 %v1194, %v1262
  %v1295 = vmax.f32 %v1195, %v1263
  %v1296 = vmax.f32 %v1196, %v1264
  %v1297 = vmax.f32 %v1197, %v1265
  %v1298 = vmax.f32 %v1198, %v1266
  %v1299 = vmax.f32 %v1199, %v1267
  %v1300 = vmax.f32 %v1200, %v1268
  %v1301 = vmax.f32 %v1201, %v1269
  %v1302 = vmax.f32 %v1202, %v1270
  %v1303 = vmax.f32 %v1203, %v1271
  %v1304 = vmax.f32 %v1204, %v1272
  %v1305 = vmax.f32 %v1205, %v1273
  %v1306 = vmax.f32 %v1206, %v1274
  %v1308 = vmax.f32 %v1207, %v1258
  %1326 = vrot.lane.b32.xlu0 %v1291, 96
  %v1327 = vpop.permute.xlu0 %1326
  %1328 = vrot.lane.b32.xlu0 %v1292, 96
  %v1329 = vpop.permute.xlu0 %1328
  %1330 = vrot.lane.b32.xlu0 %v1293, 96
  %v1331 = vpop.permute.xlu0 %1330
  %1332 = vrot.lane.b32.xlu0 %v1294, 96
  %v1333 = vpop.permute.xlu0 %1332
  %1334 = vrot.lane.b32.xlu0 %v1295, 96
  %v1335 = vpop.permute.xlu0 %1334
  %1336 = vrot.lane.b32.xlu0 %v1296, 96
  %v1337 = vpop.permute.xlu0 %1336
  %1338 = vrot.lane.b32.xlu0 %v1297, 96
  %v1339 = vpop.permute.xlu0 %1338
  %1340 = vrot.lane.b32.xlu0 %v1298, 96
  %v1341 = vpop.permute.xlu0 %1340
  %1342 = vrot.lane.b32.xlu0 %v1299, 96
  %v1343 = vpop.permute.xlu0 %1342
  %1344 = vrot.lane.b32.xlu0 %v1300, 96
  %v1345 = vpop.permute.xlu0 %1344
  %1346 = vrot.lane.b32.xlu0 %v1301, 96
  %v1347 = vpop.permute.xlu0 %1346
  %1348 = vrot.lane.b32.xlu0 %v1302, 96
  %v1349 = vpop.permute.xlu0 %1348
  %1350 = vrot.lane.b32.xlu0 %v1303, 96
  %v1351 = vpop.permute.xlu0 %1350
  %1352 = vrot.lane.b32.xlu0 %v1304, 96
  %v1353 = vpop.permute.xlu0 %1352
  %1354 = vrot.lane.b32.xlu0 %v1305, 96
  %v1355 = vpop.permute.xlu0 %1354
  %1356 = vrot.lane.b32.xlu0 %v1306, 96
  %v1357 = vpop.permute.xlu0 %1356
  %1358 = vrot.lane.b32.xlu0 %v1308, 96
  %v1359 = vpop.permute.xlu0 %1358
  %v1360 = vsel %vm195, %v1327, %v1329
  %v1361 = vsel %vm195, %v1329, %v1331
  %v1362 = vsel %vm195, %v1331, %v1333
  %v1363 = vsel %vm195, %v1333, %v1335
  %v1364 = vsel %vm195, %v1335, %v1337
  %v1365 = vsel %vm195, %v1337, %v1339
  %v1366 = vsel %vm195, %v1339, %v1341
  %v1367 = vsel %vm195, %v1341, %v1343
  %v1368 = vsel %vm195, %v1343, %v1345
  %v1369 = vsel %vm195, %v1345, %v1347
  %v1370 = vsel %vm195, %v1347, %v1349
  %v1371 = vsel %vm195, %v1349, %v1351
  %v1372 = vsel %vm195, %v1351, %v1353
  %v1373 = vsel %vm195, %v1353, %v1355
  %v1374 = vsel %vm195, %v1355, %v1357
  %v1375 = vsel %vm195, %v1357, %v1359
  %v1392 = vmax.f32 %v1291, %v1360
  %v1393 = vmax.f32 %v1292, %v1361
  %v1394 = vmax.f32 %v1293, %v1362
  %v1395 = vmax.f32 %v1294, %v1363
  %v1396 = vmax.f32 %v1295, %v1364
  %v1397 = vmax.f32 %v1296, %v1365
  %v1398 = vmax.f32 %v1297, %v1366
  %v1399 = vmax.f32 %v1298, %v1367
  %v1400 = vmax.f32 %v1299, %v1368
  %v1401 = vmax.f32 %v1300, %v1369
  %v1402 = vmax.f32 %v1301, %v1370
  %v1403 = vmax.f32 %v1302, %v1371
  %v1404 = vmax.f32 %v1303, %v1372
  %v1405 = vmax.f32 %v1304, %v1373
  %v1406 = vmax.f32 %v1305, %v1374
  %v1407 = vmax.f32 %v1306, %v1375
  %1408 = vst [vmem:[#allocation5] sm:$0x3f] %v1392
  %1409 = vst [vmem:[#allocation5 + $0x8] sm:$0x3f] %v1393
  %1410 = vst [vmem:[#allocation5 + $0x10] sm:$0x3f] %v1394
  %1411 = vst [vmem:[#allocation5 + $0x18] sm:$0x3f] %v1395
  %1412 = vst [vmem:[#allocation5 + $0x20] sm:$0x3f] %v1396
  %1413 = vst [vmem:[#allocation5 + $0x28] sm:$0x3f] %v1397
  %1414 = vst [vmem:[#allocation5 + $0x30] sm:$0x3f] %v1398
  %1415 = vst [vmem:[#allocation5 + $0x38] sm:$0x3f] %v1399
  %1416 = vst [vmem:[#allocation5 + $0x40] sm:$0x3f] %v1400
  %1417 = vst [vmem:[#allocation5 + $0x48] sm:$0x3f] %v1401
  %1418 = vst [vmem:[#allocation5 + $0x50] sm:$0x3f] %v1402
  %1419 = vst [vmem:[#allocation5 + $0x58] sm:$0x3f] %v1403
  %1420 = vst [vmem:[#allocation5 + $0x60] sm:$0x3f] %v1404
  %1421 = vst [vmem:[#allocation5 + $0x68] sm:$0x3f] %v1405
  %1422 = vst [vmem:[#allocation5 + $0x70] sm:$0x3f] %v1406
  %1423 = vst [vmem:[#allocation5 + $0x78] sm:$0x3f] %v1407
  %v1424 = vld [vmem:[#allocation5] sm:$0x3f]
  %v1425 = vld [vmem:[#allocation5 + $0x8] sm:$0x3f]
  %v1426 = vld [vmem:[#allocation5 + $0x10] sm:$0x3f]
  %v1427 = vld [vmem:[#allocation5 + $0x18] sm:$0x3f]
  %v1428 = vld [vmem:[#allocation5 + $0x20] sm:$0x3f]
  %v1429 = vld [vmem:[#allocation5 + $0x28] sm:$0x3f]
  %v1430 = vld [vmem:[#allocation5 + $0x30] sm:$0x3f]
  %v1431 = vld [vmem:[#allocation5 + $0x38] sm:$0x3f]
  %v1432 = vld [vmem:[#allocation5 + $0x40] sm:$0x3f]
  %v1433 = vld [vmem:[#allocation5 + $0x48] sm:$0x3f]
  %v1434 = vld [vmem:[#allocation5 + $0x50] sm:$0x3f]
  %v1435 = vld [vmem:[#allocation5 + $0x58] sm:$0x3f]
  %v1436 = vld [vmem:[#allocation5 + $0x60] sm:$0x3f]
  %v1437 = vld [vmem:[#allocation5 + $0x68] sm:$0x3f]
  %v1438 = vld [vmem:[#allocation5 + $0x70] sm:$0x3f]
  %v1439 = vld [vmem:[#allocation5 + $0x78] sm:$0x3f]
  %1440 = vst [vmem:[#allocation6] sm:$0x3f] %v1424
  %1441 = vst [vmem:[#allocation6 + $0x8] sm:$0x3f] %v1425
  %1442 = vst [vmem:[#allocation6 + $0x10] sm:$0x3f] %v1426
  %1443 = vst [vmem:[#allocation6 + $0x18] sm:$0x3f] %v1427
  %1444 = vst [vmem:[#allocation6 + $0x20] sm:$0x3f] %v1428
  %1445 = vst [vmem:[#allocation6 + $0x28] sm:$0x3f] %v1429
  %1446 = vst [vmem:[#allocation6 + $0x30] sm:$0x3f] %v1430
  %1447 = vst [vmem:[#allocation6 + $0x38] sm:$0x3f] %v1431
  %1448 = vst [vmem:[#allocation6 + $0x40] sm:$0x3f] %v1432
  %1449 = vst [vmem:[#allocation6 + $0x48] sm:$0x3f] %v1433
  %1450 = vst [vmem:[#allocation6 + $0x50] sm:$0x3f] %v1434
  %1451 = vst [vmem:[#allocation6 + $0x58] sm:$0x3f] %v1435
  %1452 = vst [vmem:[#allocation6 + $0x60] sm:$0x3f] %v1436
  %1453 = vst [vmem:[#allocation6 + $0x68] sm:$0x3f] %v1437
  %1454 = vst [vmem:[#allocation6 + $0x70] sm:$0x3f] %v1438
  %1455 = vst [vmem:[#allocation6 + $0x78] sm:$0x3f] %v1439
  %v1456 = vld [vmem:[#allocation5] sm:$0x3f]
  %v1457 = vld [vmem:[#allocation5 + $0x8] sm:$0x3f]
  %v1458 = vld [vmem:[#allocation5 + $0x10] sm:$0x3f]
  %v1459 = vld [vmem:[#allocation5 + $0x18] sm:$0x3f]
  %v1460 = vld [vmem:[#allocation5 + $0x20] sm:$0x3f]
  %v1461 = vld [vmem:[#allocation5 + $0x28] sm:$0x3f]
  %v1462 = vld [vmem:[#allocation5 + $0x30] sm:$0x3f]
  %v1463 = vld [vmem:[#allocation5 + $0x38] sm:$0x3f]
  %v1464 = vld [vmem:[#allocation5 + $0x40] sm:$0x3f]
  %v1465 = vld [vmem:[#allocation5 + $0x48] sm:$0x3f]
  %v1466 = vld [vmem:[#allocation5 + $0x50] sm:$0x3f]
  %v1467 = vld [vmem:[#allocation5 + $0x58] sm:$0x3f]
  %v1468 = vld [vmem:[#allocation5 + $0x60] sm:$0x3f]
  %v1469 = vld [vmem:[#allocation5 + $0x68] sm:$0x3f]
  %v1470 = vld [vmem:[#allocation5 + $0x70] sm:$0x3f]
  %v1471 = vld [vmem:[#allocation5 + $0x78] sm:$0x3f]
  %v1472 = vld [vmem:[#allocation5 + $0x80] sm:$0x3f]
  %v1490 = vrot.slane %v1456, 2
  %v1491 = vrot.slane %v1457, 2
  %v1492 = vrot.slane %v1458, 2
  %v1493 = vrot.slane %v1459, 2
  %v1494 = vrot.slane %v1460, 2
  %v1495 = vrot.slane %v1461, 2
  %v1496 = vrot.slane %v1462, 2
  %v1497 = vrot.slane %v1463, 2
  %v1498 = vrot.slane %v1464, 2
  %v1499 = vrot.slane %v1465, 2
  %v1500 = vrot.slane %v1466, 2
  %v1501 = vrot.slane %v1467, 2
  %v1502 = vrot.slane %v1468, 2
  %v1503 = vrot.slane %v1469, 2
  %v1504 = vrot.slane %v1470, 2
  %v1505 = vrot.slane %v1471, 2
  %v1506 = vrot.slane %v1472, 2
  %1507 = vrot.lane.b32.xlu0 %v1490, 126
  %v1508 = vpop.permute.xlu0 %1507
  %1509 = vrot.lane.b32.xlu0 %v1491, 126
  %v1510 = vpop.permute.xlu0 %1509
  %1511 = vrot.lane.b32.xlu0 %v1492, 126
  %v1512 = vpop.permute.xlu0 %1511
  %1513 = vrot.lane.b32.xlu0 %v1493, 126
  %v1514 = vpop.permute.xlu0 %1513
  %1515 = vrot.lane.b32.xlu0 %v1494, 126
  %v1516 = vpop.permute.xlu0 %1515
  %1517 = vrot.lane.b32.xlu0 %v1495, 126
  %v1518 = vpop.permute.xlu0 %1517
  %1519 = vrot.lane.b32.xlu0 %v1496, 126
  %v1520 = vpop.permute.xlu0 %1519
  %1521 = vrot.lane.b32.xlu0 %v1497, 126
  %v1522 = vpop.permute.xlu0 %1521
  %1523 = vrot.lane.b32.xlu0 %v1498, 126
  %v1524 = vpop.permute.xlu0 %1523
  %1525 = vrot.lane.b32.xlu0 %v1499, 126
  %v1526 = vpop.permute.xlu0 %1525
  %1527 = vrot.lane.b32.xlu0 %v1500, 126
  %v1528 = vpop.permute.xlu0 %1527
  %1529 = vrot.lane.b32.xlu0 %v1501, 126
  %v1530 = vpop.permute.xlu0 %1529
  %1531 = vrot.lane.b32.xlu0 %v1502, 126
  %v1532 = vpop.permute.xlu0 %1531
  %1533 = vrot.lane.b32.xlu0 %v1503, 126
  %v1534 = vpop.permute.xlu0 %1533
  %1535 = vrot.lane.b32.xlu0 %v1504, 126
  %v1536 = vpop.permute.xlu0 %1535
  %1537 = vrot.lane.b32.xlu0 %v1505, 126
  %v1538 = vpop.permute.xlu0 %1537
  %1539 = vrot.lane.b32.xlu0 %v1506, 126
  %v1540 = vpop.permute.xlu0 %1539
  %v1541 = vsel %vm111, %v1508, %v1510
  %v1542 = vsel %vm111, %v1510, %v1512
  %v1543 = vsel %vm111, %v1512, %v1514
  %v1544 = vsel %vm111, %v1514, %v1516
  %v1545 = vsel %vm111, %v1516, %v1518
  %v1546 = vsel %vm111, %v1518, %v1520
  %v1547 = vsel %vm111, %v1520, %v1522
  %v1548 = vsel %vm111, %v1522, %v1524
  %v1549 = vsel %vm111, %v1524, %v1526
  %v1550 = vsel %vm111, %v1526, %v1528
  %v1551 = vsel %vm111, %v1528, %v1530
  %v1552 = vsel %vm111, %v1530, %v1532
  %v1553 = vsel %vm111, %v1532, %v1534
  %v1554 = vsel %vm111, %v1534, %v1536
  %v1555 = vsel %vm111, %v1536, %v1538
  %v1556 = vsel %vm111, %v1538, %v1540
  %1573 = vst [vmem:[#allocation6] sm:$0xc0] %v1541
  %1574 = vst [vmem:[#allocation6 + $0x8] sm:$0xc0] %v1542
  %1575 = vst [vmem:[#allocation6 + $0x10] sm:$0xc0] %v1543
  %1576 = vst [vmem:[#allocation6 + $0x18] sm:$0xc0] %v1544
  %1577 = vst [vmem:[#allocation6 + $0x20] sm:$0xc0] %v1545
  %1578 = vst [vmem:[#allocation6 + $0x28] sm:$0xc0] %v1546
  %1579 = vst [vmem:[#allocation6 + $0x30] sm:$0xc0] %v1547
  %1580 = vst [vmem:[#allocation6 + $0x38] sm:$0xc0] %v1548
  %1581 = vst [vmem:[#allocation6 + $0x40] sm:$0xc0] %v1549
  %1582 = vst [vmem:[#allocation6 + $0x48] sm:$0xc0] %v1550
  %1583 = vst [vmem:[#allocation6 + $0x50] sm:$0xc0] %v1551
  %1584 = vst [vmem:[#allocation6 + $0x58] sm:$0xc0] %v1552
  %1585 = vst [vmem:[#allocation6 + $0x60] sm:$0xc0] %v1553
  %1586 = vst [vmem:[#allocation6 + $0x68] sm:$0xc0] %v1554
  %1587 = vst [vmem:[#allocation6 + $0x70] sm:$0xc0] %v1555
  %1588 = vst [vmem:[#allocation6 + $0x78] sm:$0xc0] %v1556
  %1589 = vst [vmem:[#allocation6 + $0x80] sm:$0xf] %v1541
  %1590 = vst [vmem:[#allocation6 + $0x88] sm:$0xf] %v1542
  %1591 = vst [vmem:[#allocation6 + $0x90] sm:$0xf] %v1543
  %1592 = vst [vmem:[#allocation6 + $0x98] sm:$0xf] %v1544
  %1593 = vst [vmem:[#allocation6 + $0xa0] sm:$0xf] %v1545
  %1594 = vst [vmem:[#allocation6 + $0xa8] sm:$0xf] %v1546
  %1595 = vst [vmem:[#allocation6 + $0xb0] sm:$0xf] %v1547
  %1596 = vst [vmem:[#allocation6 + $0xb8] sm:$0xf] %v1548
  %1597 = vst [vmem:[#allocation6 + $0xc0] sm:$0xf] %v1549
  %1598 = vst [vmem:[#allocation6 + $0xc8] sm:$0xf] %v1550
  %1599 = vst [vmem:[#allocation6 + $0xd0] sm:$0xf] %v1551
  %1600 = vst [vmem:[#allocation6 + $0xd8] sm:$0xf] %v1552
  %1601 = vst [vmem:[#allocation6 + $0xe0] sm:$0xf] %v1553
  %1602 = vst [vmem:[#allocation6 + $0xe8] sm:$0xf] %v1554
  %1603 = vst [vmem:[#allocation6 + $0xf0] sm:$0xf] %v1555
  %1604 = vst [vmem:[#allocation6 + $0xf8] sm:$0xf] %v1556
  %v1605 = vld [vmem:[#allocation5] sm:$0x3f]
  %v1606 = vld [vmem:[#allocation5 + $0x8] sm:$0x3f]
  %v1607 = vld [vmem:[#allocation5 + $0x10] sm:$0x3f]
  %v1608 = vld [vmem:[#allocation5 + $0x18] sm:$0x3f]
  %v1609 = vld [vmem:[#allocation5 + $0x20] sm:$0x3f]
  %v1610 = vld [vmem:[#allocation5 + $0x28] sm:$0x3f]
  %v1611 = vld [vmem:[#allocation5 + $0x30] sm:$0x3f]
  %v1612 = vld [vmem:[#allocation5 + $0x38] sm:$0x3f]
  %v1613 = vld [vmem:[#allocation5 + $0x40] sm:$0x3f]
  %v1614 = vld [vmem:[#allocation5 + $0x48] sm:$0x3f]
  %v1615 = vld [vmem:[#allocation5 + $0x50] sm:$0x3f]
  %v1616 = vld [vmem:[#allocation5 + $0x58] sm:$0x3f]
  %v1617 = vld [vmem:[#allocation5 + $0x60] sm:$0x3f]
  %v1618 = vld [vmem:[#allocation5 + $0x68] sm:$0x3f]
  %v1619 = vld [vmem:[#allocation5 + $0x70] sm:$0x3f]
  %v1620 = vld [vmem:[#allocation5 + $0x78] sm:$0x3f]
  %v1621 = vld [vmem:[#allocation5 + $0x80] sm:$0x3f]
  %v1639 = vrot.slane %v1605, 4
  %v1640 = vrot.slane %v1606, 4
  %v1641 = vrot.slane %v1607, 4
  %v1642 = vrot.slane %v1608, 4
  %v1643 = vrot.slane %v1609, 4
  %v1644 = vrot.slane %v1610, 4
  %v1645 = vrot.slane %v1611, 4
  %v1646 = vrot.slane %v1612, 4
  %v1647 = vrot.slane %v1613, 4
  %v1648 = vrot.slane %v1614, 4
  %v1649 = vrot.slane %v1615, 4
  %v1650 = vrot.slane %v1616, 4
  %v1651 = vrot.slane %v1617, 4
  %v1652 = vrot.slane %v1618, 4
  %v1653 = vrot.slane %v1619, 4
  %v1654 = vrot.slane %v1620, 4
  %v1655 = vrot.slane %v1621, 4
  %1656 = vrot.lane.b32.xlu0 %v1639, 124
  %v1657 = vpop.permute.xlu0 %1656
  %1658 = vrot.lane.b32.xlu0 %v1640, 124
  %v1659 = vpop.permute.xlu0 %1658
  %1660 = vrot.lane.b32.xlu0 %v1641, 124
  %v1661 = vpop.permute.xlu0 %1660
  %1662 = vrot.lane.b32.xlu0 %v1642, 124
  %v1663 = vpop.permute.xlu0 %1662
  %1664 = vrot.lane.b32.xlu0 %v1643, 124
  %v1665 = vpop.permute.xlu0 %1664
  %1666 = vrot.lane.b32.xlu0 %v1644, 124
  %v1667 = vpop.permute.xlu0 %1666
  %1668 = vrot.lane.b32.xlu0 %v1645, 124
  %v1669 = vpop.permute.xlu0 %1668
  %1670 = vrot.lane.b32.xlu0 %v1646, 124
  %v1671 = vpop.permute.xlu0 %1670
  %1672 = vrot.lane.b32.xlu0 %v1647, 124
  %v1673 = vpop.permute.xlu0 %1672
  %1674 = vrot.lane.b32.xlu0 %v1648, 124
  %v1675 = vpop.permute.xlu0 %1674
  %1676 = vrot.lane.b32.xlu0 %v1649, 124
  %v1677 = vpop.permute.xlu0 %1676
  %1678 = vrot.lane.b32.xlu0 %v1650, 124
  %v1679 = vpop.permute.xlu0 %1678
  %1680 = vrot.lane.b32.xlu0 %v1651, 124
  %v1681 = vpop.permute.xlu0 %1680
  %1682 = vrot.lane.b32.xlu0 %v1652, 124
  %v1683 = vpop.permute.xlu0 %1682
  %1684 = vrot.lane.b32.xlu0 %v1653, 124
  %v1685 = vpop.permute.xlu0 %1684
  %1686 = vrot.lane.b32.xlu0 %v1654, 124
  %v1687 = vpop.permute.xlu0 %1686
  %1688 = vrot.lane.b32.xlu0 %v1655, 124
  %v1689 = vpop.permute.xlu0 %1688
  %v1690 = vsel %vm167, %v1657, %v1659
  %v1691 = vsel %vm167, %v1659, %v1661
  %v1692 = vsel %vm167, %v1661, %v1663
  %v1693 = vsel %vm167, %v1663, %v1665
  %v1694 = vsel %vm167, %v1665, %v1667
  %v1695 = vsel %vm167, %v1667, %v1669
  %v1696 = vsel %vm167, %v1669, %v1671
  %v1697 = vsel %vm167, %v1671, %v1673
  %v1698 = vsel %vm167, %v1673, %v1675
  %v1699 = vsel %vm167, %v1675, %v1677
  %v1700 = vsel %vm167, %v1677, %v1679
  %v1701 = vsel %vm167, %v1679, %v1681
  %v1702 = vsel %vm167, %v1681, %v1683
  %v1703 = vsel %vm167, %v1683, %v1685
  %v1704 = vsel %vm167, %v1685, %v1687
  %v1705 = vsel %vm167, %v1687, %v1689
  %1722 = vst [vmem:[#allocation6 + $0x80] sm:$0xf0] %v1690
  %1723 = vst [vmem:[#allocation6 + $0x88] sm:$0xf0] %v1691
  %1724 = vst [vmem:[#allocation6 + $0x90] sm:$0xf0] %v1692
  %1725 = vst [vmem:[#allocation6 + $0x98] sm:$0xf0] %v1693
  %1726 = vst [vmem:[#allocation6 + $0xa0] sm:$0xf0] %v1694
  %1727 = vst [vmem:[#allocation6 + $0xa8] sm:$0xf0] %v1695
  %1728 = vst [vmem:[#allocation6 + $0xb0] sm:$0xf0] %v1696
  %1729 = vst [vmem:[#allocation6 + $0xb8] sm:$0xf0] %v1697
  %1730 = vst [vmem:[#allocation6 + $0xc0] sm:$0xf0] %v1698
  %1731 = vst [vmem:[#allocation6 + $0xc8] sm:$0xf0] %v1699
  %1732 = vst [vmem:[#allocation6 + $0xd0] sm:$0xf0] %v1700
  %1733 = vst [vmem:[#allocation6 + $0xd8] sm:$0xf0] %v1701
  %1734 = vst [vmem:[#allocation6 + $0xe0] sm:$0xf0] %v1702
  %1735 = vst [vmem:[#allocation6 + $0xe8] sm:$0xf0] %v1703
  %1736 = vst [vmem:[#allocation6 + $0xf0] sm:$0xf0] %v1704
  %1737 = vst [vmem:[#allocation6 + $0xf8] sm:$0xf0] %v1705
  %1738 = vst [vmem:[#allocation6 + $0x100] sm:$0x3] %v1690
  %1739 = vst [vmem:[#allocation6 + $0x108] sm:$0x3] %v1691
  %1740 = vst [vmem:[#allocation6 + $0x110] sm:$0x3] %v1692
  %1741 = vst [vmem:[#allocation6 + $0x118] sm:$0x3] %v1693
  %1742 = vst [vmem:[#allocation6 + $0x120] sm:$0x3] %v1694
  %1743 = vst [vmem:[#allocation6 + $0x128] sm:$0x3] %v1695
  %1744 = vst [vmem:[#allocation6 + $0x130] sm:$0x3] %v1696
  %1745 = vst [vmem:[#allocation6 + $0x138] sm:$0x3] %v1697
  %1746 = vst [vmem:[#allocation6 + $0x140] sm:$0x3] %v1698
  %1747 = vst [vmem:[#allocation6 + $0x148] sm:$0x3] %v1699
  %1748 = vst [vmem:[#allocation6 + $0x150] sm:$0x3] %v1700
  %1749 = vst [vmem:[#allocation6 + $0x158] sm:$0x3] %v1701
  %1750 = vst [vmem:[#allocation6 + $0x160] sm:$0x3] %v1702
  %1751 = vst [vmem:[#allocation6 + $0x168] sm:$0x3] %v1703
  %1752 = vst [vmem:[#allocation6 + $0x170] sm:$0x3] %v1704
  %1753 = vst [vmem:[#allocation6 + $0x178] sm:$0x3] %v1705
  %v1754 = vld [vmem:[#allocation5] sm:$0x3f]
  %v1755 = vld [vmem:[#allocation5 + $0x8] sm:$0x3f]
  %v1756 = vld [vmem:[#allocation5 + $0x10] sm:$0x3f]
  %v1757 = vld [vmem:[#allocation5 + $0x18] sm:$0x3f]
  %v1758 = vld [vmem:[#allocation5 + $0x20] sm:$0x3f]
  %v1759 = vld [vmem:[#allocation5 + $0x28] sm:$0x3f]
  %v1760 = vld [vmem:[#allocation5 + $0x30] sm:$0x3f]
  %v1761 = vld [vmem:[#allocation5 + $0x38] sm:$0x3f]
  %v1762 = vld [vmem:[#allocation5 + $0x40] sm:$0x3f]
  %v1763 = vld [vmem:[#allocation5 + $0x48] sm:$0x3f]
  %v1764 = vld [vmem:[#allocation5 + $0x50] sm:$0x3f]
  %v1765 = vld [vmem:[#allocation5 + $0x58] sm:$0x3f]
  %v1766 = vld [vmem:[#allocation5 + $0x60] sm:$0x3f]
  %v1767 = vld [vmem:[#allocation5 + $0x68] sm:$0x3f]
  %v1768 = vld [vmem:[#allocation5 + $0x70] sm:$0x3f]
  %v1769 = vld [vmem:[#allocation5 + $0x78] sm:$0x3f]
  %v1770 = vld [vmem:[#allocation5 + $0x80] sm:$0x3f]
  %v1788 = vrot.slane %v1754, 6
  %v1789 = vrot.slane %v1755, 6
  %v1790 = vrot.slane %v1756, 6
  %v1791 = vrot.slane %v1757, 6
  %v1792 = vrot.slane %v1758, 6
  %v1793 = vrot.slane %v1759, 6
  %v1794 = vrot.slane %v1760, 6
  %v1795 = vrot.slane %v1761, 6
  %v1796 = vrot.slane %v1762, 6
  %v1797 = vrot.slane %v1763, 6
  %v1798 = vrot.slane %v1764, 6
  %v1799 = vrot.slane %v1765, 6
  %v1800 = vrot.slane %v1766, 6
  %v1801 = vrot.slane %v1767, 6
  %v1802 = vrot.slane %v1768, 6
  %v1803 = vrot.slane %v1769, 6
  %v1804 = vrot.slane %v1770, 6
  %1805 = vrot.lane.b32.xlu0 %v1788, 122
  %v1806 = vpop.permute.xlu0 %1805
  %1807 = vrot.lane.b32.xlu0 %v1789, 122
  %v1808 = vpop.permute.xlu0 %1807
  %1809 = vrot.lane.b32.xlu0 %v1790, 122
  %v1810 = vpop.permute.xlu0 %1809
  %1811 = vrot.lane.b32.xlu0 %v1791, 122
  %v1812 = vpop.permute.xlu0 %1811
  %1813 = vrot.lane.b32.xlu0 %v1792, 122
  %v1814 = vpop.permute.xlu0 %1813
  %1815 = vrot.lane.b32.xlu0 %v1793, 122
  %v1816 = vpop.permute.xlu0 %1815
  %1817 = vrot.lane.b32.xlu0 %v1794, 122
  %v1818 = vpop.permute.xlu0 %1817
  %1819 = vrot.lane.b32.xlu0 %v1795, 122
  %v1820 = vpop.permute.xlu0 %1819
  %1821 = vrot.lane.b32.xlu0 %v1796, 122
  %v1822 = vpop.permute.xlu0 %1821
  %1823 = vrot.lane.b32.xlu0 %v1797, 122
  %v1824 = vpop.permute.xlu0 %1823
  %1825 = vrot.lane.b32.xlu0 %v1798, 122
  %v1826 = vpop.permute.xlu0 %1825
  %1827 = vrot.lane.b32.xlu0 %v1799, 122
  %v1828 = vpop.permute.xlu0 %1827
  %1829 = vrot.lane.b32.xlu0 %v1800, 122
  %v1830 = vpop.permute.xlu0 %1829
  %1831 = vrot.lane.b32.xlu0 %v1801, 122
  %v1832 = vpop.permute.xlu0 %1831
  %1833 = vrot.lane.b32.xlu0 %v1802, 122
  %v1834 = vpop.permute.xlu0 %1833
  %1835 = vrot.lane.b32.xlu0 %v1803, 122
  %v1836 = vpop.permute.xlu0 %1835
  %1837 = vrot.lane.b32.xlu0 %v1804, 122
  %v1838 = vpop.permute.xlu0 %1837
  %vm1839 = vcmask 998400
  %v1840 = vsel %vm1839, %v1806, %v1808
  %v1841 = vsel %vm1839, %v1808, %v1810
  %v1842 = vsel %vm1839, %v1810, %v1812
  %v1843 = vsel %vm1839, %v1812, %v1814
  %v1844 = vsel %vm1839, %v1814, %v1816
  %v1845 = vsel %vm1839, %v1816, %v1818
  %v1846 = vsel %vm1839, %v1818, %v1820
  %v1847 = vsel %vm1839, %v1820, %v1822
  %v1848 = vsel %vm1839, %v1822, %v1824
  %v1849 = vsel %vm1839, %v1824, %v1826
  %v1850 = vsel %vm1839, %v1826, %v1828
  %v1851 = vsel %vm1839, %v1828, %v1830
  %v1852 = vsel %vm1839, %v1830, %v1832
  %v1853 = vsel %vm1839, %v1832, %v1834
  %v1854 = vsel %vm1839, %v1834, %v1836
  %v1855 = vsel %vm1839, %v1836, %v1838
  %1872 = vst [vmem:[#allocation6 + $0x100] sm:$0xfc] %v1840
  %1873 = vst [vmem:[#allocation6 + $0x108] sm:$0xfc] %v1841
  %1874 = vst [vmem:[#allocation6 + $0x110] sm:$0xfc] %v1842
  %1875 = vst [vmem:[#allocation6 + $0x118] sm:$0xfc] %v1843
  %1876 = vst [vmem:[#allocation6 + $0x120] sm:$0xfc] %v1844
  %1877 = vst [vmem:[#allocation6 + $0x128] sm:$0xfc] %v1845
  %1878 = vst [vmem:[#allocation6 + $0x130] sm:$0xfc] %v1846
  %1879 = vst [vmem:[#allocation6 + $0x138] sm:$0xfc] %v1847
  %1880 = vst [vmem:[#allocation6 + $0x140] sm:$0xfc] %v1848
  %1881 = vst [vmem:[#allocation6 + $0x148] sm:$0xfc] %v1849
  %1882 = vst [vmem:[#allocation6 + $0x150] sm:$0xfc] %v1850
  %1883 = vst [vmem:[#allocation6 + $0x158] sm:$0xfc] %v1851
  %1884 = vst [vmem:[#allocation6 + $0x160] sm:$0xfc] %v1852
  %1885 = vst [vmem:[#allocation6 + $0x168] sm:$0xfc] %v1853
  %1886 = vst [vmem:[#allocation6 + $0x170] sm:$0xfc] %v1854
  %1887 = vst [vmem:[#allocation6 + $0x178] sm:$0xfc] %v1855
  %v1888 = vld [vmem:[#allocation5] sm:$0x3f]
  %v1889 = vld [vmem:[#allocation5 + $0x8] sm:$0x3f]
  %v1890 = vld [vmem:[#allocation5 + $0x10] sm:$0x3f]
  %v1891 = vld [vmem:[#allocation5 + $0x18] sm:$0x3f]
  %v1892 = vld [vmem:[#allocation5 + $0x20] sm:$0x3f]
  %v1893 = vld [vmem:[#allocation5 + $0x28] sm:$0x3f]
  %v1894 = vld [vmem:[#allocation5 + $0x30] sm:$0x3f]
  %v1895 = vld [vmem:[#allocation5 + $0x38] sm:$0x3f]
  %v1896 = vld [vmem:[#allocation5 + $0x40] sm:$0x3f]
  %v1897 = vld [vmem:[#allocation5 + $0x48] sm:$0x3f]
  %v1898 = vld [vmem:[#allocation5 + $0x50] sm:$0x3f]
  %v1899 = vld [vmem:[#allocation5 + $0x58] sm:$0x3f]
  %v1900 = vld [vmem:[#allocation5 + $0x60] sm:$0x3f]
  %v1901 = vld [vmem:[#allocation5 + $0x68] sm:$0x3f]
  %v1902 = vld [vmem:[#allocation5 + $0x70] sm:$0x3f]
  %v1903 = vld [vmem:[#allocation5 + $0x78] sm:$0x3f]
  %v1904 = vld [vmem:[#allocation5 + $0x80] sm:$0x3f]
  %1922 = vrot.lane.b32.xlu0 %v1888, 120
  %v1923 = vpop.permute.xlu0 %1922
  %1924 = vrot.lane.b32.xlu0 %v1889, 120
  %v1925 = vpop.permute.xlu0 %1924
  %1926 = vrot.lane.b32.xlu0 %v1890, 120
  %v1927 = vpop.permute.xlu0 %1926
  %1928 = vrot.lane.b32.xlu0 %v1891, 120
  %v1929 = vpop.permute.xlu0 %1928
  %1930 = vrot.lane.b32.xlu0 %v1892, 120
  %v1931 = vpop.permute.xlu0 %1930
  %1932 = vrot.lane.b32.xlu0 %v1893, 120
  %v1933 = vpop.permute.xlu0 %1932
  %1934 = vrot.lane.b32.xlu0 %v1894, 120
  %v1935 = vpop.permute.xlu0 %1934
  %1936 = vrot.lane.b32.xlu0 %v1895, 120
  %v1937 = vpop.permute.xlu0 %1936
  %1938 = vrot.lane.b32.xlu0 %v1896, 120
  %v1939 = vpop.permute.xlu0 %1938
  %1940 = vrot.lane.b32.xlu0 %v1897, 120
  %v1941 = vpop.permute.xlu0 %1940
  %1942 = vrot.lane.b32.xlu0 %v1898, 120
  %v1943 = vpop.permute.xlu0 %1942
  %1944 = vrot.lane.b32.xlu0 %v1899, 120
  %v1945 = vpop.permute.xlu0 %1944
  %1946 = vrot.lane.b32.xlu0 %v1900, 120
  %v1947 = vpop.permute.xlu0 %1946
  %1948 = vrot.lane.b32.xlu0 %v1901, 120
  %v1949 = vpop.permute.xlu0 %1948
  %1950 = vrot.lane.b32.xlu0 %v1902, 120
  %v1951 = vpop.permute.xlu0 %1950
  %1952 = vrot.lane.b32.xlu0 %v1903, 120
  %v1953 = vpop.permute.xlu0 %1952
  %1954 = vrot.lane.b32.xlu0 %v1904, 120
  %v1955 = vpop.permute.xlu0 %1954
  %vm1956 = vcmask 982016
  %v1957 = vsel %vm1956, %v1923, %v1925
  %v1958 = vsel %vm1956, %v1925, %v1927
  %v1959 = vsel %vm1956, %v1927, %v1929
  %v1960 = vsel %vm1956, %v1929, %v1931
  %v1961 = vsel %vm1956, %v1931, %v1933
  %v1962 = vsel %vm1956, %v1933, %v1935
  %v1963 = vsel %vm1956, %v1935, %v1937
  %v1964 = vsel %vm1956, %v1937, %v1939
  %v1965 = vsel %vm1956, %v1939, %v1941
  %v1966 = vsel %vm1956, %v1941, %v1943
  %v1967 = vsel %vm1956, %v1943, %v1945
  %v1968 = vsel %vm1956, %v1945, %v1947
  %v1969 = vsel %vm1956, %v1947, %v1949
  %v1970 = vsel %vm1956, %v1949, %v1951
  %v1971 = vsel %vm1956, %v1951, %v1953
  %v1972 = vsel %vm1956, %v1953, %v1955
  %1989 = vst [vmem:[#allocation6 + $0x180] sm:$0x3f] %v1957
  %1990 = vst [vmem:[#allocation6 + $0x188] sm:$0x3f] %v1958
  %1991 = vst [vmem:[#allocation6 + $0x190] sm:$0x3f] %v1959
  %1992 = vst [vmem:[#allocation6 + $0x198] sm:$0x3f] %v1960
  %1993 = vst [vmem:[#allocation6 + $0x1a0] sm:$0x3f] %v1961
  %1994 = vst [vmem:[#allocation6 + $0x1a8] sm:$0x3f] %v1962
  %1995 = vst [vmem:[#allocation6 + $0x1b0] sm:$0x3f] %v1963
  %1996 = vst [vmem:[#allocation6 + $0x1b8] sm:$0x3f] %v1964
  %1997 = vst [vmem:[#allocation6 + $0x1c0] sm:$0x3f] %v1965
  %1998 = vst [vmem:[#allocation6 + $0x1c8] sm:$0x3f] %v1966
  %1999 = vst [vmem:[#allocation6 + $0x1d0] sm:$0x3f] %v1967
  %2000 = vst [vmem:[#allocation6 + $0x1d8] sm:$0x3f] %v1968
  %2001 = vst [vmem:[#allocation6 + $0x1e0] sm:$0x3f] %v1969
  %2002 = vst [vmem:[#allocation6 + $0x1e8] sm:$0x3f] %v1970
  %2003 = vst [vmem:[#allocation6 + $0x1f0] sm:$0x3f] %v1971
  %2004 = vst [vmem:[#allocation6 + $0x1f8] sm:$0x3f] %v1972
  %v2005 = vld [vmem:[#allocation5] sm:$0x3f]
  %v2006 = vld [vmem:[#allocation5 + $0x8] sm:$0x3f]
  %v2007 = vld [vmem:[#allocation5 + $0x10] sm:$0x3f]
  %v2008 = vld [vmem:[#allocation5 + $0x18] sm:$0x3f]
  %v2009 = vld [vmem:[#allocation5 + $0x20] sm:$0x3f]
  %v2010 = vld [vmem:[#allocation5 + $0x28] sm:$0x3f]
  %v2011 = vld [vmem:[#allocation5 + $0x30] sm:$0x3f]
  %v2012 = vld [vmem:[#allocation5 + $0x38] sm:$0x3f]
  %v2013 = vld [vmem:[#allocation5 + $0x40] sm:$0x3f]
  %v2014 = vld [vmem:[#allocation5 + $0x48] sm:$0x3f]
  %v2015 = vld [vmem:[#allocation5 + $0x50] sm:$0x3f]
  %v2016 = vld [vmem:[#allocation5 + $0x58] sm:$0x3f]
  %v2017 = vld [vmem:[#allocation5 + $0x60] sm:$0x3f]
  %v2018 = vld [vmem:[#allocation5 + $0x68] sm:$0x3f]
  %v2019 = vld [vmem:[#allocation5 + $0x70] sm:$0x3f]
  %v2020 = vld [vmem:[#allocation5 + $0x78] sm:$0x3f]
  %v2021 = vld [vmem:[#allocation5 + $0x80] sm:$0x3f]
  %v2039 = vrot.slane %v2005, 2
  %v2040 = vrot.slane %v2006, 2
  %v2041 = vrot.slane %v2007, 2
  %v2042 = vrot.slane %v2008, 2
  %v2043 = vrot.slane %v2009, 2
  %v2044 = vrot.slane %v2010, 2
  %v2045 = vrot.slane %v2011, 2
  %v2046 = vrot.slane %v2012, 2
  %v2047 = vrot.slane %v2013, 2
  %v2048 = vrot.slane %v2014, 2
  %v2049 = vrot.slane %v2015, 2
  %v2050 = vrot.slane %v2016, 2
  %v2051 = vrot.slane %v2017, 2
  %v2052 = vrot.slane %v2018, 2
  %v2053 = vrot.slane %v2019, 2
  %v2054 = vrot.slane %v2020, 2
  %v2055 = vrot.slane %v2021, 2
  %2056 = vrot.lane.b32.xlu0 %v2039, 64
  %v2057 = vpop.permute.xlu0 %2056
  %2058 = vrot.lane.b32.xlu0 %v2040, 64
  %v2059 = vpop.permute.xlu0 %2058
  %2060 = vrot.lane.b32.xlu0 %v2041, 64
  %v2061 = vpop.permute.xlu0 %2060
  %2062 = vrot.lane.b32.xlu0 %v2042, 64
  %v2063 = vpop.permute.xlu0 %2062
  %2064 = vrot.lane.b32.xlu0 %v2043, 64
  %v2065 = vpop.permute.xlu0 %2064
  %2066 = vrot.lane.b32.xlu0 %v2044, 64
  %v2067 = vpop.permute.xlu0 %2066
  %2068 = vrot.lane.b32.xlu0 %v2045, 64
  %v2069 = vpop.permute.xlu0 %2068
  %2070 = vrot.lane.b32.xlu0 %v2046, 64
  %v2071 = vpop.permute.xlu0 %2070
  %2072 = vrot.lane.b32.xlu0 %v2047, 64
  %v2073 = vpop.permute.xlu0 %2072
  %2074 = vrot.lane.b32.xlu0 %v2048, 64
  %v2075 = vpop.permute.xlu0 %2074
  %2076 = vrot.lane.b32.xlu0 %v2049, 64
  %v2077 = vpop.permute.xlu0 %2076
  %2078 = vrot.lane.b32.xlu0 %v2050, 64
  %v2079 = vpop.permute.xlu0 %2078
  %2080 = vrot.lane.b32.xlu0 %v2051, 64
  %v2081 = vpop.permute.xlu0 %2080
  %2082 = vrot.lane.b32.xlu0 %v2052, 64
  %v2083 = vpop.permute.xlu0 %2082
  %2084 = vrot.lane.b32.xlu0 %v2053, 64
  %v2085 = vpop.permute.xlu0 %2084
  %2086 = vrot.lane.b32.xlu0 %v2054, 64
  %v2087 = vpop.permute.xlu0 %2086
  %2088 = vrot.lane.b32.xlu0 %v2055, 64
  %v2089 = vpop.permute.xlu0 %2088
  %v2090 = vsel %vm335, %v2057, %v2059
  %v2091 = vsel %vm335, %v2059, %v2061
  %v2092 = vsel %vm335, %v2061, %v2063
  %v2093 = vsel %vm335, %v2063, %v2065
  %v2094 = vsel %vm335, %v2065, %v2067
  %v2095 = vsel %vm335, %v2067, %v2069
  %v2096 = vsel %vm335, %v2069, %v2071
  %v2097 = vsel %vm335, %v2071, %v2073
  %v2098 = vsel %vm335, %v2073, %v2075
  %v2099 = vsel %vm335, %v2075, %v2077
  %v2100 = vsel %vm335, %v2077, %v2079
  %v2101 = vsel %vm335, %v2079, %v2081
  %v2102 = vsel %vm335, %v2081, %v2083
  %v2103 = vsel %vm335, %v2083, %v2085
  %v2104 = vsel %vm335, %v2085, %v2087
  %v2105 = vsel %vm335, %v2087, %v2089
  %2122 = vst [vmem:[#allocation6 + $0x180] sm:$0xc0] %v2090
  %2123 = vst [vmem:[#allocation6 + $0x188] sm:$0xc0] %v2091
  %2124 = vst [vmem:[#allocation6 + $0x190] sm:$0xc0] %v2092
  %2125 = vst [vmem:[#allocation6 + $0x198] sm:$0xc0] %v2093
  %2126 = vst [vmem:[#allocation6 + $0x1a0] sm:$0xc0] %v2094
  %2127 = vst [vmem:[#allocation6 + $0x1a8] sm:$0xc0] %v2095
  %2128 = vst [vmem:[#allocation6 + $0x1b0] sm:$0xc0] %v2096
  %2129 = vst [vmem:[#allocation6 + $0x1b8] sm:$0xc0] %v2097
  %2130 = vst [vmem:[#allocation6 + $0x1c0] sm:$0xc0] %v2098
  %2131 = vst [vmem:[#allocation6 + $0x1c8] sm:$0xc0] %v2099
  %2132 = vst [vmem:[#allocation6 + $0x1d0] sm:$0xc0] %v2100
  %2133 = vst [vmem:[#allocation6 + $0x1d8] sm:$0xc0] %v2101
  %2134 = vst [vmem:[#allocation6 + $0x1e0] sm:$0xc0] %v2102
  %2135 = vst [vmem:[#allocation6 + $0x1e8] sm:$0xc0] %v2103
  %2136 = vst [vmem:[#allocation6 + $0x1f0] sm:$0xc0] %v2104
  %2137 = vst [vmem:[#allocation6 + $0x1f8] sm:$0xc0] %v2105
  %2138 = vst [vmem:[#allocation6 + $0x200] sm:$0xf] %v2090
  %2139 = vst [vmem:[#allocation6 + $0x208] sm:$0xf] %v2091
  %2140 = vst [vmem:[#allocation6 + $0x210] sm:$0xf] %v2092
  %2141 = vst [vmem:[#allocation6 + $0x218] sm:$0xf] %v2093
  %2142 = vst [vmem:[#allocation6 + $0x220] sm:$0xf] %v2094
  %2143 = vst [vmem:[#allocation6 + $0x228] sm:$0xf] %v2095
  %2144 = vst [vmem:[#allocation6 + $0x230] sm:$0xf] %v2096
  %2145 = vst [vmem:[#allocation6 + $0x238] sm:$0xf] %v2097
  %2146 = vst [vmem:[#allocation6 + $0x240] sm:$0xf] %v2098
  %2147 = vst [vmem:[#allocation6 + $0x248] sm:$0xf] %v2099
  %2148 = vst [vmem:[#allocation6 + $0x250] sm:$0xf] %v2100
  %2149 = vst [vmem:[#allocation6 + $0x258] sm:$0xf] %v2101
  %2150 = vst [vmem:[#allocation6 + $0x260] sm:$0xf] %v2102
  %2151 = vst [vmem:[#allocation6 + $0x268] sm:$0xf] %v2103
  %2152 = vst [vmem:[#allocation6 + $0x270] sm:$0xf] %v2104
  %2153 = vst [vmem:[#allocation6 + $0x278] sm:$0xf] %v2105
  %v2154 = vld [vmem:[#allocation5] sm:$0x3f]
  %v2155 = vld [vmem:[#allocation5 + $0x8] sm:$0x3f]
  %v2156 = vld [vmem:[#allocation5 + $0x10] sm:$0x3f]
  %v2157 = vld [vmem:[#allocation5 + $0x18] sm:$0x3f]
  %v2158 = vld [vmem:[#allocation5 + $0x20] sm:$0x3f]
  %v2159 = vld [vmem:[#allocation5 + $0x28] sm:$0x3f]
  %v2160 = vld [vmem:[#allocation5 + $0x30] sm:$0x3f]
  %v2161 = vld [vmem:[#allocation5 + $0x38] sm:$0x3f]
  %v2162 = vld [vmem:[#allocation5 + $0x40] sm:$0x3f]
  %v2163 = vld [vmem:[#allocation5 + $0x48] sm:$0x3f]
  %v2164 = vld [vmem:[#allocation5 + $0x50] sm:$0x3f]
  %v2165 = vld [vmem:[#allocation5 + $0x58] sm:$0x3f]
  %v2166 = vld [vmem:[#allocation5 + $0x60] sm:$0x3f]
  %v2167 = vld [vmem:[#allocation5 + $0x68] sm:$0x3f]
  %v2168 = vld [vmem:[#allocation5 + $0x70] sm:$0x3f]
  %v2169 = vld [vmem:[#allocation5 + $0x78] sm:$0x3f]
  %v2170 = vld [vmem:[#allocation5 + $0x80] sm:$0x3f]
  %v2188 = vrot.slane %v2154, 4
  %v2189 = vrot.slane %v2155, 4
  %v2190 = vrot.slane %v2156, 4
  %v2191 = vrot.slane %v2157, 4
  %v2192 = vrot.slane %v2158, 4
  %v2193 = vrot.slane %v2159, 4
  %v2194 = vrot.slane %v2160, 4
  %v2195 = vrot.slane %v2161, 4
  %v2196 = vrot.slane %v2162, 4
  %v2197 = vrot.slane %v2163, 4
  %v2198 = vrot.slane %v2164, 4
  %v2199 = vrot.slane %v2165, 4
  %v2200 = vrot.slane %v2166, 4
  %v2201 = vrot.slane %v2167, 4
  %v2202 = vrot.slane %v2168, 4
  %v2203 = vrot.slane %v2169, 4
  %v2204 = vrot.slane %v2170, 4
  %2205 = vrot.lane.b32.xlu0 %v2188, 62
  %v2206 = vpop.permute.xlu0 %2205
  %2207 = vrot.lane.b32.xlu0 %v2189, 62
  %v2208 = vpop.permute.xlu0 %2207
  %2209 = vrot.lane.b32.xlu0 %v2190, 62
  %v2210 = vpop.permute.xlu0 %2209
  %2211 = vrot.lane.b32.xlu0 %v2191, 62
  %v2212 = vpop.permute.xlu0 %2211
  %2213 = vrot.lane.b32.xlu0 %v2192, 62
  %v2214 = vpop.permute.xlu0 %2213
  %2215 = vrot.lane.b32.xlu0 %v2193, 62
  %v2216 = vpop.permute.xlu0 %2215
  %2217 = vrot.lane.b32.xlu0 %v2194, 62
  %v2218 = vpop.permute.xlu0 %2217
  %2219 = vrot.lane.b32.xlu0 %v2195, 62
  %v2220 = vpop.permute.xlu0 %2219
  %2221 = vrot.lane.b32.xlu0 %v2196, 62
  %v2222 = vpop.permute.xlu0 %2221
  %2223 = vrot.lane.b32.xlu0 %v2197, 62
  %v2224 = vpop.permute.xlu0 %2223
  %2225 = vrot.lane.b32.xlu0 %v2198, 62
  %v2226 = vpop.permute.xlu0 %2225
  %2227 = vrot.lane.b32.xlu0 %v2199, 62
  %v2228 = vpop.permute.xlu0 %2227
  %2229 = vrot.lane.b32.xlu0 %v2200, 62
  %v2230 = vpop.permute.xlu0 %2229
  %2231 = vrot.lane.b32.xlu0 %v2201, 62
  %v2232 = vpop.permute.xlu0 %2231
  %2233 = vrot.lane.b32.xlu0 %v2202, 62
  %v2234 = vpop.permute.xlu0 %2233
  %2235 = vrot.lane.b32.xlu0 %v2203, 62
  %v2236 = vpop.permute.xlu0 %2235
  %2237 = vrot.lane.b32.xlu0 %v2204, 62
  %v2238 = vpop.permute.xlu0 %2237
  %v2239 = vsel %vm391, %v2206, %v2208
  %v2240 = vsel %vm391, %v2208, %v2210
  %v2241 = vsel %vm391, %v2210, %v2212
  %v2242 = vsel %vm391, %v2212, %v2214
  %v2243 = vsel %vm391, %v2214, %v2216
  %v2244 = vsel %vm391, %v2216, %v2218
  %v2245 = vsel %vm391, %v2218, %v2220
  %v2246 = vsel %vm391, %v2220, %v2222
  %v2247 = vsel %vm391, %v2222, %v2224
  %v2248 = vsel %vm391, %v2224, %v2226
  %v2249 = vsel %vm391, %v2226, %v2228
  %v2250 = vsel %vm391, %v2228, %v2230
  %v2251 = vsel %vm391, %v2230, %v2232
  %v2252 = vsel %vm391, %v2232, %v2234
  %v2253 = vsel %vm391, %v2234, %v2236
  %v2254 = vsel %vm391, %v2236, %v2238
  %2271 = vst [vmem:[#allocation6 + $0x200] sm:$0xf0] %v2239
  %2272 = vst [vmem:[#allocation6 + $0x208] sm:$0xf0] %v2240
  %2273 = vst [vmem:[#allocation6 + $0x210] sm:$0xf0] %v2241
  %2274 = vst [vmem:[#allocation6 + $0x218] sm:$0xf0] %v2242
  %2275 = vst [vmem:[#allocation6 + $0x220] sm:$0xf0] %v2243
  %2276 = vst [vmem:[#allocation6 + $0x228] sm:$0xf0] %v2244
  %2277 = vst [vmem:[#allocation6 + $0x230] sm:$0xf0] %v2245
  %2278 = vst [vmem:[#allocation6 + $0x238] sm:$0xf0] %v2246
  %2279 = vst [vmem:[#allocation6 + $0x240] sm:$0xf0] %v2247
  %2280 = vst [vmem:[#allocation6 + $0x248] sm:$0xf0] %v2248
  %2281 = vst [vmem:[#allocation6 + $0x250] sm:$0xf0] %v2249
  %2282 = vst [vmem:[#allocation6 + $0x258] sm:$0xf0] %v2250
  %2283 = vst [vmem:[#allocation6 + $0x260] sm:$0xf0] %v2251
  %2284 = vst [vmem:[#allocation6 + $0x268] sm:$0xf0] %v2252
  %2285 = vst [vmem:[#allocation6 + $0x270] sm:$0xf0] %v2253
  %2286 = vst [vmem:[#allocation6 + $0x278] sm:$0xf0] %v2254
  %2287 = vst [vmem:[#allocation6 + $0x280] sm:$0x3] %v2239
  %2288 = vst [vmem:[#allocation6 + $0x288] sm:$0x3] %v2240
  %2289 = vst [vmem:[#allocation6 + $0x290] sm:$0x3] %v2241
  %2290 = vst [vmem:[#allocation6 + $0x298] sm:$0x3] %v2242
  %2291 = vst [vmem:[#allocation6 + $0x2a0] sm:$0x3] %v2243
  %2292 = vst [vmem:[#allocation6 + $0x2a8] sm:$0x3] %v2244
  %2293 = vst [vmem:[#allocation6 + $0x2b0] sm:$0x3] %v2245
  %2294 = vst [vmem:[#allocation6 + $0x2b8] sm:$0x3] %v2246
  %2295 = vst [vmem:[#allocation6 + $0x2c0] sm:$0x3] %v2247
  %2296 = vst [vmem:[#allocation6 + $0x2c8] sm:$0x3] %v2248
  %2297 = vst [vmem:[#allocation6 + $0x2d0] sm:$0x3] %v2249
  %2298 = vst [vmem:[#allocation6 + $0x2d8] sm:$0x3] %v2250
  %2299 = vst [vmem:[#allocation6 + $0x2e0] sm:$0x3] %v2251
  %2300 = vst [vmem:[#allocation6 + $0x2e8] sm:$0x3] %v2252
  %2301 = vst [vmem:[#allocation6 + $0x2f0] sm:$0x3] %v2253
  %2302 = vst [vmem:[#allocation6 + $0x2f8] sm:$0x3] %v2254
  %v2303 = vld [vmem:[#allocation5] sm:$0x3f]
  %v2304 = vld [vmem:[#allocation5 + $0x8] sm:$0x3f]
  %v2305 = vld [vmem:[#allocation5 + $0x10] sm:$0x3f]
  %v2306 = vld [vmem:[#allocation5 + $0x18] sm:$0x3f]
  %v2307 = vld [vmem:[#allocation5 + $0x20] sm:$0x3f]
  %v2308 = vld [vmem:[#allocation5 + $0x28] sm:$0x3f]
  %v2309 = vld [vmem:[#allocation5 + $0x30] sm:$0x3f]
  %v2310 = vld [vmem:[#allocation5 + $0x38] sm:$0x3f]
  %v2311 = vld [vmem:[#allocation5 + $0x40] sm:$0x3f]
  %v2312 = vld [vmem:[#allocation5 + $0x48] sm:$0x3f]
  %v2313 = vld [vmem:[#allocation5 + $0x50] sm:$0x3f]
  %v2314 = vld [vmem:[#allocation5 + $0x58] sm:$0x3f]
  %v2315 = vld [vmem:[#allocation5 + $0x60] sm:$0x3f]
  %v2316 = vld [vmem:[#allocation5 + $0x68] sm:$0x3f]
  %v2317 = vld [vmem:[#allocation5 + $0x70] sm:$0x3f]
  %v2318 = vld [vmem:[#allocation5 + $0x78] sm:$0x3f]
  %v2319 = vld [vmem:[#allocation5 + $0x80] sm:$0x3f]
  %v2337 = vrot.slane %v2303, 6
  %v2338 = vrot.slane %v2304, 6
  %v2339 = vrot.slane %v2305, 6
  %v2340 = vrot.slane %v2306, 6
  %v2341 = vrot.slane %v2307, 6
  %v2342 = vrot.slane %v2308, 6
  %v2343 = vrot.slane %v2309, 6
  %v2344 = vrot.slane %v2310, 6
  %v2345 = vrot.slane %v2311, 6
  %v2346 = vrot.slane %v2312, 6
  %v2347 = vrot.slane %v2313, 6
  %v2348 = vrot.slane %v2314, 6
  %v2349 = vrot.slane %v2315, 6
  %v2350 = vrot.slane %v2316, 6
  %v2351 = vrot.slane %v2317, 6
  %v2352 = vrot.slane %v2318, 6
  %v2353 = vrot.slane %v2319, 6
  %2354 = vrot.lane.b32.xlu0 %v2337, 60
  %v2355 = vpop.permute.xlu0 %2354
  %2356 = vrot.lane.b32.xlu0 %v2338, 60
  %v2357 = vpop.permute.xlu0 %2356
  %2358 = vrot.lane.b32.xlu0 %v2339, 60
  %v2359 = vpop.permute.xlu0 %2358
  %2360 = vrot.lane.b32.xlu0 %v2340, 60
  %v2361 = vpop.permute.xlu0 %2360
  %2362 = vrot.lane.b32.xlu0 %v2341, 60
  %v2363 = vpop.permute.xlu0 %2362
  %2364 = vrot.lane.b32.xlu0 %v2342, 60
  %v2365 = vpop.permute.xlu0 %2364
  %2366 = vrot.lane.b32.xlu0 %v2343, 60
  %v2367 = vpop.permute.xlu0 %2366
  %2368 = vrot.lane.b32.xlu0 %v2344, 60
  %v2369 = vpop.permute.xlu0 %2368
  %2370 = vrot.lane.b32.xlu0 %v2345, 60
  %v2371 = vpop.permute.xlu0 %2370
  %2372 = vrot.lane.b32.xlu0 %v2346, 60
  %v2373 = vpop.permute.xlu0 %2372
  %2374 = vrot.lane.b32.xlu0 %v2347, 60
  %v2375 = vpop.permute.xlu0 %2374
  %2376 = vrot.lane.b32.xlu0 %v2348, 60
  %v2377 = vpop.permute.xlu0 %2376
  %2378 = vrot.lane.b32.xlu0 %v2349, 60
  %v2379 = vpop.permute.xlu0 %2378
  %2380 = vrot.lane.b32.xlu0 %v2350, 60
  %v2381 = vpop.permute.xlu0 %2380
  %2382 = vrot.lane.b32.xlu0 %v2351, 60
  %v2383 = vpop.permute.xlu0 %2382
  %2384 = vrot.lane.b32.xlu0 %v2352, 60
  %v2385 = vpop.permute.xlu0 %2384
  %2386 = vrot.lane.b32.xlu0 %v2353, 60
  %v2387 = vpop.permute.xlu0 %2386
  %v2388 = vsel %vm447, %v2355, %v2357
  %v2389 = vsel %vm447, %v2357, %v2359
  %v2390 = vsel %vm447, %v2359, %v2361
  %v2391 = vsel %vm447, %v2361, %v2363
  %v2392 = vsel %vm447, %v2363, %v2365
  %v2393 = vsel %vm447, %v2365, %v2367
  %v2394 = vsel %vm447, %v2367, %v2369
  %v2395 = vsel %vm447, %v2369, %v2371
  %v2396 = vsel %vm447, %v2371, %v2373
  %v2397 = vsel %vm447, %v2373, %v2375
  %v2398 = vsel %vm447, %v2375, %v2377
  %v2399 = vsel %vm447, %v2377, %v2379
  %v2400 = vsel %vm447, %v2379, %v2381
  %v2401 = vsel %vm447, %v2381, %v2383
  %v2402 = vsel %vm447, %v2383, %v2385
  %v2403 = vsel %vm447, %v2385, %v2387
  %2420 = vst [vmem:[#allocation6 + $0x280] sm:$0xfc] %v2388
  %2421 = vst [vmem:[#allocation6 + $0x288] sm:$0xfc] %v2389
  %2422 = vst [vmem:[#allocation6 + $0x290] sm:$0xfc] %v2390
  %2423 = vst [vmem:[#allocation6 + $0x298] sm:$0xfc] %v2391
  %2424 = vst [vmem:[#allocation6 + $0x2a0] sm:$0xfc] %v2392
  %2425 = vst [vmem:[#allocation6 + $0x2a8] sm:$0xfc] %v2393
  %2426 = vst [vmem:[#allocation6 + $0x2b0] sm:$0xfc] %v2394
  %2427 = vst [vmem:[#allocation6 + $0x2b8] sm:$0xfc] %v2395
  %2428 = vst [vmem:[#allocation6 + $0x2c0] sm:$0xfc] %v2396
  %2429 = vst [vmem:[#allocation6 + $0x2c8] sm:$0xfc] %v2397
  %2430 = vst [vmem:[#allocation6 + $0x2d0] sm:$0xfc] %v2398
  %2431 = vst [vmem:[#allocation6 + $0x2d8] sm:$0xfc] %v2399
  %2432 = vst [vmem:[#allocation6 + $0x2e0] sm:$0xfc] %v2400
  %2433 = vst [vmem:[#allocation6 + $0x2e8] sm:$0xfc] %v2401
  %2434 = vst [vmem:[#allocation6 + $0x2f0] sm:$0xfc] %v2402
  %2435 = vst [vmem:[#allocation6 + $0x2f8] sm:$0xfc] %v2403
  %v2436 = vld [vmem:[#allocation5] sm:$0x3f]
  %v2437 = vld [vmem:[#allocation5 + $0x8] sm:$0x3f]
  %v2438 = vld [vmem:[#allocation5 + $0x10] sm:$0x3f]
  %v2439 = vld [vmem:[#allocation5 + $0x18] sm:$0x3f]
  %v2440 = vld [vmem:[#allocation5 + $0x20] sm:$0x3f]
  %v2441 = vld [vmem:[#allocation5 + $0x28] sm:$0x3f]
  %v2442 = vld [vmem:[#allocation5 + $0x30] sm:$0x3f]
  %v2443 = vld [vmem:[#allocation5 + $0x38] sm:$0x3f]
  %v2444 = vld [vmem:[#allocation5 + $0x40] sm:$0x3f]
  %v2445 = vld [vmem:[#allocation5 + $0x48] sm:$0x3f]
  %v2446 = vld [vmem:[#allocation5 + $0x50] sm:$0x3f]
  %v2447 = vld [vmem:[#allocation5 + $0x58] sm:$0x3f]
  %v2448 = vld [vmem:[#allocation5 + $0x60] sm:$0x3f]
  %v2449 = vld [vmem:[#allocation5 + $0x68] sm:$0x3f]
  %v2450 = vld [vmem:[#allocation5 + $0x70] sm:$0x3f]
  %v2451 = vld [vmem:[#allocation5 + $0x78] sm:$0x3f]
  %v2452 = vld [vmem:[#allocation5 + $0x80] sm:$0x3f]
  %2470 = vrot.lane.b32.xlu0 %v2436, 58
  %v2471 = vpop.permute.xlu0 %2470
  %2472 = vrot.lane.b32.xlu0 %v2437, 58
  %v2473 = vpop.permute.xlu0 %2472
  %2474 = vrot.lane.b32.xlu0 %v2438, 58
  %v2475 = vpop.permute.xlu0 %2474
  %2476 = vrot.lane.b32.xlu0 %v2439, 58
  %v2477 = vpop.permute.xlu0 %2476
  %2478 = vrot.lane.b32.xlu0 %v2440, 58
  %v2479 = vpop.permute.xlu0 %2478
  %2480 = vrot.lane.b32.xlu0 %v2441, 58
  %v2481 = vpop.permute.xlu0 %2480
  %2482 = vrot.lane.b32.xlu0 %v2442, 58
  %v2483 = vpop.permute.xlu0 %2482
  %2484 = vrot.lane.b32.xlu0 %v2443, 58
  %v2485 = vpop.permute.xlu0 %2484
  %2486 = vrot.lane.b32.xlu0 %v2444, 58
  %v2487 = vpop.permute.xlu0 %2486
  %2488 = vrot.lane.b32.xlu0 %v2445, 58
  %v2489 = vpop.permute.xlu0 %2488
  %2490 = vrot.lane.b32.xlu0 %v2446, 58
  %v2491 = vpop.permute.xlu0 %2490
  %2492 = vrot.lane.b32.xlu0 %v2447, 58
  %v2493 = vpop.permute.xlu0 %2492
  %2494 = vrot.lane.b32.xlu0 %v2448, 58
  %v2495 = vpop.permute.xlu0 %2494
  %2496 = vrot.lane.b32.xlu0 %v2449, 58
  %v2497 = vpop.permute.xlu0 %2496
  %2498 = vrot.lane.b32.xlu0 %v2450, 58
  %v2499 = vpop.permute.xlu0 %2498
  %2500 = vrot.lane.b32.xlu0 %v2451, 58
  %v2501 = vpop.permute.xlu0 %2500
  %2502 = vrot.lane.b32.xlu0 %v2452, 58
  %v2503 = vpop.permute.xlu0 %2502
  %vm2504 = vcmask 474112
  %v2505 = vsel %vm2504, %v2471, %v2473
  %v2506 = vsel %vm2504, %v2473, %v2475
  %v2507 = vsel %vm2504, %v2475, %v2477
  %v2508 = vsel %vm2504, %v2477, %v2479
  %v2509 = vsel %vm2504, %v2479, %v2481
  %v2510 = vsel %vm2504, %v2481, %v2483
  %v2511 = vsel %vm2504, %v2483, %v2485
  %v2512 = vsel %vm2504, %v2485, %v2487
  %v2513 = vsel %vm2504, %v2487, %v2489
  %v2514 = vsel %vm2504, %v2489, %v2491
  %v2515 = vsel %vm2504, %v2491, %v2493
  %v2516 = vsel %vm2504, %v2493, %v2495
  %v2517 = vsel %vm2504, %v2495, %v2497
  %v2518 = vsel %vm2504, %v2497, %v2499
  %v2519 = vsel %vm2504, %v2499, %v2501
  %v2520 = vsel %vm2504, %v2501, %v2503
  %2537 = vst [vmem:[#allocation6 + $0x300] sm:$0x3f] %v2505
  %2538 = vst [vmem:[#allocation6 + $0x308] sm:$0x3f] %v2506
  %2539 = vst [vmem:[#allocation6 + $0x310] sm:$0x3f] %v2507
  %2540 = vst [vmem:[#allocation6 + $0x318] sm:$0x3f] %v2508
  %2541 = vst [vmem:[#allocation6 + $0x320] sm:$0x3f] %v2509
  %2542 = vst [vmem:[#allocation6 + $0x328] sm:$0x3f] %v2510
  %2543 = vst [vmem:[#allocation6 + $0x330] sm:$0x3f] %v2511
  %2544 = vst [vmem:[#allocation6 + $0x338] sm:$0x3f] %v2512
  %2545 = vst [vmem:[#allocation6 + $0x340] sm:$0x3f] %v2513
  %2546 = vst [vmem:[#allocation6 + $0x348] sm:$0x3f] %v2514
  %2547 = vst [vmem:[#allocation6 + $0x350] sm:$0x3f] %v2515
  %2548 = vst [vmem:[#allocation6 + $0x358] sm:$0x3f] %v2516
  %2549 = vst [vmem:[#allocation6 + $0x360] sm:$0x3f] %v2517
  %2550 = vst [vmem:[#allocation6 + $0x368] sm:$0x3f] %v2518
  %2551 = vst [vmem:[#allocation6 + $0x370] sm:$0x3f] %v2519
  %2552 = vst [vmem:[#allocation6 + $0x378] sm:$0x3f] %v2520
  %v2553 = vld [vmem:[#allocation5] sm:$0x3f]
  %v2554 = vld [vmem:[#allocation5 + $0x8] sm:$0x3f]
  %v2555 = vld [vmem:[#allocation5 + $0x10] sm:$0x3f]
  %v2556 = vld [vmem:[#allocation5 + $0x18] sm:$0x3f]
  %v2557 = vld [vmem:[#allocation5 + $0x20] sm:$0x3f]
  %v2558 = vld [vmem:[#allocation5 + $0x28] sm:$0x3f]
  %v2559 = vld [vmem:[#allocation5 + $0x30] sm:$0x3f]
  %v2560 = vld [vmem:[#allocation5 + $0x38] sm:$0x3f]
  %v2561 = vld [vmem:[#allocation5 + $0x40] sm:$0x3f]
  %v2562 = vld [vmem:[#allocation5 + $0x48] sm:$0x3f]
  %v2563 = vld [vmem:[#allocation5 + $0x50] sm:$0x3f]
  %v2564 = vld [vmem:[#allocation5 + $0x58] sm:$0x3f]
  %v2565 = vld [vmem:[#allocation5 + $0x60] sm:$0x3f]
  %v2566 = vld [vmem:[#allocation5 + $0x68] sm:$0x3f]
  %v2567 = vld [vmem:[#allocation5 + $0x70] sm:$0x3f]
  %v2568 = vld [vmem:[#allocation5 + $0x78] sm:$0x3f]
  %v2569 = vld [vmem:[#allocation5 + $0x80] sm:$0x3f]
  %v2587 = vrot.slane %v2553, 2
  %v2588 = vrot.slane %v2554, 2
  %v2589 = vrot.slane %v2555, 2
  %v2590 = vrot.slane %v2556, 2
  %v2591 = vrot.slane %v2557, 2
  %v2592 = vrot.slane %v2558, 2
  %v2593 = vrot.slane %v2559, 2
  %v2594 = vrot.slane %v2560, 2
  %v2595 = vrot.slane %v2561, 2
  %v2596 = vrot.slane %v2562, 2
  %v2597 = vrot.slane %v2563, 2
  %v2598 = vrot.slane %v2564, 2
  %v2599 = vrot.slane %v2565, 2
  %v2600 = vrot.slane %v2566, 2
  %v2601 = vrot.slane %v2567, 2
  %v2602 = vrot.slane %v2568, 2
  %v2603 = vrot.slane %v2569, 2
  %2604 = vrot.lane.b32.xlu0 %v2587, 56
  %v2605 = vpop.permute.xlu0 %2604
  %2606 = vrot.lane.b32.xlu0 %v2588, 56
  %v2607 = vpop.permute.xlu0 %2606
  %2608 = vrot.lane.b32.xlu0 %v2589, 56
  %v2609 = vpop.permute.xlu0 %2608
  %2610 = vrot.lane.b32.xlu0 %v2590, 56
  %v2611 = vpop.permute.xlu0 %2610
  %2612 = vrot.lane.b32.xlu0 %v2591, 56
  %v2613 = vpop.permute.xlu0 %2612
  %2614 = vrot.lane.b32.xlu0 %v2592, 56
  %v2615 = vpop.permute.xlu0 %2614
  %2616 = vrot.lane.b32.xlu0 %v2593, 56
  %v2617 = vpop.permute.xlu0 %2616
  %2618 = vrot.lane.b32.xlu0 %v2594, 56
  %v2619 = vpop.permute.xlu0 %2618
  %2620 = vrot.lane.b32.xlu0 %v2595, 56
  %v2621 = vpop.permute.xlu0 %2620
  %2622 = vrot.lane.b32.xlu0 %v2596, 56
  %v2623 = vpop.permute.xlu0 %2622
  %2624 = vrot.lane.b32.xlu0 %v2597, 56
  %v2625 = vpop.permute.xlu0 %2624
  %2626 = vrot.lane.b32.xlu0 %v2598, 56
  %v2627 = vpop.permute.xlu0 %2626
  %2628 = vrot.lane.b32.xlu0 %v2599, 56
  %v2629 = vpop.permute.xlu0 %2628
  %2630 = vrot.lane.b32.xlu0 %v2600, 56
  %v2631 = vpop.permute.xlu0 %2630
  %2632 = vrot.lane.b32.xlu0 %v2601, 56
  %v2633 = vpop.permute.xlu0 %2632
  %2634 = vrot.lane.b32.xlu0 %v2602, 56
  %v2635 = vpop.permute.xlu0 %2634
  %2636 = vrot.lane.b32.xlu0 %v2603, 56
  %v2637 = vpop.permute.xlu0 %2636
  %vm2638 = vcmask 457728
  %v2639 = vsel %vm2638, %v2605, %v2607
  %v2640 = vsel %vm2638, %v2607, %v2609
  %v2641 = vsel %vm2638, %v2609, %v2611
  %v2642 = vsel %vm2638, %v2611, %v2613
  %v2643 = vsel %vm2638, %v2613, %v2615
  %v2644 = vsel %vm2638, %v2615, %v2617
  %v2645 = vsel %vm2638, %v2617, %v2619
  %v2646 = vsel %vm2638, %v2619, %v2621
  %v2647 = vsel %vm2638, %v2621, %v2623
  %v2648 = vsel %vm2638, %v2623, %v2625
  %v2649 = vsel %vm2638, %v2625, %v2627
  %v2650 = vsel %vm2638, %v2627, %v2629
  %v2651 = vsel %vm2638, %v2629, %v2631
  %v2652 = vsel %vm2638, %v2631, %v2633
  %v2653 = vsel %vm2638, %v2633, %v2635
  %v2654 = vsel %vm2638, %v2635, %v2637
  %2671 = vst [vmem:[#allocation6 + $0x300] sm:$0xc0] %v2639
  %2672 = vst [vmem:[#allocation6 + $0x308] sm:$0xc0] %v2640
  %2673 = vst [vmem:[#allocation6 + $0x310] sm:$0xc0] %v2641
  %2674 = vst [vmem:[#allocation6 + $0x318] sm:$0xc0] %v2642
  %2675 = vst [vmem:[#allocation6 + $0x320] sm:$0xc0] %v2643
  %2676 = vst [vmem:[#allocation6 + $0x328] sm:$0xc0] %v2644
  %2677 = vst [vmem:[#allocation6 + $0x330] sm:$0xc0] %v2645
  %2678 = vst [vmem:[#allocation6 + $0x338] sm:$0xc0] %v2646
  %2679 = vst [vmem:[#allocation6 + $0x340] sm:$0xc0] %v2647
  %2680 = vst [vmem:[#allocation6 + $0x348] sm:$0xc0] %v2648
  %2681 = vst [vmem:[#allocation6 + $0x350] sm:$0xc0] %v2649
  %2682 = vst [vmem:[#allocation6 + $0x358] sm:$0xc0] %v2650
  %2683 = vst [vmem:[#allocation6 + $0x360] sm:$0xc0] %v2651
  %2684 = vst [vmem:[#allocation6 + $0x368] sm:$0xc0] %v2652
  %2685 = vst [vmem:[#allocation6 + $0x370] sm:$0xc0] %v2653
  %2686 = vst [vmem:[#allocation6 + $0x378] sm:$0xc0] %v2654
  %2687 = vst [vmem:[#allocation6 + $0x380] sm:$0xf] %v2639
  %2688 = vst [vmem:[#allocation6 + $0x388] sm:$0xf] %v2640
  %2689 = vst [vmem:[#allocation6 + $0x390] sm:$0xf] %v2641
  %2690 = vst [vmem:[#allocation6 + $0x398] sm:$0xf] %v2642
  %2691 = vst [vmem:[#allocation6 + $0x3a0] sm:$0xf] %v2643
  %2692 = vst [vmem:[#allocation6 + $0x3a8] sm:$0xf] %v2644
  %2693 = vst [vmem:[#allocation6 + $0x3b0] sm:$0xf] %v2645
  %2694 = vst [vmem:[#allocation6 + $0x3b8] sm:$0xf] %v2646
  %2695 = vst [vmem:[#allocation6 + $0x3c0] sm:$0xf] %v2647
  %2696 = vst [vmem:[#allocation6 + $0x3c8] sm:$0xf] %v2648
  %2697 = vst [vmem:[#allocation6 + $0x3d0] sm:$0xf] %v2649
  %2698 = vst [vmem:[#allocation6 + $0x3d8] sm:$0xf] %v2650
  %2699 = vst [vmem:[#allocation6 + $0x3e0] sm:$0xf] %v2651
  %2700 = vst [vmem:[#allocation6 + $0x3e8] sm:$0xf] %v2652
  %2701 = vst [vmem:[#allocation6 + $0x3f0] sm:$0xf] %v2653
  %2702 = vst [vmem:[#allocation6 + $0x3f8] sm:$0xf] %v2654
  %v2703 = vld [vmem:[#allocation5 + $0x8] sm:$0x3f]
  %v2704 = vld [vmem:[#allocation5 + $0x10] sm:$0x3f]
  %v2705 = vld [vmem:[#allocation5 + $0x18] sm:$0x3f]
  %v2706 = vld [vmem:[#allocation5 + $0x20] sm:$0x3f]
  %v2707 = vld [vmem:[#allocation5 + $0x28] sm:$0x3f]
  %v2708 = vld [vmem:[#allocation5 + $0x30] sm:$0x3f]
  %v2709 = vld [vmem:[#allocation5 + $0x38] sm:$0x3f]
  %v2710 = vld [vmem:[#allocation5 + $0x40] sm:$0x3f]
  %v2711 = vld [vmem:[#allocation5 + $0x48] sm:$0x3f]
  %v2712 = vld [vmem:[#allocation5 + $0x50] sm:$0x3f]
  %v2713 = vld [vmem:[#allocation5 + $0x58] sm:$0x3f]
  %v2714 = vld [vmem:[#allocation5 + $0x60] sm:$0x3f]
  %v2715 = vld [vmem:[#allocation5 + $0x68] sm:$0x3f]
  %v2716 = vld [vmem:[#allocation5 + $0x70] sm:$0x3f]
  %v2717 = vld [vmem:[#allocation5 + $0x78] sm:$0x3f]
  %v2718 = vld [vmem:[#allocation5 + $0x80] sm:$0x3f]
  %v2735 = vrot.slane %v2703, 4
  %v2736 = vrot.slane %v2704, 4
  %v2737 = vrot.slane %v2705, 4
  %v2738 = vrot.slane %v2706, 4
  %v2739 = vrot.slane %v2707, 4
  %v2740 = vrot.slane %v2708, 4
  %v2741 = vrot.slane %v2709, 4
  %v2742 = vrot.slane %v2710, 4
  %v2743 = vrot.slane %v2711, 4
  %v2744 = vrot.slane %v2712, 4
  %v2745 = vrot.slane %v2713, 4
  %v2746 = vrot.slane %v2714, 4
  %v2747 = vrot.slane %v2715, 4
  %v2748 = vrot.slane %v2716, 4
  %v2749 = vrot.slane %v2717, 4
  %v2750 = vrot.slane %v2718, 4
  %2767 = vst [vmem:[#allocation6 + $0x380] sm:$0xf0] %v2735
  %2768 = vst [vmem:[#allocation6 + $0x388] sm:$0xf0] %v2736
  %2769 = vst [vmem:[#allocation6 + $0x390] sm:$0xf0] %v2737
  %2770 = vst [vmem:[#allocation6 + $0x398] sm:$0xf0] %v2738
  %2771 = vst [vmem:[#allocation6 + $0x3a0] sm:$0xf0] %v2739
  %2772 = vst [vmem:[#allocation6 + $0x3a8] sm:$0xf0] %v2740
  %2773 = vst [vmem:[#allocation6 + $0x3b0] sm:$0xf0] %v2741
  %2774 = vst [vmem:[#allocation6 + $0x3b8] sm:$0xf0] %v2742
  %2775 = vst [vmem:[#allocation6 + $0x3c0] sm:$0xf0] %v2743
  %2776 = vst [vmem:[#allocation6 + $0x3c8] sm:$0xf0] %v2744
  %2777 = vst [vmem:[#allocation6 + $0x3d0] sm:$0xf0] %v2745
  %2778 = vst [vmem:[#allocation6 + $0x3d8] sm:$0xf0] %v2746
  %2779 = vst [vmem:[#allocation6 + $0x3e0] sm:$0xf0] %v2747
  %2780 = vst [vmem:[#allocation6 + $0x3e8] sm:$0xf0] %v2748
  %2781 = vst [vmem:[#allocation6 + $0x3f0] sm:$0xf0] %v2749
  %2782 = vst [vmem:[#allocation6 + $0x3f8] sm:$0xf0] %v2750
  %2783 = vst [vmem:[#allocation6 + $0x400] sm:$0x3] %v2735
  %2784 = vst [vmem:[#allocation6 + $0x408] sm:$0x3] %v2736
  %2785 = vst [vmem:[#allocation6 + $0x410] sm:$0x3] %v2737
  %2786 = vst [vmem:[#allocation6 + $0x418] sm:$0x3] %v2738
  %2787 = vst [vmem:[#allocation6 + $0x420] sm:$0x3] %v2739
  %2788 = vst [vmem:[#allocation6 + $0x428] sm:$0x3] %v2740
  %2789 = vst [vmem:[#allocation6 + $0x430] sm:$0x3] %v2741
  %2790 = vst [vmem:[#allocation6 + $0x438] sm:$0x3] %v2742
  %2791 = vst [vmem:[#allocation6 + $0x440] sm:$0x3] %v2743
  %2792 = vst [vmem:[#allocation6 + $0x448] sm:$0x3] %v2744
  %2793 = vst [vmem:[#allocation6 + $0x450] sm:$0x3] %v2745
  %2794 = vst [vmem:[#allocation6 + $0x458] sm:$0x3] %v2746
  %2795 = vst [vmem:[#allocation6 + $0x460] sm:$0x3] %v2747
  %2796 = vst [vmem:[#allocation6 + $0x468] sm:$0x3] %v2748
  %2797 = vst [vmem:[#allocation6 + $0x470] sm:$0x3] %v2749
  %2798 = vst [vmem:[#allocation6 + $0x478] sm:$0x3] %v2750
  %v2799 = vld [vmem:[#allocation5 + $0x8] sm:$0x3f]
  %v2800 = vld [vmem:[#allocation5 + $0x10] sm:$0x3f]
  %v2801 = vld [vmem:[#allocation5 + $0x18] sm:$0x3f]
  %v2802 = vld [vmem:[#allocation5 + $0x20] sm:$0x3f]
  %v2803 = vld [vmem:[#allocation5 + $0x28] sm:$0x3f]
  %v2804 = vld [vmem:[#allocation5 + $0x30] sm:$0x3f]
  %v2805 = vld [vmem:[#allocation5 + $0x38] sm:$0x3f]
  %v2806 = vld [vmem:[#allocation5 + $0x40] sm:$0x3f]
  %v2807 = vld [vmem:[#allocation5 + $0x48] sm:$0x3f]
  %v2808 = vld [vmem:[#allocation5 + $0x50] sm:$0x3f]
  %v2809 = vld [vmem:[#allocation5 + $0x58] sm:$0x3f]
  %v2810 = vld [vmem:[#allocation5 + $0x60] sm:$0x3f]
  %v2811 = vld [vmem:[#allocation5 + $0x68] sm:$0x3f]
  %v2812 = vld [vmem:[#allocation5 + $0x70] sm:$0x3f]
  %v2813 = vld [vmem:[#allocation5 + $0x78] sm:$0x3f]
  %v2814 = vld [vmem:[#allocation5 + $0x80] sm:$0x3f]
  %v2815 = vld [vmem:[#allocation5 + $0x88] sm:$0x3f]
  %v2833 = vrot.slane %v2799, 6
  %v2834 = vrot.slane %v2800, 6
  %v2835 = vrot.slane %v2801, 6
  %v2836 = vrot.slane %v2802, 6
  %v2837 = vrot.slane %v2803, 6
  %v2838 = vrot.slane %v2804, 6
  %v2839 = vrot.slane %v2805, 6
  %v2840 = vrot.slane %v2806, 6
  %v2841 = vrot.slane %v2807, 6
  %v2842 = vrot.slane %v2808, 6
  %v2843 = vrot.slane %v2809, 6
  %v2844 = vrot.slane %v2810, 6
  %v2845 = vrot.slane %v2811, 6
  %v2846 = vrot.slane %v2812, 6
  %v2847 = vrot.slane %v2813, 6
  %v2848 = vrot.slane %v2814, 6
  %v2849 = vrot.slane %v2815, 6
  %2850 = vrot.lane.b32.xlu0 %v2833, 126
  %v2851 = vpop.permute.xlu0 %2850
  %2852 = vrot.lane.b32.xlu0 %v2834, 126
  %v2853 = vpop.permute.xlu0 %2852
  %2854 = vrot.lane.b32.xlu0 %v2835, 126
  %v2855 = vpop.permute.xlu0 %2854
  %2856 = vrot.lane.b32.xlu0 %v2836, 126
  %v2857 = vpop.permute.xlu0 %2856
  %2858 = vrot.lane.b32.xlu0 %v2837, 126
  %v2859 = vpop.permute.xlu0 %2858
  %2860 = vrot.lane.b32.xlu0 %v2838, 126
  %v2861 = vpop.permute.xlu0 %2860
  %2862 = vrot.lane.b32.xlu0 %v2839, 126
  %v2863 = vpop.permute.xlu0 %2862
  %2864 = vrot.lane.b32.xlu0 %v2840, 126
  %v2865 = vpop.permute.xlu0 %2864
  %2866 = vrot.lane.b32.xlu0 %v2841, 126
  %v2867 = vpop.permute.xlu0 %2866
  %2868 = vrot.lane.b32.xlu0 %v2842, 126
  %v2869 = vpop.permute.xlu0 %2868
  %2870 = vrot.lane.b32.xlu0 %v2843, 126
  %v2871 = vpop.permute.xlu0 %2870
  %2872 = vrot.lane.b32.xlu0 %v2844, 126
  %v2873 = vpop.permute.xlu0 %2872
  %2874 = vrot.lane.b32.xlu0 %v2845, 126
  %v2875 = vpop.permute.xlu0 %2874
  %2876 = vrot.lane.b32.xlu0 %v2846, 126
  %v2877 = vpop.permute.xlu0 %2876
  %2878 = vrot.lane.b32.xlu0 %v2847, 126
  %v2879 = vpop.permute.xlu0 %2878
  %2880 = vrot.lane.b32.xlu0 %v2848, 126
  %v2881 = vpop.permute.xlu0 %2880
  %2882 = vrot.lane.b32.xlu0 %v2849, 126
  %v2883 = vpop.permute.xlu0 %2882
  %v2884 = vsel %vm111, %v2851, %v2853
  %v2885 = vsel %vm111, %v2853, %v2855
  %v2886 = vsel %vm111, %v2855, %v2857
  %v2887 = vsel %vm111, %v2857, %v2859
  %v2888 = vsel %vm111, %v2859, %v2861
  %v2889 = vsel %vm111, %v2861, %v2863
  %v2890 = vsel %vm111, %v2863, %v2865
  %v2891 = vsel %vm111, %v2865, %v2867
  %v2892 = vsel %vm111, %v2867, %v2869
  %v2893 = vsel %vm111, %v2869, %v2871
  %v2894 = vsel %vm111, %v2871, %v2873
  %v2895 = vsel %vm111, %v2873, %v2875
  %v2896 = vsel %vm111, %v2875, %v2877
  %v2897 = vsel %vm111, %v2877, %v2879
  %v2898 = vsel %vm111, %v2879, %v2881
  %v2899 = vsel %vm111, %v2881, %v2883
  %2916 = vst [vmem:[#allocation6 + $0x400] sm:$0xfc] %v2884
  %2917 = vst [vmem:[#allocation6 + $0x408] sm:$0xfc] %v2885
  %2918 = vst [vmem:[#allocation6 + $0x410] sm:$0xfc] %v2886
  %2919 = vst [vmem:[#allocation6 + $0x418] sm:$0xfc] %v2887
  %2920 = vst [vmem:[#allocation6 + $0x420] sm:$0xfc] %v2888
  %2921 = vst [vmem:[#allocation6 + $0x428] sm:$0xfc] %v2889
  %2922 = vst [vmem:[#allocation6 + $0x430] sm:$0xfc] %v2890
  %2923 = vst [vmem:[#allocation6 + $0x438] sm:$0xfc] %v2891
  %2924 = vst [vmem:[#allocation6 + $0x440] sm:$0xfc] %v2892
  %2925 = vst [vmem:[#allocation6 + $0x448] sm:$0xfc] %v2893
  %2926 = vst [vmem:[#allocation6 + $0x450] sm:$0xfc] %v2894
  %2927 = vst [vmem:[#allocation6 + $0x458] sm:$0xfc] %v2895
  %2928 = vst [vmem:[#allocation6 + $0x460] sm:$0xfc] %v2896
  %2929 = vst [vmem:[#allocation6 + $0x468] sm:$0xfc] %v2897
  %2930 = vst [vmem:[#allocation6 + $0x470] sm:$0xfc] %v2898
  %2931 = vst [vmem:[#allocation6 + $0x478] sm:$0xfc] %v2899
  %v2932 = vld [vmem:[#allocation5 + $0x8] sm:$0x3f]
  %v2933 = vld [vmem:[#allocation5 + $0x10] sm:$0x3f]
  %v2934 = vld [vmem:[#allocation5 + $0x18] sm:$0x3f]
  %v2935 = vld [vmem:[#allocation5 + $0x20] sm:$0x3f]
  %v2936 = vld [vmem:[#allocation5 + $0x28] sm:$0x3f]
  %v2937 = vld [vmem:[#allocation5 + $0x30] sm:$0x3f]
  %v2938 = vld [vmem:[#allocation5 + $0x38] sm:$0x3f]
  %v2939 = vld [vmem:[#allocation5 + $0x40] sm:$0x3f]
  %v2940 = vld [vmem:[#allocation5 + $0x48] sm:$0x3f]
  %v2941 = vld [vmem:[#allocation5 + $0x50] sm:$0x3f]
  %v2942 = vld [vmem:[#allocation5 + $0x58] sm:$0x3f]
  %v2943 = vld [vmem:[#allocation5 + $0x60] sm:$0x3f]
  %v2944 = vld [vmem:[#allocation5 + $0x68] sm:$0x3f]
  %v2945 = vld [vmem:[#allocation5 + $0x70] sm:$0x3f]
  %v2946 = vld [vmem:[#allocation5 + $0x78] sm:$0x3f]
  %v2947 = vld [vmem:[#allocation5 + $0x80] sm:$0x3f]
  %v2948 = vld [vmem:[#allocation5 + $0x88] sm:$0x3f]
  %2966 = vrot.lane.b32.xlu0 %v2932, 124
  %v2967 = vpop.permute.xlu0 %2966
  %2968 = vrot.lane.b32.xlu0 %v2933, 124
  %v2969 = vpop.permute.xlu0 %2968
  %2970 = vrot.lane.b32.xlu0 %v2934, 124
  %v2971 = vpop.permute.xlu0 %2970
  %2972 = vrot.lane.b32.xlu0 %v2935, 124
  %v2973 = vpop.permute.xlu0 %2972
  %2974 = vrot.lane.b32.xlu0 %v2936, 124
  %v2975 = vpop.permute.xlu0 %2974
  %2976 = vrot.lane.b32.xlu0 %v2937, 124
  %v2977 = vpop.permute.xlu0 %2976
  %2978 = vrot.lane.b32.xlu0 %v2938, 124
  %v2979 = vpop.permute.xlu0 %2978
  %2980 = vrot.lane.b32.xlu0 %v2939, 124
  %v2981 = vpop.permute.xlu0 %2980
  %2982 = vrot.lane.b32.xlu0 %v2940, 124
  %v2983 = vpop.permute.xlu0 %2982
  %2984 = vrot.lane.b32.xlu0 %v2941, 124
  %v2985 = vpop.permute.xlu0 %2984
  %2986 = vrot.lane.b32.xlu0 %v2942, 124
  %v2987 = vpop.permute.xlu0 %2986
  %2988 = vrot.lane.b32.xlu0 %v2943, 124
  %v2989 = vpop.permute.xlu0 %2988
  %2990 = vrot.lane.b32.xlu0 %v2944, 124
  %v2991 = vpop.permute.xlu0 %2990
  %2992 = vrot.lane.b32.xlu0 %v2945, 124
  %v2993 = vpop.permute.xlu0 %2992
  %2994 = vrot.lane.b32.xlu0 %v2946, 124
  %v2995 = vpop.permute.xlu0 %2994
  %2996 = vrot.lane.b32.xlu0 %v2947, 124
  %v2997 = vpop.permute.xlu0 %2996
  %2998 = vrot.lane.b32.xlu0 %v2948, 124
  %v2999 = vpop.permute.xlu0 %2998
  %v3000 = vsel %vm167, %v2967, %v2969
  %v3001 = vsel %vm167, %v2969, %v2971
  %v3002 = vsel %vm167, %v2971, %v2973
  %v3003 = vsel %vm167, %v2973, %v2975
  %v3004 = vsel %vm167, %v2975, %v2977
  %v3005 = vsel %vm167, %v2977, %v2979
  %v3006 = vsel %vm167, %v2979, %v2981
  %v3007 = vsel %vm167, %v2981, %v2983
  %v3008 = vsel %vm167, %v2983, %v2985
  %v3009 = vsel %vm167, %v2985, %v2987
  %v3010 = vsel %vm167, %v2987, %v2989
  %v3011 = vsel %vm167, %v2989, %v2991
  %v3012 = vsel %vm167, %v2991, %v2993
  %v3013 = vsel %vm167, %v2993, %v2995
  %v3014 = vsel %vm167, %v2995, %v2997
  %v3015 = vsel %vm167, %v2997, %v2999
  %3032 = vst [vmem:[#allocation6 + $0x480] sm:$0x3f] %v3000
  %3033 = vst [vmem:[#allocation6 + $0x488] sm:$0x3f] %v3001
  %3034 = vst [vmem:[#allocation6 + $0x490] sm:$0x3f] %v3002
  %3035 = vst [vmem:[#allocation6 + $0x498] sm:$0x3f] %v3003
  %3036 = vst [vmem:[#allocation6 + $0x4a0] sm:$0x3f] %v3004
  %3037 = vst [vmem:[#allocation6 + $0x4a8] sm:$0x3f] %v3005
  %3038 = vst [vmem:[#allocation6 + $0x4b0] sm:$0x3f] %v3006
  %3039 = vst [vmem:[#allocation6 + $0x4b8] sm:$0x3f] %v3007
  %3040 = vst [vmem:[#allocation6 + $0x4c0] sm:$0x3f] %v3008
  %3041 = vst [vmem:[#allocation6 + $0x4c8] sm:$0x3f] %v3009
  %3042 = vst [vmem:[#allocation6 + $0x4d0] sm:$0x3f] %v3010
  %3043 = vst [vmem:[#allocation6 + $0x4d8] sm:$0x3f] %v3011
  %3044 = vst [vmem:[#allocation6 + $0x4e0] sm:$0x3f] %v3012
  %3045 = vst [vmem:[#allocation6 + $0x4e8] sm:$0x3f] %v3013
  %3046 = vst [vmem:[#allocation6 + $0x4f0] sm:$0x3f] %v3014
  %3047 = vst [vmem:[#allocation6 + $0x4f8] sm:$0x3f] %v3015
  %v3048 = vld [vmem:[#allocation5 + $0x8] sm:$0x3f]
  %v3049 = vld [vmem:[#allocation5 + $0x10] sm:$0x3f]
  %v3050 = vld [vmem:[#allocation5 + $0x18] sm:$0x3f]
  %v3051 = vld [vmem:[#allocation5 + $0x20] sm:$0x3f]
  %v3052 = vld [vmem:[#allocation5 + $0x28] sm:$0x3f]
  %v3053 = vld [vmem:[#allocation5 + $0x30] sm:$0x3f]
  %v3054 = vld [vmem:[#allocation5 + $0x38] sm:$0x3f]
  %v3055 = vld [vmem:[#allocation5 + $0x40] sm:$0x3f]
  %v3056 = vld [vmem:[#allocation5 + $0x48] sm:$0x3f]
  %v3057 = vld [vmem:[#allocation5 + $0x50] sm:$0x3f]
  %v3058 = vld [vmem:[#allocation5 + $0x58] sm:$0x3f]
  %v3059 = vld [vmem:[#allocation5 + $0x60] sm:$0x3f]
  %v3060 = vld [vmem:[#allocation5 + $0x68] sm:$0x3f]
  %v3061 = vld [vmem:[#allocation5 + $0x70] sm:$0x3f]
  %v3062 = vld [vmem:[#allocation5 + $0x78] sm:$0x3f]
  %v3063 = vld [vmem:[#allocation5 + $0x80] sm:$0x3f]
  %v3064 = vld [vmem:[#allocation5 + $0x88] sm:$0x3f]
  %v3082 = vrot.slane %v3048, 2
  %v3083 = vrot.slane %v3049, 2
  %v3084 = vrot.slane %v3050, 2
  %v3085 = vrot.slane %v3051, 2
  %v3086 = vrot.slane %v3052, 2
  %v3087 = vrot.slane %v3053, 2
  %v3088 = vrot.slane %v3054, 2
  %v3089 = vrot.slane %v3055, 2
  %v3090 = vrot.slane %v3056, 2
  %v3091 = vrot.slane %v3057, 2
  %v3092 = vrot.slane %v3058, 2
  %v3093 = vrot.slane %v3059, 2
  %v3094 = vrot.slane %v3060, 2
  %v3095 = vrot.slane %v3061, 2
  %v3096 = vrot.slane %v3062, 2
  %v3097 = vrot.slane %v3063, 2
  %v3098 = vrot.slane %v3064, 2
  %3099 = vrot.lane.b32.xlu0 %v3082, 122
  %v3100 = vpop.permute.xlu0 %3099
  %3101 = vrot.lane.b32.xlu0 %v3083, 122
  %v3102 = vpop.permute.xlu0 %3101
  %3103 = vrot.lane.b32.xlu0 %v3084, 122
  %v3104 = vpop.permute.xlu0 %3103
  %3105 = vrot.lane.b32.xlu0 %v3085, 122
  %v3106 = vpop.permute.xlu0 %3105
  %3107 = vrot.lane.b32.xlu0 %v3086, 122
  %v3108 = vpop.permute.xlu0 %3107
  %3109 = vrot.lane.b32.xlu0 %v3087, 122
  %v3110 = vpop.permute.xlu0 %3109
  %3111 = vrot.lane.b32.xlu0 %v3088, 122
  %v3112 = vpop.permute.xlu0 %3111
  %3113 = vrot.lane.b32.xlu0 %v3089, 122
  %v3114 = vpop.permute.xlu0 %3113
  %3115 = vrot.lane.b32.xlu0 %v3090, 122
  %v3116 = vpop.permute.xlu0 %3115
  %3117 = vrot.lane.b32.xlu0 %v3091, 122
  %v3118 = vpop.permute.xlu0 %3117
  %3119 = vrot.lane.b32.xlu0 %v3092, 122
  %v3120 = vpop.permute.xlu0 %3119
  %3121 = vrot.lane.b32.xlu0 %v3093, 122
  %v3122 = vpop.permute.xlu0 %3121
  %3123 = vrot.lane.b32.xlu0 %v3094, 122
  %v3124 = vpop.permute.xlu0 %3123
  %3125 = vrot.lane.b32.xlu0 %v3095, 122
  %v3126 = vpop.permute.xlu0 %3125
  %3127 = vrot.lane.b32.xlu0 %v3096, 122
  %v3128 = vpop.permute.xlu0 %3127
  %3129 = vrot.lane.b32.xlu0 %v3097, 122
  %v3130 = vpop.permute.xlu0 %3129
  %3131 = vrot.lane.b32.xlu0 %v3098, 122
  %v3132 = vpop.permute.xlu0 %3131
  %v3133 = vsel %vm1839, %v3100, %v3102
  %v3134 = vsel %vm1839, %v3102, %v3104
  %v3135 = vsel %vm1839, %v3104, %v3106
  %v3136 = vsel %vm1839, %v3106, %v3108
  %v3137 = vsel %vm1839, %v3108, %v3110
  %v3138 = vsel %vm1839, %v3110, %v3112
  %v3139 = vsel %vm1839, %v3112, %v3114
  %v3140 = vsel %vm1839, %v3114, %v3116
  %v3141 = vsel %vm1839, %v3116, %v3118
  %v3142 = vsel %vm1839, %v3118, %v3120
  %v3143 = vsel %vm1839, %v3120, %v3122
  %v3144 = vsel %vm1839, %v3122, %v3124
  %v3145 = vsel %vm1839, %v3124, %v3126
  %v3146 = vsel %vm1839, %v3126, %v3128
  %v3147 = vsel %vm1839, %v3128, %v3130
  %v3148 = vsel %vm1839, %v3130, %v3132
  %3165 = vst [vmem:[#allocation6 + $0x480] sm:$0xc0] %v3133
  %3166 = vst [vmem:[#allocation6 + $0x488] sm:$0xc0] %v3134
  %3167 = vst [vmem:[#allocation6 + $0x490] sm:$0xc0] %v3135
  %3168 = vst [vmem:[#allocation6 + $0x498] sm:$0xc0] %v3136
  %3169 = vst [vmem:[#allocation6 + $0x4a0] sm:$0xc0] %v3137
  %3170 = vst [vmem:[#allocation6 + $0x4a8] sm:$0xc0] %v3138
  %3171 = vst [vmem:[#allocation6 + $0x4b0] sm:$0xc0] %v3139
  %3172 = vst [vmem:[#allocation6 + $0x4b8] sm:$0xc0] %v3140
  %3173 = vst [vmem:[#allocation6 + $0x4c0] sm:$0xc0] %v3141
  %3174 = vst [vmem:[#allocation6 + $0x4c8] sm:$0xc0] %v3142
  %3175 = vst [vmem:[#allocation6 + $0x4d0] sm:$0xc0] %v3143
  %3176 = vst [vmem:[#allocation6 + $0x4d8] sm:$0xc0] %v3144
  %3177 = vst [vmem:[#allocation6 + $0x4e0] sm:$0xc0] %v3145
  %3178 = vst [vmem:[#allocation6 + $0x4e8] sm:$0xc0] %v3146
  %3179 = vst [vmem:[#allocation6 + $0x4f0] sm:$0xc0] %v3147
  %3180 = vst [vmem:[#allocation6 + $0x4f8] sm:$0xc0] %v3148
  %3181 = vst [vmem:[#allocation6 + $0x500] sm:$0xf] %v3133
  %3182 = vst [vmem:[#allocation6 + $0x508] sm:$0xf] %v3134
  %3183 = vst [vmem:[#allocation6 + $0x510] sm:$0xf] %v3135
  %3184 = vst [vmem:[#allocation6 + $0x518] sm:$0xf] %v3136
  %3185 = vst [vmem:[#allocation6 + $0x520] sm:$0xf] %v3137
  %3186 = vst [vmem:[#allocation6 + $0x528] sm:$0xf] %v3138
  %3187 = vst [vmem:[#allocation6 + $0x530] sm:$0xf] %v3139
  %3188 = vst [vmem:[#allocation6 + $0x538] sm:$0xf] %v3140
  %3189 = vst [vmem:[#allocation6 + $0x540] sm:$0xf] %v3141
  %3190 = vst [vmem:[#allocation6 + $0x548] sm:$0xf] %v3142
  %3191 = vst [vmem:[#allocation6 + $0x550] sm:$0xf] %v3143
  %3192 = vst [vmem:[#allocation6 + $0x558] sm:$0xf] %v3144
  %3193 = vst [vmem:[#allocation6 + $0x560] sm:$0xf] %v3145
  %3194 = vst [vmem:[#allocation6 + $0x568] sm:$0xf] %v3146
  %3195 = vst [vmem:[#allocation6 + $0x570] sm:$0xf] %v3147
  %3196 = vst [vmem:[#allocation6 + $0x578] sm:$0xf] %v3148
  %v3197 = vld [vmem:[#allocation5 + $0x8] sm:$0x3f]
  %v3198 = vld [vmem:[#allocation5 + $0x10] sm:$0x3f]
  %v3199 = vld [vmem:[#allocation5 + $0x18] sm:$0x3f]
  %v3200 = vld [vmem:[#allocation5 + $0x20] sm:$0x3f]
  %v3201 = vld [vmem:[#allocation5 + $0x28] sm:$0x3f]
  %v3202 = vld [vmem:[#allocation5 + $0x30] sm:$0x3f]
  %v3203 = vld [vmem:[#allocation5 + $0x38] sm:$0x3f]
  %v3204 = vld [vmem:[#allocation5 + $0x40] sm:$0x3f]
  %v3205 = vld [vmem:[#allocation5 + $0x48] sm:$0x3f]
  %v3206 = vld [vmem:[#allocation5 + $0x50] sm:$0x3f]
  %v3207 = vld [vmem:[#allocation5 + $0x58] sm:$0x3f]
  %v3208 = vld [vmem:[#allocation5 + $0x60] sm:$0x3f]
  %v3209 = vld [vmem:[#allocation5 + $0x68] sm:$0x3f]
  %v3210 = vld [vmem:[#allocation5 + $0x70] sm:$0x3f]
  %v3211 = vld [vmem:[#allocation5 + $0x78] sm:$0x3f]
  %v3212 = vld [vmem:[#allocation5 + $0x80] sm:$0x3f]
  %v3213 = vld [vmem:[#allocation5 + $0x88] sm:$0x3f]
  %v3231 = vrot.slane %v3197, 4
  %v3232 = vrot.slane %v3198, 4
  %v3233 = vrot.slane %v3199, 4
  %v3234 = vrot.slane %v3200, 4
  %v3235 = vrot.slane %v3201, 4
  %v3236 = vrot.slane %v3202, 4
  %v3237 = vrot.slane %v3203, 4
  %v3238 = vrot.slane %v3204, 4
  %v3239 = vrot.slane %v3205, 4
  %v3240 = vrot.slane %v3206, 4
  %v3241 = vrot.slane %v3207, 4
  %v3242 = vrot.slane %v3208, 4
  %v3243 = vrot.slane %v3209, 4
  %v3244 = vrot.slane %v3210, 4
  %v3245 = vrot.slane %v3211, 4
  %v3246 = vrot.slane %v3212, 4
  %v3247 = vrot.slane %v3213, 4
  %3248 = vrot.lane.b32.xlu0 %v3231, 120
  %v3249 = vpop.permute.xlu0 %3248
  %3250 = vrot.lane.b32.xlu0 %v3232, 120
  %v3251 = vpop.permute.xlu0 %3250
  %3252 = vrot.lane.b32.xlu0 %v3233, 120
  %v3253 = vpop.permute.xlu0 %3252
  %3254 = vrot.lane.b32.xlu0 %v3234, 120
  %v3255 = vpop.permute.xlu0 %3254
  %3256 = vrot.lane.b32.xlu0 %v3235, 120
  %v3257 = vpop.permute.xlu0 %3256
  %3258 = vrot.lane.b32.xlu0 %v3236, 120
  %v3259 = vpop.permute.xlu0 %3258
  %3260 = vrot.lane.b32.xlu0 %v3237, 120
  %v3261 = vpop.permute.xlu0 %3260
  %3262 = vrot.lane.b32.xlu0 %v3238, 120
  %v3263 = vpop.permute.xlu0 %3262
  %3264 = vrot.lane.b32.xlu0 %v3239, 120
  %v3265 = vpop.permute.xlu0 %3264
  %3266 = vrot.lane.b32.xlu0 %v3240, 120
  %v3267 = vpop.permute.xlu0 %3266
  %3268 = vrot.lane.b32.xlu0 %v3241, 120
  %v3269 = vpop.permute.xlu0 %3268
  %3270 = vrot.lane.b32.xlu0 %v3242, 120
  %v3271 = vpop.permute.xlu0 %3270
  %3272 = vrot.lane.b32.xlu0 %v3243, 120
  %v3273 = vpop.permute.xlu0 %3272
  %3274 = vrot.lane.b32.xlu0 %v3244, 120
  %v3275 = vpop.permute.xlu0 %3274
  %3276 = vrot.lane.b32.xlu0 %v3245, 120
  %v3277 = vpop.permute.xlu0 %3276
  %3278 = vrot.lane.b32.xlu0 %v3246, 120
  %v3279 = vpop.permute.xlu0 %3278
  %3280 = vrot.lane.b32.xlu0 %v3247, 120
  %v3281 = vpop.permute.xlu0 %3280
  %v3282 = vsel %vm1956, %v3249, %v3251
  %v3283 = vsel %vm1956, %v3251, %v3253
  %v3284 = vsel %vm1956, %v3253, %v3255
  %v3285 = vsel %vm1956, %v3255, %v3257
  %v3286 = vsel %vm1956, %v3257, %v3259
  %v3287 = vsel %vm1956, %v3259, %v3261
  %v3288 = vsel %vm1956, %v3261, %v3263
  %v3289 = vsel %vm1956, %v3263, %v3265
  %v3290 = vsel %vm1956, %v3265, %v3267
  %v3291 = vsel %vm1956, %v3267, %v3269
  %v3292 = vsel %vm1956, %v3269, %v3271
  %v3293 = vsel %vm1956, %v3271, %v3273
  %v3294 = vsel %vm1956, %v3273, %v3275
  %v3295 = vsel %vm1956, %v3275, %v3277
  %v3296 = vsel %vm1956, %v3277, %v3279
  %v3297 = vsel %vm1956, %v3279, %v3281
  %3314 = vst [vmem:[#allocation6 + $0x500] sm:$0xf0] %v3282
  %3315 = vst [vmem:[#allocation6 + $0x508] sm:$0xf0] %v3283
  %3316 = vst [vmem:[#allocation6 + $0x510] sm:$0xf0] %v3284
  %3317 = vst [vmem:[#allocation6 + $0x518] sm:$0xf0] %v3285
  %3318 = vst [vmem:[#allocation6 + $0x520] sm:$0xf0] %v3286
  %3319 = vst [vmem:[#allocation6 + $0x528] sm:$0xf0] %v3287
  %3320 = vst [vmem:[#allocation6 + $0x530] sm:$0xf0] %v3288
  %3321 = vst [vmem:[#allocation6 + $0x538] sm:$0xf0] %v3289
  %3322 = vst [vmem:[#allocation6 + $0x540] sm:$0xf0] %v3290
  %3323 = vst [vmem:[#allocation6 + $0x548] sm:$0xf0] %v3291
  %3324 = vst [vmem:[#allocation6 + $0x550] sm:$0xf0] %v3292
  %3325 = vst [vmem:[#allocation6 + $0x558] sm:$0xf0] %v3293
  %3326 = vst [vmem:[#allocation6 + $0x560] sm:$0xf0] %v3294
  %3327 = vst [vmem:[#allocation6 + $0x568] sm:$0xf0] %v3295
  %3328 = vst [vmem:[#allocation6 + $0x570] sm:$0xf0] %v3296
  %3329 = vst [vmem:[#allocation6 + $0x578] sm:$0xf0] %v3297
  %3330 = vst [vmem:[#allocation6 + $0x580] sm:$0x3] %v3282
  %3331 = vst [vmem:[#allocation6 + $0x588] sm:$0x3] %v3283
  %3332 = vst [vmem:[#allocation6 + $0x590] sm:$0x3] %v3284
  %3333 = vst [vmem:[#allocation6 + $0x598] sm:$0x3] %v3285
  %3334 = vst [vmem:[#allocation6 + $0x5a0] sm:$0x3] %v3286
  %3335 = vst [vmem:[#allocation6 + $0x5a8] sm:$0x3] %v3287
  %3336 = vst [vmem:[#allocation6 + $0x5b0] sm:$0x3] %v3288
  %3337 = vst [vmem:[#allocation6 + $0x5b8] sm:$0x3] %v3289
  %3338 = vst [vmem:[#allocation6 + $0x5c0] sm:$0x3] %v3290
  %3339 = vst [vmem:[#allocation6 + $0x5c8] sm:$0x3] %v3291
  %3340 = vst [vmem:[#allocation6 + $0x5d0] sm:$0x3] %v3292
  %3341 = vst [vmem:[#allocation6 + $0x5d8] sm:$0x3] %v3293
  %3342 = vst [vmem:[#allocation6 + $0x5e0] sm:$0x3] %v3294
  %3343 = vst [vmem:[#allocation6 + $0x5e8] sm:$0x3] %v3295
  %3344 = vst [vmem:[#allocation6 + $0x5f0] sm:$0x3] %v3296
  %3345 = vst [vmem:[#allocation6 + $0x5f8] sm:$0x3] %v3297
  %v3346 = vld [vmem:[#allocation5 + $0x8] sm:$0x3f]
  %v3347 = vld [vmem:[#allocation5 + $0x10] sm:$0x3f]
  %v3348 = vld [vmem:[#allocation5 + $0x18] sm:$0x3f]
  %v3349 = vld [vmem:[#allocation5 + $0x20] sm:$0x3f]
  %v3350 = vld [vmem:[#allocation5 + $0x28] sm:$0x3f]
  %v3351 = vld [vmem:[#allocation5 + $0x30] sm:$0x3f]
  %v3352 = vld [vmem:[#allocation5 + $0x38] sm:$0x3f]
  %v3353 = vld [vmem:[#allocation5 + $0x40] sm:$0x3f]
  %v3354 = vld [vmem:[#allocation5 + $0x48] sm:$0x3f]
  %v3355 = vld [vmem:[#allocation5 + $0x50] sm:$0x3f]
  %v3356 = vld [vmem:[#allocation5 + $0x58] sm:$0x3f]
  %v3357 = vld [vmem:[#allocation5 + $0x60] sm:$0x3f]
  %v3358 = vld [vmem:[#allocation5 + $0x68] sm:$0x3f]
  %v3359 = vld [vmem:[#allocation5 + $0x70] sm:$0x3f]
  %v3360 = vld [vmem:[#allocation5 + $0x78] sm:$0x3f]
  %v3361 = vld [vmem:[#allocation5 + $0x80] sm:$0x3f]
  %v3362 = vld [vmem:[#allocation5 + $0x88] sm:$0x3f]
  %v3380 = vrot.slane %v3346, 6
  %v3381 = vrot.slane %v3347, 6
  %v3382 = vrot.slane %v3348, 6
  %v3383 = vrot.slane %v3349, 6
  %v3384 = vrot.slane %v3350, 6
  %v3385 = vrot.slane %v3351, 6
  %v3386 = vrot.slane %v3352, 6
  %v3387 = vrot.slane %v3353, 6
  %v3388 = vrot.slane %v3354, 6
  %v3389 = vrot.slane %v3355, 6
  %v3390 = vrot.slane %v3356, 6
  %v3391 = vrot.slane %v3357, 6
  %v3392 = vrot.slane %v3358, 6
  %v3393 = vrot.slane %v3359, 6
  %v3394 = vrot.slane %v3360, 6
  %v3395 = vrot.slane %v3361, 6
  %v3396 = vrot.slane %v3362, 6
  %3397 = vrot.lane.b32.xlu0 %v3380, 64
  %v3398 = vpop.permute.xlu0 %3397
  %3399 = vrot.lane.b32.xlu0 %v3381, 64
  %v3400 = vpop.permute.xlu0 %3399
  %3401 = vrot.lane.b32.xlu0 %v3382, 64
  %v3402 = vpop.permute.xlu0 %3401
  %3403 = vrot.lane.b32.xlu0 %v3383, 64
  %v3404 = vpop.permute.xlu0 %3403
  %3405 = vrot.lane.b32.xlu0 %v3384, 64
  %v3406 = vpop.permute.xlu0 %3405
  %3407 = vrot.lane.b32.xlu0 %v3385, 64
  %v3408 = vpop.permute.xlu0 %3407
  %3409 = vrot.lane.b32.xlu0 %v3386, 64
  %v3410 = vpop.permute.xlu0 %3409
  %3411 = vrot.lane.b32.xlu0 %v3387, 64
  %v3412 = vpop.permute.xlu0 %3411
  %3413 = vrot.lane.b32.xlu0 %v3388, 64
  %v3414 = vpop.permute.xlu0 %3413
  %3415 = vrot.lane.b32.xlu0 %v3389, 64
  %v3416 = vpop.permute.xlu0 %3415
  %3417 = vrot.lane.b32.xlu0 %v3390, 64
  %v3418 = vpop.permute.xlu0 %3417
  %3419 = vrot.lane.b32.xlu0 %v3391, 64
  %v3420 = vpop.permute.xlu0 %3419
  %3421 = vrot.lane.b32.xlu0 %v3392, 64
  %v3422 = vpop.permute.xlu0 %3421
  %3423 = vrot.lane.b32.xlu0 %v3393, 64
  %v3424 = vpop.permute.xlu0 %3423
  %3425 = vrot.lane.b32.xlu0 %v3394, 64
  %v3426 = vpop.permute.xlu0 %3425
  %3427 = vrot.lane.b32.xlu0 %v3395, 64
  %v3428 = vpop.permute.xlu0 %3427
  %3429 = vrot.lane.b32.xlu0 %v3396, 64
  %v3430 = vpop.permute.xlu0 %3429
  %v3431 = vsel %vm335, %v3398, %v3400
  %v3432 = vsel %vm335, %v3400, %v3402
  %v3433 = vsel %vm335, %v3402, %v3404
  %v3434 = vsel %vm335, %v3404, %v3406
  %v3435 = vsel %vm335, %v3406, %v3408
  %v3436 = vsel %vm335, %v3408, %v3410
  %v3437 = vsel %vm335, %v3410, %v3412
  %v3438 = vsel %vm335, %v3412, %v3414
  %v3439 = vsel %vm335, %v3414, %v3416
  %v3440 = vsel %vm335, %v3416, %v3418
  %v3441 = vsel %vm335, %v3418, %v3420
  %v3442 = vsel %vm335, %v3420, %v3422
  %v3443 = vsel %vm335, %v3422, %v3424
  %v3444 = vsel %vm335, %v3424, %v3426
  %v3445 = vsel %vm335, %v3426, %v3428
  %v3446 = vsel %vm335, %v3428, %v3430
  %3463 = vst [vmem:[#allocation6 + $0x580] sm:$0xfc] %v3431
  %3464 = vst [vmem:[#allocation6 + $0x588] sm:$0xfc] %v3432
  %3465 = vst [vmem:[#allocation6 + $0x590] sm:$0xfc] %v3433
  %3466 = vst [vmem:[#allocation6 + $0x598] sm:$0xfc] %v3434
  %3467 = vst [vmem:[#allocation6 + $0x5a0] sm:$0xfc] %v3435
  %3468 = vst [vmem:[#allocation6 + $0x5a8] sm:$0xfc] %v3436
  %3469 = vst [vmem:[#allocation6 + $0x5b0] sm:$0xfc] %v3437
  %3470 = vst [vmem:[#allocation6 + $0x5b8] sm:$0xfc] %v3438
  %3471 = vst [vmem:[#allocation6 + $0x5c0] sm:$0xfc] %v3439
  %3472 = vst [vmem:[#allocation6 + $0x5c8] sm:$0xfc] %v3440
  %3473 = vst [vmem:[#allocation6 + $0x5d0] sm:$0xfc] %v3441
  %3474 = vst [vmem:[#allocation6 + $0x5d8] sm:$0xfc] %v3442
  %3475 = vst [vmem:[#allocation6 + $0x5e0] sm:$0xfc] %v3443
  %3476 = vst [vmem:[#allocation6 + $0x5e8] sm:$0xfc] %v3444
  %3477 = vst [vmem:[#allocation6 + $0x5f0] sm:$0xfc] %v3445
  %3478 = vst [vmem:[#allocation6 + $0x5f8] sm:$0xfc] %v3446
  %v3479 = vld [vmem:[#allocation5 + $0x8] sm:$0x3f]
  %v3480 = vld [vmem:[#allocation5 + $0x10] sm:$0x3f]
  %v3481 = vld [vmem:[#allocation5 + $0x18] sm:$0x3f]
  %v3482 = vld [vmem:[#allocation5 + $0x20] sm:$0x3f]
  %v3483 = vld [vmem:[#allocation5 + $0x28] sm:$0x3f]
  %v3484 = vld [vmem:[#allocation5 + $0x30] sm:$0x3f]
  %v3485 = vld [vmem:[#allocation5 + $0x38] sm:$0x3f]
  %v3486 = vld [vmem:[#allocation5 + $0x40] sm:$0x3f]
  %v3487 = vld [vmem:[#allocation5 + $0x48] sm:$0x3f]
  %v3488 = vld [vmem:[#allocation5 + $0x50] sm:$0x3f]
  %v3489 = vld [vmem:[#allocation5 + $0x58] sm:$0x3f]
  %v3490 = vld [vmem:[#allocation5 + $0x60] sm:$0x3f]
  %v3491 = vld [vmem:[#allocation5 + $0x68] sm:$0x3f]
  %v3492 = vld [vmem:[#allocation5 + $0x70] sm:$0x3f]
  %v3493 = vld [vmem:[#allocation5 + $0x78] sm:$0x3f]
  %v3494 = vld [vmem:[#allocation5 + $0x80] sm:$0x3f]
  %v3495 = vld [vmem:[#allocation5 + $0x88] sm:$0x3f]
  %3513 = vrot.lane.b32.xlu0 %v3479, 62
  %v3514 = vpop.permute.xlu0 %3513
  %3515 = vrot.lane.b32.xlu0 %v3480, 62
  %v3516 = vpop.permute.xlu0 %3515
  %3517 = vrot.lane.b32.xlu0 %v3481, 62
  %v3518 = vpop.permute.xlu0 %3517
  %3519 = vrot.lane.b32.xlu0 %v3482, 62
  %v3520 = vpop.permute.xlu0 %3519
  %3521 = vrot.lane.b32.xlu0 %v3483, 62
  %v3522 = vpop.permute.xlu0 %3521
  %3523 = vrot.lane.b32.xlu0 %v3484, 62
  %v3524 = vpop.permute.xlu0 %3523
  %3525 = vrot.lane.b32.xlu0 %v3485, 62
  %v3526 = vpop.permute.xlu0 %3525
  %3527 = vrot.lane.b32.xlu0 %v3486, 62
  %v3528 = vpop.permute.xlu0 %3527
  %3529 = vrot.lane.b32.xlu0 %v3487, 62
  %v3530 = vpop.permute.xlu0 %3529
  %3531 = vrot.lane.b32.xlu0 %v3488, 62
  %v3532 = vpop.permute.xlu0 %3531
  %3533 = vrot.lane.b32.xlu0 %v3489, 62
  %v3534 = vpop.permute.xlu0 %3533
  %3535 = vrot.lane.b32.xlu0 %v3490, 62
  %v3536 = vpop.permute.xlu0 %3535
  %3537 = vrot.lane.b32.xlu0 %v3491, 62
  %v3538 = vpop.permute.xlu0 %3537
  %3539 = vrot.lane.b32.xlu0 %v3492, 62
  %v3540 = vpop.permute.xlu0 %3539
  %3541 = vrot.lane.b32.xlu0 %v3493, 62
  %v3542 = vpop.permute.xlu0 %3541
  %3543 = vrot.lane.b32.xlu0 %v3494, 62
  %v3544 = vpop.permute.xlu0 %3543
  %3545 = vrot.lane.b32.xlu0 %v3495, 62
  %v3546 = vpop.permute.xlu0 %3545
  %v3547 = vsel %vm391, %v3514, %v3516
  %v3548 = vsel %vm391, %v3516, %v3518
  %v3549 = vsel %vm391, %v3518, %v3520
  %v3550 = vsel %vm391, %v3520, %v3522
  %v3551 = vsel %vm391, %v3522, %v3524
  %v3552 = vsel %vm391, %v3524, %v3526
  %v3553 = vsel %vm391, %v3526, %v3528
  %v3554 = vsel %vm391, %v3528, %v3530
  %v3555 = vsel %vm391, %v3530, %v3532
  %v3556 = vsel %vm391, %v3532, %v3534
  %v3557 = vsel %vm391, %v3534, %v3536
  %v3558 = vsel %vm391, %v3536, %v3538
  %v3559 = vsel %vm391, %v3538, %v3540
  %v3560 = vsel %vm391, %v3540, %v3542
  %v3561 = vsel %vm391, %v3542, %v3544
  %v3562 = vsel %vm391, %v3544, %v3546
  %3579 = vst [vmem:[#allocation6 + $0x600] sm:$0x3f] %v3547
  %3580 = vst [vmem:[#allocation6 + $0x608] sm:$0x3f] %v3548
  %3581 = vst [vmem:[#allocation6 + $0x610] sm:$0x3f] %v3549
  %3582 = vst [vmem:[#allocation6 + $0x618] sm:$0x3f] %v3550
  %3583 = vst [vmem:[#allocation6 + $0x620] sm:$0x3f] %v3551
  %3584 = vst [vmem:[#allocation6 + $0x628] sm:$0x3f] %v3552
  %3585 = vst [vmem:[#allocation6 + $0x630] sm:$0x3f] %v3553
  %3586 = vst [vmem:[#allocation6 + $0x638] sm:$0x3f] %v3554
  %3587 = vst [vmem:[#allocation6 + $0x640] sm:$0x3f] %v3555
  %3588 = vst [vmem:[#allocation6 + $0x648] sm:$0x3f] %v3556
  %3589 = vst [vmem:[#allocation6 + $0x650] sm:$0x3f] %v3557
  %3590 = vst [vmem:[#allocation6 + $0x658] sm:$0x3f] %v3558
  %3591 = vst [vmem:[#allocation6 + $0x660] sm:$0x3f] %v3559
  %3592 = vst [vmem:[#allocation6 + $0x668] sm:$0x3f] %v3560
  %3593 = vst [vmem:[#allocation6 + $0x670] sm:$0x3f] %v3561
  %3594 = vst [vmem:[#allocation6 + $0x678] sm:$0x3f] %v3562
  %v3595 = vld [vmem:[#allocation5 + $0x8] sm:$0x3f]
  %v3596 = vld [vmem:[#allocation5 + $0x10] sm:$0x3f]
  %v3597 = vld [vmem:[#allocation5 + $0x18] sm:$0x3f]
  %v3598 = vld [vmem:[#allocation5 + $0x20] sm:$0x3f]
  %v3599 = vld [vmem:[#allocation5 + $0x28] sm:$0x3f]
  %v3600 = vld [vmem:[#allocation5 + $0x30] sm:$0x3f]
  %v3601 = vld [vmem:[#allocation5 + $0x38] sm:$0x3f]
  %v3602 = vld [vmem:[#allocation5 + $0x40] sm:$0x3f]
  %v3603 = vld [vmem:[#allocation5 + $0x48] sm:$0x3f]
  %v3604 = vld [vmem:[#allocation5 + $0x50] sm:$0x3f]
  %v3605 = vld [vmem:[#allocation5 + $0x58] sm:$0x3f]
  %v3606 = vld [vmem:[#allocation5 + $0x60] sm:$0x3f]
  %v3607 = vld [vmem:[#allocation5 + $0x68] sm:$0x3f]
  %v3608 = vld [vmem:[#allocation5 + $0x70] sm:$0x3f]
  %v3609 = vld [vmem:[#allocation5 + $0x78] sm:$0x3f]
  %v3610 = vld [vmem:[#allocation5 + $0x80] sm:$0x3f]
  %v3611 = vld [vmem:[#allocation5 + $0x88] sm:$0x3f]
  %v3629 = vrot.slane %v3595, 2
  %v3630 = vrot.slane %v3596, 2
  %v3631 = vrot.slane %v3597, 2
  %v3632 = vrot.slane %v3598, 2
  %v3633 = vrot.slane %v3599, 2
  %v3634 = vrot.slane %v3600, 2
  %v3635 = vrot.slane %v3601, 2
  %v3636 = vrot.slane %v3602, 2
  %v3637 = vrot.slane %v3603, 2
  %v3638 = vrot.slane %v3604, 2
  %v3639 = vrot.slane %v3605, 2
  %v3640 = vrot.slane %v3606, 2
  %v3641 = vrot.slane %v3607, 2
  %v3642 = vrot.slane %v3608, 2
  %v3643 = vrot.slane %v3609, 2
  %v3644 = vrot.slane %v3610, 2
  %v3645 = vrot.slane %v3611, 2
  %3646 = vrot.lane.b32.xlu0 %v3629, 60
  %v3647 = vpop.permute.xlu0 %3646
  %3648 = vrot.lane.b32.xlu0 %v3630, 60
  %v3649 = vpop.permute.xlu0 %3648
  %3650 = vrot.lane.b32.xlu0 %v3631, 60
  %v3651 = vpop.permute.xlu0 %3650
  %3652 = vrot.lane.b32.xlu0 %v3632, 60
  %v3653 = vpop.permute.xlu0 %3652
  %3654 = vrot.lane.b32.xlu0 %v3633, 60
  %v3655 = vpop.permute.xlu0 %3654
  %3656 = vrot.lane.b32.xlu0 %v3634, 60
  %v3657 = vpop.permute.xlu0 %3656
  %3658 = vrot.lane.b32.xlu0 %v3635, 60
  %v3659 = vpop.permute.xlu0 %3658
  %3660 = vrot.lane.b32.xlu0 %v3636, 60
  %v3661 = vpop.permute.xlu0 %3660
  %3662 = vrot.lane.b32.xlu0 %v3637, 60
  %v3663 = vpop.permute.xlu0 %3662
  %3664 = vrot.lane.b32.xlu0 %v3638, 60
  %v3665 = vpop.permute.xlu0 %3664
  %3666 = vrot.lane.b32.xlu0 %v3639, 60
  %v3667 = vpop.permute.xlu0 %3666
  %3668 = vrot.lane.b32.xlu0 %v3640, 60
  %v3669 = vpop.permute.xlu0 %3668
  %3670 = vrot.lane.b32.xlu0 %v3641, 60
  %v3671 = vpop.permute.xlu0 %3670
  %3672 = vrot.lane.b32.xlu0 %v3642, 60
  %v3673 = vpop.permute.xlu0 %3672
  %3674 = vrot.lane.b32.xlu0 %v3643, 60
  %v3675 = vpop.permute.xlu0 %3674
  %3676 = vrot.lane.b32.xlu0 %v3644, 60
  %v3677 = vpop.permute.xlu0 %3676
  %3678 = vrot.lane.b32.xlu0 %v3645, 60
  %v3679 = vpop.permute.xlu0 %3678
  %v3680 = vsel %vm447, %v3647, %v3649
  %v3681 = vsel %vm447, %v3649, %v3651
  %v3682 = vsel %vm447, %v3651, %v3653
  %v3683 = vsel %vm447, %v3653, %v3655
  %v3684 = vsel %vm447, %v3655, %v3657
  %v3685 = vsel %vm447, %v3657, %v3659
  %v3686 = vsel %vm447, %v3659, %v3661
  %v3687 = vsel %vm447, %v3661, %v3663
  %v3688 = vsel %vm447, %v3663, %v3665
  %v3689 = vsel %vm447, %v3665, %v3667
  %v3690 = vsel %vm447, %v3667, %v3669
  %v3691 = vsel %vm447, %v3669, %v3671
  %v3692 = vsel %vm447, %v3671, %v3673
  %v3693 = vsel %vm447, %v3673, %v3675
  %v3694 = vsel %vm447, %v3675, %v3677
  %v3695 = vsel %vm447, %v3677, %v3679
  %3712 = vst [vmem:[#allocation6 + $0x600] sm:$0xc0] %v3680
  %3713 = vst [vmem:[#allocation6 + $0x608] sm:$0xc0] %v3681
  %3714 = vst [vmem:[#allocation6 + $0x610] sm:$0xc0] %v3682
  %3715 = vst [vmem:[#allocation6 + $0x618] sm:$0xc0] %v3683
  %3716 = vst [vmem:[#allocation6 + $0x620] sm:$0xc0] %v3684
  %3717 = vst [vmem:[#allocation6 + $0x628] sm:$0xc0] %v3685
  %3718 = vst [vmem:[#allocation6 + $0x630] sm:$0xc0] %v3686
  %3719 = vst [vmem:[#allocation6 + $0x638] sm:$0xc0] %v3687
  %3720 = vst [vmem:[#allocation6 + $0x640] sm:$0xc0] %v3688
  %3721 = vst [vmem:[#allocation6 + $0x648] sm:$0xc0] %v3689
  %3722 = vst [vmem:[#allocation6 + $0x650] sm:$0xc0] %v3690
  %3723 = vst [vmem:[#allocation6 + $0x658] sm:$0xc0] %v3691
  %3724 = vst [vmem:[#allocation6 + $0x660] sm:$0xc0] %v3692
  %3725 = vst [vmem:[#allocation6 + $0x668] sm:$0xc0] %v3693
  %3726 = vst [vmem:[#allocation6 + $0x670] sm:$0xc0] %v3694
  %3727 = vst [vmem:[#allocation6 + $0x678] sm:$0xc0] %v3695
  %3728 = vst [vmem:[#allocation6 + $0x680] sm:$0xf] %v3680
  %3729 = vst [vmem:[#allocation6 + $0x688] sm:$0xf] %v3681
  %3730 = vst [vmem:[#allocation6 + $0x690] sm:$0xf] %v3682
  %3731 = vst [vmem:[#allocation6 + $0x698] sm:$0xf] %v3683
  %3732 = vst [vmem:[#allocation6 + $0x6a0] sm:$0xf] %v3684
  %3733 = vst [vmem:[#allocation6 + $0x6a8] sm:$0xf] %v3685
  %3734 = vst [vmem:[#allocation6 + $0x6b0] sm:$0xf] %v3686
  %3735 = vst [vmem:[#allocation6 + $0x6b8] sm:$0xf] %v3687
  %3736 = vst [vmem:[#allocation6 + $0x6c0] sm:$0xf] %v3688
  %3737 = vst [vmem:[#allocation6 + $0x6c8] sm:$0xf] %v3689
  %3738 = vst [vmem:[#allocation6 + $0x6d0] sm:$0xf] %v3690
  %3739 = vst [vmem:[#allocation6 + $0x6d8] sm:$0xf] %v3691
  %3740 = vst [vmem:[#allocation6 + $0x6e0] sm:$0xf] %v3692
  %3741 = vst [vmem:[#allocation6 + $0x6e8] sm:$0xf] %v3693
  %3742 = vst [vmem:[#allocation6 + $0x6f0] sm:$0xf] %v3694
  %3743 = vst [vmem:[#allocation6 + $0x6f8] sm:$0xf] %v3695
  %v3744 = vld [vmem:[#allocation5 + $0x8] sm:$0x3f]
  %v3745 = vld [vmem:[#allocation5 + $0x10] sm:$0x3f]
  %v3746 = vld [vmem:[#allocation5 + $0x18] sm:$0x3f]
  %v3747 = vld [vmem:[#allocation5 + $0x20] sm:$0x3f]
  %v3748 = vld [vmem:[#allocation5 + $0x28] sm:$0x3f]
  %v3749 = vld [vmem:[#allocation5 + $0x30] sm:$0x3f]
  %v3750 = vld [vmem:[#allocation5 + $0x38] sm:$0x3f]
  %v3751 = vld [vmem:[#allocation5 + $0x40] sm:$0x3f]
  %v3752 = vld [vmem:[#allocation5 + $0x48] sm:$0x3f]
  %v3753 = vld [vmem:[#allocation5 + $0x50] sm:$0x3f]
  %v3754 = vld [vmem:[#allocation5 + $0x58] sm:$0x3f]
  %v3755 = vld [vmem:[#allocation5 + $0x60] sm:$0x3f]
  %v3756 = vld [vmem:[#allocation5 + $0x68] sm:$0x3f]
  %v3757 = vld [vmem:[#allocation5 + $0x70] sm:$0x3f]
  %v3758 = vld [vmem:[#allocation5 + $0x78] sm:$0x3f]
  %v3759 = vld [vmem:[#allocation5 + $0x80] sm:$0x3f]
  %v3760 = vld [vmem:[#allocation5 + $0x88] sm:$0x3f]
  %v3778 = vrot.slane %v3744, 4
  %v3779 = vrot.slane %v3745, 4
  %v3780 = vrot.slane %v3746, 4
  %v3781 = vrot.slane %v3747, 4
  %v3782 = vrot.slane %v3748, 4
  %v3783 = vrot.slane %v3749, 4
  %v3784 = vrot.slane %v3750, 4
  %v3785 = vrot.slane %v3751, 4
  %v3786 = vrot.slane %v3752, 4
  %v3787 = vrot.slane %v3753, 4
  %v3788 = vrot.slane %v3754, 4
  %v3789 = vrot.slane %v3755, 4
  %v3790 = vrot.slane %v3756, 4
  %v3791 = vrot.slane %v3757, 4
  %v3792 = vrot.slane %v3758, 4
  %v3793 = vrot.slane %v3759, 4
  %v3794 = vrot.slane %v3760, 4
  %3795 = vrot.lane.b32.xlu0 %v3778, 58
  %v3796 = vpop.permute.xlu0 %3795
  %3797 = vrot.lane.b32.xlu0 %v3779, 58
  %v3798 = vpop.permute.xlu0 %3797
  %3799 = vrot.lane.b32.xlu0 %v3780, 58
  %v3800 = vpop.permute.xlu0 %3799
  %3801 = vrot.lane.b32.xlu0 %v3781, 58
  %v3802 = vpop.permute.xlu0 %3801
  %3803 = vrot.lane.b32.xlu0 %v3782, 58
  %v3804 = vpop.permute.xlu0 %3803
  %3805 = vrot.lane.b32.xlu0 %v3783, 58
  %v3806 = vpop.permute.xlu0 %3805
  %3807 = vrot.lane.b32.xlu0 %v3784, 58
  %v3808 = vpop.permute.xlu0 %3807
  %3809 = vrot.lane.b32.xlu0 %v3785, 58
  %v3810 = vpop.permute.xlu0 %3809
  %3811 = vrot.lane.b32.xlu0 %v3786, 58
  %v3812 = vpop.permute.xlu0 %3811
  %3813 = vrot.lane.b32.xlu0 %v3787, 58
  %v3814 = vpop.permute.xlu0 %3813
  %3815 = vrot.lane.b32.xlu0 %v3788, 58
  %v3816 = vpop.permute.xlu0 %3815
  %3817 = vrot.lane.b32.xlu0 %v3789, 58
  %v3818 = vpop.permute.xlu0 %3817
  %3819 = vrot.lane.b32.xlu0 %v3790, 58
  %v3820 = vpop.permute.xlu0 %3819
  %3821 = vrot.lane.b32.xlu0 %v3791, 58
  %v3822 = vpop.permute.xlu0 %3821
  %3823 = vrot.lane.b32.xlu0 %v3792, 58
  %v3824 = vpop.permute.xlu0 %3823
  %3825 = vrot.lane.b32.xlu0 %v3793, 58
  %v3826 = vpop.permute.xlu0 %3825
  %3827 = vrot.lane.b32.xlu0 %v3794, 58
  %v3828 = vpop.permute.xlu0 %3827
  %v3829 = vsel %vm2504, %v3796, %v3798
  %v3830 = vsel %vm2504, %v3798, %v3800
  %v3831 = vsel %vm2504, %v3800, %v3802
  %v3832 = vsel %vm2504, %v3802, %v3804
  %v3833 = vsel %vm2504, %v3804, %v3806
  %v3834 = vsel %vm2504, %v3806, %v3808
  %v3835 = vsel %vm2504, %v3808, %v3810
  %v3836 = vsel %vm2504, %v3810, %v3812
  %v3837 = vsel %vm2504, %v3812, %v3814
  %v3838 = vsel %vm2504, %v3814, %v3816
  %v3839 = vsel %vm2504, %v3816, %v3818
  %v3840 = vsel %vm2504, %v3818, %v3820
  %v3841 = vsel %vm2504, %v3820, %v3822
  %v3842 = vsel %vm2504, %v3822, %v3824
  %v3843 = vsel %vm2504, %v3824, %v3826
  %v3844 = vsel %vm2504, %v3826, %v3828
  %3861 = vst [vmem:[#allocation6 + $0x680] sm:$0xf0] %v3829
  %3862 = vst [vmem:[#allocation6 + $0x688] sm:$0xf0] %v3830
  %3863 = vst [vmem:[#allocation6 + $0x690] sm:$0xf0] %v3831
  %3864 = vst [vmem:[#allocation6 + $0x698] sm:$0xf0] %v3832
  %3865 = vst [vmem:[#allocation6 + $0x6a0] sm:$0xf0] %v3833
  %3866 = vst [vmem:[#allocation6 + $0x6a8] sm:$0xf0] %v3834
  %3867 = vst [vmem:[#allocation6 + $0x6b0] sm:$0xf0] %v3835
  %3868 = vst [vmem:[#allocation6 + $0x6b8] sm:$0xf0] %v3836
  %3869 = vst [vmem:[#allocation6 + $0x6c0] sm:$0xf0] %v3837
  %3870 = vst [vmem:[#allocation6 + $0x6c8] sm:$0xf0] %v3838
  %3871 = vst [vmem:[#allocation6 + $0x6d0] sm:$0xf0] %v3839
  %3872 = vst [vmem:[#allocation6 + $0x6d8] sm:$0xf0] %v3840
  %3873 = vst [vmem:[#allocation6 + $0x6e0] sm:$0xf0] %v3841
  %3874 = vst [vmem:[#allocation6 + $0x6e8] sm:$0xf0] %v3842
  %3875 = vst [vmem:[#allocation6 + $0x6f0] sm:$0xf0] %v3843
  %3876 = vst [vmem:[#allocation6 + $0x6f8] sm:$0xf0] %v3844
  %3877 = vst [vmem:[#allocation6 + $0x700] sm:$0x3] %v3829
  %3878 = vst [vmem:[#allocation6 + $0x708] sm:$0x3] %v3830
  %3879 = vst [vmem:[#allocation6 + $0x710] sm:$0x3] %v3831
  %3880 = vst [vmem:[#allocation6 + $0x718] sm:$0x3] %v3832
  %3881 = vst [vmem:[#allocation6 + $0x720] sm:$0x3] %v3833
  %3882 = vst [vmem:[#allocation6 + $0x728] sm:$0x3] %v3834
  %3883 = vst [vmem:[#allocation6 + $0x730] sm:$0x3] %v3835
  %3884 = vst [vmem:[#allocation6 + $0x738] sm:$0x3] %v3836
  %3885 = vst [vmem:[#allocation6 + $0x740] sm:$0x3] %v3837
  %3886 = vst [vmem:[#allocation6 + $0x748] sm:$0x3] %v3838
  %3887 = vst [vmem:[#allocation6 + $0x750] sm:$0x3] %v3839
  %3888 = vst [vmem:[#allocation6 + $0x758] sm:$0x3] %v3840
  %3889 = vst [vmem:[#allocation6 + $0x760] sm:$0x3] %v3841
  %3890 = vst [vmem:[#allocation6 + $0x768] sm:$0x3] %v3842
  %3891 = vst [vmem:[#allocation6 + $0x770] sm:$0x3] %v3843
  %3892 = vst [vmem:[#allocation6 + $0x778] sm:$0x3] %v3844
  %v3893 = vld [vmem:[#allocation5 + $0x8] sm:$0x3f]
  %v3894 = vld [vmem:[#allocation5 + $0x10] sm:$0x3f]
  %v3895 = vld [vmem:[#allocation5 + $0x18] sm:$0x3f]
  %v3896 = vld [vmem:[#allocation5 + $0x20] sm:$0x3f]
  %v3897 = vld [vmem:[#allocation5 + $0x28] sm:$0x3f]
  %v3898 = vld [vmem:[#allocation5 + $0x30] sm:$0x3f]
  %v3899 = vld [vmem:[#allocation5 + $0x38] sm:$0x3f]
  %v3900 = vld [vmem:[#allocation5 + $0x40] sm:$0x3f]
  %v3901 = vld [vmem:[#allocation5 + $0x48] sm:$0x3f]
  %v3902 = vld [vmem:[#allocation5 + $0x50] sm:$0x3f]
  %v3903 = vld [vmem:[#allocation5 + $0x58] sm:$0x3f]
  %v3904 = vld [vmem:[#allocation5 + $0x60] sm:$0x3f]
  %v3905 = vld [vmem:[#allocation5 + $0x68] sm:$0x3f]
  %v3906 = vld [vmem:[#allocation5 + $0x70] sm:$0x3f]
  %v3907 = vld [vmem:[#allocation5 + $0x78] sm:$0x3f]
  %v3908 = vld [vmem:[#allocation5 + $0x80] sm:$0x3f]
  %v3909 = vld [vmem:[#allocation5 + $0x88] sm:$0x3f]
  %v3927 = vrot.slane %v3893, 6
  %v3928 = vrot.slane %v3894, 6
  %v3929 = vrot.slane %v3895, 6
  %v3930 = vrot.slane %v3896, 6
  %v3931 = vrot.slane %v3897, 6
  %v3932 = vrot.slane %v3898, 6
  %v3933 = vrot.slane %v3899, 6
  %v3934 = vrot.slane %v3900, 6
  %v3935 = vrot.slane %v3901, 6
  %v3936 = vrot.slane %v3902, 6
  %v3937 = vrot.slane %v3903, 6
  %v3938 = vrot.slane %v3904, 6
  %v3939 = vrot.slane %v3905, 6
  %v3940 = vrot.slane %v3906, 6
  %v3941 = vrot.slane %v3907, 6
  %v3942 = vrot.slane %v3908, 6
  %v3943 = vrot.slane %v3909, 6
  %3944 = vrot.lane.b32.xlu0 %v3927, 56
  %v3945 = vpop.permute.xlu0 %3944
  %3946 = vrot.lane.b32.xlu0 %v3928, 56
  %v3947 = vpop.permute.xlu0 %3946
  %3948 = vrot.lane.b32.xlu0 %v3929, 56
  %v3949 = vpop.permute.xlu0 %3948
  %3950 = vrot.lane.b32.xlu0 %v3930, 56
  %v3951 = vpop.permute.xlu0 %3950
  %3952 = vrot.lane.b32.xlu0 %v3931, 56
  %v3953 = vpop.permute.xlu0 %3952
  %3954 = vrot.lane.b32.xlu0 %v3932, 56
  %v3955 = vpop.permute.xlu0 %3954
  %3956 = vrot.lane.b32.xlu0 %v3933, 56
  %v3957 = vpop.permute.xlu0 %3956
  %3958 = vrot.lane.b32.xlu0 %v3934, 56
  %v3959 = vpop.permute.xlu0 %3958
  %3960 = vrot.lane.b32.xlu0 %v3935, 56
  %v3961 = vpop.permute.xlu0 %3960
  %3962 = vrot.lane.b32.xlu0 %v3936, 56
  %v3963 = vpop.permute.xlu0 %3962
  %3964 = vrot.lane.b32.xlu0 %v3937, 56
  %v3965 = vpop.permute.xlu0 %3964
  %3966 = vrot.lane.b32.xlu0 %v3938, 56
  %v3967 = vpop.permute.xlu0 %3966
  %3968 = vrot.lane.b32.xlu0 %v3939, 56
  %v3969 = vpop.permute.xlu0 %3968
  %3970 = vrot.lane.b32.xlu0 %v3940, 56
  %v3971 = vpop.permute.xlu0 %3970
  %3972 = vrot.lane.b32.xlu0 %v3941, 56
  %v3973 = vpop.permute.xlu0 %3972
  %3974 = vrot.lane.b32.xlu0 %v3942, 56
  %v3975 = vpop.permute.xlu0 %3974
  %3976 = vrot.lane.b32.xlu0 %v3943, 56
  %v3977 = vpop.permute.xlu0 %3976
  %v3978 = vsel %vm2638, %v3945, %v3947
  %v3979 = vsel %vm2638, %v3947, %v3949
  %v3980 = vsel %vm2638, %v3949, %v3951
  %v3981 = vsel %vm2638, %v3951, %v3953
  %v3982 = vsel %vm2638, %v3953, %v3955
  %v3983 = vsel %vm2638, %v3955, %v3957
  %v3984 = vsel %vm2638, %v3957, %v3959
  %v3985 = vsel %vm2638, %v3959, %v3961
  %v3986 = vsel %vm2638, %v3961, %v3963
  %v3987 = vsel %vm2638, %v3963, %v3965
  %v3988 = vsel %vm2638, %v3965, %v3967
  %v3989 = vsel %vm2638, %v3967, %v3969
  %v3990 = vsel %vm2638, %v3969, %v3971
  %v3991 = vsel %vm2638, %v3971, %v3973
  %v3992 = vsel %vm2638, %v3973, %v3975
  %v3993 = vsel %vm2638, %v3975, %v3977
  %4010 = vst [vmem:[#allocation6 + $0x700] sm:$0xfc] %v3978
  %4011 = vst [vmem:[#allocation6 + $0x708] sm:$0xfc] %v3979
  %4012 = vst [vmem:[#allocation6 + $0x710] sm:$0xfc] %v3980
  %4013 = vst [vmem:[#allocation6 + $0x718] sm:$0xfc] %v3981
  %4014 = vst [vmem:[#allocation6 + $0x720] sm:$0xfc] %v3982
  %4015 = vst [vmem:[#allocation6 + $0x728] sm:$0xfc] %v3983
  %4016 = vst [vmem:[#allocation6 + $0x730] sm:$0xfc] %v3984
  %4017 = vst [vmem:[#allocation6 + $0x738] sm:$0xfc] %v3985
  %4018 = vst [vmem:[#allocation6 + $0x740] sm:$0xfc] %v3986
  %4019 = vst [vmem:[#allocation6 + $0x748] sm:$0xfc] %v3987
  %4020 = vst [vmem:[#allocation6 + $0x750] sm:$0xfc] %v3988
  %4021 = vst [vmem:[#allocation6 + $0x758] sm:$0xfc] %v3989
  %4022 = vst [vmem:[#allocation6 + $0x760] sm:$0xfc] %v3990
  %4023 = vst [vmem:[#allocation6 + $0x768] sm:$0xfc] %v3991
  %4024 = vst [vmem:[#allocation6 + $0x770] sm:$0xfc] %v3992
  %4025 = vst [vmem:[#allocation6 + $0x778] sm:$0xfc] %v3993
  %v4026 = vld [vmem:[#allocation5 + $0x10] sm:$0x3f]
  %v4027 = vld [vmem:[#allocation5 + $0x18] sm:$0x3f]
  %v4028 = vld [vmem:[#allocation5 + $0x20] sm:$0x3f]
  %v4029 = vld [vmem:[#allocation5 + $0x28] sm:$0x3f]
  %v4030 = vld [vmem:[#allocation5 + $0x30] sm:$0x3f]
  %v4031 = vld [vmem:[#allocation5 + $0x38] sm:$0x3f]
  %v4032 = vld [vmem:[#allocation5 + $0x40] sm:$0x3f]
  %v4033 = vld [vmem:[#allocation5 + $0x48] sm:$0x3f]
  %v4034 = vld [vmem:[#allocation5 + $0x50] sm:$0x3f]
  %v4035 = vld [vmem:[#allocation5 + $0x58] sm:$0x3f]
  %v4036 = vld [vmem:[#allocation5 + $0x60] sm:$0x3f]
  %v4037 = vld [vmem:[#allocation5 + $0x68] sm:$0x3f]
  %v4038 = vld [vmem:[#allocation5 + $0x70] sm:$0x3f]
  %v4039 = vld [vmem:[#allocation5 + $0x78] sm:$0x3f]
  %v4040 = vld [vmem:[#allocation5 + $0x80] sm:$0x3f]
  %v4041 = vld [vmem:[#allocation5 + $0x88] sm:$0x3f]
  %4042 = vst [vmem:[#allocation6 + $0x780] sm:$0x3f] %v4026
  %4043 = vst [vmem:[#allocation6 + $0x788] sm:$0x3f] %v4027
  %4044 = vst [vmem:[#allocation6 + $0x790] sm:$0x3f] %v4028
  %4045 = vst [vmem:[#allocation6 + $0x798] sm:$0x3f] %v4029
  %4046 = vst [vmem:[#allocation6 + $0x7a0] sm:$0x3f] %v4030
  %4047 = vst [vmem:[#allocation6 + $0x7a8] sm:$0x3f] %v4031
  %4048 = vst [vmem:[#allocation6 + $0x7b0] sm:$0x3f] %v4032
  %4049 = vst [vmem:[#allocation6 + $0x7b8] sm:$0x3f] %v4033
  %4050 = vst [vmem:[#allocation6 + $0x7c0] sm:$0x3f] %v4034
  %4051 = vst [vmem:[#allocation6 + $0x7c8] sm:$0x3f] %v4035
  %4052 = vst [vmem:[#allocation6 + $0x7d0] sm:$0x3f] %v4036
  %4053 = vst [vmem:[#allocation6 + $0x7d8] sm:$0x3f] %v4037
  %4054 = vst [vmem:[#allocation6 + $0x7e0] sm:$0x3f] %v4038
  %4055 = vst [vmem:[#allocation6 + $0x7e8] sm:$0x3f] %v4039
  %4056 = vst [vmem:[#allocation6 + $0x7f0] sm:$0x3f] %v4040
  %4057 = vst [vmem:[#allocation6 + $0x7f8] sm:$0x3f] %v4041
  %v4058 = vld [vmem:[#allocation5 + $0x10] sm:$0x3f]
  %v4059 = vld [vmem:[#allocation5 + $0x18] sm:$0x3f]
  %v4060 = vld [vmem:[#allocation5 + $0x20] sm:$0x3f]
  %v4061 = vld [vmem:[#allocation5 + $0x28] sm:$0x3f]
  %v4062 = vld [vmem:[#allocation5 + $0x30] sm:$0x3f]
  %v4063 = vld [vmem:[#allocation5 + $0x38] sm:$0x3f]
  %v4064 = vld [vmem:[#allocation5 + $0x40] sm:$0x3f]
  %v4065 = vld [vmem:[#allocation5 + $0x48] sm:$0x3f]
  %v4066 = vld [vmem:[#allocation5 + $0x50] sm:$0x3f]
  %v4067 = vld [vmem:[#allocation5 + $0x58] sm:$0x3f]
  %v4068 = vld [vmem:[#allocation5 + $0x60] sm:$0x3f]
  %v4069 = vld [vmem:[#allocation5 + $0x68] sm:$0x3f]
  %v4070 = vld [vmem:[#allocation5 + $0x70] sm:$0x3f]
  %v4071 = vld [vmem:[#allocation5 + $0x78] sm:$0x3f]
  %v4072 = vld [vmem:[#allocation5 + $0x80] sm:$0x3f]
  %v4073 = vld [vmem:[#allocation5 + $0x88] sm:$0x3f]
  %v4074 = vld [vmem:[#allocation5 + $0x90] sm:$0x3f]
  %v4092 = vrot.slane %v4058, 2
  %v4093 = vrot.slane %v4059, 2
  %v4094 = vrot.slane %v4060, 2
  %v4095 = vrot.slane %v4061, 2
  %v4096 = vrot.slane %v4062, 2
  %v4097 = vrot.slane %v4063, 2
  %v4098 = vrot.slane %v4064, 2
  %v4099 = vrot.slane %v4065, 2
  %v4100 = vrot.slane %v4066, 2
  %v4101 = vrot.slane %v4067, 2
  %v4102 = vrot.slane %v4068, 2
  %v4103 = vrot.slane %v4069, 2
  %v4104 = vrot.slane %v4070, 2
  %v4105 = vrot.slane %v4071, 2
  %v4106 = vrot.slane %v4072, 2
  %v4107 = vrot.slane %v4073, 2
  %v4108 = vrot.slane %v4074, 2
  %4109 = vrot.lane.b32.xlu0 %v4092, 126
  %v4110 = vpop.permute.xlu0 %4109
  %4111 = vrot.lane.b32.xlu0 %v4093, 126
  %v4112 = vpop.permute.xlu0 %4111
  %4113 = vrot.lane.b32.xlu0 %v4094, 126
  %v4114 = vpop.permute.xlu0 %4113
  %4115 = vrot.lane.b32.xlu0 %v4095, 126
  %v4116 = vpop.permute.xlu0 %4115
  %4117 = vrot.lane.b32.xlu0 %v4096, 126
  %v4118 = vpop.permute.xlu0 %4117
  %4119 = vrot.lane.b32.xlu0 %v4097, 126
  %v4120 = vpop.permute.xlu0 %4119
  %4121 = vrot.lane.b32.xlu0 %v4098, 126
  %v4122 = vpop.permute.xlu0 %4121
  %4123 = vrot.lane.b32.xlu0 %v4099, 126
  %v4124 = vpop.permute.xlu0 %4123
  %4125 = vrot.lane.b32.xlu0 %v4100, 126
  %v4126 = vpop.permute.xlu0 %4125
  %4127 = vrot.lane.b32.xlu0 %v4101, 126
  %v4128 = vpop.permute.xlu0 %4127
  %4129 = vrot.lane.b32.xlu0 %v4102, 126
  %v4130 = vpop.permute.xlu0 %4129
  %4131 = vrot.lane.b32.xlu0 %v4103, 126
  %v4132 = vpop.permute.xlu0 %4131
  %4133 = vrot.lane.b32.xlu0 %v4104, 126
  %v4134 = vpop.permute.xlu0 %4133
  %4135 = vrot.lane.b32.xlu0 %v4105, 126
  %v4136 = vpop.permute.xlu0 %4135
  %4137 = vrot.lane.b32.xlu0 %v4106, 126
  %v4138 = vpop.permute.xlu0 %4137
  %4139 = vrot.lane.b32.xlu0 %v4107, 126
  %v4140 = vpop.permute.xlu0 %4139
  %4141 = vrot.lane.b32.xlu0 %v4108, 126
  %v4142 = vpop.permute.xlu0 %4141
  %v4143 = vsel %vm111, %v4110, %v4112
  %v4144 = vsel %vm111, %v4112, %v4114
  %v4145 = vsel %vm111, %v4114, %v4116
  %v4146 = vsel %vm111, %v4116, %v4118
  %v4147 = vsel %vm111, %v4118, %v4120
  %v4148 = vsel %vm111, %v4120, %v4122
  %v4149 = vsel %vm111, %v4122, %v4124
  %v4150 = vsel %vm111, %v4124, %v4126
  %v4151 = vsel %vm111, %v4126, %v4128
  %v4152 = vsel %vm111, %v4128, %v4130
  %v4153 = vsel %vm111, %v4130, %v4132
  %v4154 = vsel %vm111, %v4132, %v4134
  %v4155 = vsel %vm111, %v4134, %v4136
  %v4156 = vsel %vm111, %v4136, %v4138
  %v4157 = vsel %vm111, %v4138, %v4140
  %v4158 = vsel %vm111, %v4140, %v4142
  %4175 = vst [vmem:[#allocation6 + $0x780] sm:$0xc0] %v4143
  %4176 = vst [vmem:[#allocation6 + $0x788] sm:$0xc0] %v4144
  %4177 = vst [vmem:[#allocation6 + $0x790] sm:$0xc0] %v4145
  %4178 = vst [vmem:[#allocation6 + $0x798] sm:$0xc0] %v4146
  %4179 = vst [vmem:[#allocation6 + $0x7a0] sm:$0xc0] %v4147
  %4180 = vst [vmem:[#allocation6 + $0x7a8] sm:$0xc0] %v4148
  %4181 = vst [vmem:[#allocation6 + $0x7b0] sm:$0xc0] %v4149
  %4182 = vst [vmem:[#allocation6 + $0x7b8] sm:$0xc0] %v4150
  %4183 = vst [vmem:[#allocation6 + $0x7c0] sm:$0xc0] %v4151
  %4184 = vst [vmem:[#allocation6 + $0x7c8] sm:$0xc0] %v4152
  %4185 = vst [vmem:[#allocation6 + $0x7d0] sm:$0xc0] %v4153
  %4186 = vst [vmem:[#allocation6 + $0x7d8] sm:$0xc0] %v4154
  %4187 = vst [vmem:[#allocation6 + $0x7e0] sm:$0xc0] %v4155
  %4188 = vst [vmem:[#allocation6 + $0x7e8] sm:$0xc0] %v4156
  %4189 = vst [vmem:[#allocation6 + $0x7f0] sm:$0xc0] %v4157
  %4190 = vst [vmem:[#allocation6 + $0x7f8] sm:$0xc0] %v4158
  %4191 = vst [vmem:[#allocation6 + $0x800] sm:$0xf] %v4143
  %4192 = vst [vmem:[#allocation6 + $0x808] sm:$0xf] %v4144
  %4193 = vst [vmem:[#allocation6 + $0x810] sm:$0xf] %v4145
  %4194 = vst [vmem:[#allocation6 + $0x818] sm:$0xf] %v4146
  %4195 = vst [vmem:[#allocation6 + $0x820] sm:$0xf] %v4147
  %4196 = vst [vmem:[#allocation6 + $0x828] sm:$0xf] %v4148
  %4197 = vst [vmem:[#allocation6 + $0x830] sm:$0xf] %v4149
  %4198 = vst [vmem:[#allocation6 + $0x838] sm:$0xf] %v4150
  %4199 = vst [vmem:[#allocation6 + $0x840] sm:$0xf] %v4151
  %4200 = vst [vmem:[#allocation6 + $0x848] sm:$0xf] %v4152
  %4201 = vst [vmem:[#allocation6 + $0x850] sm:$0xf] %v4153
  %4202 = vst [vmem:[#allocation6 + $0x858] sm:$0xf] %v4154
  %4203 = vst [vmem:[#allocation6 + $0x860] sm:$0xf] %v4155
  %4204 = vst [vmem:[#allocation6 + $0x868] sm:$0xf] %v4156
  %4205 = vst [vmem:[#allocation6 + $0x870] sm:$0xf] %v4157
  %4206 = vst [vmem:[#allocation6 + $0x878] sm:$0xf] %v4158
  %v4207 = vld [vmem:[#allocation5 + $0x10] sm:$0x3f]
  %v4208 = vld [vmem:[#allocation5 + $0x18] sm:$0x3f]
  %v4209 = vld [vmem:[#allocation5 + $0x20] sm:$0x3f]
  %v4210 = vld [vmem:[#allocation5 + $0x28] sm:$0x3f]
  %v4211 = vld [vmem:[#allocation5 + $0x30] sm:$0x3f]
  %v4212 = vld [vmem:[#allocation5 + $0x38] sm:$0x3f]
  %v4213 = vld [vmem:[#allocation5 + $0x40] sm:$0x3f]
  %v4214 = vld [vmem:[#allocation5 + $0x48] sm:$0x3f]
  %v4215 = vld [vmem:[#allocation5 + $0x50] sm:$0x3f]
  %v4216 = vld [vmem:[#allocation5 + $0x58] sm:$0x3f]
  %v4217 = vld [vmem:[#allocation5 + $0x60] sm:$0x3f]
  %v4218 = vld [vmem:[#allocation5 + $0x68] sm:$0x3f]
  %v4219 = vld [vmem:[#allocation5 + $0x70] sm:$0x3f]
  %v4220 = vld [vmem:[#allocation5 + $0x78] sm:$0x3f]
  %v4221 = vld [vmem:[#allocation5 + $0x80] sm:$0x3f]
  %v4222 = vld [vmem:[#allocation5 + $0x88] sm:$0x3f]
  %v4223 = vld [vmem:[#allocation5 + $0x90] sm:$0x3f]
  %v4241 = vrot.slane %v4207, 4
  %v4242 = vrot.slane %v4208, 4
  %v4243 = vrot.slane %v4209, 4
  %v4244 = vrot.slane %v4210, 4
  %v4245 = vrot.slane %v4211, 4
  %v4246 = vrot.slane %v4212, 4
  %v4247 = vrot.slane %v4213, 4
  %v4248 = vrot.slane %v4214, 4
  %v4249 = vrot.slane %v4215, 4
  %v4250 = vrot.slane %v4216, 4
  %v4251 = vrot.slane %v4217, 4
  %v4252 = vrot.slane %v4218, 4
  %v4253 = vrot.slane %v4219, 4
  %v4254 = vrot.slane %v4220, 4
  %v4255 = vrot.slane %v4221, 4
  %v4256 = vrot.slane %v4222, 4
  %v4257 = vrot.slane %v4223, 4
  %4258 = vrot.lane.b32.xlu0 %v4241, 124
  %v4259 = vpop.permute.xlu0 %4258
  %4260 = vrot.lane.b32.xlu0 %v4242, 124
  %v4261 = vpop.permute.xlu0 %4260
  %4262 = vrot.lane.b32.xlu0 %v4243, 124
  %v4263 = vpop.permute.xlu0 %4262
  %4264 = vrot.lane.b32.xlu0 %v4244, 124
  %v4265 = vpop.permute.xlu0 %4264
  %4266 = vrot.lane.b32.xlu0 %v4245, 124
  %v4267 = vpop.permute.xlu0 %4266
  %4268 = vrot.lane.b32.xlu0 %v4246, 124
  %v4269 = vpop.permute.xlu0 %4268
  %4270 = vrot.lane.b32.xlu0 %v4247, 124
  %v4271 = vpop.permute.xlu0 %4270
  %4272 = vrot.lane.b32.xlu0 %v4248, 124
  %v4273 = vpop.permute.xlu0 %4272
  %4274 = vrot.lane.b32.xlu0 %v4249, 124
  %v4275 = vpop.permute.xlu0 %4274
  %4276 = vrot.lane.b32.xlu0 %v4250, 124
  %v4277 = vpop.permute.xlu0 %4276
  %4278 = vrot.lane.b32.xlu0 %v4251, 124
  %v4279 = vpop.permute.xlu0 %4278
  %4280 = vrot.lane.b32.xlu0 %v4252, 124
  %v4281 = vpop.permute.xlu0 %4280
  %4282 = vrot.lane.b32.xlu0 %v4253, 124
  %v4283 = vpop.permute.xlu0 %4282
  %4284 = vrot.lane.b32.xlu0 %v4254, 124
  %v4285 = vpop.permute.xlu0 %4284
  %4286 = vrot.lane.b32.xlu0 %v4255, 124
  %v4287 = vpop.permute.xlu0 %4286
  %4288 = vrot.lane.b32.xlu0 %v4256, 124
  %v4289 = vpop.permute.xlu0 %4288
  %4290 = vrot.lane.b32.xlu0 %v4257, 124
  %v4291 = vpop.permute.xlu0 %4290
  %v4292 = vsel %vm167, %v4259, %v4261
  %v4293 = vsel %vm167, %v4261, %v4263
  %v4294 = vsel %vm167, %v4263, %v4265
  %v4295 = vsel %vm167, %v4265, %v4267
  %v4296 = vsel %vm167, %v4267, %v4269
  %v4297 = vsel %vm167, %v4269, %v4271
  %v4298 = vsel %vm167, %v4271, %v4273
  %v4299 = vsel %vm167, %v4273, %v4275
  %v4300 = vsel %vm167, %v4275, %v4277
  %v4301 = vsel %vm167, %v4277, %v4279
  %v4302 = vsel %vm167, %v4279, %v4281
  %v4303 = vsel %vm167, %v4281, %v4283
  %v4304 = vsel %vm167, %v4283, %v4285
  %v4305 = vsel %vm167, %v4285, %v4287
  %v4306 = vsel %vm167, %v4287, %v4289
  %v4307 = vsel %vm167, %v4289, %v4291
  %4324 = vst [vmem:[#allocation6 + $0x800] sm:$0xf0] %v4292
  %4325 = vst [vmem:[#allocation6 + $0x808] sm:$0xf0] %v4293
  %4326 = vst [vmem:[#allocation6 + $0x810] sm:$0xf0] %v4294
  %4327 = vst [vmem:[#allocation6 + $0x818] sm:$0xf0] %v4295
  %4328 = vst [vmem:[#allocation6 + $0x820] sm:$0xf0] %v4296
  %4329 = vst [vmem:[#allocation6 + $0x828] sm:$0xf0] %v4297
  %4330 = vst [vmem:[#allocation6 + $0x830] sm:$0xf0] %v4298
  %4331 = vst [vmem:[#allocation6 + $0x838] sm:$0xf0] %v4299
  %4332 = vst [vmem:[#allocation6 + $0x840] sm:$0xf0] %v4300
  %4333 = vst [vmem:[#allocation6 + $0x848] sm:$0xf0] %v4301
  %4334 = vst [vmem:[#allocation6 + $0x850] sm:$0xf0] %v4302
  %4335 = vst [vmem:[#allocation6 + $0x858] sm:$0xf0] %v4303
  %4336 = vst [vmem:[#allocation6 + $0x860] sm:$0xf0] %v4304
  %4337 = vst [vmem:[#allocation6 + $0x868] sm:$0xf0] %v4305
  %4338 = vst [vmem:[#allocation6 + $0x870] sm:$0xf0] %v4306
  %4339 = vst [vmem:[#allocation6 + $0x878] sm:$0xf0] %v4307
  %4340 = vst [vmem:[#allocation6 + $0x880] sm:$0x3] %v4292
  %4341 = vst [vmem:[#allocation6 + $0x888] sm:$0x3] %v4293
  %4342 = vst [vmem:[#allocation6 + $0x890] sm:$0x3] %v4294
  %4343 = vst [vmem:[#allocation6 + $0x898] sm:$0x3] %v4295
  %4344 = vst [vmem:[#allocation6 + $0x8a0] sm:$0x3] %v4296
  %4345 = vst [vmem:[#allocation6 + $0x8a8] sm:$0x3] %v4297
  %4346 = vst [vmem:[#allocation6 + $0x8b0] sm:$0x3] %v4298
  %4347 = vst [vmem:[#allocation6 + $0x8b8] sm:$0x3] %v4299
  %4348 = vst [vmem:[#allocation6 + $0x8c0] sm:$0x3] %v4300
  %4349 = vst [vmem:[#allocation6 + $0x8c8] sm:$0x3] %v4301
  %4350 = vst [vmem:[#allocation6 + $0x8d0] sm:$0x3] %v4302
  %4351 = vst [vmem:[#allocation6 + $0x8d8] sm:$0x3] %v4303
  %4352 = vst [vmem:[#allocation6 + $0x8e0] sm:$0x3] %v4304
  %4353 = vst [vmem:[#allocation6 + $0x8e8] sm:$0x3] %v4305
  %4354 = vst [vmem:[#allocation6 + $0x8f0] sm:$0x3] %v4306
  %4355 = vst [vmem:[#allocation6 + $0x8f8] sm:$0x3] %v4307
  %v4356 = vld [vmem:[#allocation5 + $0x10] sm:$0x3f]
  %v4357 = vld [vmem:[#allocation5 + $0x18] sm:$0x3f]
  %v4358 = vld [vmem:[#allocation5 + $0x20] sm:$0x3f]
  %v4359 = vld [vmem:[#allocation5 + $0x28] sm:$0x3f]
  %v4360 = vld [vmem:[#allocation5 + $0x30] sm:$0x3f]
  %v4361 = vld [vmem:[#allocation5 + $0x38] sm:$0x3f]
  %v4362 = vld [vmem:[#allocation5 + $0x40] sm:$0x3f]
  %v4363 = vld [vmem:[#allocation5 + $0x48] sm:$0x3f]
  %v4364 = vld [vmem:[#allocation5 + $0x50] sm:$0x3f]
  %v4365 = vld [vmem:[#allocation5 + $0x58] sm:$0x3f]
  %v4366 = vld [vmem:[#allocation5 + $0x60] sm:$0x3f]
  %v4367 = vld [vmem:[#allocation5 + $0x68] sm:$0x3f]
  %v4368 = vld [vmem:[#allocation5 + $0x70] sm:$0x3f]
  %v4369 = vld [vmem:[#allocation5 + $0x78] sm:$0x3f]
  %v4370 = vld [vmem:[#allocation5 + $0x80] sm:$0x3f]
  %v4371 = vld [vmem:[#allocation5 + $0x88] sm:$0x3f]
  %v4372 = vld [vmem:[#allocation5 + $0x90] sm:$0x3f]
  %v4390 = vrot.slane %v4356, 6
  %v4391 = vrot.slane %v4357, 6
  %v4392 = vrot.slane %v4358, 6
  %v4393 = vrot.slane %v4359, 6
  %v4394 = vrot.slane %v4360, 6
  %v4395 = vrot.slane %v4361, 6
  %v4396 = vrot.slane %v4362, 6
  %v4397 = vrot.slane %v4363, 6
  %v4398 = vrot.slane %v4364, 6
  %v4399 = vrot.slane %v4365, 6
  %v4400 = vrot.slane %v4366, 6
  %v4401 = vrot.slane %v4367, 6
  %v4402 = vrot.slane %v4368, 6
  %v4403 = vrot.slane %v4369, 6
  %v4404 = vrot.slane %v4370, 6
  %v4405 = vrot.slane %v4371, 6
  %v4406 = vrot.slane %v4372, 6
  %4407 = vrot.lane.b32.xlu0 %v4390, 122
  %v4408 = vpop.permute.xlu0 %4407
  %4409 = vrot.lane.b32.xlu0 %v4391, 122
  %v4410 = vpop.permute.xlu0 %4409
  %4411 = vrot.lane.b32.xlu0 %v4392, 122
  %v4412 = vpop.permute.xlu0 %4411
  %4413 = vrot.lane.b32.xlu0 %v4393, 122
  %v4414 = vpop.permute.xlu0 %4413
  %4415 = vrot.lane.b32.xlu0 %v4394, 122
  %v4416 = vpop.permute.xlu0 %4415
  %4417 = vrot.lane.b32.xlu0 %v4395, 122
  %v4418 = vpop.permute.xlu0 %4417
  %4419 = vrot.lane.b32.xlu0 %v4396, 122
  %v4420 = vpop.permute.xlu0 %4419
  %4421 = vrot.lane.b32.xlu0 %v4397, 122
  %v4422 = vpop.permute.xlu0 %4421
  %4423 = vrot.lane.b32.xlu0 %v4398, 122
  %v4424 = vpop.permute.xlu0 %4423
  %4425 = vrot.lane.b32.xlu0 %v4399, 122
  %v4426 = vpop.permute.xlu0 %4425
  %4427 = vrot.lane.b32.xlu0 %v4400, 122
  %v4428 = vpop.permute.xlu0 %4427
  %4429 = vrot.lane.b32.xlu0 %v4401, 122
  %v4430 = vpop.permute.xlu0 %4429
  %4431 = vrot.lane.b32.xlu0 %v4402, 122
  %v4432 = vpop.permute.xlu0 %4431
  %4433 = vrot.lane.b32.xlu0 %v4403, 122
  %v4434 = vpop.permute.xlu0 %4433
  %4435 = vrot.lane.b32.xlu0 %v4404, 122
  %v4436 = vpop.permute.xlu0 %4435
  %4437 = vrot.lane.b32.xlu0 %v4405, 122
  %v4438 = vpop.permute.xlu0 %4437
  %4439 = vrot.lane.b32.xlu0 %v4406, 122
  %v4440 = vpop.permute.xlu0 %4439
  %v4441 = vsel %vm1839, %v4408, %v4410
  %v4442 = vsel %vm1839, %v4410, %v4412
  %v4443 = vsel %vm1839, %v4412, %v4414
  %v4444 = vsel %vm1839, %v4414, %v4416
  %v4445 = vsel %vm1839, %v4416, %v4418
  %v4446 = vsel %vm1839, %v4418, %v4420
  %v4447 = vsel %vm1839, %v4420, %v4422
  %v4448 = vsel %vm1839, %v4422, %v4424
  %v4449 = vsel %vm1839, %v4424, %v4426
  %v4450 = vsel %vm1839, %v4426, %v4428
  %v4451 = vsel %vm1839, %v4428, %v4430
  %v4452 = vsel %vm1839, %v4430, %v4432
  %v4453 = vsel %vm1839, %v4432, %v4434
  %v4454 = vsel %vm1839, %v4434, %v4436
  %v4455 = vsel %vm1839, %v4436, %v4438
  %v4456 = vsel %vm1839, %v4438, %v4440
  %4473 = vst [vmem:[#allocation6 + $0x880] sm:$0xfc] %v4441
  %4474 = vst [vmem:[#allocation6 + $0x888] sm:$0xfc] %v4442
  %4475 = vst [vmem:[#allocation6 + $0x890] sm:$0xfc] %v4443
  %4476 = vst [vmem:[#allocation6 + $0x898] sm:$0xfc] %v4444
  %4477 = vst [vmem:[#allocation6 + $0x8a0] sm:$0xfc] %v4445
  %4478 = vst [vmem:[#allocation6 + $0x8a8] sm:$0xfc] %v4446
  %4479 = vst [vmem:[#allocation6 + $0x8b0] sm:$0xfc] %v4447
  %4480 = vst [vmem:[#allocation6 + $0x8b8] sm:$0xfc] %v4448
  %4481 = vst [vmem:[#allocation6 + $0x8c0] sm:$0xfc] %v4449
  %4482 = vst [vmem:[#allocation6 + $0x8c8] sm:$0xfc] %v4450
  %4483 = vst [vmem:[#allocation6 + $0x8d0] sm:$0xfc] %v4451
  %4484 = vst [vmem:[#allocation6 + $0x8d8] sm:$0xfc] %v4452
  %4485 = vst [vmem:[#allocation6 + $0x8e0] sm:$0xfc] %v4453
  %4486 = vst [vmem:[#allocation6 + $0x8e8] sm:$0xfc] %v4454
  %4487 = vst [vmem:[#allocation6 + $0x8f0] sm:$0xfc] %v4455
  %4488 = vst [vmem:[#allocation6 + $0x8f8] sm:$0xfc] %v4456
  %v4489 = vld [vmem:[#allocation5 + $0x10] sm:$0x3f]
  %v4490 = vld [vmem:[#allocation5 + $0x18] sm:$0x3f]
  %v4491 = vld [vmem:[#allocation5 + $0x20] sm:$0x3f]
  %v4492 = vld [vmem:[#allocation5 + $0x28] sm:$0x3f]
  %v4493 = vld [vmem:[#allocation5 + $0x30] sm:$0x3f]
  %v4494 = vld [vmem:[#allocation5 + $0x38] sm:$0x3f]
  %v4495 = vld [vmem:[#allocation5 + $0x40] sm:$0x3f]
  %v4496 = vld [vmem:[#allocation5 + $0x48] sm:$0x3f]
  %v4497 = vld [vmem:[#allocation5 + $0x50] sm:$0x3f]
  %v4498 = vld [vmem:[#allocation5 + $0x58] sm:$0x3f]
  %v4499 = vld [vmem:[#allocation5 + $0x60] sm:$0x3f]
  %v4500 = vld [vmem:[#allocation5 + $0x68] sm:$0x3f]
  %v4501 = vld [vmem:[#allocation5 + $0x70] sm:$0x3f]
  %v4502 = vld [vmem:[#allocation5 + $0x78] sm:$0x3f]
  %v4503 = vld [vmem:[#allocation5 + $0x80] sm:$0x3f]
  %v4504 = vld [vmem:[#allocation5 + $0x88] sm:$0x3f]
  %v4505 = vld [vmem:[#allocation5 + $0x90] sm:$0x3f]
  %4523 = vrot.lane.b32.xlu0 %v4489, 120
  %v4524 = vpop.permute.xlu0 %4523
  %4525 = vrot.lane.b32.xlu0 %v4490, 120
  %v4526 = vpop.permute.xlu0 %4525
  %4527 = vrot.lane.b32.xlu0 %v4491, 120
  %v4528 = vpop.permute.xlu0 %4527
  %4529 = vrot.lane.b32.xlu0 %v4492, 120
  %v4530 = vpop.permute.xlu0 %4529
  %4531 = vrot.lane.b32.xlu0 %v4493, 120
  %v4532 = vpop.permute.xlu0 %4531
  %4533 = vrot.lane.b32.xlu0 %v4494, 120
  %v4534 = vpop.permute.xlu0 %4533
  %4535 = vrot.lane.b32.xlu0 %v4495, 120
  %v4536 = vpop.permute.xlu0 %4535
  %4537 = vrot.lane.b32.xlu0 %v4496, 120
  %v4538 = vpop.permute.xlu0 %4537
  %4539 = vrot.lane.b32.xlu0 %v4497, 120
  %v4540 = vpop.permute.xlu0 %4539
  %4541 = vrot.lane.b32.xlu0 %v4498, 120
  %v4542 = vpop.permute.xlu0 %4541
  %4543 = vrot.lane.b32.xlu0 %v4499, 120
  %v4544 = vpop.permute.xlu0 %4543
  %4545 = vrot.lane.b32.xlu0 %v4500, 120
  %v4546 = vpop.permute.xlu0 %4545
  %4547 = vrot.lane.b32.xlu0 %v4501, 120
  %v4548 = vpop.permute.xlu0 %4547
  %4549 = vrot.lane.b32.xlu0 %v4502, 120
  %v4550 = vpop.permute.xlu0 %4549
  %4551 = vrot.lane.b32.xlu0 %v4503, 120
  %v4552 = vpop.permute.xlu0 %4551
  %4553 = vrot.lane.b32.xlu0 %v4504, 120
  %v4554 = vpop.permute.xlu0 %4553
  %4555 = vrot.lane.b32.xlu0 %v4505, 120
  %v4556 = vpop.permute.xlu0 %4555
  %v4557 = vsel %vm1956, %v4524, %v4526
  %v4558 = vsel %vm1956, %v4526, %v4528
  %v4559 = vsel %vm1956, %v4528, %v4530
  %v4560 = vsel %vm1956, %v4530, %v4532
  %v4561 = vsel %vm1956, %v4532, %v4534
  %v4562 = vsel %vm1956, %v4534, %v4536
  %v4563 = vsel %vm1956, %v4536, %v4538
  %v4564 = vsel %vm1956, %v4538, %v4540
  %v4565 = vsel %vm1956, %v4540, %v4542
  %v4566 = vsel %vm1956, %v4542, %v4544
  %v4567 = vsel %vm1956, %v4544, %v4546
  %v4568 = vsel %vm1956, %v4546, %v4548
  %v4569 = vsel %vm1956, %v4548, %v4550
  %v4570 = vsel %vm1956, %v4550, %v4552
  %v4571 = vsel %vm1956, %v4552, %v4554
  %v4572 = vsel %vm1956, %v4554, %v4556
  %4589 = vst [vmem:[#allocation6 + $0x900] sm:$0x3f] %v4557
  %4590 = vst [vmem:[#allocation6 + $0x908] sm:$0x3f] %v4558
  %4591 = vst [vmem:[#allocation6 + $0x910] sm:$0x3f] %v4559
  %4592 = vst [vmem:[#allocation6 + $0x918] sm:$0x3f] %v4560
  %4593 = vst [vmem:[#allocation6 + $0x920] sm:$0x3f] %v4561
  %4594 = vst [vmem:[#allocation6 + $0x928] sm:$0x3f] %v4562
  %4595 = vst [vmem:[#allocation6 + $0x930] sm:$0x3f] %v4563
  %4596 = vst [vmem:[#allocation6 + $0x938] sm:$0x3f] %v4564
  %4597 = vst [vmem:[#allocation6 + $0x940] sm:$0x3f] %v4565
  %4598 = vst [vmem:[#allocation6 + $0x948] sm:$0x3f] %v4566
  %4599 = vst [vmem:[#allocation6 + $0x950] sm:$0x3f] %v4567
  %4600 = vst [vmem:[#allocation6 + $0x958] sm:$0x3f] %v4568
  %4601 = vst [vmem:[#allocation6 + $0x960] sm:$0x3f] %v4569
  %4602 = vst [vmem:[#allocation6 + $0x968] sm:$0x3f] %v4570
  %4603 = vst [vmem:[#allocation6 + $0x970] sm:$0x3f] %v4571
  %4604 = vst [vmem:[#allocation6 + $0x978] sm:$0x3f] %v4572
  %v4605 = vld [vmem:[%s3] sm:$0xff]
  %v4606 = vld [vmem:[%s3 + $0x8] sm:$0xff]
  %v4607 = vld [vmem:[%s3 + $0x10] sm:$0xff]
  %v4608 = vld [vmem:[%s3 + $0x18] sm:$0xff]
  %v4609 = vld [vmem:[#allocation6] sm:$0xff]
  %v4610 = vld [vmem:[#allocation6 + $0x8] sm:$0xff]
  %v4611 = vld [vmem:[#allocation6 + $0x10] sm:$0xff]
  %v4612 = vld [vmem:[#allocation6 + $0x18] sm:$0xff]
  %v4613 = vld [vmem:[#allocation6 + $0x20] sm:$0xff]
  %v4614 = vld [vmem:[#allocation6 + $0x28] sm:$0xff]
  %v4615 = vld [vmem:[#allocation6 + $0x30] sm:$0xff]
  %v4616 = vld [vmem:[#allocation6 + $0x38] sm:$0xff]
  %v4617 = vld [vmem:[#allocation6 + $0x40] sm:$0xff]
  %v4618 = vld [vmem:[#allocation6 + $0x48] sm:$0xff]
  %v4619 = vld [vmem:[#allocation6 + $0x50] sm:$0xff]
  %v4620 = vld [vmem:[#allocation6 + $0x58] sm:$0xff]
  %v4621 = vld [vmem:[#allocation6 + $0x60] sm:$0xff]
  %v4622 = vld [vmem:[#allocation6 + $0x68] sm:$0xff]
  %v4623 = vld [vmem:[#allocation6 + $0x70] sm:$0xff]
  %v4624 = vld [vmem:[#allocation6 + $0x78] sm:$0xff]
  %v4625 = vld [vmem:[#allocation6 + $0x80] sm:$0xff]
  %v4626 = vld [vmem:[#allocation6 + $0x88] sm:$0xff]
  %v4627 = vld [vmem:[#allocation6 + $0x90] sm:$0xff]
  %v4628 = vld [vmem:[#allocation6 + $0x98] sm:$0xff]
  %v4629 = vld [vmem:[#allocation6 + $0xa0] sm:$0xff]
  %v4630 = vld [vmem:[#allocation6 + $0xa8] sm:$0xff]
  %v4631 = vld [vmem:[#allocation6 + $0xb0] sm:$0xff]
  %v4632 = vld [vmem:[#allocation6 + $0xb8] sm:$0xff]
  %v4633 = vld [vmem:[#allocation6 + $0xc0] sm:$0xff]
  %v4634 = vld [vmem:[#allocation6 + $0xc8] sm:$0xff]
  %v4635 = vld [vmem:[#allocation6 + $0xd0] sm:$0xff]
  %v4636 = vld [vmem:[#allocation6 + $0xd8] sm:$0xff]
  %v4637 = vld [vmem:[#allocation6 + $0xe0] sm:$0xff]
  %v4638 = vld [vmem:[#allocation6 + $0xe8] sm:$0xff]
  %v4639 = vld [vmem:[#allocation6 + $0xf0] sm:$0xff]
  %v4640 = vld [vmem:[#allocation6 + $0xf8] sm:$0xff]
  %v4641 = vld [vmem:[#allocation6 + $0x100] sm:$0xff]
  %v4642 = vld [vmem:[#allocation6 + $0x108] sm:$0xff]
  %v4643 = vld [vmem:[#allocation6 + $0x110] sm:$0xff]
  %v4644 = vld [vmem:[#allocation6 + $0x118] sm:$0xff]
  %v4645 = vld [vmem:[#allocation6 + $0x120] sm:$0xff]
  %v4646 = vld [vmem:[#allocation6 + $0x128] sm:$0xff]
  %v4647 = vld [vmem:[#allocation6 + $0x130] sm:$0xff]
  %v4648 = vld [vmem:[#allocation6 + $0x138] sm:$0xff]
  %v4649 = vld [vmem:[#allocation6 + $0x140] sm:$0xff]
  %v4650 = vld [vmem:[#allocation6 + $0x148] sm:$0xff]
  %v4651 = vld [vmem:[#allocation6 + $0x150] sm:$0xff]
  %v4652 = vld [vmem:[#allocation6 + $0x158] sm:$0xff]
  %v4653 = vld [vmem:[#allocation6 + $0x160] sm:$0xff]
  %v4654 = vld [vmem:[#allocation6 + $0x168] sm:$0xff]
  %v4655 = vld [vmem:[#allocation6 + $0x170] sm:$0xff]
  %v4656 = vld [vmem:[#allocation6 + $0x178] sm:$0xff]
  %v4657 = vld [vmem:[#allocation6 + $0x180] sm:$0xff]
  %v4658 = vld [vmem:[#allocation6 + $0x188] sm:$0xff]
  %v4659 = vld [vmem:[#allocation6 + $0x190] sm:$0xff]
  %v4660 = vld [vmem:[#allocation6 + $0x198] sm:$0xff]
  %v4661 = vld [vmem:[#allocation6 + $0x1a0] sm:$0xff]
  %v4662 = vld [vmem:[#allocation6 + $0x1a8] sm:$0xff]
  %v4663 = vld [vmem:[#allocation6 + $0x1b0] sm:$0xff]
  %v4664 = vld [vmem:[#allocation6 + $0x1b8] sm:$0xff]
  %v4665 = vld [vmem:[#allocation6 + $0x1c0] sm:$0xff]
  %v4666 = vld [vmem:[#allocation6 + $0x1c8] sm:$0xff]
  %v4667 = vld [vmem:[#allocation6 + $0x1d0] sm:$0xff]
  %v4668 = vld [vmem:[#allocation6 + $0x1d8] sm:$0xff]
  %v4669 = vld [vmem:[#allocation6 + $0x1e0] sm:$0xff]
  %v4670 = vld [vmem:[#allocation6 + $0x1e8] sm:$0xff]
  %v4671 = vld [vmem:[#allocation6 + $0x1f0] sm:$0xff]
  %v4672 = vld [vmem:[#allocation6 + $0x1f8] sm:$0xff]
  %v4673 = vld [vmem:[#allocation6 + $0x200] sm:$0xff]
  %v4674 = vld [vmem:[#allocation6 + $0x208] sm:$0xff]
  %v4675 = vld [vmem:[#allocation6 + $0x210] sm:$0xff]
  %v4676 = vld [vmem:[#allocation6 + $0x218] sm:$0xff]
  %v4677 = vld [vmem:[#allocation6 + $0x220] sm:$0xff]
  %v4678 = vld [vmem:[#allocation6 + $0x228] sm:$0xff]
  %v4679 = vld [vmem:[#allocation6 + $0x230] sm:$0xff]
  %v4680 = vld [vmem:[#allocation6 + $0x238] sm:$0xff]
  %v4681 = vld [vmem:[#allocation6 + $0x240] sm:$0xff]
  %v4682 = vld [vmem:[#allocation6 + $0x248] sm:$0xff]
  %v4683 = vld [vmem:[#allocation6 + $0x250] sm:$0xff]
  %v4684 = vld [vmem:[#allocation6 + $0x258] sm:$0xff]
  %v4685 = vld [vmem:[#allocation6 + $0x260] sm:$0xff]
  %v4686 = vld [vmem:[#allocation6 + $0x268] sm:$0xff]
  %v4687 = vld [vmem:[#allocation6 + $0x270] sm:$0xff]
  %v4688 = vld [vmem:[#allocation6 + $0x278] sm:$0xff]
  %v4689 = vld [vmem:[#allocation6 + $0x280] sm:$0xff]
  %v4690 = vld [vmem:[#allocation6 + $0x288] sm:$0xff]
  %v4691 = vld [vmem:[#allocation6 + $0x290] sm:$0xff]
  %v4692 = vld [vmem:[#allocation6 + $0x298] sm:$0xff]
  %v4693 = vld [vmem:[#allocation6 + $0x2a0] sm:$0xff]
  %v4694 = vld [vmem:[#allocation6 + $0x2a8] sm:$0xff]
  %v4695 = vld [vmem:[#allocation6 + $0x2b0] sm:$0xff]
  %v4696 = vld [vmem:[#allocation6 + $0x2b8] sm:$0xff]
  %v4697 = vld [vmem:[#allocation6 + $0x2c0] sm:$0xff]
  %v4698 = vld [vmem:[#allocation6 + $0x2c8] sm:$0xff]
  %v4699 = vld [vmem:[#allocation6 + $0x2d0] sm:$0xff]
  %v4700 = vld [vmem:[#allocation6 + $0x2d8] sm:$0xff]
  %v4701 = vld [vmem:[#allocation6 + $0x2e0] sm:$0xff]
  %v4702 = vld [vmem:[#allocation6 + $0x2e8] sm:$0xff]
  %v4703 = vld [vmem:[#allocation6 + $0x2f0] sm:$0xff]
  %v4704 = vld [vmem:[#allocation6 + $0x2f8] sm:$0xff]
  %v4705 = vld [vmem:[#allocation6 + $0x300] sm:$0xff]
  %v4706 = vld [vmem:[#allocation6 + $0x308] sm:$0xff]
  %v4707 = vld [vmem:[#allocation6 + $0x310] sm:$0xff]
  %v4708 = vld [vmem:[#allocation6 + $0x318] sm:$0xff]
  %v4709 = vld [vmem:[#allocation6 + $0x320] sm:$0xff]
  %v4710 = vld [vmem:[#allocation6 + $0x328] sm:$0xff]
  %v4711 = vld [vmem:[#allocation6 + $0x330] sm:$0xff]
  %v4712 = vld [vmem:[#allocation6 + $0x338] sm:$0xff]
  %v4713 = vld [vmem:[#allocation6 + $0x340] sm:$0xff]
  %v4714 = vld [vmem:[#allocation6 + $0x348] sm:$0xff]
  %v4715 = vld [vmem:[#allocation6 + $0x350] sm:$0xff]
  %v4716 = vld [vmem:[#allocation6 + $0x358] sm:$0xff]
  %v4717 = vld [vmem:[#allocation6 + $0x360] sm:$0xff]
  %v4718 = vld [vmem:[#allocation6 + $0x368] sm:$0xff]
  %v4719 = vld [vmem:[#allocation6 + $0x370] sm:$0xff]
  %v4720 = vld [vmem:[#allocation6 + $0x378] sm:$0xff]
  %v4721 = vld [vmem:[#allocation6 + $0x380] sm:$0xff]
  %v4722 = vld [vmem:[#allocation6 + $0x388] sm:$0xff]
  %v4723 = vld [vmem:[#allocation6 + $0x390] sm:$0xff]
  %v4724 = vld [vmem:[#allocation6 + $0x398] sm:$0xff]
  %v4725 = vld [vmem:[#allocation6 + $0x3a0] sm:$0xff]
  %v4726 = vld [vmem:[#allocation6 + $0x3a8] sm:$0xff]
  %v4727 = vld [vmem:[#allocation6 + $0x3b0] sm:$0xff]
  %v4728 = vld [vmem:[#allocation6 + $0x3b8] sm:$0xff]
  %v4729 = vld [vmem:[#allocation6 + $0x3c0] sm:$0xff]
  %v4730 = vld [vmem:[#allocation6 + $0x3c8] sm:$0xff]
  %v4731 = vld [vmem:[#allocation6 + $0x3d0] sm:$0xff]
  %v4732 = vld [vmem:[#allocation6 + $0x3d8] sm:$0xff]
  %v4733 = vld [vmem:[#allocation6 + $0x3e0] sm:$0xff]
  %v4734 = vld [vmem:[#allocation6 + $0x3e8] sm:$0xff]
  %v4735 = vld [vmem:[#allocation6 + $0x3f0] sm:$0xff]
  %v4736 = vld [vmem:[#allocation6 + $0x3f8] sm:$0xff]
  %v4737 = vld [vmem:[#allocation6 + $0x400] sm:$0xff]
  %v4738 = vld [vmem:[#allocation6 + $0x408] sm:$0xff]
  %v4739 = vld [vmem:[#allocation6 + $0x410] sm:$0xff]
  %v4740 = vld [vmem:[#allocation6 + $0x418] sm:$0xff]
  %v4741 = vld [vmem:[#allocation6 + $0x420] sm:$0xff]
  %v4742 = vld [vmem:[#allocation6 + $0x428] sm:$0xff]
  %v4743 = vld [vmem:[#allocation6 + $0x430] sm:$0xff]
  %v4744 = vld [vmem:[#allocation6 + $0x438] sm:$0xff]
  %v4745 = vld [vmem:[#allocation6 + $0x440] sm:$0xff]
  %v4746 = vld [vmem:[#allocation6 + $0x448] sm:$0xff]
  %v4747 = vld [vmem:[#allocation6 + $0x450] sm:$0xff]
  %v4748 = vld [vmem:[#allocation6 + $0x458] sm:$0xff]
  %v4749 = vld [vmem:[#allocation6 + $0x460] sm:$0xff]
  %v4750 = vld [vmem:[#allocation6 + $0x468] sm:$0xff]
  %v4751 = vld [vmem:[#allocation6 + $0x470] sm:$0xff]
  %v4752 = vld [vmem:[#allocation6 + $0x478] sm:$0xff]
  %v4753 = vld [vmem:[#allocation6 + $0x480] sm:$0xff]
  %v4754 = vld [vmem:[#allocation6 + $0x488] sm:$0xff]
  %v4755 = vld [vmem:[#allocation6 + $0x490] sm:$0xff]
  %v4756 = vld [vmem:[#allocation6 + $0x498] sm:$0xff]
  %v4757 = vld [vmem:[#allocation6 + $0x4a0] sm:$0xff]
  %v4758 = vld [vmem:[#allocation6 + $0x4a8] sm:$0xff]
  %v4759 = vld [vmem:[#allocation6 + $0x4b0] sm:$0xff]
  %v4760 = vld [vmem:[#allocation6 + $0x4b8] sm:$0xff]
  %v4761 = vld [vmem:[#allocation6 + $0x4c0] sm:$0xff]
  %v4762 = vld [vmem:[#allocation6 + $0x4c8] sm:$0xff]
  %v4763 = vld [vmem:[#allocation6 + $0x4d0] sm:$0xff]
  %v4764 = vld [vmem:[#allocation6 + $0x4d8] sm:$0xff]
  %v4765 = vld [vmem:[#allocation6 + $0x4e0] sm:$0xff]
  %v4766 = vld [vmem:[#allocation6 + $0x4e8] sm:$0xff]
  %v4767 = vld [vmem:[#allocation6 + $0x4f0] sm:$0xff]
  %v4768 = vld [vmem:[#allocation6 + $0x4f8] sm:$0xff]
  %v4769 = vld [vmem:[#allocation6 + $0x500] sm:$0xff]
  %v4770 = vld [vmem:[#allocation6 + $0x508] sm:$0xff]
  %v4771 = vld [vmem:[#allocation6 + $0x510] sm:$0xff]
  %v4772 = vld [vmem:[#allocation6 + $0x518] sm:$0xff]
  %v4773 = vld [vmem:[#allocation6 + $0x520] sm:$0xff]
  %v4774 = vld [vmem:[#allocation6 + $0x528] sm:$0xff]
  %v4775 = vld [vmem:[#allocation6 + $0x530] sm:$0xff]
  %v4776 = vld [vmem:[#allocation6 + $0x538] sm:$0xff]
  %v4777 = vld [vmem:[#allocation6 + $0x540] sm:$0xff]
  %v4778 = vld [vmem:[#allocation6 + $0x548] sm:$0xff]
  %v4779 = vld [vmem:[#allocation6 + $0x550] sm:$0xff]
  %v4780 = vld [vmem:[#allocation6 + $0x558] sm:$0xff]
  %v4781 = vld [vmem:[#allocation6 + $0x560] sm:$0xff]
  %v4782 = vld [vmem:[#allocation6 + $0x568] sm:$0xff]
  %v4783 = vld [vmem:[#allocation6 + $0x570] sm:$0xff]
  %v4784 = vld [vmem:[#allocation6 + $0x578] sm:$0xff]
  %v4785 = vld [vmem:[#allocation6 + $0x580] sm:$0xff]
  %v4786 = vld [vmem:[#allocation6 + $0x588] sm:$0xff]
  %v4787 = vld [vmem:[#allocation6 + $0x590] sm:$0xff]
  %v4788 = vld [vmem:[#allocation6 + $0x598] sm:$0xff]
  %v4789 = vld [vmem:[#allocation6 + $0x5a0] sm:$0xff]
  %v4790 = vld [vmem:[#allocation6 + $0x5a8] sm:$0xff]
  %v4791 = vld [vmem:[#allocation6 + $0x5b0] sm:$0xff]
  %v4792 = vld [vmem:[#allocation6 + $0x5b8] sm:$0xff]
  %v4793 = vld [vmem:[#allocation6 + $0x5c0] sm:$0xff]
  %v4794 = vld [vmem:[#allocation6 + $0x5c8] sm:$0xff]
  %v4795 = vld [vmem:[#allocation6 + $0x5d0] sm:$0xff]
  %v4796 = vld [vmem:[#allocation6 + $0x5d8] sm:$0xff]
  %v4797 = vld [vmem:[#allocation6 + $0x5e0] sm:$0xff]
  %v4798 = vld [vmem:[#allocation6 + $0x5e8] sm:$0xff]
  %v4799 = vld [vmem:[#allocation6 + $0x5f0] sm:$0xff]
  %v4800 = vld [vmem:[#allocation6 + $0x5f8] sm:$0xff]
  %v4801 = vld [vmem:[#allocation6 + $0x600] sm:$0xff]
  %v4802 = vld [vmem:[#allocation6 + $0x608] sm:$0xff]
  %v4803 = vld [vmem:[#allocation6 + $0x610] sm:$0xff]
  %v4804 = vld [vmem:[#allocation6 + $0x618] sm:$0xff]
  %v4805 = vld [vmem:[#allocation6 + $0x620] sm:$0xff]
  %v4806 = vld [vmem:[#allocation6 + $0x628] sm:$0xff]
  %v4807 = vld [vmem:[#allocation6 + $0x630] sm:$0xff]
  %v4808 = vld [vmem:[#allocation6 + $0x638] sm:$0xff]
  %v4809 = vld [vmem:[#allocation6 + $0x640] sm:$0xff]
  %v4810 = vld [vmem:[#allocation6 + $0x648] sm:$0xff]
  %v4811 = vld [vmem:[#allocation6 + $0x650] sm:$0xff]
  %v4812 = vld [vmem:[#allocation6 + $0x658] sm:$0xff]
  %v4813 = vld [vmem:[#allocation6 + $0x660] sm:$0xff]
  %v4814 = vld [vmem:[#allocation6 + $0x668] sm:$0xff]
  %v4815 = vld [vmem:[#allocation6 + $0x670] sm:$0xff]
  %v4816 = vld [vmem:[#allocation6 + $0x678] sm:$0xff]
  %v4817 = vld [vmem:[#allocation6 + $0x680] sm:$0xff]
  %v4818 = vld [vmem:[#allocation6 + $0x688] sm:$0xff]
  %v4819 = vld [vmem:[#allocation6 + $0x690] sm:$0xff]
  %v4820 = vld [vmem:[#allocation6 + $0x698] sm:$0xff]
  %v4821 = vld [vmem:[#allocation6 + $0x6a0] sm:$0xff]
  %v4822 = vld [vmem:[#allocation6 + $0x6a8] sm:$0xff]
  %v4823 = vld [vmem:[#allocation6 + $0x6b0] sm:$0xff]
  %v4824 = vld [vmem:[#allocation6 + $0x6b8] sm:$0xff]
  %v4825 = vld [vmem:[#allocation6 + $0x6c0] sm:$0xff]
  %v4826 = vld [vmem:[#allocation6 + $0x6c8] sm:$0xff]
  %v4827 = vld [vmem:[#allocation6 + $0x6d0] sm:$0xff]
  %v4828 = vld [vmem:[#allocation6 + $0x6d8] sm:$0xff]
  %v4829 = vld [vmem:[#allocation6 + $0x6e0] sm:$0xff]
  %v4830 = vld [vmem:[#allocation6 + $0x6e8] sm:$0xff]
  %v4831 = vld [vmem:[#allocation6 + $0x6f0] sm:$0xff]
  %v4832 = vld [vmem:[#allocation6 + $0x6f8] sm:$0xff]
  %v4833 = vld [vmem:[#allocation6 + $0x700] sm:$0xff]
  %v4834 = vld [vmem:[#allocation6 + $0x708] sm:$0xff]
  %v4835 = vld [vmem:[#allocation6 + $0x710] sm:$0xff]
  %v4836 = vld [vmem:[#allocation6 + $0x718] sm:$0xff]
  %v4837 = vld [vmem:[#allocation6 + $0x720] sm:$0xff]
  %v4838 = vld [vmem:[#allocation6 + $0x728] sm:$0xff]
  %v4839 = vld [vmem:[#allocation6 + $0x730] sm:$0xff]
  %v4840 = vld [vmem:[#allocation6 + $0x738] sm:$0xff]
  %v4841 = vld [vmem:[#allocation6 + $0x740] sm:$0xff]
  %v4842 = vld [vmem:[#allocation6 + $0x748] sm:$0xff]
  %v4843 = vld [vmem:[#allocation6 + $0x750] sm:$0xff]
  %v4844 = vld [vmem:[#allocation6 + $0x758] sm:$0xff]
  %v4845 = vld [vmem:[#allocation6 + $0x760] sm:$0xff]
  %v4846 = vld [vmem:[#allocation6 + $0x768] sm:$0xff]
  %v4847 = vld [vmem:[#allocation6 + $0x770] sm:$0xff]
  %v4848 = vld [vmem:[#allocation6 + $0x778] sm:$0xff]
  %v4849 = vld [vmem:[#allocation6 + $0x780] sm:$0xff]
  %v4850 = vld [vmem:[#allocation6 + $0x788] sm:$0xff]
  %v4851 = vld [vmem:[#allocation6 + $0x790] sm:$0xff]
  %v4852 = vld [vmem:[#allocation6 + $0x798] sm:$0xff]
  %v4853 = vld [vmem:[#allocation6 + $0x7a0] sm:$0xff]
  %v4854 = vld [vmem:[#allocation6 + $0x7a8] sm:$0xff]
  %v4855 = vld [vmem:[#allocation6 + $0x7b0] sm:$0xff]
  %v4856 = vld [vmem:[#allocation6 + $0x7b8] sm:$0xff]
  %v4857 = vld [vmem:[#allocation6 + $0x7c0] sm:$0xff]
  %v4858 = vld [vmem:[#allocation6 + $0x7c8] sm:$0xff]
  %v4859 = vld [vmem:[#allocation6 + $0x7d0] sm:$0xff]
  %v4860 = vld [vmem:[#allocation6 + $0x7d8] sm:$0xff]
  %v4861 = vld [vmem:[#allocation6 + $0x7e0] sm:$0xff]
  %v4862 = vld [vmem:[#allocation6 + $0x7e8] sm:$0xff]
  %v4863 = vld [vmem:[#allocation6 + $0x7f0] sm:$0xff]
  %v4864 = vld [vmem:[#allocation6 + $0x7f8] sm:$0xff]
  %v4865 = vld [vmem:[#allocation6 + $0x800] sm:$0xff]
  %v4866 = vld [vmem:[#allocation6 + $0x808] sm:$0xff]
  %v4867 = vld [vmem:[#allocation6 + $0x810] sm:$0xff]
  %v4868 = vld [vmem:[#allocation6 + $0x818] sm:$0xff]
  %v4869 = vld [vmem:[#allocation6 + $0x820] sm:$0xff]
  %v4870 = vld [vmem:[#allocation6 + $0x828] sm:$0xff]
  %v4871 = vld [vmem:[#allocation6 + $0x830] sm:$0xff]
  %v4872 = vld [vmem:[#allocation6 + $0x838] sm:$0xff]
  %v4873 = vld [vmem:[#allocation6 + $0x840] sm:$0xff]
  %v4874 = vld [vmem:[#allocation6 + $0x848] sm:$0xff]
  %v4875 = vld [vmem:[#allocation6 + $0x850] sm:$0xff]
  %v4876 = vld [vmem:[#allocation6 + $0x858] sm:$0xff]
  %v4877 = vld [vmem:[#allocation6 + $0x860] sm:$0xff]
  %v4878 = vld [vmem:[#allocation6 + $0x868] sm:$0xff]
  %v4879 = vld [vmem:[#allocation6 + $0x870] sm:$0xff]
  %v4880 = vld [vmem:[#allocation6 + $0x878] sm:$0xff]
  %v4881 = vld [vmem:[#allocation6 + $0x880] sm:$0xff]
  %v4882 = vld [vmem:[#allocation6 + $0x888] sm:$0xff]
  %v4883 = vld [vmem:[#allocation6 + $0x890] sm:$0xff]
  %v4884 = vld [vmem:[#allocation6 + $0x898] sm:$0xff]
  %v4885 = vld [vmem:[#allocation6 + $0x8a0] sm:$0xff]
  %v4886 = vld [vmem:[#allocation6 + $0x8a8] sm:$0xff]
  %v4887 = vld [vmem:[#allocation6 + $0x8b0] sm:$0xff]
  %v4888 = vld [vmem:[#allocation6 + $0x8b8] sm:$0xff]
  %v4889 = vld [vmem:[#allocation6 + $0x8c0] sm:$0xff]
  %v4890 = vld [vmem:[#allocation6 + $0x8c8] sm:$0xff]
  %v4891 = vld [vmem:[#allocation6 + $0x8d0] sm:$0xff]
  %v4892 = vld [vmem:[#allocation6 + $0x8d8] sm:$0xff]
  %v4893 = vld [vmem:[#allocation6 + $0x8e0] sm:$0xff]
  %v4894 = vld [vmem:[#allocation6 + $0x8e8] sm:$0xff]
  %v4895 = vld [vmem:[#allocation6 + $0x8f0] sm:$0xff]
  %v4896 = vld [vmem:[#allocation6 + $0x8f8] sm:$0xff]
  %v4897 = vld [vmem:[#allocation6 + $0x900] sm:$0x3f]
  %v4898 = vld [vmem:[#allocation6 + $0x908] sm:$0x3f]
  %v4899 = vld [vmem:[#allocation6 + $0x910] sm:$0x3f]
  %v4900 = vld [vmem:[#allocation6 + $0x918] sm:$0x3f]
  %v4901 = vld [vmem:[#allocation6 + $0x920] sm:$0x3f]
  %v4902 = vld [vmem:[#allocation6 + $0x928] sm:$0x3f]
  %v4903 = vld [vmem:[#allocation6 + $0x930] sm:$0x3f]
  %v4904 = vld [vmem:[#allocation6 + $0x938] sm:$0x3f]
  %v4905 = vld [vmem:[#allocation6 + $0x940] sm:$0x3f]
  %v4906 = vld [vmem:[#allocation6 + $0x948] sm:$0x3f]
  %v4907 = vld [vmem:[#allocation6 + $0x950] sm:$0x3f]
  %v4908 = vld [vmem:[#allocation6 + $0x958] sm:$0x3f]
  %v4909 = vld [vmem:[#allocation6 + $0x960] sm:$0x3f]
  %v4910 = vld [vmem:[#allocation6 + $0x968] sm:$0x3f]
  %v4911 = vld [vmem:[#allocation6 + $0x970] sm:$0x3f]
  %v4912 = vld [vmem:[#allocation6 + $0x978] sm:$0x3f]
  %v4913 = vld [vmem:[%s4] sm:$0xff]
  %v4914 = vld [vmem:[%s4 + $0x8] sm:$0xff]
  %4916 = vset.pattern.permute.xlu0 0
  %4917 = vperm.xlu0 %4916, %v4913
  %v4918 = vpop.permute.xlu0 %4917
  %4921 = vset.pattern.permute.xlu0 0
  %4922 = vperm.xlu0 %4921, %v4914
  %v4923 = vpop.permute.xlu0 %4922
  %vm4925 = vcmask 179200
  %v4927 = vsel %vm4925, %v4606, 0
  %v4930 = vsel %vm4925, %v4608, 0
  %vm4932 = vcmask 1045504
  %v4934 = vsel %vm4932, %v4897, 0
  %v4937 = vsel %vm4932, %v4898, 0
  %v4940 = vsel %vm4932, %v4899, 0
  %v4943 = vsel %vm4932, %v4900, 0
  %v4946 = vsel %vm4932, %v4901, 0
  %v4949 = vsel %vm4932, %v4902, 0
  %v4952 = vsel %vm4932, %v4903, 0
  %v4955 = vsel %vm4932, %v4904, 0
  %v4958 = vsel %vm4932, %v4905, 0
  %v4961 = vsel %vm4932, %v4906, 0
  %v4964 = vsel %vm4932, %v4907, 0
  %v4967 = vsel %vm4932, %v4908, 0
  %v4970 = vsel %vm4932, %v4909, 0
  %v4973 = vsel %vm4932, %v4910, 0
  %v4976 = vsel %vm4932, %v4911, 0
  %v4979 = vsel %vm4932, %v4912, 0
  %4981 = vmatpush.msra.mxu0 %v4849
  %4982 = vmatpush.msra.mxu0 %v4833
  %4983 = vmatpush.msra.mxu0 %v4817
  %4984 = vmatpush.msra.mxu0 %v4801
  %4985 = vmatpush.msra.mxu0 %v4785
  %4986 = vmatpush.msra.mxu0 %v4769
  %4987 = vmatpush.msra.mxu0 %v4753
  %4988 = vmatpush.msra.mxu0 %v4737
  %4989 = vmatpush.msra.mxu0 %v4721
  %4990 = vmatpush.msra.mxu0 %v4705
  %4991 = vmatpush.msra.mxu0 %v4689
  %4992 = vmatpush.msra.mxu0 %v4673
  %4993 = vmatpush.msra.mxu0 %v4657
  %4994 = vmatpush.msra.mxu0 %v4641
  %4995 = vmatpush.msra.mxu0 %v4625
  %4996 = vmatpush.msra.mxu0 %v4609
  %4997 = vmatmul.f32.gmra.mxu0 %v4605
  %v4998 = vpop.f32.mrf.mxu0
  %v4999 = vadd.f32 %v4918, %v4998
  %5000 = vmatmul.f32.gmra.mxu0 %v4607
  %v5001 = vpop.f32.mrf.mxu0
  %v5002 = vadd.f32 %v4923, %v5001
  %5003 = vdwg.mxu0
  %5004 = vmatpush.msra.mxu0 0.0
  %5005 = vmatpush.msra.mxu0 0.0
  %5006 = vmatpush.msra.mxu0 0.0
  %5007 = vmatpush.msra.mxu0 0.0
  %5008 = vmatpush.msra.mxu0 0.0
  %5009 = vmatpush.msra.mxu0 0.0
  %5010 = vmatpush.msra.mxu0 0.0
  %5011 = vmatpush.msra.mxu0 0.0
  %5012 = vmatpush.msra.mxu0 0.0
  %5013 = vmatpush.msra.mxu0 0.0
  %5014 = vmatpush.msra.mxu0 0.0
  %5015 = vmatpush.msra.mxu0 0.0
  %5016 = vmatpush.msra.mxu0 0.0
  %5017 = vmatpush.msra.mxu0 %v4934
  %5018 = vmatpush.msra.mxu0 %v4881
  %5019 = vmatpush.msra.mxu0 %v4865
  %5020 = vmatmul.f32.gmra.mxu0 %v4927
  %v5021 = vpop.f32.mrf.mxu0
  %v5022 = vadd.f32 %v4999, %v5021
  %5023 = vmatmul.f32.gmra.mxu0 %v4930
  %v5024 = vpop.f32.mrf.mxu0
  %v5025 = vadd.f32 %v5002, %v5024
  %5026 = vdwg.mxu0
  %5027 = vmatpush.msra.mxu0 %v4850
  %5028 = vmatpush.msra.mxu0 %v4834
  %5029 = vmatpush.msra.mxu0 %v4818
  %5030 = vmatpush.msra.mxu0 %v4802
  %5031 = vmatpush.msra.mxu0 %v4786
  %5032 = vmatpush.msra.mxu0 %v4770
  %5033 = vmatpush.msra.mxu0 %v4754
  %5034 = vmatpush.msra.mxu0 %v4738
  %5035 = vmatpush.msra.mxu0 %v4722
  %5036 = vmatpush.msra.mxu0 %v4706
  %5037 = vmatpush.msra.mxu0 %v4690
  %5038 = vmatpush.msra.mxu0 %v4674
  %5039 = vmatpush.msra.mxu0 %v4658
  %5040 = vmatpush.msra.mxu0 %v4642
  %5041 = vmatpush.msra.mxu0 %v4626
  %5042 = vmatpush.msra.mxu0 %v4610
  %5043 = vmatmul.f32.gmra.mxu0 %v4605
  %v5044 = vpop.f32.mrf.mxu0
  %v5045 = vadd.f32 %v4918, %v5044
  %5046 = vmatmul.f32.gmra.mxu0 %v4607
  %v5047 = vpop.f32.mrf.mxu0
  %v5048 = vadd.f32 %v4923, %v5047
  %5049 = vdwg.mxu0
  %5050 = vmatpush.msra.mxu0 0.0
  %5051 = vmatpush.msra.mxu0 0.0
  %5052 = vmatpush.msra.mxu0 0.0
  %5053 = vmatpush.msra.mxu0 0.0
  %5054 = vmatpush.msra.mxu0 0.0
  %5055 = vmatpush.msra.mxu0 0.0
  %5056 = vmatpush.msra.mxu0 0.0
  %5057 = vmatpush.msra.mxu0 0.0
  %5058 = vmatpush.msra.mxu0 0.0
  %5059 = vmatpush.msra.mxu0 0.0
  %5060 = vmatpush.msra.mxu0 0.0
  %5061 = vmatpush.msra.mxu0 0.0
  %5062 = vmatpush.msra.mxu0 0.0
  %5063 = vmatpush.msra.mxu0 %v4937
  %5064 = vmatpush.msra.mxu0 %v4882
  %5065 = vmatpush.msra.mxu0 %v4866
  %5066 = vmatmul.f32.gmra.mxu0 %v4927
  %v5067 = vpop.f32.mrf.mxu0
  %v5068 = vadd.f32 %v5045, %v5067
  %5069 = vmatmul.f32.gmra.mxu0 %v4930
  %v5070 = vpop.f32.mrf.mxu0
  %v5071 = vadd.f32 %v5048, %v5070
  %5072 = vdwg.mxu0
  %5073 = vmatpush.msra.mxu0 %v4851
  %5074 = vmatpush.msra.mxu0 %v4835
  %5075 = vmatpush.msra.mxu0 %v4819
  %5076 = vmatpush.msra.mxu0 %v4803
  %5077 = vmatpush.msra.mxu0 %v4787
  %5078 = vmatpush.msra.mxu0 %v4771
  %5079 = vmatpush.msra.mxu0 %v4755
  %5080 = vmatpush.msra.mxu0 %v4739
  %5081 = vmatpush.msra.mxu0 %v4723
  %5082 = vmatpush.msra.mxu0 %v4707
  %5083 = vmatpush.msra.mxu0 %v4691
  %5084 = vmatpush.msra.mxu0 %v4675
  %5085 = vmatpush.msra.mxu0 %v4659
  %5086 = vmatpush.msra.mxu0 %v4643
  %5087 = vmatpush.msra.mxu0 %v4627
  %5088 = vmatpush.msra.mxu0 %v4611
  %5089 = vmatmul.f32.gmra.mxu0 %v4605
  %v5090 = vpop.f32.mrf.mxu0
  %v5091 = vadd.f32 %v4918, %v5090
  %5092 = vmatmul.f32.gmra.mxu0 %v4607
  %v5093 = vpop.f32.mrf.mxu0
  %v5094 = vadd.f32 %v4923, %v5093
  %5095 = vdwg.mxu0
  %5096 = vmatpush.msra.mxu0 0.0
  %5097 = vmatpush.msra.mxu0 0.0
  %5098 = vmatpush.msra.mxu0 0.0
  %5099 = vmatpush.msra.mxu0 0.0
  %5100 = vmatpush.msra.mxu0 0.0
  %5101 = vmatpush.msra.mxu0 0.0
  %5102 = vmatpush.msra.mxu0 0.0
  %5103 = vmatpush.msra.mxu0 0.0
  %5104 = vmatpush.msra.mxu0 0.0
  %5105 = vmatpush.msra.mxu0 0.0
  %5106 = vmatpush.msra.mxu0 0.0
  %5107 = vmatpush.msra.mxu0 0.0
  %5108 = vmatpush.msra.mxu0 0.0
  %5109 = vmatpush.msra.mxu0 %v4940
  %5110 = vmatpush.msra.mxu0 %v4883
  %5111 = vmatpush.msra.mxu0 %v4867
  %5112 = vmatmul.f32.gmra.mxu0 %v4927
  %v5113 = vpop.f32.mrf.mxu0
  %v5114 = vadd.f32 %v5091, %v5113
  %5115 = vmatmul.f32.gmra.mxu0 %v4930
  %v5116 = vpop.f32.mrf.mxu0
  %v5117 = vadd.f32 %v5094, %v5116
  %5118 = vdwg.mxu0
  %5119 = vmatpush.msra.mxu0 %v4852
  %5120 = vmatpush.msra.mxu0 %v4836
  %5121 = vmatpush.msra.mxu0 %v4820
  %5122 = vmatpush.msra.mxu0 %v4804
  %5123 = vmatpush.msra.mxu0 %v4788
  %5124 = vmatpush.msra.mxu0 %v4772
  %5125 = vmatpush.msra.mxu0 %v4756
  %5126 = vmatpush.msra.mxu0 %v4740
  %5127 = vmatpush.msra.mxu0 %v4724
  %5128 = vmatpush.msra.mxu0 %v4708
  %5129 = vmatpush.msra.mxu0 %v4692
  %5130 = vmatpush.msra.mxu0 %v4676
  %5131 = vmatpush.msra.mxu0 %v4660
  %5132 = vmatpush.msra.mxu0 %v4644
  %5133 = vmatpush.msra.mxu0 %v4628
  %5134 = vmatpush.msra.mxu0 %v4612
  %5135 = vmatmul.f32.gmra.mxu0 %v4605
  %v5136 = vpop.f32.mrf.mxu0
  %v5137 = vadd.f32 %v4918, %v5136
  %5138 = vmatmul.f32.gmra.mxu0 %v4607
  %v5139 = vpop.f32.mrf.mxu0
  %v5140 = vadd.f32 %v4923, %v5139
  %5141 = vdwg.mxu0
  %5142 = vmatpush.msra.mxu0 0.0
  %5143 = vmatpush.msra.mxu0 0.0
  %5144 = vmatpush.msra.mxu0 0.0
  %5145 = vmatpush.msra.mxu0 0.0
  %5146 = vmatpush.msra.mxu0 0.0
  %5147 = vmatpush.msra.mxu0 0.0
  %5148 = vmatpush.msra.mxu0 0.0
  %5149 = vmatpush.msra.mxu0 0.0
  %5150 = vmatpush.msra.mxu0 0.0
  %5151 = vmatpush.msra.mxu0 0.0
  %5152 = vmatpush.msra.mxu0 0.0
  %5153 = vmatpush.msra.mxu0 0.0
  %5154 = vmatpush.msra.mxu0 0.0
  %5155 = vmatpush.msra.mxu0 %v4943
  %5156 = vmatpush.msra.mxu0 %v4884
  %5157 = vmatpush.msra.mxu0 %v4868
  %5158 = vmatmul.f32.gmra.mxu0 %v4927
  %v5159 = vpop.f32.mrf.mxu0
  %v5160 = vadd.f32 %v5137, %v5159
  %5161 = vmatmul.f32.gmra.mxu0 %v4930
  %v5162 = vpop.f32.mrf.mxu0
  %v5163 = vadd.f32 %v5140, %v5162
  %5164 = vdwg.mxu0
  %5165 = vmatpush.msra.mxu0 %v4853
  %5166 = vmatpush.msra.mxu0 %v4837
  %5167 = vmatpush.msra.mxu0 %v4821
  %5168 = vmatpush.msra.mxu0 %v4805
  %5169 = vmatpush.msra.mxu0 %v4789
  %5170 = vmatpush.msra.mxu0 %v4773
  %5171 = vmatpush.msra.mxu0 %v4757
  %5172 = vmatpush.msra.mxu0 %v4741
  %5173 = vmatpush.msra.mxu0 %v4725
  %5174 = vmatpush.msra.mxu0 %v4709
  %5175 = vmatpush.msra.mxu0 %v4693
  %5176 = vmatpush.msra.mxu0 %v4677
  %5177 = vmatpush.msra.mxu0 %v4661
  %5178 = vmatpush.msra.mxu0 %v4645
  %5179 = vmatpush.msra.mxu0 %v4629
  %5180 = vmatpush.msra.mxu0 %v4613
  %5181 = vmatmul.f32.gmra.mxu0 %v4605
  %v5182 = vpop.f32.mrf.mxu0
  %v5183 = vadd.f32 %v4918, %v5182
  %5184 = vmatmul.f32.gmra.mxu0 %v4607
  %v5185 = vpop.f32.mrf.mxu0
  %v5186 = vadd.f32 %v4923, %v5185
  %5187 = vdwg.mxu0
  %5188 = vmatpush.msra.mxu0 0.0
  %5189 = vmatpush.msra.mxu0 0.0
  %5190 = vmatpush.msra.mxu0 0.0
  %5191 = vmatpush.msra.mxu0 0.0
  %5192 = vmatpush.msra.mxu0 0.0
  %5193 = vmatpush.msra.mxu0 0.0
  %5194 = vmatpush.msra.mxu0 0.0
  %5195 = vmatpush.msra.mxu0 0.0
  %5196 = vmatpush.msra.mxu0 0.0
  %5197 = vmatpush.msra.mxu0 0.0
  %5198 = vmatpush.msra.mxu0 0.0
  %5199 = vmatpush.msra.mxu0 0.0
  %5200 = vmatpush.msra.mxu0 0.0
  %5201 = vmatpush.msra.mxu0 %v4946
  %5202 = vmatpush.msra.mxu0 %v4885
  %5203 = vmatpush.msra.mxu0 %v4869
  %5204 = vmatmul.f32.gmra.mxu0 %v4927
  %v5205 = vpop.f32.mrf.mxu0
  %v5206 = vadd.f32 %v5183, %v5205
  %5207 = vmatmul.f32.gmra.mxu0 %v4930
  %v5208 = vpop.f32.mrf.mxu0
  %v5209 = vadd.f32 %v5186, %v5208
  %5210 = vdwg.mxu0
  %5211 = vmatpush.msra.mxu0 %v4854
  %5212 = vmatpush.msra.mxu0 %v4838
  %5213 = vmatpush.msra.mxu0 %v4822
  %5214 = vmatpush.msra.mxu0 %v4806
  %5215 = vmatpush.msra.mxu0 %v4790
  %5216 = vmatpush.msra.mxu0 %v4774
  %5217 = vmatpush.msra.mxu0 %v4758
  %5218 = vmatpush.msra.mxu0 %v4742
  %5219 = vmatpush.msra.mxu0 %v4726
  %5220 = vmatpush.msra.mxu0 %v4710
  %5221 = vmatpush.msra.mxu0 %v4694
  %5222 = vmatpush.msra.mxu0 %v4678
  %5223 = vmatpush.msra.mxu0 %v4662
  %5224 = vmatpush.msra.mxu0 %v4646
  %5225 = vmatpush.msra.mxu0 %v4630
  %5226 = vmatpush.msra.mxu0 %v4614
  %5227 = vmatmul.f32.gmra.mxu0 %v4605
  %v5228 = vpop.f32.mrf.mxu0
  %v5229 = vadd.f32 %v4918, %v5228
  %5230 = vmatmul.f32.gmra.mxu0 %v4607
  %v5231 = vpop.f32.mrf.mxu0
  %v5232 = vadd.f32 %v4923, %v5231
  %5233 = vdwg.mxu0
  %5234 = vmatpush.msra.mxu0 0.0
  %5235 = vmatpush.msra.mxu0 0.0
  %5236 = vmatpush.msra.mxu0 0.0
  %5237 = vmatpush.msra.mxu0 0.0
  %5238 = vmatpush.msra.mxu0 0.0
  %5239 = vmatpush.msra.mxu0 0.0
  %5240 = vmatpush.msra.mxu0 0.0
  %5241 = vmatpush.msra.mxu0 0.0
  %5242 = vmatpush.msra.mxu0 0.0
  %5243 = vmatpush.msra.mxu0 0.0
  %5244 = vmatpush.msra.mxu0 0.0
  %5245 = vmatpush.msra.mxu0 0.0
  %5246 = vmatpush.msra.mxu0 0.0
  %5247 = vmatpush.msra.mxu0 %v4949
  %5248 = vmatpush.msra.mxu0 %v4886
  %5249 = vmatpush.msra.mxu0 %v4870
  %5250 = vmatmul.f32.gmra.mxu0 %v4927
  %v5251 = vpop.f32.mrf.mxu0
  %v5252 = vadd.f32 %v5229, %v5251
  %5253 = vmatmul.f32.gmra.mxu0 %v4930
  %v5254 = vpop.f32.mrf.mxu0
  %v5255 = vadd.f32 %v5232, %v5254
  %5256 = vdwg.mxu0
  %5257 = vmatpush.msra.mxu0 %v4855
  %5258 = vmatpush.msra.mxu0 %v4839
  %5259 = vmatpush.msra.mxu0 %v4823
  %5260 = vmatpush.msra.mxu0 %v4807
  %5261 = vmatpush.msra.mxu0 %v4791
  %5262 = vmatpush.msra.mxu0 %v4775
  %5263 = vmatpush.msra.mxu0 %v4759
  %5264 = vmatpush.msra.mxu0 %v4743
  %5265 = vmatpush.msra.mxu0 %v4727
  %5266 = vmatpush.msra.mxu0 %v4711
  %5267 = vmatpush.msra.mxu0 %v4695
  %5268 = vmatpush.msra.mxu0 %v4679
  %5269 = vmatpush.msra.mxu0 %v4663
  %5270 = vmatpush.msra.mxu0 %v4647
  %5271 = vmatpush.msra.mxu0 %v4631
  %5272 = vmatpush.msra.mxu0 %v4615
  %5273 = vmatmul.f32.gmra.mxu0 %v4605
  %v5274 = vpop.f32.mrf.mxu0
  %v5275 = vadd.f32 %v4918, %v5274
  %5276 = vmatmul.f32.gmra.mxu0 %v4607
  %v5277 = vpop.f32.mrf.mxu0
  %v5278 = vadd.f32 %v4923, %v5277
  %5279 = vdwg.mxu0
  %5280 = vmatpush.msra.mxu0 0.0
  %5281 = vmatpush.msra.mxu0 0.0
  %5282 = vmatpush.msra.mxu0 0.0
  %5283 = vmatpush.msra.mxu0 0.0
  %5284 = vmatpush.msra.mxu0 0.0
  %5285 = vmatpush.msra.mxu0 0.0
  %5286 = vmatpush.msra.mxu0 0.0
  %5287 = vmatpush.msra.mxu0 0.0
  %5288 = vmatpush.msra.mxu0 0.0
  %5289 = vmatpush.msra.mxu0 0.0
  %5290 = vmatpush.msra.mxu0 0.0
  %5291 = vmatpush.msra.mxu0 0.0
  %5292 = vmatpush.msra.mxu0 0.0
  %5293 = vmatpush.msra.mxu0 %v4952
  %5294 = vmatpush.msra.mxu0 %v4887
  %5295 = vmatpush.msra.mxu0 %v4871
  %5296 = vmatmul.f32.gmra.mxu0 %v4927
  %v5297 = vpop.f32.mrf.mxu0
  %v5298 = vadd.f32 %v5275, %v5297
  %5299 = vmatmul.f32.gmra.mxu0 %v4930
  %v5300 = vpop.f32.mrf.mxu0
  %v5301 = vadd.f32 %v5278, %v5300
  %5302 = vdwg.mxu0
  %5303 = vmatpush.msra.mxu0 %v4856
  %5304 = vmatpush.msra.mxu0 %v4840
  %5305 = vmatpush.msra.mxu0 %v4824
  %5306 = vmatpush.msra.mxu0 %v4808
  %5307 = vmatpush.msra.mxu0 %v4792
  %5308 = vmatpush.msra.mxu0 %v4776
  %5309 = vmatpush.msra.mxu0 %v4760
  %5310 = vmatpush.msra.mxu0 %v4744
  %5311 = vmatpush.msra.mxu0 %v4728
  %5312 = vmatpush.msra.mxu0 %v4712
  %5313 = vmatpush.msra.mxu0 %v4696
  %5314 = vmatpush.msra.mxu0 %v4680
  %5315 = vmatpush.msra.mxu0 %v4664
  %5316 = vmatpush.msra.mxu0 %v4648
  %5317 = vmatpush.msra.mxu0 %v4632
  %5318 = vmatpush.msra.mxu0 %v4616
  %5319 = vmatmul.f32.gmra.mxu0 %v4605
  %v5320 = vpop.f32.mrf.mxu0
  %v5321 = vadd.f32 %v4918, %v5320
  %5322 = vmatmul.f32.gmra.mxu0 %v4607
  %v5323 = vpop.f32.mrf.mxu0
  %v5324 = vadd.f32 %v4923, %v5323
  %5325 = vdwg.mxu0
  %5326 = vmatpush.msra.mxu0 0.0
  %5327 = vmatpush.msra.mxu0 0.0
  %5328 = vmatpush.msra.mxu0 0.0
  %5329 = vmatpush.msra.mxu0 0.0
  %5330 = vmatpush.msra.mxu0 0.0
  %5331 = vmatpush.msra.mxu0 0.0
  %5332 = vmatpush.msra.mxu0 0.0
  %5333 = vmatpush.msra.mxu0 0.0
  %5334 = vmatpush.msra.mxu0 0.0
  %5335 = vmatpush.msra.mxu0 0.0
  %5336 = vmatpush.msra.mxu0 0.0
  %5337 = vmatpush.msra.mxu0 0.0
  %5338 = vmatpush.msra.mxu0 0.0
  %5339 = vmatpush.msra.mxu0 %v4955
  %5340 = vmatpush.msra.mxu0 %v4888
  %5341 = vmatpush.msra.mxu0 %v4872
  %5342 = vmatmul.f32.gmra.mxu0 %v4927
  %v5343 = vpop.f32.mrf.mxu0
  %v5344 = vadd.f32 %v5321, %v5343
  %5345 = vmatmul.f32.gmra.mxu0 %v4930
  %v5346 = vpop.f32.mrf.mxu0
  %v5347 = vadd.f32 %v5324, %v5346
  %5348 = vdwg.mxu0
  %5349 = vmatpush.msra.mxu0 %v4857
  %5350 = vmatpush.msra.mxu0 %v4841
  %5351 = vmatpush.msra.mxu0 %v4825
  %5352 = vmatpush.msra.mxu0 %v4809
  %5353 = vmatpush.msra.mxu0 %v4793
  %5354 = vmatpush.msra.mxu0 %v4777
  %5355 = vmatpush.msra.mxu0 %v4761
  %5356 = vmatpush.msra.mxu0 %v4745
  %5357 = vmatpush.msra.mxu0 %v4729
  %5358 = vmatpush.msra.mxu0 %v4713
  %5359 = vmatpush.msra.mxu0 %v4697
  %5360 = vmatpush.msra.mxu0 %v4681
  %5361 = vmatpush.msra.mxu0 %v4665
  %5362 = vmatpush.msra.mxu0 %v4649
  %5363 = vmatpush.msra.mxu0 %v4633
  %5364 = vmatpush.msra.mxu0 %v4617
  %5365 = vmatmul.f32.gmra.mxu0 %v4605
  %v5366 = vpop.f32.mrf.mxu0
  %v5367 = vadd.f32 %v4918, %v5366
  %5368 = vmatmul.f32.gmra.mxu0 %v4607
  %v5369 = vpop.f32.mrf.mxu0
  %v5370 = vadd.f32 %v4923, %v5369
  %5371 = vdwg.mxu0
  %5372 = vmatpush.msra.mxu0 0.0
  %5373 = vmatpush.msra.mxu0 0.0
  %5374 = vmatpush.msra.mxu0 0.0
  %5375 = vmatpush.msra.mxu0 0.0
  %5376 = vmatpush.msra.mxu0 0.0
  %5377 = vmatpush.msra.mxu0 0.0
  %5378 = vmatpush.msra.mxu0 0.0
  %5379 = vmatpush.msra.mxu0 0.0
  %5380 = vmatpush.msra.mxu0 0.0
  %5381 = vmatpush.msra.mxu0 0.0
  %5382 = vmatpush.msra.mxu0 0.0
  %5383 = vmatpush.msra.mxu0 0.0
  %5384 = vmatpush.msra.mxu0 0.0
  %5385 = vmatpush.msra.mxu0 %v4958
  %5386 = vmatpush.msra.mxu0 %v4889
  %5387 = vmatpush.msra.mxu0 %v4873
  %5388 = vmatmul.f32.gmra.mxu0 %v4927
  %v5389 = vpop.f32.mrf.mxu0
  %v5390 = vadd.f32 %v5367, %v5389
  %5391 = vmatmul.f32.gmra.mxu0 %v4930
  %v5392 = vpop.f32.mrf.mxu0
  %v5393 = vadd.f32 %v5370, %v5392
  %5394 = vdwg.mxu0
  %5395 = vmatpush.msra.mxu0 %v4858
  %5396 = vmatpush.msra.mxu0 %v4842
  %5397 = vmatpush.msra.mxu0 %v4826
  %5398 = vmatpush.msra.mxu0 %v4810
  %5399 = vmatpush.msra.mxu0 %v4794
  %5400 = vmatpush.msra.mxu0 %v4778
  %5401 = vmatpush.msra.mxu0 %v4762
  %5402 = vmatpush.msra.mxu0 %v4746
  %5403 = vmatpush.msra.mxu0 %v4730
  %5404 = vmatpush.msra.mxu0 %v4714
  %5405 = vmatpush.msra.mxu0 %v4698
  %5406 = vmatpush.msra.mxu0 %v4682
  %5407 = vmatpush.msra.mxu0 %v4666
  %5408 = vmatpush.msra.mxu0 %v4650
  %5409 = vmatpush.msra.mxu0 %v4634
  %5410 = vmatpush.msra.mxu0 %v4618
  %5411 = vmatmul.f32.gmra.mxu0 %v4605
  %v5412 = vpop.f32.mrf.mxu0
  %v5413 = vadd.f32 %v4918, %v5412
  %5414 = vmatmul.f32.gmra.mxu0 %v4607
  %v5415 = vpop.f32.mrf.mxu0
  %v5416 = vadd.f32 %v4923, %v5415
  %5417 = vdwg.mxu0
  %5418 = vmatpush.msra.mxu0 0.0
  %5419 = vmatpush.msra.mxu0 0.0
  %5420 = vmatpush.msra.mxu0 0.0
  %5421 = vmatpush.msra.mxu0 0.0
  %5422 = vmatpush.msra.mxu0 0.0
  %5423 = vmatpush.msra.mxu0 0.0
  %5424 = vmatpush.msra.mxu0 0.0
  %5425 = vmatpush.msra.mxu0 0.0
  %5426 = vmatpush.msra.mxu0 0.0
  %5427 = vmatpush.msra.mxu0 0.0
  %5428 = vmatpush.msra.mxu0 0.0
  %5429 = vmatpush.msra.mxu0 0.0
  %5430 = vmatpush.msra.mxu0 0.0
  %5431 = vmatpush.msra.mxu0 %v4961
  %5432 = vmatpush.msra.mxu0 %v4890
  %5433 = vmatpush.msra.mxu0 %v4874
  %5434 = vmatmul.f32.gmra.mxu0 %v4927
  %v5435 = vpop.f32.mrf.mxu0
  %v5436 = vadd.f32 %v5413, %v5435
  %5437 = vmatmul.f32.gmra.mxu0 %v4930
  %v5438 = vpop.f32.mrf.mxu0
  %v5439 = vadd.f32 %v5416, %v5438
  %5440 = vdwg.mxu0
  %5441 = vmatpush.msra.mxu0 %v4859
  %5442 = vmatpush.msra.mxu0 %v4843
  %5443 = vmatpush.msra.mxu0 %v4827
  %5444 = vmatpush.msra.mxu0 %v4811
  %5445 = vmatpush.msra.mxu0 %v4795
  %5446 = vmatpush.msra.mxu0 %v4779
  %5447 = vmatpush.msra.mxu0 %v4763
  %5448 = vmatpush.msra.mxu0 %v4747
  %5449 = vmatpush.msra.mxu0 %v4731
  %5450 = vmatpush.msra.mxu0 %v4715
  %5451 = vmatpush.msra.mxu0 %v4699
  %5452 = vmatpush.msra.mxu0 %v4683
  %5453 = vmatpush.msra.mxu0 %v4667
  %5454 = vmatpush.msra.mxu0 %v4651
  %5455 = vmatpush.msra.mxu0 %v4635
  %5456 = vmatpush.msra.mxu0 %v4619
  %5457 = vmatmul.f32.gmra.mxu0 %v4605
  %v5458 = vpop.f32.mrf.mxu0
  %v5459 = vadd.f32 %v4918, %v5458
  %5460 = vmatmul.f32.gmra.mxu0 %v4607
  %v5461 = vpop.f32.mrf.mxu0
  %v5462 = vadd.f32 %v4923, %v5461
  %5463 = vdwg.mxu0
  %5464 = vmatpush.msra.mxu0 0.0
  %5465 = vmatpush.msra.mxu0 0.0
  %5466 = vmatpush.msra.mxu0 0.0
  %5467 = vmatpush.msra.mxu0 0.0
  %5468 = vmatpush.msra.mxu0 0.0
  %5469 = vmatpush.msra.mxu0 0.0
  %5470 = vmatpush.msra.mxu0 0.0
  %5471 = vmatpush.msra.mxu0 0.0
  %5472 = vmatpush.msra.mxu0 0.0
  %5473 = vmatpush.msra.mxu0 0.0
  %5474 = vmatpush.msra.mxu0 0.0
  %5475 = vmatpush.msra.mxu0 0.0
  %5476 = vmatpush.msra.mxu0 0.0
  %5477 = vmatpush.msra.mxu0 %v4964
  %5478 = vmatpush.msra.mxu0 %v4891
  %5479 = vmatpush.msra.mxu0 %v4875
  %5480 = vmatmul.f32.gmra.mxu0 %v4927
  %v5481 = vpop.f32.mrf.mxu0
  %v5482 = vadd.f32 %v5459, %v5481
  %5483 = vmatmul.f32.gmra.mxu0 %v4930
  %v5484 = vpop.f32.mrf.mxu0
  %v5485 = vadd.f32 %v5462, %v5484
  %5486 = vdwg.mxu0
  %5487 = vmatpush.msra.mxu0 %v4860
  %5488 = vmatpush.msra.mxu0 %v4844
  %5489 = vmatpush.msra.mxu0 %v4828
  %5490 = vmatpush.msra.mxu0 %v4812
  %5491 = vmatpush.msra.mxu0 %v4796
  %5492 = vmatpush.msra.mxu0 %v4780
  %5493 = vmatpush.msra.mxu0 %v4764
  %5494 = vmatpush.msra.mxu0 %v4748
  %5495 = vmatpush.msra.mxu0 %v4732
  %5496 = vmatpush.msra.mxu0 %v4716
  %5497 = vmatpush.msra.mxu0 %v4700
  %5498 = vmatpush.msra.mxu0 %v4684
  %5499 = vmatpush.msra.mxu0 %v4668
  %5500 = vmatpush.msra.mxu0 %v4652
  %5501 = vmatpush.msra.mxu0 %v4636
  %5502 = vmatpush.msra.mxu0 %v4620
  %5503 = vmatmul.f32.gmra.mxu0 %v4605
  %v5504 = vpop.f32.mrf.mxu0
  %v5505 = vadd.f32 %v4918, %v5504
  %5506 = vmatmul.f32.gmra.mxu0 %v4607
  %v5507 = vpop.f32.mrf.mxu0
  %v5508 = vadd.f32 %v4923, %v5507
  %5509 = vdwg.mxu0
  %5510 = vmatpush.msra.mxu0 0.0
  %5511 = vmatpush.msra.mxu0 0.0
  %5512 = vmatpush.msra.mxu0 0.0
  %5513 = vmatpush.msra.mxu0 0.0
  %5514 = vmatpush.msra.mxu0 0.0
  %5515 = vmatpush.msra.mxu0 0.0
  %5516 = vmatpush.msra.mxu0 0.0
  %5517 = vmatpush.msra.mxu0 0.0
  %5518 = vmatpush.msra.mxu0 0.0
  %5519 = vmatpush.msra.mxu0 0.0
  %5520 = vmatpush.msra.mxu0 0.0
  %5521 = vmatpush.msra.mxu0 0.0
  %5522 = vmatpush.msra.mxu0 0.0
  %5523 = vmatpush.msra.mxu0 %v4967
  %5524 = vmatpush.msra.mxu0 %v4892
  %5525 = vmatpush.msra.mxu0 %v4876
  %5526 = vmatmul.f32.gmra.mxu0 %v4927
  %v5527 = vpop.f32.mrf.mxu0
  %v5528 = vadd.f32 %v5505, %v5527
  %5529 = vmatmul.f32.gmra.mxu0 %v4930
  %v5530 = vpop.f32.mrf.mxu0
  %v5531 = vadd.f32 %v5508, %v5530
  %5532 = vdwg.mxu0
  %5533 = vmatpush.msra.mxu0 %v4861
  %5534 = vmatpush.msra.mxu0 %v4845
  %5535 = vmatpush.msra.mxu0 %v4829
  %5536 = vmatpush.msra.mxu0 %v4813
  %5537 = vmatpush.msra.mxu0 %v4797
  %5538 = vmatpush.msra.mxu0 %v4781
  %5539 = vmatpush.msra.mxu0 %v4765
  %5540 = vmatpush.msra.mxu0 %v4749
  %5541 = vmatpush.msra.mxu0 %v4733
  %5542 = vmatpush.msra.mxu0 %v4717
  %5543 = vmatpush.msra.mxu0 %v4701
  %5544 = vmatpush.msra.mxu0 %v4685
  %5545 = vmatpush.msra.mxu0 %v4669
  %5546 = vmatpush.msra.mxu0 %v4653
  %5547 = vmatpush.msra.mxu0 %v4637
  %5548 = vmatpush.msra.mxu0 %v4621
  %5549 = vmatmul.f32.gmra.mxu0 %v4605
  %v5550 = vpop.f32.mrf.mxu0
  %v5551 = vadd.f32 %v4918, %v5550
  %5552 = vmatmul.f32.gmra.mxu0 %v4607
  %v5553 = vpop.f32.mrf.mxu0
  %v5554 = vadd.f32 %v4923, %v5553
  %5555 = vdwg.mxu0
  %5556 = vmatpush.msra.mxu0 0.0
  %5557 = vmatpush.msra.mxu0 0.0
  %5558 = vmatpush.msra.mxu0 0.0
  %5559 = vmatpush.msra.mxu0 0.0
  %5560 = vmatpush.msra.mxu0 0.0
  %5561 = vmatpush.msra.mxu0 0.0
  %5562 = vmatpush.msra.mxu0 0.0
  %5563 = vmatpush.msra.mxu0 0.0
  %5564 = vmatpush.msra.mxu0 0.0
  %5565 = vmatpush.msra.mxu0 0.0
  %5566 = vmatpush.msra.mxu0 0.0
  %5567 = vmatpush.msra.mxu0 0.0
  %5568 = vmatpush.msra.mxu0 0.0
  %5569 = vmatpush.msra.mxu0 %v4970
  %5570 = vmatpush.msra.mxu0 %v4893
  %5571 = vmatpush.msra.mxu0 %v4877
  %5572 = vmatmul.f32.gmra.mxu0 %v4927
  %v5573 = vpop.f32.mrf.mxu0
  %v5574 = vadd.f32 %v5551, %v5573
  %5575 = vmatmul.f32.gmra.mxu0 %v4930
  %v5576 = vpop.f32.mrf.mxu0
  %v5577 = vadd.f32 %v5554, %v5576
  %5578 = vdwg.mxu0
  %5579 = vmatpush.msra.mxu0 %v4862
  %5580 = vmatpush.msra.mxu0 %v4846
  %5581 = vmatpush.msra.mxu0 %v4830
  %5582 = vmatpush.msra.mxu0 %v4814
  %5583 = vmatpush.msra.mxu0 %v4798
  %5584 = vmatpush.msra.mxu0 %v4782
  %5585 = vmatpush.msra.mxu0 %v4766
  %5586 = vmatpush.msra.mxu0 %v4750
  %5587 = vmatpush.msra.mxu0 %v4734
  %5588 = vmatpush.msra.mxu0 %v4718
  %5589 = vmatpush.msra.mxu0 %v4702
  %5590 = vmatpush.msra.mxu0 %v4686
  %5591 = vmatpush.msra.mxu0 %v4670
  %5592 = vmatpush.msra.mxu0 %v4654
  %5593 = vmatpush.msra.mxu0 %v4638
  %5594 = vmatpush.msra.mxu0 %v4622
  %5595 = vmatmul.f32.gmra.mxu0 %v4605
  %v5596 = vpop.f32.mrf.mxu0
  %v5597 = vadd.f32 %v4918, %v5596
  %5598 = vmatmul.f32.gmra.mxu0 %v4607
  %v5599 = vpop.f32.mrf.mxu0
  %v5600 = vadd.f32 %v4923, %v5599
  %5601 = vdwg.mxu0
  %5602 = vmatpush.msra.mxu0 0.0
  %5603 = vmatpush.msra.mxu0 0.0
  %5604 = vmatpush.msra.mxu0 0.0
  %5605 = vmatpush.msra.mxu0 0.0
  %5606 = vmatpush.msra.mxu0 0.0
  %5607 = vmatpush.msra.mxu0 0.0
  %5608 = vmatpush.msra.mxu0 0.0
  %5609 = vmatpush.msra.mxu0 0.0
  %5610 = vmatpush.msra.mxu0 0.0
  %5611 = vmatpush.msra.mxu0 0.0
  %5612 = vmatpush.msra.mxu0 0.0
  %5613 = vmatpush.msra.mxu0 0.0
  %5614 = vmatpush.msra.mxu0 0.0
  %5615 = vmatpush.msra.mxu0 %v4973
  %5616 = vmatpush.msra.mxu0 %v4894
  %5617 = vmatpush.msra.mxu0 %v4878
  %5618 = vmatmul.f32.gmra.mxu0 %v4927
  %v5619 = vpop.f32.mrf.mxu0
  %v5620 = vadd.f32 %v5597, %v5619
  %5621 = vmatmul.f32.gmra.mxu0 %v4930
  %v5622 = vpop.f32.mrf.mxu0
  %v5623 = vadd.f32 %v5600, %v5622
  %5624 = vdwg.mxu0
  %5625 = vmatpush.msra.mxu0 %v4863
  %5626 = vmatpush.msra.mxu0 %v4847
  %5627 = vmatpush.msra.mxu0 %v4831
  %5628 = vmatpush.msra.mxu0 %v4815
  %5629 = vmatpush.msra.mxu0 %v4799
  %5630 = vmatpush.msra.mxu0 %v4783
  %5631 = vmatpush.msra.mxu0 %v4767
  %5632 = vmatpush.msra.mxu0 %v4751
  %5633 = vmatpush.msra.mxu0 %v4735
  %5634 = vmatpush.msra.mxu0 %v4719
  %5635 = vmatpush.msra.mxu0 %v4703
  %5636 = vmatpush.msra.mxu0 %v4687
  %5637 = vmatpush.msra.mxu0 %v4671
  %5638 = vmatpush.msra.mxu0 %v4655
  %5639 = vmatpush.msra.mxu0 %v4639
  %5640 = vmatpush.msra.mxu0 %v4623
  %5641 = vmatmul.f32.gmra.mxu0 %v4605
  %v5642 = vpop.f32.mrf.mxu0
  %v5643 = vadd.f32 %v4918, %v5642
  %5644 = vmatmul.f32.gmra.mxu0 %v4607
  %v5645 = vpop.f32.mrf.mxu0
  %v5646 = vadd.f32 %v4923, %v5645
  %5647 = vdwg.mxu0
  %5648 = vmatpush.msra.mxu0 0.0
  %5649 = vmatpush.msra.mxu0 0.0
  %5650 = vmatpush.msra.mxu0 0.0
  %5651 = vmatpush.msra.mxu0 0.0
  %5652 = vmatpush.msra.mxu0 0.0
  %5653 = vmatpush.msra.mxu0 0.0
  %5654 = vmatpush.msra.mxu0 0.0
  %5655 = vmatpush.msra.mxu0 0.0
  %5656 = vmatpush.msra.mxu0 0.0
  %5657 = vmatpush.msra.mxu0 0.0
  %5658 = vmatpush.msra.mxu0 0.0
  %5659 = vmatpush.msra.mxu0 0.0
  %5660 = vmatpush.msra.mxu0 0.0
  %5661 = vmatpush.msra.mxu0 %v4976
  %5662 = vmatpush.msra.mxu0 %v4895
  %5663 = vmatpush.msra.mxu0 %v4879
  %5664 = vmatmul.f32.gmra.mxu0 %v4927
  %v5665 = vpop.f32.mrf.mxu0
  %v5666 = vadd.f32 %v5643, %v5665
  %5667 = vmatmul.f32.gmra.mxu0 %v4930
  %v5668 = vpop.f32.mrf.mxu0
  %v5669 = vadd.f32 %v5646, %v5668
  %5670 = vdwg.mxu0
  %5671 = vmatpush.msra.mxu0 %v4864
  %5672 = vmatpush.msra.mxu0 %v4848
  %5673 = vmatpush.msra.mxu0 %v4832
  %5674 = vmatpush.msra.mxu0 %v4816
  %5675 = vmatpush.msra.mxu0 %v4800
  %5676 = vmatpush.msra.mxu0 %v4784
  %5677 = vmatpush.msra.mxu0 %v4768
  %5678 = vmatpush.msra.mxu0 %v4752
  %5679 = vmatpush.msra.mxu0 %v4736
  %5680 = vmatpush.msra.mxu0 %v4720
  %5681 = vmatpush.msra.mxu0 %v4704
  %5682 = vmatpush.msra.mxu0 %v4688
  %5683 = vmatpush.msra.mxu0 %v4672
  %5684 = vmatpush.msra.mxu0 %v4656
  %5685 = vmatpush.msra.mxu0 %v4640
  %5686 = vmatpush.msra.mxu0 %v4624
  %5687 = vmatmul.f32.gmra.mxu0 %v4605
  %v5688 = vpop.f32.mrf.mxu0
  %v5689 = vadd.f32 %v4918, %v5688
  %5690 = vmatmul.f32.gmra.mxu0 %v4607
  %v5691 = vpop.f32.mrf.mxu0
  %v5692 = vadd.f32 %v4923, %v5691
  %5693 = vdwg.mxu0
  %5694 = vmatpush.msra.mxu0 0.0
  %5695 = vmatpush.msra.mxu0 0.0
  %5696 = vmatpush.msra.mxu0 0.0
  %5697 = vmatpush.msra.mxu0 0.0
  %5698 = vmatpush.msra.mxu0 0.0
  %5699 = vmatpush.msra.mxu0 0.0
  %5700 = vmatpush.msra.mxu0 0.0
  %5701 = vmatpush.msra.mxu0 0.0
  %5702 = vmatpush.msra.mxu0 0.0
  %5703 = vmatpush.msra.mxu0 0.0
  %5704 = vmatpush.msra.mxu0 0.0
  %5705 = vmatpush.msra.mxu0 0.0
  %5706 = vmatpush.msra.mxu0 0.0
  %5707 = vmatpush.msra.mxu0 %v4979
  %5708 = vmatpush.msra.mxu0 %v4896
  %5709 = vmatpush.msra.mxu0 %v4880
  %5710 = vmatmul.f32.gmra.mxu0 %v4927
  %v5711 = vpop.f32.mrf.mxu0
  %v5712 = vadd.f32 %v5689, %v5711
  %5713 = vmatmul.f32.gmra.mxu0 %v4930
  %v5714 = vpop.f32.mrf.mxu0
  %v5715 = vadd.f32 %v5692, %v5714
  %5716 = vdwg.mxu0
  %v5717 = vmax.f32 %v5022, 0.0
  %v5718 = vmax.f32 %v5068, 0.0
  %v5719 = vmax.f32 %v5114, 0.0
  %v5720 = vmax.f32 %v5160, 0.0
  %v5721 = vmax.f32 %v5206, 0.0
  %v5722 = vmax.f32 %v5252, 0.0
  %v5723 = vmax.f32 %v5298, 0.0
  %v5724 = vmax.f32 %v5344, 0.0
  %v5725 = vmax.f32 %v5390, 0.0
  %v5726 = vmax.f32 %v5436, 0.0
  %v5727 = vmax.f32 %v5482, 0.0
  %v5728 = vmax.f32 %v5528, 0.0
  %v5729 = vmax.f32 %v5574, 0.0
  %v5730 = vmax.f32 %v5620, 0.0
  %v5731 = vmax.f32 %v5666, 0.0
  %v5732 = vmax.f32 %v5712, 0.0
  %v5733 = vmax.f32 %v5025, 0.0
  %v5734 = vmax.f32 %v5071, 0.0
  %v5735 = vmax.f32 %v5117, 0.0
  %v5736 = vmax.f32 %v5163, 0.0
  %v5737 = vmax.f32 %v5209, 0.0
  %v5738 = vmax.f32 %v5255, 0.0
  %v5739 = vmax.f32 %v5301, 0.0
  %v5740 = vmax.f32 %v5347, 0.0
  %v5741 = vmax.f32 %v5393, 0.0
  %v5742 = vmax.f32 %v5439, 0.0
  %v5743 = vmax.f32 %v5485, 0.0
  %v5744 = vmax.f32 %v5531, 0.0
  %v5745 = vmax.f32 %v5577, 0.0
  %v5746 = vmax.f32 %v5623, 0.0
  %v5747 = vmax.f32 %v5669, 0.0
  %v5748 = vmax.f32 %v5715, 0.0
  %5749 = vst [vmem:[#allocation7] sm:$0xff] %v5717
  %5750 = vst [vmem:[#allocation7 + $0x8] sm:$0xff] %v5718
  %5751 = vst [vmem:[#allocation7 + $0x10] sm:$0xff] %v5719
  %5752 = vst [vmem:[#allocation7 + $0x18] sm:$0xff] %v5720
  %5753 = vst [vmem:[#allocation7 + $0x20] sm:$0xff] %v5721
  %5754 = vst [vmem:[#allocation7 + $0x28] sm:$0xff] %v5722
  %5755 = vst [vmem:[#allocation7 + $0x30] sm:$0xff] %v5723
  %5756 = vst [vmem:[#allocation7 + $0x38] sm:$0xff] %v5724
  %5757 = vst [vmem:[#allocation7 + $0x40] sm:$0xff] %v5725
  %5758 = vst [vmem:[#allocation7 + $0x48] sm:$0xff] %v5726
  %5759 = vst [vmem:[#allocation7 + $0x50] sm:$0xff] %v5727
  %5760 = vst [vmem:[#allocation7 + $0x58] sm:$0xff] %v5728
  %5761 = vst [vmem:[#allocation7 + $0x60] sm:$0xff] %v5729
  %5762 = vst [vmem:[#allocation7 + $0x68] sm:$0xff] %v5730
  %5763 = vst [vmem:[#allocation7 + $0x70] sm:$0xff] %v5731
  %5764 = vst [vmem:[#allocation7 + $0x78] sm:$0xff] %v5732
  %5765 = vst [vmem:[#allocation7 + $0x98] sm:$0xff] %v5733
  %5766 = vst [vmem:[#allocation7 + $0xa0] sm:$0xff] %v5734
  %5767 = vst [vmem:[#allocation7 + $0xa8] sm:$0xff] %v5735
  %5768 = vst [vmem:[#allocation7 + $0xb0] sm:$0xff] %v5736
  %5769 = vst [vmem:[#allocation7 + $0xb8] sm:$0xff] %v5737
  %5770 = vst [vmem:[#allocation7 + $0xc0] sm:$0xff] %v5738
  %5771 = vst [vmem:[#allocation7 + $0xc8] sm:$0xff] %v5739
  %5772 = vst [vmem:[#allocation7 + $0xd0] sm:$0xff] %v5740
  %5773 = vst [vmem:[#allocation7 + $0xd8] sm:$0xff] %v5741
  %5774 = vst [vmem:[#allocation7 + $0xe0] sm:$0xff] %v5742
  %5775 = vst [vmem:[#allocation7 + $0xe8] sm:$0xff] %v5743
  %5776 = vst [vmem:[#allocation7 + $0xf0] sm:$0xff] %v5744
  %5777 = vst [vmem:[#allocation7 + $0xf8] sm:$0xff] %v5745
  %5778 = vst [vmem:[#allocation7 + $0x100] sm:$0xff] %v5746
  %5779 = vst [vmem:[#allocation7 + $0x108] sm:$0xff] %v5747
  %5780 = vst [vmem:[#allocation7 + $0x110] sm:$0xff] %v5748
  %v5781 = vld [vmem:[#allocation7] sm:$0xff]
  %v5782 = vld [vmem:[#allocation7 + $0x8] sm:$0xff]
  %v5783 = vld [vmem:[#allocation7 + $0x10] sm:$0xff]
  %v5784 = vld [vmem:[#allocation7 + $0x18] sm:$0xff]
  %v5785 = vld [vmem:[#allocation7 + $0x20] sm:$0xff]
  %v5786 = vld [vmem:[#allocation7 + $0x28] sm:$0xff]
  %v5787 = vld [vmem:[#allocation7 + $0x30] sm:$0xff]
  %v5788 = vld [vmem:[#allocation7 + $0x38] sm:$0xff]
  %v5789 = vld [vmem:[#allocation7 + $0x40] sm:$0xff]
  %v5790 = vld [vmem:[#allocation7 + $0x48] sm:$0xff]
  %v5791 = vld [vmem:[#allocation7 + $0x50] sm:$0xff]
  %v5792 = vld [vmem:[#allocation7 + $0x58] sm:$0xff]
  %v5793 = vld [vmem:[#allocation7 + $0x60] sm:$0xff]
  %v5794 = vld [vmem:[#allocation7 + $0x68] sm:$0xff]
  %v5795 = vld [vmem:[#allocation7 + $0x70] sm:$0xff]
  %v5796 = vld [vmem:[#allocation7 + $0x78] sm:$0xff]
  %v5797 = vld [vmem:[#allocation7 + $0x98] sm:$0xff]
  %v5798 = vld [vmem:[#allocation7 + $0xa0] sm:$0xff]
  %v5799 = vld [vmem:[#allocation7 + $0xa8] sm:$0xff]
  %v5800 = vld [vmem:[#allocation7 + $0xb0] sm:$0xff]
  %v5801 = vld [vmem:[#allocation7 + $0xb8] sm:$0xff]
  %v5802 = vld [vmem:[#allocation7 + $0xc0] sm:$0xff]
  %v5803 = vld [vmem:[#allocation7 + $0xc8] sm:$0xff]
  %v5804 = vld [vmem:[#allocation7 + $0xd0] sm:$0xff]
  %v5805 = vld [vmem:[#allocation7 + $0xd8] sm:$0xff]
  %v5806 = vld [vmem:[#allocation7 + $0xe0] sm:$0xff]
  %v5807 = vld [vmem:[#allocation7 + $0xe8] sm:$0xff]
  %v5808 = vld [vmem:[#allocation7 + $0xf0] sm:$0xff]
  %v5809 = vld [vmem:[#allocation7 + $0xf8] sm:$0xff]
  %v5810 = vld [vmem:[#allocation7 + $0x100] sm:$0xff]
  %v5811 = vld [vmem:[#allocation7 + $0x108] sm:$0xff]
  %v5812 = vld [vmem:[#allocation7 + $0x110] sm:$0xff]
  %v5813 = vld [vmem:[#allocation7 + $0x80] sm:$0xff]
  %v5814 = vld [vmem:[#allocation7 + $0x118] sm:$0xff]
  %5849 = vrot.lane.b32.xlu0 %v5781, 126
  %v5850 = vpop.permute.xlu0 %5849
  %5851 = vrot.lane.b32.xlu0 %v5782, 126
  %v5852 = vpop.permute.xlu0 %5851
  %5853 = vrot.lane.b32.xlu0 %v5783, 126
  %v5854 = vpop.permute.xlu0 %5853
  %5855 = vrot.lane.b32.xlu0 %v5784, 126
  %v5856 = vpop.permute.xlu0 %5855
  %5857 = vrot.lane.b32.xlu0 %v5785, 126
  %v5858 = vpop.permute.xlu0 %5857
  %5859 = vrot.lane.b32.xlu0 %v5786, 126
  %v5860 = vpop.permute.xlu0 %5859
  %5861 = vrot.lane.b32.xlu0 %v5787, 126
  %v5862 = vpop.permute.xlu0 %5861
  %5863 = vrot.lane.b32.xlu0 %v5788, 126
  %v5864 = vpop.permute.xlu0 %5863
  %5865 = vrot.lane.b32.xlu0 %v5789, 126
  %v5866 = vpop.permute.xlu0 %5865
  %5867 = vrot.lane.b32.xlu0 %v5790, 126
  %v5868 = vpop.permute.xlu0 %5867
  %5869 = vrot.lane.b32.xlu0 %v5791, 126
  %v5870 = vpop.permute.xlu0 %5869
  %5871 = vrot.lane.b32.xlu0 %v5792, 126
  %v5872 = vpop.permute.xlu0 %5871
  %5873 = vrot.lane.b32.xlu0 %v5793, 126
  %v5874 = vpop.permute.xlu0 %5873
  %5875 = vrot.lane.b32.xlu0 %v5794, 126
  %v5876 = vpop.permute.xlu0 %5875
  %5877 = vrot.lane.b32.xlu0 %v5795, 126
  %v5878 = vpop.permute.xlu0 %5877
  %5879 = vrot.lane.b32.xlu0 %v5796, 126
  %v5880 = vpop.permute.xlu0 %5879
  %5881 = vrot.lane.b32.xlu0 %v5813, 126
  %v5882 = vpop.permute.xlu0 %5881
  %5883 = vrot.lane.b32.xlu0 %v5797, 126
  %v5884 = vpop.permute.xlu0 %5883
  %5885 = vrot.lane.b32.xlu0 %v5798, 126
  %v5886 = vpop.permute.xlu0 %5885
  %5887 = vrot.lane.b32.xlu0 %v5799, 126
  %v5888 = vpop.permute.xlu0 %5887
  %5889 = vrot.lane.b32.xlu0 %v5800, 126
  %v5890 = vpop.permute.xlu0 %5889
  %5891 = vrot.lane.b32.xlu0 %v5801, 126
  %v5892 = vpop.permute.xlu0 %5891
  %5893 = vrot.lane.b32.xlu0 %v5802, 126
  %v5894 = vpop.permute.xlu0 %5893
  %5895 = vrot.lane.b32.xlu0 %v5803, 126
  %v5896 = vpop.permute.xlu0 %5895
  %5897 = vrot.lane.b32.xlu0 %v5804, 126
  %v5898 = vpop.permute.xlu0 %5897
  %5899 = vrot.lane.b32.xlu0 %v5805, 126
  %v5900 = vpop.permute.xlu0 %5899
  %5901 = vrot.lane.b32.xlu0 %v5806, 126
  %v5902 = vpop.permute.xlu0 %5901
  %5903 = vrot.lane.b32.xlu0 %v5807, 126
  %v5904 = vpop.permute.xlu0 %5903
  %5905 = vrot.lane.b32.xlu0 %v5808, 126
  %v5906 = vpop.permute.xlu0 %5905
  %5907 = vrot.lane.b32.xlu0 %v5809, 126
  %v5908 = vpop.permute.xlu0 %5907
  %5909 = vrot.lane.b32.xlu0 %v5810, 126
  %v5910 = vpop.permute.xlu0 %5909
  %5911 = vrot.lane.b32.xlu0 %v5811, 126
  %v5912 = vpop.permute.xlu0 %5911
  %5913 = vrot.lane.b32.xlu0 %v5812, 126
  %v5914 = vpop.permute.xlu0 %5913
  %5915 = vrot.lane.b32.xlu0 %v5814, 126
  %v5916 = vpop.permute.xlu0 %5915
  %v5917 = vsel %vm111, %v5850, %v5852
  %v5918 = vsel %vm111, %v5852, %v5854
  %v5919 = vsel %vm111, %v5854, %v5856
  %v5920 = vsel %vm111, %v5856, %v5858
  %v5921 = vsel %vm111, %v5858, %v5860
  %v5922 = vsel %vm111, %v5860, %v5862
  %v5923 = vsel %vm111, %v5862, %v5864
  %v5924 = vsel %vm111, %v5864, %v5866
  %v5925 = vsel %vm111, %v5866, %v5868
  %v5926 = vsel %vm111, %v5868, %v5870
  %v5927 = vsel %vm111, %v5870, %v5872
  %v5928 = vsel %vm111, %v5872, %v5874
  %v5929 = vsel %vm111, %v5874, %v5876
  %v5930 = vsel %vm111, %v5876, %v5878
  %v5931 = vsel %vm111, %v5878, %v5880
  %v5932 = vsel %vm111, %v5880, %v5882
  %v5933 = vsel %vm111, %v5884, %v5886
  %v5934 = vsel %vm111, %v5886, %v5888
  %v5935 = vsel %vm111, %v5888, %v5890
  %v5936 = vsel %vm111, %v5890, %v5892
  %v5937 = vsel %vm111, %v5892, %v5894
  %v5938 = vsel %vm111, %v5894, %v5896
  %v5939 = vsel %vm111, %v5896, %v5898
  %v5940 = vsel %vm111, %v5898, %v5900
  %v5941 = vsel %vm111, %v5900, %v5902
  %v5942 = vsel %vm111, %v5902, %v5904
  %v5943 = vsel %vm111, %v5904, %v5906
  %v5944 = vsel %vm111, %v5906, %v5908
  %v5945 = vsel %vm111, %v5908, %v5910
  %v5946 = vsel %vm111, %v5910, %v5912
  %v5947 = vsel %vm111, %v5912, %v5914
  %v5948 = vsel %vm111, %v5914, %v5916
  %v5981 = vmax.f32 %v5781, %v5917
  %v5982 = vmax.f32 %v5782, %v5918
  %v5983 = vmax.f32 %v5783, %v5919
  %v5984 = vmax.f32 %v5784, %v5920
  %v5985 = vmax.f32 %v5785, %v5921
  %v5986 = vmax.f32 %v5786, %v5922
  %v5987 = vmax.f32 %v5787, %v5923
  %v5988 = vmax.f32 %v5788, %v5924
  %v5989 = vmax.f32 %v5789, %v5925
  %v5990 = vmax.f32 %v5790, %v5926
  %v5991 = vmax.f32 %v5791, %v5927
  %v5992 = vmax.f32 %v5792, %v5928
  %v5993 = vmax.f32 %v5793, %v5929
  %v5994 = vmax.f32 %v5794, %v5930
  %v5995 = vmax.f32 %v5795, %v5931
  %v5996 = vmax.f32 %v5796, %v5932
  %v5997 = vmax.f32 %v5797, %v5933
  %v5998 = vmax.f32 %v5798, %v5934
  %v5999 = vmax.f32 %v5799, %v5935
  %v6000 = vmax.f32 %v5800, %v5936
  %v6001 = vmax.f32 %v5801, %v5937
  %v6002 = vmax.f32 %v5802, %v5938
  %v6003 = vmax.f32 %v5803, %v5939
  %v6004 = vmax.f32 %v5804, %v5940
  %v6005 = vmax.f32 %v5805, %v5941
  %v6006 = vmax.f32 %v5806, %v5942
  %v6007 = vmax.f32 %v5807, %v5943
  %v6008 = vmax.f32 %v5808, %v5944
  %v6009 = vmax.f32 %v5809, %v5945
  %v6010 = vmax.f32 %v5810, %v5946
  %v6011 = vmax.f32 %v5811, %v5947
  %v6012 = vmax.f32 %v5812, %v5948
  %v6015 = vmax.f32 %v5813, %v5882
  %v6016 = vmax.f32 %v5814, %v5916
  %6051 = vrot.lane.b32.xlu0 %v5981, 64
  %v6052 = vpop.permute.xlu0 %6051
  %6053 = vrot.lane.b32.xlu0 %v5982, 64
  %v6054 = vpop.permute.xlu0 %6053
  %6055 = vrot.lane.b32.xlu0 %v5983, 64
  %v6056 = vpop.permute.xlu0 %6055
  %6057 = vrot.lane.b32.xlu0 %v5984, 64
  %v6058 = vpop.permute.xlu0 %6057
  %6059 = vrot.lane.b32.xlu0 %v5985, 64
  %v6060 = vpop.permute.xlu0 %6059
  %6061 = vrot.lane.b32.xlu0 %v5986, 64
  %v6062 = vpop.permute.xlu0 %6061
  %6063 = vrot.lane.b32.xlu0 %v5987, 64
  %v6064 = vpop.permute.xlu0 %6063
  %6065 = vrot.lane.b32.xlu0 %v5988, 64
  %v6066 = vpop.permute.xlu0 %6065
  %6067 = vrot.lane.b32.xlu0 %v5989, 64
  %v6068 = vpop.permute.xlu0 %6067
  %6069 = vrot.lane.b32.xlu0 %v5990, 64
  %v6070 = vpop.permute.xlu0 %6069
  %6071 = vrot.lane.b32.xlu0 %v5991, 64
  %v6072 = vpop.permute.xlu0 %6071
  %6073 = vrot.lane.b32.xlu0 %v5992, 64
  %v6074 = vpop.permute.xlu0 %6073
  %6075 = vrot.lane.b32.xlu0 %v5993, 64
  %v6076 = vpop.permute.xlu0 %6075
  %6077 = vrot.lane.b32.xlu0 %v5994, 64
  %v6078 = vpop.permute.xlu0 %6077
  %6079 = vrot.lane.b32.xlu0 %v5995, 64
  %v6080 = vpop.permute.xlu0 %6079
  %6081 = vrot.lane.b32.xlu0 %v5996, 64
  %v6082 = vpop.permute.xlu0 %6081
  %6083 = vrot.lane.b32.xlu0 %v6015, 64
  %v6084 = vpop.permute.xlu0 %6083
  %6085 = vrot.lane.b32.xlu0 %v5997, 64
  %v6086 = vpop.permute.xlu0 %6085
  %6087 = vrot.lane.b32.xlu0 %v5998, 64
  %v6088 = vpop.permute.xlu0 %6087
  %6089 = vrot.lane.b32.xlu0 %v5999, 64
  %v6090 = vpop.permute.xlu0 %6089
  %6091 = vrot.lane.b32.xlu0 %v6000, 64
  %v6092 = vpop.permute.xlu0 %6091
  %6093 = vrot.lane.b32.xlu0 %v6001, 64
  %v6094 = vpop.permute.xlu0 %6093
  %6095 = vrot.lane.b32.xlu0 %v6002, 64
  %v6096 = vpop.permute.xlu0 %6095
  %6097 = vrot.lane.b32.xlu0 %v6003, 64
  %v6098 = vpop.permute.xlu0 %6097
  %6099 = vrot.lane.b32.xlu0 %v6004, 64
  %v6100 = vpop.permute.xlu0 %6099
  %6101 = vrot.lane.b32.xlu0 %v6005, 64
  %v6102 = vpop.permute.xlu0 %6101
  %6103 = vrot.lane.b32.xlu0 %v6006, 64
  %v6104 = vpop.permute.xlu0 %6103
  %6105 = vrot.lane.b32.xlu0 %v6007, 64
  %v6106 = vpop.permute.xlu0 %6105
  %6107 = vrot.lane.b32.xlu0 %v6008, 64
  %v6108 = vpop.permute.xlu0 %6107
  %6109 = vrot.lane.b32.xlu0 %v6009, 64
  %v6110 = vpop.permute.xlu0 %6109
  %6111 = vrot.lane.b32.xlu0 %v6010, 64
  %v6112 = vpop.permute.xlu0 %6111
  %6113 = vrot.lane.b32.xlu0 %v6011, 64
  %v6114 = vpop.permute.xlu0 %6113
  %6115 = vrot.lane.b32.xlu0 %v6012, 64
  %v6116 = vpop.permute.xlu0 %6115
  %6117 = vrot.lane.b32.xlu0 %v6016, 64
  %v6118 = vpop.permute.xlu0 %6117
  %v6119 = vsel %vm335, %v6052, %v6054
  %v6120 = vsel %vm335, %v6054, %v6056
  %v6121 = vsel %vm335, %v6056, %v6058
  %v6122 = vsel %vm335, %v6058, %v6060
  %v6123 = vsel %vm335, %v6060, %v6062
  %v6124 = vsel %vm335, %v6062, %v6064
  %v6125 = vsel %vm335, %v6064, %v6066
  %v6126 = vsel %vm335, %v6066, %v6068
  %v6127 = vsel %vm335, %v6068, %v6070
  %v6128 = vsel %vm335, %v6070, %v6072
  %v6129 = vsel %vm335, %v6072, %v6074
  %v6130 = vsel %vm335, %v6074, %v6076
  %v6131 = vsel %vm335, %v6076, %v6078
  %v6132 = vsel %vm335, %v6078, %v6080
  %v6133 = vsel %vm335, %v6080, %v6082
  %v6134 = vsel %vm335, %v6082, %v6084
  %v6135 = vsel %vm335, %v6086, %v6088
  %v6136 = vsel %vm335, %v6088, %v6090
  %v6137 = vsel %vm335, %v6090, %v6092
  %v6138 = vsel %vm335, %v6092, %v6094
  %v6139 = vsel %vm335, %v6094, %v6096
  %v6140 = vsel %vm335, %v6096, %v6098
  %v6141 = vsel %vm335, %v6098, %v6100
  %v6142 = vsel %vm335, %v6100, %v6102
  %v6143 = vsel %vm335, %v6102, %v6104
  %v6144 = vsel %vm335, %v6104, %v6106
  %v6145 = vsel %vm335, %v6106, %v6108
  %v6146 = vsel %vm335, %v6108, %v6110
  %v6147 = vsel %vm335, %v6110, %v6112
  %v6148 = vsel %vm335, %v6112, %v6114
  %v6149 = vsel %vm335, %v6114, %v6116
  %v6150 = vsel %vm335, %v6116, %v6118
  %v6183 = vmax.f32 %v5981, %v6119
  %v6184 = vmax.f32 %v5982, %v6120
  %v6185 = vmax.f32 %v5983, %v6121
  %v6186 = vmax.f32 %v5984, %v6122
  %v6187 = vmax.f32 %v5985, %v6123
  %v6188 = vmax.f32 %v5986, %v6124
  %v6189 = vmax.f32 %v5987, %v6125
  %v6190 = vmax.f32 %v5988, %v6126
  %v6191 = vmax.f32 %v5989, %v6127
  %v6192 = vmax.f32 %v5990, %v6128
  %v6193 = vmax.f32 %v5991, %v6129
  %v6194 = vmax.f32 %v5992, %v6130
  %v6195 = vmax.f32 %v5993, %v6131
  %v6196 = vmax.f32 %v5994, %v6132
  %v6197 = vmax.f32 %v5995, %v6133
  %v6198 = vmax.f32 %v5996, %v6134
  %v6199 = vmax.f32 %v5997, %v6135
  %v6200 = vmax.f32 %v5998, %v6136
  %v6201 = vmax.f32 %v5999, %v6137
  %v6202 = vmax.f32 %v6000, %v6138
  %v6203 = vmax.f32 %v6001, %v6139
  %v6204 = vmax.f32 %v6002, %v6140
  %v6205 = vmax.f32 %v6003, %v6141
  %v6206 = vmax.f32 %v6004, %v6142
  %v6207 = vmax.f32 %v6005, %v6143
  %v6208 = vmax.f32 %v6006, %v6144
  %v6209 = vmax.f32 %v6007, %v6145
  %v6210 = vmax.f32 %v6008, %v6146
  %v6211 = vmax.f32 %v6009, %v6147
  %v6212 = vmax.f32 %v6010, %v6148
  %v6213 = vmax.f32 %v6011, %v6149
  %v6214 = vmax.f32 %v6012, %v6150
  %6215 = vst [vmem:[#allocation8] sm:$0xff] %v6183
  %6216 = vst [vmem:[#allocation8 + $0x8] sm:$0xff] %v6184
  %6217 = vst [vmem:[#allocation8 + $0x10] sm:$0xff] %v6185
  %6218 = vst [vmem:[#allocation8 + $0x18] sm:$0xff] %v6186
  %6219 = vst [vmem:[#allocation8 + $0x20] sm:$0xff] %v6187
  %6220 = vst [vmem:[#allocation8 + $0x28] sm:$0xff] %v6188
  %6221 = vst [vmem:[#allocation8 + $0x30] sm:$0xff] %v6189
  %6222 = vst [vmem:[#allocation8 + $0x38] sm:$0xff] %v6190
  %6223 = vst [vmem:[#allocation8 + $0x40] sm:$0xff] %v6191
  %6224 = vst [vmem:[#allocation8 + $0x48] sm:$0xff] %v6192
  %6225 = vst [vmem:[#allocation8 + $0x50] sm:$0xff] %v6193
  %6226 = vst [vmem:[#allocation8 + $0x58] sm:$0xff] %v6194
  %6227 = vst [vmem:[#allocation8 + $0x60] sm:$0xff] %v6195
  %6228 = vst [vmem:[#allocation8 + $0x68] sm:$0xff] %v6196
  %6229 = vst [vmem:[#allocation8 + $0x70] sm:$0xff] %v6197
  %6230 = vst [vmem:[#allocation8 + $0x78] sm:$0xff] %v6198
  %6231 = vst [vmem:[#allocation8 + $0x80] sm:$0xff] %v6199
  %6232 = vst [vmem:[#allocation8 + $0x88] sm:$0xff] %v6200
  %6233 = vst [vmem:[#allocation8 + $0x90] sm:$0xff] %v6201
  %6234 = vst [vmem:[#allocation8 + $0x98] sm:$0xff] %v6202
  %6235 = vst [vmem:[#allocation8 + $0xa0] sm:$0xff] %v6203
  %6236 = vst [vmem:[#allocation8 + $0xa8] sm:$0xff] %v6204
  %6237 = vst [vmem:[#allocation8 + $0xb0] sm:$0xff] %v6205
  %6238 = vst [vmem:[#allocation8 + $0xb8] sm:$0xff] %v6206
  %6239 = vst [vmem:[#allocation8 + $0xc0] sm:$0xff] %v6207
  %6240 = vst [vmem:[#allocation8 + $0xc8] sm:$0xff] %v6208
  %6241 = vst [vmem:[#allocation8 + $0xd0] sm:$0xff] %v6209
  %6242 = vst [vmem:[#allocation8 + $0xd8] sm:$0xff] %v6210
  %6243 = vst [vmem:[#allocation8 + $0xe0] sm:$0xff] %v6211
  %6244 = vst [vmem:[#allocation8 + $0xe8] sm:$0xff] %v6212
  %6245 = vst [vmem:[#allocation8 + $0xf0] sm:$0xff] %v6213
  %6246 = vst [vmem:[#allocation8 + $0xf8] sm:$0xff] %v6214
  %v6247 = vld [vmem:[#allocation8] sm:$0xff]
  %v6248 = vld [vmem:[#allocation8 + $0x80] sm:$0xff]
  %vm6249 = vcmask 7168
  %6250 = vst.msk [vmem:[#allocation9] sm:$0xff] %vm6249, %v6247
  %6251 = vst.msk [vmem:[#allocation9 + $0x8] sm:$0xff] %vm6249, %v6248
  %v6252 = vld [vmem:[#allocation8 + $0x40] sm:$0xff]
  %v6253 = vld [vmem:[#allocation8 + $0xc0] sm:$0xff]
  %6256 = vrot.lane.b32.xlu0 %v6252, 1
  %v6257 = vpop.permute.xlu0 %6256
  %6258 = vrot.lane.b32.xlu0 %v6253, 1
  %v6259 = vpop.permute.xlu0 %6258
  %vm6262 = vcmask 15368
  %6263 = vst.msk [vmem:[#allocation9] sm:$0xff] %vm6262, %v6257
  %6264 = vst.msk [vmem:[#allocation9 + $0x8] sm:$0xff] %vm6262, %v6259
  %v6265 = vld [vmem:[#allocation8] sm:$0xff]
  %v6266 = vld [vmem:[#allocation8 + $0x80] sm:$0xff]
  %6269 = vrot.lane.b32.xlu0 %v6265, 124
  %v6270 = vpop.permute.xlu0 %6269
  %6271 = vrot.lane.b32.xlu0 %v6266, 124
  %v6272 = vpop.permute.xlu0 %6271
  %6275 = vst.msk [vmem:[#allocation9 + $0x10] sm:$0xff] %vm6249, %v6270
  %6276 = vst.msk [vmem:[#allocation9 + $0x18] sm:$0xff] %vm6249, %v6272
  %v6277 = vld [vmem:[#allocation8 + $0x40] sm:$0xff]
  %v6278 = vld [vmem:[#allocation8 + $0xc0] sm:$0xff]
  %6281 = vrot.lane.b32.xlu0 %v6277, 125
  %v6282 = vpop.permute.xlu0 %6281
  %6283 = vrot.lane.b32.xlu0 %v6278, 125
  %v6284 = vpop.permute.xlu0 %6283
  %6287 = vst.msk [vmem:[#allocation9 + $0x10] sm:$0xff] %vm6262, %v6282
  %6288 = vst.msk [vmem:[#allocation9 + $0x18] sm:$0xff] %vm6262, %v6284
  %v6289 = vld [vmem:[#allocation8] sm:$0xff]
  %v6290 = vld [vmem:[#allocation8 + $0x80] sm:$0xff]
  %6293 = vrot.lane.b32.xlu0 %v6289, 120
  %v6294 = vpop.permute.xlu0 %6293
  %6295 = vrot.lane.b32.xlu0 %v6290, 120
  %v6296 = vpop.permute.xlu0 %6295
  %6299 = vst.msk [vmem:[#allocation9 + $0x20] sm:$0xff] %vm6249, %v6294
  %6300 = vst.msk [vmem:[#allocation9 + $0x28] sm:$0xff] %vm6249, %v6296
  %v6301 = vld [vmem:[#allocation8 + $0x40] sm:$0xff]
  %v6302 = vld [vmem:[#allocation8 + $0xc0] sm:$0xff]
  %6305 = vrot.lane.b32.xlu0 %v6301, 121
  %v6306 = vpop.permute.xlu0 %6305
  %6307 = vrot.lane.b32.xlu0 %v6302, 121
  %v6308 = vpop.permute.xlu0 %6307
  %6311 = vst.msk [vmem:[#allocation9 + $0x20] sm:$0xff] %vm6262, %v6306
  %6312 = vst.msk [vmem:[#allocation9 + $0x28] sm:$0xff] %vm6262, %v6308
  %v6313 = vld [vmem:[#allocation8] sm:$0xff]
  %v6314 = vld [vmem:[#allocation8 + $0x80] sm:$0xff]
  %6317 = vrot.lane.b32.xlu0 %v6313, 116
  %v6318 = vpop.permute.xlu0 %6317
  %6319 = vrot.lane.b32.xlu0 %v6314, 116
  %v6320 = vpop.permute.xlu0 %6319
  %6323 = vst.msk [vmem:[#allocation9 + $0x30] sm:$0xff] %vm6249, %v6318
  %6324 = vst.msk [vmem:[#allocation9 + $0x38] sm:$0xff] %vm6249, %v6320
  %v6325 = vld [vmem:[#allocation8 + $0x40] sm:$0xff]
  %v6326 = vld [vmem:[#allocation8 + $0xc0] sm:$0xff]
  %6329 = vrot.lane.b32.xlu0 %v6325, 117
  %v6330 = vpop.permute.xlu0 %6329
  %6331 = vrot.lane.b32.xlu0 %v6326, 117
  %v6332 = vpop.permute.xlu0 %6331
  %6335 = vst.msk [vmem:[#allocation9 + $0x30] sm:$0xff] %vm6262, %v6330
  %6336 = vst.msk [vmem:[#allocation9 + $0x38] sm:$0xff] %vm6262, %v6332
  %v6337 = vld [vmem:[#allocation8] sm:$0xff]
  %v6338 = vld [vmem:[#allocation8 + $0x80] sm:$0xff]
  %6341 = vrot.lane.b32.xlu0 %v6337, 112
  %v6342 = vpop.permute.xlu0 %6341
  %6343 = vrot.lane.b32.xlu0 %v6338, 112
  %v6344 = vpop.permute.xlu0 %6343
  %6347 = vst.msk [vmem:[#allocation9 + $0x40] sm:$0xff] %vm6249, %v6342
  %6348 = vst.msk [vmem:[#allocation9 + $0x48] sm:$0xff] %vm6249, %v6344
  %v6349 = vld [vmem:[#allocation8 + $0x40] sm:$0xff]
  %v6350 = vld [vmem:[#allocation8 + $0xc0] sm:$0xff]
  %6353 = vrot.lane.b32.xlu0 %v6349, 113
  %v6354 = vpop.permute.xlu0 %6353
  %6355 = vrot.lane.b32.xlu0 %v6350, 113
  %v6356 = vpop.permute.xlu0 %6355
  %6359 = vst.msk [vmem:[#allocation9 + $0x40] sm:$0xff] %vm6262, %v6354
  %6360 = vst.msk [vmem:[#allocation9 + $0x48] sm:$0xff] %vm6262, %v6356
  %v6361 = vld [vmem:[#allocation8 + $0x8] sm:$0xff]
  %v6362 = vld [vmem:[#allocation8 + $0x88] sm:$0xff]
  %6363 = vst.msk [vmem:[#allocation9 + $0x50] sm:$0xff] %vm6249, %v6361
  %6364 = vst.msk [vmem:[#allocation9 + $0x58] sm:$0xff] %vm6249, %v6362
  %v6365 = vld [vmem:[#allocation8 + $0x48] sm:$0xff]
  %v6366 = vld [vmem:[#allocation8 + $0xc8] sm:$0xff]
  %6369 = vrot.lane.b32.xlu0 %v6365, 1
  %v6370 = vpop.permute.xlu0 %6369
  %6371 = vrot.lane.b32.xlu0 %v6366, 1
  %v6372 = vpop.permute.xlu0 %6371
  %6375 = vst.msk [vmem:[#allocation9 + $0x50] sm:$0xff] %vm6262, %v6370
  %6376 = vst.msk [vmem:[#allocation9 + $0x58] sm:$0xff] %vm6262, %v6372
  %v6377 = vld [vmem:[#allocation8 + $0x8] sm:$0xff]
  %v6378 = vld [vmem:[#allocation8 + $0x88] sm:$0xff]
  %6381 = vrot.lane.b32.xlu0 %v6377, 124
  %v6382 = vpop.permute.xlu0 %6381
  %6383 = vrot.lane.b32.xlu0 %v6378, 124
  %v6384 = vpop.permute.xlu0 %6383
  %6387 = vst.msk [vmem:[#allocation9 + $0x60] sm:$0xff] %vm6249, %v6382
  %6388 = vst.msk [vmem:[#allocation9 + $0x68] sm:$0xff] %vm6249, %v6384
  %v6389 = vld [vmem:[#allocation8 + $0x48] sm:$0xff]
  %v6390 = vld [vmem:[#allocation8 + $0xc8] sm:$0xff]
  %6393 = vrot.lane.b32.xlu0 %v6389, 125
  %v6394 = vpop.permute.xlu0 %6393
  %6395 = vrot.lane.b32.xlu0 %v6390, 125
  %v6396 = vpop.permute.xlu0 %6395
  %6399 = vst.msk [vmem:[#allocation9 + $0x60] sm:$0xff] %vm6262, %v6394
  %6400 = vst.msk [vmem:[#allocation9 + $0x68] sm:$0xff] %vm6262, %v6396
  %v6401 = vld [vmem:[#allocation8 + $0x8] sm:$0xff]
  %v6402 = vld [vmem:[#allocation8 + $0x88] sm:$0xff]
  %6405 = vrot.lane.b32.xlu0 %v6401, 120
  %v6406 = vpop.permute.xlu0 %6405
  %6407 = vrot.lane.b32.xlu0 %v6402, 120
  %v6408 = vpop.permute.xlu0 %6407
  %6411 = vst.msk [vmem:[#allocation9 + $0x70] sm:$0xff] %vm6249, %v6406
  %6412 = vst.msk [vmem:[#allocation9 + $0x78] sm:$0xff] %vm6249, %v6408
  %v6413 = vld [vmem:[#allocation8 + $0x48] sm:$0xff]
  %v6414 = vld [vmem:[#allocation8 + $0xc8] sm:$0xff]
  %6417 = vrot.lane.b32.xlu0 %v6413, 121
  %v6418 = vpop.permute.xlu0 %6417
  %6419 = vrot.lane.b32.xlu0 %v6414, 121
  %v6420 = vpop.permute.xlu0 %6419
  %6423 = vst.msk [vmem:[#allocation9 + $0x70] sm:$0xff] %vm6262, %v6418
  %6424 = vst.msk [vmem:[#allocation9 + $0x78] sm:$0xff] %vm6262, %v6420
  %v6425 = vld [vmem:[#allocation8 + $0x8] sm:$0xff]
  %v6426 = vld [vmem:[#allocation8 + $0x88] sm:$0xff]
  %6429 = vrot.lane.b32.xlu0 %v6425, 116
  %v6430 = vpop.permute.xlu0 %6429
  %6431 = vrot.lane.b32.xlu0 %v6426, 116
  %v6432 = vpop.permute.xlu0 %6431
  %6435 = vst.msk [vmem:[#allocation9 + $0x80] sm:$0xff] %vm6249, %v6430
  %6436 = vst.msk [vmem:[#allocation9 + $0x88] sm:$0xff] %vm6249, %v6432
  %v6437 = vld [vmem:[#allocation8 + $0x48] sm:$0xff]
  %v6438 = vld [vmem:[#allocation8 + $0xc8] sm:$0xff]
  %6441 = vrot.lane.b32.xlu0 %v6437, 117
  %v6442 = vpop.permute.xlu0 %6441
  %6443 = vrot.lane.b32.xlu0 %v6438, 117
  %v6444 = vpop.permute.xlu0 %6443
  %6447 = vst.msk [vmem:[#allocation9 + $0x80] sm:$0xff] %vm6262, %v6442
  %6448 = vst.msk [vmem:[#allocation9 + $0x88] sm:$0xff] %vm6262, %v6444
  %v6449 = vld [vmem:[#allocation8 + $0x8] sm:$0xff]
  %v6450 = vld [vmem:[#allocation8 + $0x88] sm:$0xff]
  %6453 = vrot.lane.b32.xlu0 %v6449, 112
  %v6454 = vpop.permute.xlu0 %6453
  %6455 = vrot.lane.b32.xlu0 %v6450, 112
  %v6456 = vpop.permute.xlu0 %6455
  %6459 = vst.msk [vmem:[#allocation9 + $0x90] sm:$0xff] %vm6249, %v6454
  %6460 = vst.msk [vmem:[#allocation9 + $0x98] sm:$0xff] %vm6249, %v6456
  %v6461 = vld [vmem:[#allocation8 + $0x48] sm:$0xff]
  %v6462 = vld [vmem:[#allocation8 + $0xc8] sm:$0xff]
  %6465 = vrot.lane.b32.xlu0 %v6461, 113
  %v6466 = vpop.permute.xlu0 %6465
  %6467 = vrot.lane.b32.xlu0 %v6462, 113
  %v6468 = vpop.permute.xlu0 %6467
  %6471 = vst.msk [vmem:[#allocation9 + $0x90] sm:$0xff] %vm6262, %v6466
  %6472 = vst.msk [vmem:[#allocation9 + $0x98] sm:$0xff] %vm6262, %v6468
  %v6473 = vld [vmem:[#allocation8 + $0x10] sm:$0xff]
  %v6474 = vld [vmem:[#allocation8 + $0x90] sm:$0xff]
  %6475 = vst.msk [vmem:[#allocation9 + $0xa0] sm:$0xff] %vm6249, %v6473
  %6476 = vst.msk [vmem:[#allocation9 + $0xa8] sm:$0xff] %vm6249, %v6474
  %v6477 = vld [vmem:[#allocation8 + $0x50] sm:$0xff]
  %v6478 = vld [vmem:[#allocation8 + $0xd0] sm:$0xff]
  %6481 = vrot.lane.b32.xlu0 %v6477, 1
  %v6482 = vpop.permute.xlu0 %6481
  %6483 = vrot.lane.b32.xlu0 %v6478, 1
  %v6484 = vpop.permute.xlu0 %6483
  %6487 = vst.msk [vmem:[#allocation9 + $0xa0] sm:$0xff] %vm6262, %v6482
  %6488 = vst.msk [vmem:[#allocation9 + $0xa8] sm:$0xff] %vm6262, %v6484
  %v6489 = vld [vmem:[#allocation8 + $0x10] sm:$0xff]
  %v6490 = vld [vmem:[#allocation8 + $0x90] sm:$0xff]
  %6493 = vrot.lane.b32.xlu0 %v6489, 124
  %v6494 = vpop.permute.xlu0 %6493
  %6495 = vrot.lane.b32.xlu0 %v6490, 124
  %v6496 = vpop.permute.xlu0 %6495
  %6499 = vst.msk [vmem:[#allocation9 + $0xb0] sm:$0xff] %vm6249, %v6494
  %6500 = vst.msk [vmem:[#allocation9 + $0xb8] sm:$0xff] %vm6249, %v6496
  %v6501 = vld [vmem:[#allocation8 + $0x50] sm:$0xff]
  %v6502 = vld [vmem:[#allocation8 + $0xd0] sm:$0xff]
  %6505 = vrot.lane.b32.xlu0 %v6501, 125
  %v6506 = vpop.permute.xlu0 %6505
  %6507 = vrot.lane.b32.xlu0 %v6502, 125
  %v6508 = vpop.permute.xlu0 %6507
  %6511 = vst.msk [vmem:[#allocation9 + $0xb0] sm:$0xff] %vm6262, %v6506
  %6512 = vst.msk [vmem:[#allocation9 + $0xb8] sm:$0xff] %vm6262, %v6508
  %v6513 = vld [vmem:[#allocation8 + $0x10] sm:$0xff]
  %v6514 = vld [vmem:[#allocation8 + $0x90] sm:$0xff]
  %6517 = vrot.lane.b32.xlu0 %v6513, 120
  %v6518 = vpop.permute.xlu0 %6517
  %6519 = vrot.lane.b32.xlu0 %v6514, 120
  %v6520 = vpop.permute.xlu0 %6519
  %6523 = vst.msk [vmem:[#allocation9 + $0xc0] sm:$0xff] %vm6249, %v6518
  %6524 = vst.msk [vmem:[#allocation9 + $0xc8] sm:$0xff] %vm6249, %v6520
  %v6525 = vld [vmem:[#allocation8 + $0x50] sm:$0xff]
  %v6526 = vld [vmem:[#allocation8 + $0xd0] sm:$0xff]
  %6529 = vrot.lane.b32.xlu0 %v6525, 121
  %v6530 = vpop.permute.xlu0 %6529
  %6531 = vrot.lane.b32.xlu0 %v6526, 121
  %v6532 = vpop.permute.xlu0 %6531
  %6535 = vst.msk [vmem:[#allocation9 + $0xc0] sm:$0xff] %vm6262, %v6530
  %6536 = vst.msk [vmem:[#allocation9 + $0xc8] sm:$0xff] %vm6262, %v6532
  %v6537 = vld [vmem:[#allocation8 + $0x10] sm:$0xff]
  %v6538 = vld [vmem:[#allocation8 + $0x90] sm:$0xff]
  %6541 = vrot.lane.b32.xlu0 %v6537, 116
  %v6542 = vpop.permute.xlu0 %6541
  %6543 = vrot.lane.b32.xlu0 %v6538, 116
  %v6544 = vpop.permute.xlu0 %6543
  %6547 = vst.msk [vmem:[#allocation9 + $0xd0] sm:$0xff] %vm6249, %v6542
  %6548 = vst.msk [vmem:[#allocation9 + $0xd8] sm:$0xff] %vm6249, %v6544
  %v6549 = vld [vmem:[#allocation8 + $0x50] sm:$0xff]
  %v6550 = vld [vmem:[#allocation8 + $0xd0] sm:$0xff]
  %6553 = vrot.lane.b32.xlu0 %v6549, 117
  %v6554 = vpop.permute.xlu0 %6553
  %6555 = vrot.lane.b32.xlu0 %v6550, 117
  %v6556 = vpop.permute.xlu0 %6555
  %6559 = vst.msk [vmem:[#allocation9 + $0xd0] sm:$0xff] %vm6262, %v6554
  %6560 = vst.msk [vmem:[#allocation9 + $0xd8] sm:$0xff] %vm6262, %v6556
  %v6561 = vld [vmem:[#allocation8 + $0x10] sm:$0xff]
  %v6562 = vld [vmem:[#allocation8 + $0x90] sm:$0xff]
  %6565 = vrot.lane.b32.xlu0 %v6561, 112
  %v6566 = vpop.permute.xlu0 %6565
  %6567 = vrot.lane.b32.xlu0 %v6562, 112
  %v6568 = vpop.permute.xlu0 %6567
  %6571 = vst.msk [vmem:[#allocation9 + $0xe0] sm:$0xff] %vm6249, %v6566
  %6572 = vst.msk [vmem:[#allocation9 + $0xe8] sm:$0xff] %vm6249, %v6568
  %v6573 = vld [vmem:[#allocation8 + $0x50] sm:$0xff]
  %v6574 = vld [vmem:[#allocation8 + $0xd0] sm:$0xff]
  %6577 = vrot.lane.b32.xlu0 %v6573, 113
  %v6578 = vpop.permute.xlu0 %6577
  %6579 = vrot.lane.b32.xlu0 %v6574, 113
  %v6580 = vpop.permute.xlu0 %6579
  %6583 = vst.msk [vmem:[#allocation9 + $0xe0] sm:$0xff] %vm6262, %v6578
  %6584 = vst.msk [vmem:[#allocation9 + $0xe8] sm:$0xff] %vm6262, %v6580
  %v6585 = vld [vmem:[#allocation8 + $0x18] sm:$0xff]
  %v6586 = vld [vmem:[#allocation8 + $0x98] sm:$0xff]
  %6587 = vst.msk [vmem:[#allocation9 + $0xf0] sm:$0xff] %vm6249, %v6585
  %6588 = vst.msk [vmem:[#allocation9 + $0xf8] sm:$0xff] %vm6249, %v6586
  %v6589 = vld [vmem:[#allocation8 + $0x58] sm:$0xff]
  %v6590 = vld [vmem:[#allocation8 + $0xd8] sm:$0xff]
  %6593 = vrot.lane.b32.xlu0 %v6589, 1
  %v6594 = vpop.permute.xlu0 %6593
  %6595 = vrot.lane.b32.xlu0 %v6590, 1
  %v6596 = vpop.permute.xlu0 %6595
  %6599 = vst.msk [vmem:[#allocation9 + $0xf0] sm:$0xff] %vm6262, %v6594
  %6600 = vst.msk [vmem:[#allocation9 + $0xf8] sm:$0xff] %vm6262, %v6596
  %v6601 = vld [vmem:[#allocation8 + $0x18] sm:$0xff]
  %v6602 = vld [vmem:[#allocation8 + $0x98] sm:$0xff]
  %6605 = vrot.lane.b32.xlu0 %v6601, 124
  %v6606 = vpop.permute.xlu0 %6605
  %6607 = vrot.lane.b32.xlu0 %v6602, 124
  %v6608 = vpop.permute.xlu0 %6607
  %6611 = vst.msk [vmem:[#allocation9 + $0x100] sm:$0xff] %vm6249, %v6606
  %6612 = vst.msk [vmem:[#allocation9 + $0x108] sm:$0xff] %vm6249, %v6608
  %v6613 = vld [vmem:[#allocation8 + $0x58] sm:$0xff]
  %v6614 = vld [vmem:[#allocation8 + $0xd8] sm:$0xff]
  %6617 = vrot.lane.b32.xlu0 %v6613, 125
  %v6618 = vpop.permute.xlu0 %6617
  %6619 = vrot.lane.b32.xlu0 %v6614, 125
  %v6620 = vpop.permute.xlu0 %6619
  %6623 = vst.msk [vmem:[#allocation9 + $0x100] sm:$0xff] %vm6262, %v6618
  %6624 = vst.msk [vmem:[#allocation9 + $0x108] sm:$0xff] %vm6262, %v6620
  %v6625 = vld [vmem:[#allocation8 + $0x18] sm:$0xff]
  %v6626 = vld [vmem:[#allocation8 + $0x98] sm:$0xff]
  %6629 = vrot.lane.b32.xlu0 %v6625, 120
  %v6630 = vpop.permute.xlu0 %6629
  %6631 = vrot.lane.b32.xlu0 %v6626, 120
  %v6632 = vpop.permute.xlu0 %6631
  %6635 = vst.msk [vmem:[#allocation9 + $0x110] sm:$0xff] %vm6249, %v6630
  %6636 = vst.msk [vmem:[#allocation9 + $0x118] sm:$0xff] %vm6249, %v6632
  %v6637 = vld [vmem:[#allocation8 + $0x58] sm:$0xff]
  %v6638 = vld [vmem:[#allocation8 + $0xd8] sm:$0xff]
  %6641 = vrot.lane.b32.xlu0 %v6637, 121
  %v6642 = vpop.permute.xlu0 %6641
  %6643 = vrot.lane.b32.xlu0 %v6638, 121
  %v6644 = vpop.permute.xlu0 %6643
  %6647 = vst.msk [vmem:[#allocation9 + $0x110] sm:$0xff] %vm6262, %v6642
  %6648 = vst.msk [vmem:[#allocation9 + $0x118] sm:$0xff] %vm6262, %v6644
  %v6649 = vld [vmem:[#allocation8 + $0x18] sm:$0xff]
  %v6650 = vld [vmem:[#allocation8 + $0x98] sm:$0xff]
  %6653 = vrot.lane.b32.xlu0 %v6649, 116
  %v6654 = vpop.permute.xlu0 %6653
  %6655 = vrot.lane.b32.xlu0 %v6650, 116
  %v6656 = vpop.permute.xlu0 %6655
  %6659 = vst.msk [vmem:[#allocation9 + $0x120] sm:$0xff] %vm6249, %v6654
  %6660 = vst.msk [vmem:[#allocation9 + $0x128] sm:$0xff] %vm6249, %v6656
  %v6661 = vld [vmem:[#allocation8 + $0x58] sm:$0xff]
  %v6662 = vld [vmem:[#allocation8 + $0xd8] sm:$0xff]
  %6665 = vrot.lane.b32.xlu0 %v6661, 117
  %v6666 = vpop.permute.xlu0 %6665
  %6667 = vrot.lane.b32.xlu0 %v6662, 117
  %v6668 = vpop.permute.xlu0 %6667
  %6671 = vst.msk [vmem:[#allocation9 + $0x120] sm:$0xff] %vm6262, %v6666
  %6672 = vst.msk [vmem:[#allocation9 + $0x128] sm:$0xff] %vm6262, %v6668
  %v6673 = vld [vmem:[#allocation8 + $0x18] sm:$0xff]
  %v6674 = vld [vmem:[#allocation8 + $0x98] sm:$0xff]
  %6677 = vrot.lane.b32.xlu0 %v6673, 112
  %v6678 = vpop.permute.xlu0 %6677
  %6679 = vrot.lane.b32.xlu0 %v6674, 112
  %v6680 = vpop.permute.xlu0 %6679
  %6683 = vst.msk [vmem:[#allocation9 + $0x130] sm:$0xff] %vm6249, %v6678
  %6684 = vst.msk [vmem:[#allocation9 + $0x138] sm:$0xff] %vm6249, %v6680
  %v6685 = vld [vmem:[#allocation8 + $0x58] sm:$0xff]
  %v6686 = vld [vmem:[#allocation8 + $0xd8] sm:$0xff]
  %6689 = vrot.lane.b32.xlu0 %v6685, 113
  %v6690 = vpop.permute.xlu0 %6689
  %6691 = vrot.lane.b32.xlu0 %v6686, 113
  %v6692 = vpop.permute.xlu0 %6691
  %6695 = vst.msk [vmem:[#allocation9 + $0x130] sm:$0xff] %vm6262, %v6690
  %6696 = vst.msk [vmem:[#allocation9 + $0x138] sm:$0xff] %vm6262, %v6692
  %v6697 = vld [vmem:[#allocation8 + $0x20] sm:$0xff]
  %v6698 = vld [vmem:[#allocation8 + $0xa0] sm:$0xff]
  %6699 = vst.msk [vmem:[#allocation9 + $0x140] sm:$0xff] %vm6249, %v6697
  %6700 = vst.msk [vmem:[#allocation9 + $0x148] sm:$0xff] %vm6249, %v6698
  %v6701 = vld [vmem:[#allocation8 + $0x60] sm:$0xff]
  %v6702 = vld [vmem:[#allocation8 + $0xe0] sm:$0xff]
  %6705 = vrot.lane.b32.xlu0 %v6701, 1
  %v6706 = vpop.permute.xlu0 %6705
  %6707 = vrot.lane.b32.xlu0 %v6702, 1
  %v6708 = vpop.permute.xlu0 %6707
  %6711 = vst.msk [vmem:[#allocation9 + $0x140] sm:$0xff] %vm6262, %v6706
  %6712 = vst.msk [vmem:[#allocation9 + $0x148] sm:$0xff] %vm6262, %v6708
  %v6713 = vld [vmem:[#allocation8 + $0x20] sm:$0xff]
  %v6714 = vld [vmem:[#allocation8 + $0xa0] sm:$0xff]
  %6717 = vrot.lane.b32.xlu0 %v6713, 124
  %v6718 = vpop.permute.xlu0 %6717
  %6719 = vrot.lane.b32.xlu0 %v6714, 124
  %v6720 = vpop.permute.xlu0 %6719
  %6723 = vst.msk [vmem:[#allocation9 + $0x150] sm:$0xff] %vm6249, %v6718
  %6724 = vst.msk [vmem:[#allocation9 + $0x158] sm:$0xff] %vm6249, %v6720
  %v6725 = vld [vmem:[#allocation8 + $0x60] sm:$0xff]
  %v6726 = vld [vmem:[#allocation8 + $0xe0] sm:$0xff]
  %6729 = vrot.lane.b32.xlu0 %v6725, 125
  %v6730 = vpop.permute.xlu0 %6729
  %6731 = vrot.lane.b32.xlu0 %v6726, 125
  %v6732 = vpop.permute.xlu0 %6731
  %6735 = vst.msk [vmem:[#allocation9 + $0x150] sm:$0xff] %vm6262, %v6730
  %6736 = vst.msk [vmem:[#allocation9 + $0x158] sm:$0xff] %vm6262, %v6732
  %v6737 = vld [vmem:[#allocation8 + $0x20] sm:$0xff]
  %v6738 = vld [vmem:[#allocation8 + $0xa0] sm:$0xff]
  %6741 = vrot.lane.b32.xlu0 %v6737, 120
  %v6742 = vpop.permute.xlu0 %6741
  %6743 = vrot.lane.b32.xlu0 %v6738, 120
  %v6744 = vpop.permute.xlu0 %6743
  %6747 = vst.msk [vmem:[#allocation9 + $0x160] sm:$0xff] %vm6249, %v6742
  %6748 = vst.msk [vmem:[#allocation9 + $0x168] sm:$0xff] %vm6249, %v6744
  %v6749 = vld [vmem:[#allocation8 + $0x60] sm:$0xff]
  %v6750 = vld [vmem:[#allocation8 + $0xe0] sm:$0xff]
  %6753 = vrot.lane.b32.xlu0 %v6749, 121
  %v6754 = vpop.permute.xlu0 %6753
  %6755 = vrot.lane.b32.xlu0 %v6750, 121
  %v6756 = vpop.permute.xlu0 %6755
  %6759 = vst.msk [vmem:[#allocation9 + $0x160] sm:$0xff] %vm6262, %v6754
  %6760 = vst.msk [vmem:[#allocation9 + $0x168] sm:$0xff] %vm6262, %v6756
  %v6761 = vld [vmem:[#allocation8 + $0x20] sm:$0xff]
  %v6762 = vld [vmem:[#allocation8 + $0xa0] sm:$0xff]
  %6765 = vrot.lane.b32.xlu0 %v6761, 116
  %v6766 = vpop.permute.xlu0 %6765
  %6767 = vrot.lane.b32.xlu0 %v6762, 116
  %v6768 = vpop.permute.xlu0 %6767
  %6771 = vst.msk [vmem:[#allocation9 + $0x170] sm:$0xff] %vm6249, %v6766
  %6772 = vst.msk [vmem:[#allocation9 + $0x178] sm:$0xff] %vm6249, %v6768
  %v6773 = vld [vmem:[#allocation8 + $0x60] sm:$0xff]
  %v6774 = vld [vmem:[#allocation8 + $0xe0] sm:$0xff]
  %6777 = vrot.lane.b32.xlu0 %v6773, 117
  %v6778 = vpop.permute.xlu0 %6777
  %6779 = vrot.lane.b32.xlu0 %v6774, 117
  %v6780 = vpop.permute.xlu0 %6779
  %6783 = vst.msk [vmem:[#allocation9 + $0x170] sm:$0xff] %vm6262, %v6778
  %6784 = vst.msk [vmem:[#allocation9 + $0x178] sm:$0xff] %vm6262, %v6780
  %v6785 = vld [vmem:[#allocation8 + $0x20] sm:$0xff]
  %v6786 = vld [vmem:[#allocation8 + $0xa0] sm:$0xff]
  %6789 = vrot.lane.b32.xlu0 %v6785, 112
  %v6790 = vpop.permute.xlu0 %6789
  %6791 = vrot.lane.b32.xlu0 %v6786, 112
  %v6792 = vpop.permute.xlu0 %6791
  %6795 = vst.msk [vmem:[#allocation9 + $0x180] sm:$0xff] %vm6249, %v6790
  %6796 = vst.msk [vmem:[#allocation9 + $0x188] sm:$0xff] %vm6249, %v6792
  %v6797 = vld [vmem:[#allocation8 + $0x60] sm:$0xff]
  %v6798 = vld [vmem:[#allocation8 + $0xe0] sm:$0xff]
  %6801 = vrot.lane.b32.xlu0 %v6797, 113
  %v6802 = vpop.permute.xlu0 %6801
  %6803 = vrot.lane.b32.xlu0 %v6798, 113
  %v6804 = vpop.permute.xlu0 %6803
  %6807 = vst.msk [vmem:[#allocation9 + $0x180] sm:$0xff] %vm6262, %v6802
  %6808 = vst.msk [vmem:[#allocation9 + $0x188] sm:$0xff] %vm6262, %v6804
  %v6809 = vld [vmem:[%s5] sm:$0xff]
  %v6810 = vld [vmem:[%s5 + $0x8] sm:$0xff]
  %v6811 = vld [vmem:[%s5 + $0x10] sm:$0xff]
  %v6812 = vld [vmem:[%s5 + $0x18] sm:$0xff]
  %v6813 = vld [vmem:[%s5 + $0x20] sm:$0xff]
  %v6814 = vld [vmem:[%s5 + $0x28] sm:$0xff]
  %v6815 = vld [vmem:[%s5 + $0x30] sm:$0xff]
  %v6816 = vld [vmem:[%s5 + $0x38] sm:$0xff]
  %v6817 = vld [vmem:[%s5 + $0x40] sm:$0xff]
  %v6818 = vld [vmem:[%s5 + $0x48] sm:$0xff]
  %v6819 = vld [vmem:[%s5 + $0x50] sm:$0xff]
  %v6820 = vld [vmem:[%s5 + $0x58] sm:$0xff]
  %v6821 = vld [vmem:[%s5 + $0x60] sm:$0xff]
  %v6822 = vld [vmem:[%s5 + $0x68] sm:$0xff]
  %v6823 = vld [vmem:[%s5 + $0x70] sm:$0xff]
  %v6824 = vld [vmem:[%s5 + $0x78] sm:$0xff]
  %v6825 = vld [vmem:[%s5 + $0x80] sm:$0xff]
  %v6826 = vld [vmem:[%s5 + $0x88] sm:$0xff]
  %v6827 = vld [vmem:[%s5 + $0x90] sm:$0xff]
  %v6828 = vld [vmem:[%s5 + $0x98] sm:$0xff]
  %v6829 = vld [vmem:[%s5 + $0xa0] sm:$0xff]
  %v6830 = vld [vmem:[%s5 + $0xa8] sm:$0xff]
  %v6831 = vld [vmem:[%s5 + $0xb0] sm:$0xff]
  %v6832 = vld [vmem:[%s5 + $0xb8] sm:$0xff]
  %v6833 = vld [vmem:[%s5 + $0xc0] sm:$0xff]
  %v6834 = vld [vmem:[%s5 + $0xc8] sm:$0xff]
  %v6835 = vld [vmem:[%s5 + $0xd0] sm:$0xff]
  %v6836 = vld [vmem:[%s5 + $0xd8] sm:$0xff]
  %v6837 = vld [vmem:[%s5 + $0xe0] sm:$0xff]
  %v6838 = vld [vmem:[%s5 + $0xe8] sm:$0xff]
  %v6839 = vld [vmem:[%s5 + $0xf0] sm:$0xff]
  %v6840 = vld [vmem:[%s5 + $0xf8] sm:$0xff]
  %v6841 = vld [vmem:[%s5 + $0x100] sm:$0xff]
  %v6842 = vld [vmem:[%s5 + $0x108] sm:$0xff]
  %v6843 = vld [vmem:[%s5 + $0x110] sm:$0xff]
  %v6844 = vld [vmem:[%s5 + $0x118] sm:$0xff]
  %v6845 = vld [vmem:[%s5 + $0x120] sm:$0xff]
  %v6846 = vld [vmem:[%s5 + $0x128] sm:$0xff]
  %v6847 = vld [vmem:[%s5 + $0x130] sm:$0xff]
  %v6848 = vld [vmem:[%s5 + $0x138] sm:$0xff]
  %v6849 = vld [vmem:[%s5 + $0x140] sm:$0xff]
  %v6850 = vld [vmem:[%s5 + $0x148] sm:$0xff]
  %v6851 = vld [vmem:[%s5 + $0x150] sm:$0xff]
  %v6852 = vld [vmem:[%s5 + $0x158] sm:$0xff]
  %v6853 = vld [vmem:[%s5 + $0x160] sm:$0xff]
  %v6854 = vld [vmem:[%s5 + $0x168] sm:$0xff]
  %v6855 = vld [vmem:[%s5 + $0x170] sm:$0xff]
  %v6856 = vld [vmem:[%s5 + $0x178] sm:$0xff]
  %v6857 = vld [vmem:[%s5 + $0x180] sm:$0xff]
  %v6858 = vld [vmem:[%s5 + $0x188] sm:$0xff]
  %v6859 = vld [vmem:[%s5 + $0x190] sm:$0xff]
  %v6860 = vld [vmem:[%s5 + $0x198] sm:$0xff]
  %v6861 = vld [vmem:[%s5 + $0x1a0] sm:$0xff]
  %v6862 = vld [vmem:[%s5 + $0x1a8] sm:$0xff]
  %v6863 = vld [vmem:[%s5 + $0x1b0] sm:$0xff]
  %v6864 = vld [vmem:[%s5 + $0x1b8] sm:$0xff]
  %v6865 = vld [vmem:[%s5 + $0x1c0] sm:$0xff]
  %v6866 = vld [vmem:[%s5 + $0x1c8] sm:$0xff]
  %v6867 = vld [vmem:[%s5 + $0x1d0] sm:$0xff]
  %v6868 = vld [vmem:[%s5 + $0x1d8] sm:$0xff]
  %v6869 = vld [vmem:[#allocation9] sm:$0xff]
  %v6870 = vld [vmem:[#allocation9 + $0x8] sm:$0xff]
  %v6871 = vld [vmem:[#allocation9 + $0x10] sm:$0xff]
  %v6872 = vld [vmem:[#allocation9 + $0x18] sm:$0xff]
  %v6873 = vld [vmem:[#allocation9 + $0x20] sm:$0xff]
  %v6874 = vld [vmem:[#allocation9 + $0x28] sm:$0xff]
  %v6875 = vld [vmem:[#allocation9 + $0x30] sm:$0xff]
  %v6876 = vld [vmem:[#allocation9 + $0x38] sm:$0xff]
  %v6877 = vld [vmem:[#allocation9 + $0x40] sm:$0xff]
  %v6878 = vld [vmem:[#allocation9 + $0x48] sm:$0xff]
  %v6879 = vld [vmem:[#allocation9 + $0x50] sm:$0xff]
  %v6880 = vld [vmem:[#allocation9 + $0x58] sm:$0xff]
  %v6881 = vld [vmem:[#allocation9 + $0x60] sm:$0xff]
  %v6882 = vld [vmem:[#allocation9 + $0x68] sm:$0xff]
  %v6883 = vld [vmem:[#allocation9 + $0x70] sm:$0xff]
  %v6884 = vld [vmem:[#allocation9 + $0x78] sm:$0xff]
  %v6885 = vld [vmem:[#allocation9 + $0x80] sm:$0xff]
  %v6886 = vld [vmem:[#allocation9 + $0x88] sm:$0xff]
  %v6887 = vld [vmem:[#allocation9 + $0x90] sm:$0xff]
  %v6888 = vld [vmem:[#allocation9 + $0x98] sm:$0xff]
  %v6889 = vld [vmem:[#allocation9 + $0xa0] sm:$0xff]
  %v6890 = vld [vmem:[#allocation9 + $0xa8] sm:$0xff]
  %v6891 = vld [vmem:[#allocation9 + $0xb0] sm:$0xff]
  %v6892 = vld [vmem:[#allocation9 + $0xb8] sm:$0xff]
  %v6893 = vld [vmem:[#allocation9 + $0xc0] sm:$0xff]
  %v6894 = vld [vmem:[#allocation9 + $0xc8] sm:$0xff]
  %v6895 = vld [vmem:[#allocation9 + $0xd0] sm:$0xff]
  %v6896 = vld [vmem:[#allocation9 + $0xd8] sm:$0xff]
  %v6897 = vld [vmem:[#allocation9 + $0xe0] sm:$0xff]
  %v6898 = vld [vmem:[#allocation9 + $0xe8] sm:$0xff]
  %v6899 = vld [vmem:[#allocation9 + $0xf0] sm:$0xff]
  %v6900 = vld [vmem:[#allocation9 + $0xf8] sm:$0xff]
  %v6901 = vld [vmem:[#allocation9 + $0x100] sm:$0xff]
  %v6902 = vld [vmem:[#allocation9 + $0x108] sm:$0xff]
  %v6903 = vld [vmem:[#allocation9 + $0x110] sm:$0xff]
  %v6904 = vld [vmem:[#allocation9 + $0x118] sm:$0xff]
  %v6905 = vld [vmem:[#allocation9 + $0x120] sm:$0xff]
  %v6906 = vld [vmem:[#allocation9 + $0x128] sm:$0xff]
  %v6907 = vld [vmem:[#allocation9 + $0x130] sm:$0xff]
  %v6908 = vld [vmem:[#allocation9 + $0x138] sm:$0xff]
  %v6909 = vld [vmem:[#allocation9 + $0x140] sm:$0xff]
  %v6910 = vld [vmem:[#allocation9 + $0x148] sm:$0xff]
  %v6911 = vld [vmem:[#allocation9 + $0x150] sm:$0xff]
  %v6912 = vld [vmem:[#allocation9 + $0x158] sm:$0xff]
  %v6913 = vld [vmem:[#allocation9 + $0x160] sm:$0xff]
  %v6914 = vld [vmem:[#allocation9 + $0x168] sm:$0xff]
  %v6915 = vld [vmem:[#allocation9 + $0x170] sm:$0xff]
  %v6916 = vld [vmem:[#allocation9 + $0x178] sm:$0xff]
  %v6917 = vld [vmem:[#allocation9 + $0x180] sm:$0xff]
  %v6918 = vld [vmem:[#allocation9 + $0x188] sm:$0xff]
  %v6919 = vld [vmem:[%s6] sm:$0xff]
  %v6920 = vld [vmem:[%s6 + $0x8] sm:$0xff]
  %v6921 = vld [vmem:[%s6 + $0x10] sm:$0xff]
  %v6922 = vld [vmem:[%s6 + $0x18] sm:$0xff]
  %v6923 = vld [vmem:[%s6 + $0x20] sm:$0xff]
  %v6924 = vld [vmem:[%s6 + $0x28] sm:$0xff]
  %v6925 = vld [vmem:[%s6 + $0x30] sm:$0xff]
  %v6926 = vld [vmem:[%s6 + $0x38] sm:$0xff]
  %v6927 = vld [vmem:[%s6 + $0x40] sm:$0xff]
  %v6928 = vld [vmem:[%s6 + $0x48] sm:$0xff]
  %v6929 = vld [vmem:[%s6 + $0x50] sm:$0xff]
  %v6930 = vld [vmem:[%s6 + $0x58] sm:$0xff]
  %v6931 = vld [vmem:[%s6 + $0x60] sm:$0xff]
  %v6932 = vld [vmem:[%s6 + $0x68] sm:$0xff]
  %v6933 = vld [vmem:[%s6 + $0x70] sm:$0xff]
  %6935 = vset.pattern.permute.xlu0 0
  %6936 = vperm.xlu0 %6935, %v6919
  %v6937 = vpop.permute.xlu0 %6936
  %6940 = vset.pattern.permute.xlu0 0
  %6941 = vperm.xlu0 %6940, %v6920
  %v6942 = vpop.permute.xlu0 %6941
  %6945 = vset.pattern.permute.xlu0 0
  %6946 = vperm.xlu0 %6945, %v6921
  %v6947 = vpop.permute.xlu0 %6946
  %6950 = vset.pattern.permute.xlu0 0
  %6951 = vperm.xlu0 %6950, %v6922
  %v6952 = vpop.permute.xlu0 %6951
  %6955 = vset.pattern.permute.xlu0 0
  %6956 = vperm.xlu0 %6955, %v6923
  %v6957 = vpop.permute.xlu0 %6956
  %6960 = vset.pattern.permute.xlu0 0
  %6961 = vperm.xlu0 %6960, %v6924
  %v6962 = vpop.permute.xlu0 %6961
  %6965 = vset.pattern.permute.xlu0 0
  %6966 = vperm.xlu0 %6965, %v6925
  %v6967 = vpop.permute.xlu0 %6966
  %6970 = vset.pattern.permute.xlu0 0
  %6971 = vperm.xlu0 %6970, %v6926
  %v6972 = vpop.permute.xlu0 %6971
  %6975 = vset.pattern.permute.xlu0 0
  %6976 = vperm.xlu0 %6975, %v6927
  %v6977 = vpop.permute.xlu0 %6976
  %6980 = vset.pattern.permute.xlu0 0
  %6981 = vperm.xlu0 %6980, %v6928
  %v6982 = vpop.permute.xlu0 %6981
  %6985 = vset.pattern.permute.xlu0 0
  %6986 = vperm.xlu0 %6985, %v6929
  %v6987 = vpop.permute.xlu0 %6986
  %6990 = vset.pattern.permute.xlu0 0
  %6991 = vperm.xlu0 %6990, %v6930
  %v6992 = vpop.permute.xlu0 %6991
  %6995 = vset.pattern.permute.xlu0 0
  %6996 = vperm.xlu0 %6995, %v6931
  %v6997 = vpop.permute.xlu0 %6996
  %7000 = vset.pattern.permute.xlu0 0
  %7001 = vperm.xlu0 %7000, %v6932
  %v7002 = vpop.permute.xlu0 %7001
  %7005 = vset.pattern.permute.xlu0 0
  %7006 = vperm.xlu0 %7005, %v6933
  %v7007 = vpop.permute.xlu0 %7006
  %vm7009 = vcmask 130048
  %v7011 = vsel %vm7009, %v6812, 0
  %v7014 = vsel %vm7009, %v6816, 0
  %v7017 = vsel %vm7009, %v6820, 0
  %v7020 = vsel %vm7009, %v6824, 0
  %v7023 = vsel %vm7009, %v6828, 0
  %v7026 = vsel %vm7009, %v6832, 0
  %v7029 = vsel %vm7009, %v6836, 0
  %v7032 = vsel %vm7009, %v6840, 0
  %v7035 = vsel %vm7009, %v6844, 0
  %v7038 = vsel %vm7009, %v6848, 0
  %v7041 = vsel %vm7009, %v6852, 0
  %v7044 = vsel %vm7009, %v6856, 0
  %v7047 = vsel %vm7009, %v6860, 0
  %v7050 = vsel %vm7009, %v6864, 0
  %v7053 = vsel %vm7009, %v6868, 0
  %7055 = vmatpush.msra.mxu0 %v6884
  %7056 = vmatpush.msra.mxu0 %v6883
  %7057 = vmatpush.msra.mxu0 %v6882
  %7058 = vmatpush.msra.mxu0 %v6881
  %7059 = vmatpush.msra.mxu0 %v6880
  %7060 = vmatpush.msra.mxu0 %v6879
  %7061 = vmatpush.msra.mxu0 %v6878
  %7062 = vmatpush.msra.mxu0 %v6877
  %7063 = vmatpush.msra.mxu0 %v6876
  %7064 = vmatpush.msra.mxu0 %v6875
  %7065 = vmatpush.msra.mxu0 %v6874
  %7066 = vmatpush.msra.mxu0 %v6873
  %7067 = vmatpush.msra.mxu0 %v6872
  %7068 = vmatpush.msra.mxu0 %v6871
  %7069 = vmatpush.msra.mxu0 %v6870
  %7070 = vmatpush.msra.mxu0 %v6869
  %7071 = vmatmul.f32.gmra.mxu0 %v6809
  %v7072 = vpop.f32.mrf.mxu0
  %v7073 = vadd.f32 %v6937, %v7072
  %7074 = vmatmul.f32.gmra.mxu0 %v6813
  %v7075 = vpop.f32.mrf.mxu0
  %v7076 = vadd.f32 %v6942, %v7075
  %7077 = vmatmul.f32.gmra.mxu0 %v6817
  %v7078 = vpop.f32.mrf.mxu0
  %v7079 = vadd.f32 %v6947, %v7078
  %7080 = vmatmul.f32.gmra.mxu0 %v6821
  %v7081 = vpop.f32.mrf.mxu0
  %v7082 = vadd.f32 %v6952, %v7081
  %7083 = vmatmul.f32.gmra.mxu0 %v6825
  %v7084 = vpop.f32.mrf.mxu0
  %v7085 = vadd.f32 %v6957, %v7084
  %7086 = vmatmul.f32.gmra.mxu0 %v6829
  %v7087 = vpop.f32.mrf.mxu0
  %v7088 = vadd.f32 %v6962, %v7087
  %7089 = vmatmul.f32.gmra.mxu0 %v6833
  %v7090 = vpop.f32.mrf.mxu0
  %v7091 = vadd.f32 %v6967, %v7090
  %7092 = vmatmul.f32.gmra.mxu0 %v6837
  %v7093 = vpop.f32.mrf.mxu0
  %v7094 = vadd.f32 %v6972, %v7093
  %7095 = vmatmul.f32.gmra.mxu0 %v6841
  %v7096 = vpop.f32.mrf.mxu0
  %v7097 = vadd.f32 %v6977, %v7096
  %7098 = vmatmul.f32.gmra.mxu0 %v6845
  %v7099 = vpop.f32.mrf.mxu0
  %v7100 = vadd.f32 %v6982, %v7099
  %7101 = vmatmul.f32.gmra.mxu0 %v6849
  %v7102 = vpop.f32.mrf.mxu0
  %v7103 = vadd.f32 %v6987, %v7102
  %7104 = vmatmul.f32.gmra.mxu0 %v6853
  %v7105 = vpop.f32.mrf.mxu0
  %v7106 = vadd.f32 %v6992, %v7105
  %7107 = vmatmul.f32.gmra.mxu0 %v6857
  %v7108 = vpop.f32.mrf.mxu0
  %v7109 = vadd.f32 %v6997, %v7108
  %7110 = vmatmul.f32.gmra.mxu0 %v6861
  %v7111 = vpop.f32.mrf.mxu0
  %v7112 = vadd.f32 %v7002, %v7111
  %7113 = vmatmul.f32.gmra.mxu0 %v6865
  %v7114 = vpop.f32.mrf.mxu0
  %v7115 = vadd.f32 %v7007, %v7114
  %7116 = vdwg.mxu0
  %7117 = vmatpush.msra.mxu0 %v6900
  %7118 = vmatpush.msra.mxu0 %v6899
  %7119 = vmatpush.msra.mxu0 %v6898
  %7120 = vmatpush.msra.mxu0 %v6897
  %7121 = vmatpush.msra.mxu0 %v6896
  %7122 = vmatpush.msra.mxu0 %v6895
  %7123 = vmatpush.msra.mxu0 %v6894
  %7124 = vmatpush.msra.mxu0 %v6893
  %7125 = vmatpush.msra.mxu0 %v6892
  %7126 = vmatpush.msra.mxu0 %v6891
  %7127 = vmatpush.msra.mxu0 %v6890
  %7128 = vmatpush.msra.mxu0 %v6889
  %7129 = vmatpush.msra.mxu0 %v6888
  %7130 = vmatpush.msra.mxu0 %v6887
  %7131 = vmatpush.msra.mxu0 %v6886
  %7132 = vmatpush.msra.mxu0 %v6885
  %7133 = vmatmul.f32.gmra.mxu0 %v6810
  %v7134 = vpop.f32.mrf.mxu0
  %v7135 = vadd.f32 %v7073, %v7134
  %7136 = vmatmul.f32.gmra.mxu0 %v6814
  %v7137 = vpop.f32.mrf.mxu0
  %v7138 = vadd.f32 %v7076, %v7137
  %7139 = vmatmul.f32.gmra.mxu0 %v6818
  %v7140 = vpop.f32.mrf.mxu0
  %v7141 = vadd.f32 %v7079, %v7140
  %7142 = vmatmul.f32.gmra.mxu0 %v6822
  %v7143 = vpop.f32.mrf.mxu0
  %v7144 = vadd.f32 %v7082, %v7143
  %7145 = vmatmul.f32.gmra.mxu0 %v6826
  %v7146 = vpop.f32.mrf.mxu0
  %v7147 = vadd.f32 %v7085, %v7146
  %7148 = vmatmul.f32.gmra.mxu0 %v6830
  %v7149 = vpop.f32.mrf.mxu0
  %v7150 = vadd.f32 %v7088, %v7149
  %7151 = vmatmul.f32.gmra.mxu0 %v6834
  %v7152 = vpop.f32.mrf.mxu0
  %v7153 = vadd.f32 %v7091, %v7152
  %7154 = vmatmul.f32.gmra.mxu0 %v6838
  %v7155 = vpop.f32.mrf.mxu0
  %v7156 = vadd.f32 %v7094, %v7155
  %7157 = vmatmul.f32.gmra.mxu0 %v6842
  %v7158 = vpop.f32.mrf.mxu0
  %v7159 = vadd.f32 %v7097, %v7158
  %7160 = vmatmul.f32.gmra.mxu0 %v6846
  %v7161 = vpop.f32.mrf.mxu0
  %v7162 = vadd.f32 %v7100, %v7161
  %7163 = vmatmul.f32.gmra.mxu0 %v6850
  %v7164 = vpop.f32.mrf.mxu0
  %v7165 = vadd.f32 %v7103, %v7164
  %7166 = vmatmul.f32.gmra.mxu0 %v6854
  %v7167 = vpop.f32.mrf.mxu0
  %v7168 = vadd.f32 %v7106, %v7167
  %7169 = vmatmul.f32.gmra.mxu0 %v6858
  %v7170 = vpop.f32.mrf.mxu0
  %v7171 = vadd.f32 %v7109, %v7170
  %7172 = vmatmul.f32.gmra.mxu0 %v6862
  %v7173 = vpop.f32.mrf.mxu0
  %v7174 = vadd.f32 %v7112, %v7173
  %7175 = vmatmul.f32.gmra.mxu0 %v6866
  %v7176 = vpop.f32.mrf.mxu0
  %v7177 = vadd.f32 %v7115, %v7176
  %7178 = vdwg.mxu0
  %7179 = vmatpush.msra.mxu0 %v6916
  %7180 = vmatpush.msra.mxu0 %v6915
  %7181 = vmatpush.msra.mxu0 %v6914
  %7182 = vmatpush.msra.mxu0 %v6913
  %7183 = vmatpush.msra.mxu0 %v6912
  %7184 = vmatpush.msra.mxu0 %v6911
  %7185 = vmatpush.msra.mxu0 %v6910
  %7186 = vmatpush.msra.mxu0 %v6909
  %7187 = vmatpush.msra.mxu0 %v6908
  %7188 = vmatpush.msra.mxu0 %v6907
  %7189 = vmatpush.msra.mxu0 %v6906
  %7190 = vmatpush.msra.mxu0 %v6905
  %7191 = vmatpush.msra.mxu0 %v6904
  %7192 = vmatpush.msra.mxu0 %v6903
  %7193 = vmatpush.msra.mxu0 %v6902
  %7194 = vmatpush.msra.mxu0 %v6901
  %7195 = vmatmul.f32.gmra.mxu0 %v6811
  %v7196 = vpop.f32.mrf.mxu0
  %v7197 = vadd.f32 %v7135, %v7196
  %7198 = vmatmul.f32.gmra.mxu0 %v6815
  %v7199 = vpop.f32.mrf.mxu0
  %v7200 = vadd.f32 %v7138, %v7199
  %7201 = vmatmul.f32.gmra.mxu0 %v6819
  %v7202 = vpop.f32.mrf.mxu0
  %v7203 = vadd.f32 %v7141, %v7202
  %7204 = vmatmul.f32.gmra.mxu0 %v6823
  %v7205 = vpop.f32.mrf.mxu0
  %v7206 = vadd.f32 %v7144, %v7205
  %7207 = vmatmul.f32.gmra.mxu0 %v6827
  %v7208 = vpop.f32.mrf.mxu0
  %v7209 = vadd.f32 %v7147, %v7208
  %7210 = vmatmul.f32.gmra.mxu0 %v6831
  %v7211 = vpop.f32.mrf.mxu0
  %v7212 = vadd.f32 %v7150, %v7211
  %7213 = vmatmul.f32.gmra.mxu0 %v6835
  %v7214 = vpop.f32.mrf.mxu0
  %v7215 = vadd.f32 %v7153, %v7214
  %7216 = vmatmul.f32.gmra.mxu0 %v6839
  %v7217 = vpop.f32.mrf.mxu0
  %v7218 = vadd.f32 %v7156, %v7217
  %7219 = vmatmul.f32.gmra.mxu0 %v6843
  %v7220 = vpop.f32.mrf.mxu0
  %v7221 = vadd.f32 %v7159, %v7220
  %7222 = vmatmul.f32.gmra.mxu0 %v6847
  %v7223 = vpop.f32.mrf.mxu0
  %v7224 = vadd.f32 %v7162, %v7223
  %7225 = vmatmul.f32.gmra.mxu0 %v6851
  %v7226 = vpop.f32.mrf.mxu0
  %v7227 = vadd.f32 %v7165, %v7226
  %7228 = vmatmul.f32.gmra.mxu0 %v6855
  %v7229 = vpop.f32.mrf.mxu0
  %v7230 = vadd.f32 %v7168, %v7229
  %7231 = vmatmul.f32.gmra.mxu0 %v6859
  %v7232 = vpop.f32.mrf.mxu0
  %v7233 = vadd.f32 %v7171, %v7232
  %7234 = vmatmul.f32.gmra.mxu0 %v6863
  %v7235 = vpop.f32.mrf.mxu0
  %v7236 = vadd.f32 %v7174, %v7235
  %7237 = vmatmul.f32.gmra.mxu0 %v6867
  %v7238 = vpop.f32.mrf.mxu0
  %v7239 = vadd.f32 %v7177, %v7238
  %7240 = vdwg.mxu0
  %7241 = vmatpush.msra.mxu0 0.0
  %7242 = vmatpush.msra.mxu0 0.0
  %7243 = vmatpush.msra.mxu0 0.0
  %7244 = vmatpush.msra.mxu0 0.0
  %7245 = vmatpush.msra.mxu0 0.0
  %7246 = vmatpush.msra.mxu0 0.0
  %7247 = vmatpush.msra.mxu0 0.0
  %7248 = vmatpush.msra.mxu0 0.0
  %7249 = vmatpush.msra.mxu0 0.0
  %7250 = vmatpush.msra.mxu0 0.0
  %7251 = vmatpush.msra.mxu0 0.0
  %7252 = vmatpush.msra.mxu0 0.0
  %7253 = vmatpush.msra.mxu0 0.0
  %7254 = vmatpush.msra.mxu0 0.0
  %7255 = vmatpush.msra.mxu0 %v6918
  %7256 = vmatpush.msra.mxu0 %v6917
  %7257 = vmatmul.f32.gmra.mxu0 %v7011
  %v7258 = vpop.f32.mrf.mxu0
  %v7259 = vadd.f32 %v7197, %v7258
  %7260 = vmatmul.f32.gmra.mxu0 %v7014
  %v7261 = vpop.f32.mrf.mxu0
  %v7262 = vadd.f32 %v7200, %v7261
  %7263 = vmatmul.f32.gmra.mxu0 %v7017
  %v7264 = vpop.f32.mrf.mxu0
  %v7265 = vadd.f32 %v7203, %v7264
  %7266 = vmatmul.f32.gmra.mxu0 %v7020
  %v7267 = vpop.f32.mrf.mxu0
  %v7268 = vadd.f32 %v7206, %v7267
  %7269 = vmatmul.f32.gmra.mxu0 %v7023
  %v7270 = vpop.f32.mrf.mxu0
  %v7271 = vadd.f32 %v7209, %v7270
  %7272 = vmatmul.f32.gmra.mxu0 %v7026
  %v7273 = vpop.f32.mrf.mxu0
  %v7274 = vadd.f32 %v7212, %v7273
  %7275 = vmatmul.f32.gmra.mxu0 %v7029
  %v7276 = vpop.f32.mrf.mxu0
  %v7277 = vadd.f32 %v7215, %v7276
  %7278 = vmatmul.f32.gmra.mxu0 %v7032
  %v7279 = vpop.f32.mrf.mxu0
  %v7280 = vadd.f32 %v7218, %v7279
  %7281 = vmatmul.f32.gmra.mxu0 %v7035
  %v7282 = vpop.f32.mrf.mxu0
  %v7283 = vadd.f32 %v7221, %v7282
  %7284 = vmatmul.f32.gmra.mxu0 %v7038
  %v7285 = vpop.f32.mrf.mxu0
  %v7286 = vadd.f32 %v7224, %v7285
  %7287 = vmatmul.f32.gmra.mxu0 %v7041
  %v7288 = vpop.f32.mrf.mxu0
  %v7289 = vadd.f32 %v7227, %v7288
  %7290 = vmatmul.f32.gmra.mxu0 %v7044
  %v7291 = vpop.f32.mrf.mxu0
  %v7292 = vadd.f32 %v7230, %v7291
  %7293 = vmatmul.f32.gmra.mxu0 %v7047
  %v7294 = vpop.f32.mrf.mxu0
  %v7295 = vadd.f32 %v7233, %v7294
  %7296 = vmatmul.f32.gmra.mxu0 %v7050
  %v7297 = vpop.f32.mrf.mxu0
  %v7298 = vadd.f32 %v7236, %v7297
  %7299 = vmatmul.f32.gmra.mxu0 %v7053
  %v7300 = vpop.f32.mrf.mxu0
  %v7301 = vadd.f32 %v7239, %v7300
  %7302 = vdwg.mxu0
  %v7303 = vmax.f32 %v7259, 0.0
  %v7304 = vmax.f32 %v7262, 0.0
  %v7305 = vmax.f32 %v7265, 0.0
  %v7306 = vmax.f32 %v7268, 0.0
  %v7307 = vmax.f32 %v7271, 0.0
  %v7308 = vmax.f32 %v7274, 0.0
  %v7309 = vmax.f32 %v7277, 0.0
  %v7310 = vmax.f32 %v7280, 0.0
  %v7311 = vmax.f32 %v7283, 0.0
  %v7312 = vmax.f32 %v7286, 0.0
  %v7313 = vmax.f32 %v7289, 0.0
  %v7314 = vmax.f32 %v7292, 0.0
  %v7315 = vmax.f32 %v7295, 0.0
  %v7316 = vmax.f32 %v7298, 0.0
  %v7317 = vmax.f32 %v7301, 0.0
  %v7318 = vld [vmem:[%s7] sm:$0xff]
  %v7319 = vld [vmem:[%s7 + $0x8] sm:$0xff]
  %v7320 = vld [vmem:[%s7 + $0x10] sm:$0xff]
  %v7321 = vld [vmem:[%s7 + $0x18] sm:$0xff]
  %v7322 = vld [vmem:[%s7 + $0x20] sm:$0xff]
  %v7323 = vld [vmem:[%s7 + $0x28] sm:$0xff]
  %v7324 = vld [vmem:[%s7 + $0x30] sm:$0xff]
  %v7325 = vld [vmem:[%s7 + $0x38] sm:$0xff]
  %v7326 = vld [vmem:[%s7 + $0x40] sm:$0xff]
  %v7327 = vld [vmem:[%s7 + $0x48] sm:$0xff]
  %v7328 = vld [vmem:[%s7 + $0x50] sm:$0xf]
  %v7329 = vld [vmem:[%s8] sm:$0xff]
  %v7330 = vld [vmem:[%s8 + $0x8] sm:$0xff]
  %v7331 = vld [vmem:[%s8 + $0x10] sm:$0xff]
  %v7332 = vld [vmem:[%s8 + $0x18] sm:$0xff]
  %v7333 = vld [vmem:[%s8 + $0x20] sm:$0xff]
  %v7334 = vld [vmem:[%s8 + $0x28] sm:$0xff]
  %v7335 = vld [vmem:[%s8 + $0x30] sm:$0xff]
  %v7336 = vld [vmem:[%s8 + $0x38] sm:$0xff]
  %v7337 = vld [vmem:[%s8 + $0x40] sm:$0xff]
  %v7338 = vld [vmem:[%s8 + $0x48] sm:$0xff]
  %v7339 = vld [vmem:[%s8 + $0x50] sm:$0xf]
  %7341 = vset.pattern.permute.xlu0 0
  %7342 = vperm.xlu0 %7341, %v7329
  %v7343 = vpop.permute.xlu0 %7342
  %7346 = vset.pattern.permute.xlu0 0
  %7347 = vperm.xlu0 %7346, %v7330
  %v7348 = vpop.permute.xlu0 %7347
  %7351 = vset.pattern.permute.xlu0 0
  %7352 = vperm.xlu0 %7351, %v7331
  %v7353 = vpop.permute.xlu0 %7352
  %7356 = vset.pattern.permute.xlu0 0
  %7357 = vperm.xlu0 %7356, %v7332
  %v7358 = vpop.permute.xlu0 %7357
  %7361 = vset.pattern.permute.xlu0 0
  %7362 = vperm.xlu0 %7361, %v7333
  %v7363 = vpop.permute.xlu0 %7362
  %7366 = vset.pattern.permute.xlu0 0
  %7367 = vperm.xlu0 %7366, %v7334
  %v7368 = vpop.permute.xlu0 %7367
  %7371 = vset.pattern.permute.xlu0 0
  %7372 = vperm.xlu0 %7371, %v7335
  %v7373 = vpop.permute.xlu0 %7372
  %7376 = vset.pattern.permute.xlu0 0
  %7377 = vperm.xlu0 %7376, %v7336
  %v7378 = vpop.permute.xlu0 %7377
  %7381 = vset.pattern.permute.xlu0 0
  %7382 = vperm.xlu0 %7381, %v7337
  %v7383 = vpop.permute.xlu0 %7382
  %7386 = vset.pattern.permute.xlu0 0
  %7387 = vperm.xlu0 %7386, %v7338
  %v7388 = vpop.permute.xlu0 %7387
  %7391 = vset.pattern.permute.xlu0 0
  %7392 = vperm.xlu0 %7391, %v7339
  %v7393 = vpop.permute.xlu0 %7392
  %v7396 = vsel %vm1956, %v7318, 0
  %v7399 = vsel %vm1956, %v7319, 0
  %v7402 = vsel %vm1956, %v7320, 0
  %v7405 = vsel %vm1956, %v7321, 0
  %v7408 = vsel %vm1956, %v7322, 0
  %v7411 = vsel %vm1956, %v7323, 0
  %v7414 = vsel %vm1956, %v7324, 0
  %v7417 = vsel %vm1956, %v7325, 0
  %v7420 = vsel %vm1956, %v7326, 0
  %v7423 = vsel %vm1956, %v7327, 0
  %v7426 = vsel %vm1956, %v7328, 0
  %7428 = vmatpush.msra.mxu0 0.0
  %7429 = vmatpush.msra.mxu0 %v7317
  %7430 = vmatpush.msra.mxu0 %v7316
  %7431 = vmatpush.msra.mxu0 %v7315
  %7432 = vmatpush.msra.mxu0 %v7314
  %7433 = vmatpush.msra.mxu0 %v7313
  %7434 = vmatpush.msra.mxu0 %v7312
  %7435 = vmatpush.msra.mxu0 %v7311
  %7436 = vmatpush.msra.mxu0 %v7310
  %7437 = vmatpush.msra.mxu0 %v7309
  %7438 = vmatpush.msra.mxu0 %v7308
  %7439 = vmatpush.msra.mxu0 %v7307
  %7440 = vmatpush.msra.mxu0 %v7306
  %7441 = vmatpush.msra.mxu0 %v7305
  %7442 = vmatpush.msra.mxu0 %v7304
  %7443 = vmatpush.msra.mxu0 %v7303
  %7444 = vmatmul.f32.gmra.mxu0 %v7396
  %v7445 = vpop.f32.mrf.mxu0
  %v7446 = vadd.f32 %v7343, %v7445
  %7447 = vmatmul.f32.gmra.mxu0 %v7399
  %v7448 = vpop.f32.mrf.mxu0
  %v7449 = vadd.f32 %v7348, %v7448
  %7450 = vmatmul.f32.gmra.mxu0 %v7402
  %v7451 = vpop.f32.mrf.mxu0
  %v7452 = vadd.f32 %v7353, %v7451
  %7453 = vmatmul.f32.gmra.mxu0 %v7405
  %v7454 = vpop.f32.mrf.mxu0
  %v7455 = vadd.f32 %v7358, %v7454
  %7456 = vmatmul.f32.gmra.mxu0 %v7408
  %v7457 = vpop.f32.mrf.mxu0
  %v7458 = vadd.f32 %v7363, %v7457
  %7459 = vmatmul.f32.gmra.mxu0 %v7411
  %v7460 = vpop.f32.mrf.mxu0
  %v7461 = vadd.f32 %v7368, %v7460
  %7462 = vmatmul.f32.gmra.mxu0 %v7414
  %v7463 = vpop.f32.mrf.mxu0
  %v7464 = vadd.f32 %v7373, %v7463
  %7465 = vmatmul.f32.gmra.mxu0 %v7417
  %v7466 = vpop.f32.mrf.mxu0
  %v7467 = vadd.f32 %v7378, %v7466
  %7468 = vmatmul.f32.gmra.mxu0 %v7420
  %v7469 = vpop.f32.mrf.mxu0
  %v7470 = vadd.f32 %v7383, %v7469
  %7471 = vmatmul.f32.gmra.mxu0 %v7423
  %v7472 = vpop.f32.mrf.mxu0
  %v7473 = vadd.f32 %v7388, %v7472
  %7474 = vmatmul.f32.gmra.mxu0 %v7426
  %v7475 = vpop.f32.mrf.mxu0
  %v7476 = vadd.f32 %v7393, %v7475
  %7477 = vdwg.mxu0
  %v7478 = vmax.f32 %v7446, 0.0
  %v7479 = vmax.f32 %v7449, 0.0
  %v7480 = vmax.f32 %v7452, 0.0
  %v7481 = vmax.f32 %v7455, 0.0
  %v7482 = vmax.f32 %v7458, 0.0
  %v7483 = vmax.f32 %v7461, 0.0
  %v7484 = vmax.f32 %v7464, 0.0
  %v7485 = vmax.f32 %v7467, 0.0
  %v7486 = vmax.f32 %v7470, 0.0
  %v7487 = vmax.f32 %v7473, 0.0
  %v7488 = vmax.f32 %v7476, 0.0
  %v7489 = vld [vmem:[%s9] sm:$0xff]
  %v7490 = vld [vmem:[%s9 + $0x8] sm:$0x3]
  %v7491 = vld [vmem:[%s10] sm:$0xff]
  %v7492 = vld [vmem:[%s10 + $0x8] sm:$0x3]
  %7494 = vset.pattern.permute.xlu0 0
  %7495 = vperm.xlu0 %7494, %v7491
  %v7496 = vpop.permute.xlu0 %7495
  %7499 = vset.pattern.permute.xlu0 0
  %7500 = vperm.xlu0 %7499, %v7492
  %v7501 = vpop.permute.xlu0 %7500
  %vm7503 = vcmask 687104
  %v7505 = vsel %vm7503, %v7489, 0
  %v7508 = vsel %vm7503, %v7490, 0
  %vm7510 = vcmask 1043456
  %v7512 = vsel %vm7510, %v7488, 0
  %7514 = vmatpush.msra.mxu0 0.0
  %7515 = vmatpush.msra.mxu0 0.0
  %7516 = vmatpush.msra.mxu0 0.0
  %7517 = vmatpush.msra.mxu0 0.0
  %7518 = vmatpush.msra.mxu0 0.0
  %7519 = vmatpush.msra.mxu0 %v7512
  %7520 = vmatpush.msra.mxu0 %v7487
  %7521 = vmatpush.msra.mxu0 %v7486
  %7522 = vmatpush.msra.mxu0 %v7485
  %7523 = vmatpush.msra.mxu0 %v7484
  %7524 = vmatpush.msra.mxu0 %v7483
  %7525 = vmatpush.msra.mxu0 %v7482
  %7526 = vmatpush.msra.mxu0 %v7481
  %7527 = vmatpush.msra.mxu0 %v7480
  %7528 = vmatpush.msra.mxu0 %v7479
  %7529 = vmatpush.msra.mxu0 %v7478
  %7530 = vmatmul.f32.gmra.mxu0 %v7505
  %v7531 = vpop.f32.mrf.mxu0
  %v7532 = vadd.f32 %v7496, %v7531
  %7533 = vmatmul.f32.gmra.mxu0 %v7508
  %v7534 = vpop.f32.mrf.mxu0
  %v7535 = vadd.f32 %v7501, %v7534
  %7536 = vdwg.mxu0
  %vm7537 = vcmask 15360
  %7538 = vst.msk [vmem:[%s11] sm:$0xff] %vm7537, %v7532
  %vm7539 = vcmask 9216
  %7540 = vst.msk [vmem:[%s11 + $0x8] sm:$0x3] %vm7539, %v7535
  // Predicated region
  $region46: #{lenet_forward.1} parent=0 // pred_check
    _
  $region47: #{lenet_forward.1} parent=0 // pred_check_branch
    %7542 = sbr.rel (0) target = $region49
  $region48: #{lenet_forward.1} parent=0 // pred_region
    _
  $region49: #{lenet_forward.1} parent=0 // pred_fallthru
    _
  // Predicated region
  $region50: #{lenet_forward.1} parent=0 // pred_check
    _
  $region51: #{lenet_forward.1} parent=0 // pred_check_branch
    %7544 = sbr.rel (0) target = $region53
  $region52: #{lenet_forward.1} parent=0 // pred_region
    _
  $region53: #{lenet_forward.1} parent=0 // pred_fallthru
    _

</llo_original>
